<compile_context>
chip_gen: v7x
topology: tpu7x:2x2x1
jax: 0.10.0
libtpu: 0.0.40
codegen_flags: <defaults>
</compile_context>

<pallas_src>
import jax
import jax.numpy as jnp
import numpy as np
from jax.experimental import pallas as pl
from jax.experimental.pallas import tpu as pltpu


def _round_up(x, m):
    return ((x + m - 1) // m) * m


def _pick_time_tile(T, B):
    """Largest time tile dividing T whose output slab is sublane-dense (TT*B % 8 == 0)."""
    for tt in (64, 32, 16, 8):
        if T % tt == 0 and (tt * B) % 8 == 0:
            return tt
    return T  # small/odd T: single block (block shape == full array dims is always legal)


def _gru_decoder_kernel(gi0_ref,   # (TT*B, 3Hp) f32  layer-0 input projection tile (+ biases folded)
                        h0_ref,    # (L, B, Hp)   f32  initial hidden (zero-padded lanes)
                        whh_ref,   # (L, H, 3Hp)  bf16 hidden weights (transposed, gate-padded on N only)
                        wih_ref,   # (L-1, H, 3Hp) bf16 input weights for layers 1..L-1
                        bco_ref,   # (L-1, 1, 3Hp) f32  combined bias [b_ih_r+b_hh_r, b_ih_z+b_hh_z, b_ih_n]
                        bhn_ref,   # (L, 1, Hp)   f32  b_hh_n (must stay inside the r* term)
                        hseq_ref,  # out: (TT*B, Hp) f32 last-layer hidden for this time tile
                        hfin_ref,  # out: (L, B, Hp) f32 final hidden state (written at last grid step)
                        hcar_ref): # scratch: (L, B, Hp) f32 hidden carry across grid steps
    ti = pl.program_id(0)
    L, B, Hp = hcar_ref.shape
    H = whh_ref.shape[1]
    TT = hseq_ref.shape[0] // B
    GHp = 3 * Hp

    @pl.when(ti == 0)
    def _():
        hcar_ref[...] = h0_ref[...]

    # Hoist bias broadcasts out of the unrolled loops (JAX does not CSE broadcast_in_dim).
    bco = [jnp.broadcast_to(bco_ref[l], (B, GHp)) for l in range(L - 1)]
    bhn = [jnp.broadcast_to(bhn_ref[l], (B, Hp)) for l in range(L)]

    h = [hcar_ref[l] for l in range(L)]          # per-layer (B, Hp) f32, padded lanes are 0
    outs = []
    for tt in range(TT):                         # bounded static unroll over the time tile
        # gh only depends on the previous step's hidden -> hoist all L matmuls off the
        # layer dependency chain; they pipeline back-to-back on the MXU.
        gh = [jnp.dot(h[l][:, :H].astype(jnp.bfloat16), whh_ref[l],
                      preferred_element_type=jnp.float32) for l in range(L)]
        inp = None
        for l in range(L):                       # static unroll over layers
            if l == 0:
                gi = gi0_ref[tt * B:(tt + 1) * B, :]      # precomputed, biases folded in
            else:
                gi = jnp.dot(inp[:, :H].astype(jnp.bfloat16), wih_ref[l - 1],
                             preferred_element_type=jnp.float32) + bco[l - 1]
            # PyTorch gate order: [reset, update, new]; slices are 128-lane aligned.
            r = jax.nn.sigmoid(gi[:, 0 * Hp:1 * Hp] + gh[l][:, 0 * Hp:1 * Hp])
            z = jax.nn.sigmoid(gi[:, 1 * Hp:2 * Hp] + gh[l][:, 1 * Hp:2 * Hp])
            n = jnp.tanh(gi[:, 2 * Hp:3 * Hp] + r * (gh[l][:, 2 * Hp:3 * Hp] + bhn[l]))
            h[l] = (1.0 - z) * n + z * h[l]
            inp = h[l]
        outs.append(inp)

    # One sublane/lane-dense store for the whole time tile (no per-step masked partial vst).
    hseq_ref[...] = jnp.concatenate(outs, axis=0)

    for l in range(L):                           # carry hidden state to the next grid step
        hcar_ref[l] = h[l]

    @pl.when(ti == pl.num_programs(0) - 1)
    def _():
        for l in range(L):
            hfin_ref[l] = h[l]


def _pad_gates(w, H, Hp):
    """Pad a gate-blocked last axis from 3H to 3Hp (each gate zero-padded to Hp lanes)."""
    lead = w.shape[:-1]
    w = w.reshape(lead + (3, H))
    pad = [(0, 0)] * (w.ndim - 1) + [(0, Hp - H)]
    return jnp.pad(w, pad).reshape(lead + (3 * Hp,))


def prepare_params(params):
    """One-time weight layout (transpose / gate-pad / bias-combine / bf16 cast).

    Done once, outside the jitted forward, so the per-call path contains no re-layout.
    """
    w_hh = params["w_hh"]
    L, _, H = w_hh.shape
    assert L >= 2, "kernel assumes num_layers >= 2 (PyTorch default here is 4)"
    Hp = _round_up(H, 128)                                              # lane-align each gate block

    # Layer-0 input projection stays f32 (one tiny matmul in the wrapper, off the recurrence).
    wih0 = _pad_gates(params["w_ih0"].T, H, Hp)                         # (IN, 3Hp)

    # Kernel matmul weights: gate-padded on the N axis only (K stays at H=64), bf16 for MXU.
    wih_k = _pad_gates(jnp.transpose(params["w_ih_rest"], (0, 2, 1)),
                       H, Hp).astype(jnp.bfloat16)                      # (L-1, H, 3Hp)
    whh_k = _pad_gates(jnp.transpose(w_hh, (0, 2, 1)),
                       H, Hp).astype(jnp.bfloat16)                      # (L, H, 3Hp)

    b_ih, b_hh = params["b_ih"], params["b_hh"]                         # (L, 3H)
    # r/z gates get (b_ih + b_hh) up front; the n gate keeps b_hh_n inside the r* term.
    b_comb = jnp.concatenate(
        [b_ih[:, :2 * H] + b_hh[:, :2 * H], b_ih[:, 2 * H:]], axis=1)   # (L, 3H)
    b_comb = _pad_gates(b_comb, H, Hp)                                  # (L, 3Hp)
    b_hn = jnp.pad(b_hh[:, 2 * H:], ((0, 0), (0, Hp - H)))              # (L, Hp)

    return {
        "wih0": wih0,                                   # (IN, 3Hp) f32
        "b0": b_comb[0],                                # (3Hp,)    f32
        "whh_k": whh_k,                                 # (L, H, 3Hp) bf16
        "wih_k": wih_k,                                 # (L-1, H, 3Hp) bf16
        "bco": b_comb[1:].reshape(L - 1, 1, 3 * Hp),    # (L-1, 1, 3Hp) f32
        "bhn": b_hn.reshape(L, 1, Hp),                  # (L, 1, Hp) f32
        "w_fc_t": params["w_fc"].T,                     # (H, OUT) f32
        "b_fc": params["b_fc"],                         # (OUT,)   f32
    }


@jax.jit
def decoder_forward(x, hidden, prep):
    """x: (B, T, IN) f32, hidden: (L, B, H) f32 -> (prediction (B, T, OUT), hidden (L, B, H))."""
    B, T, IN = x.shape
    L, _, H = hidden.shape
    Hp = prep["bhn"].shape[-1]
    OUT = prep["w_fc_t"].shape[-1]
    TT = _pick_time_tile(T, B)
    nT = T // TT

    # Hoist the layer-0 input projection out of the recurrence (one small f32 matmul).
    # Rows are ordered t-major, b-minor so the kernel's time tiles are contiguous slabs.
    x_tb = jnp.transpose(x, (1, 0, 2)).reshape(T * B, IN)
    gi0 = jnp.dot(x_tb, prep["wih0"], preferred_element_type=jnp.float32) + prep["b0"]

    h0 = jnp.pad(hidden, ((0, 0), (0, 0), (0, Hp - H)))                 # padded lanes stay 0 in-kernel

    grid_spec = pltpu.PrefetchScalarGridSpec(
        num_scalar_prefetch=0,
        grid=(nT,),
        in_specs=[
            pl.BlockSpec((TT * B, 3 * Hp), lambda i: (i, 0)),           # gi0: tiled over T
            pl.BlockSpec((L, B, Hp), lambda i: (0, 0, 0)),              # h0 (full)
            pl.BlockSpec((L, H, 3 * Hp), lambda i: (0, 0, 0)),          # whh (bf16, full)
            pl.BlockSpec((L - 1, H, 3 * Hp), lambda i: (0, 0, 0)),      # wih (bf16, full)
            pl.BlockSpec((L - 1, 1, 3 * Hp), lambda i: (0, 0, 0)),      # bco
            pl.BlockSpec((L, 1, Hp), lambda i: (0, 0, 0)),              # bhn
        ],
        out_specs=(
            pl.BlockSpec((TT * B, Hp), lambda i: (i, 0)),               # hseq: tiled over T
            pl.BlockSpec((L, B, Hp), lambda i: (0, 0, 0)),              # hfin: resident
        ),
        scratch_shapes=[pltpu.VMEM((L, B, Hp), jnp.float32)],           # hidden-state carry
    )
    hseq, hfin = pl.pallas_call(
        _gru_decoder_kernel,
        out_shape=(jax.ShapeDtypeStruct((T * B, Hp), jnp.float32),
                   jax.ShapeDtypeStruct((L, B, Hp), jnp.float32)),
        grid_spec=grid_spec,
        compiler_params=pltpu.CompilerParams(dimension_semantics=("arbitrary",)),
    )(gi0, h0, prep["whh_k"], prep["wih_k"], prep["bco"], prep["bhn"])

    # fc + exp head outside the recurrence (OUT=4 is lane-sparse; keep it as one XLA matmul).
    h_last = hseq[:, :H]                                                # (T*B, H)
    pred = jnp.exp(jnp.dot(h_last, prep["w_fc_t"],
                           preferred_element_type=jnp.float32) + prep["b_fc"])
    prediction = pred.reshape(T, B, OUT).transpose(1, 0, 2)             # (B, T, OUT)
    return prediction, hfin[:, :, :H]


def init_params(key, input_size, hidden_size, output_size, num_layers):
    """Deterministic init matching PyTorch GRU/Linear parameter shapes."""
    H = hidden_size
    k = 1.0 / np.sqrt(H)
    keys = jax.random.split(key, 8)
    u = lambda kk, shape: jax.random.uniform(kk, shape, jnp.float32, -k, k)
    return {
        "w_ih0": u(keys[0], (3 * H, input_size)),                  # weight_ih_l0
        "w_ih_rest": u(keys[1], (num_layers - 1, 3 * H, H)),       # weight_ih_l{1..}
        "w_hh": u(keys[2], (num_layers, 3 * H, H)),                # weight_hh_l{..}
        "b_ih": u(keys[3], (num_layers, 3 * H)),
        "b_hh": u(keys[4], (num_layers, 3 * H)),
        "w_fc": u(keys[5], (output_size, H)),
        "b_fc": u(keys[6], (output_size,)),
    }


def decoder_reference(x, hidden, params):
    """Pure-JAX f32 reference (PyTorch GRU semantics, eval mode)."""
    B, T, IN = x.shape
    L, _, H = hidden.shape
    h = [hidden[l] for l in range(L)]
    outs = []
    for t in range(T):
        inp = x[:, t, :]
        for l in range(L):
            w_ih = params["w_ih0"] if l == 0 else params["w_ih_rest"][l - 1]
            gi = inp @ w_ih.T + params["b_ih"][l]
            gh = h[l] @ params["w_hh"][l].T + params["b_hh"][l]
            r = jax.nn.sigmoid(gi[:, :H] + gh[:, :H])
            z = jax.nn.sigmoid(gi[:, H:2 * H] + gh[:, H:2 * H])
            n = jnp.tanh(gi[:, 2 * H:] + r * gh[:, 2 * H:])
            h[l] = (1.0 - z) * n + z * h[l]
            inp = h[l]
        outs.append(inp)
    out = jnp.stack(outs, axis=1)
    pred = jnp.exp(out @ params["w_fc"].T + params["b_fc"])
    return pred, jnp.stack(h, axis=0)


if __name__ == "__main__":
    INPUT_SIZE, HIDDEN_SIZE, OUTPUT_SIZE, NUM_LAYERS = 3, 64, 4, 4
    B, T = 2, 8

    key = jax.random.PRNGKey(0)
    kp, kx, kh = jax.random.split(key, 3)

    params = init_params(kp, INPUT_SIZE, HIDDEN_SIZE, OUTPUT_SIZE, NUM_LAYERS)
    x = jax.random.normal(kx, (B, T, INPUT_SIZE), jnp.float32)
    hidden0 = jax.random.normal(kh, (NUM_LAYERS, B, HIDDEN_SIZE), jnp.float32)

    prep = prepare_params(params)          # one-time weight layout, outside the jitted forward
    pred, h_final = decoder_forward(x, hidden0, prep)
    pred = jax.block_until_ready(pred)
    h_final = jax.block_until_ready(h_final)

    pred_ref, h_ref = decoder_reference(x, hidden0, params)
    assert pred.shape == (B, T, OUTPUT_SIZE) and h_final.shape == (NUM_LAYERS, B, HIDDEN_SIZE)
    # Tolerances relaxed vs the pure-f32 reference because the recurrent matmuls intentionally
    # use bf16 MXU operands (f32 accumulation / gate math).
    np.testing.assert_allclose(np.asarray(pred), np.asarray(pred_ref), rtol=2e-2, atol=1e-2)
    np.testing.assert_allclose(np.asarray(h_final), np.asarray(h_ref), rtol=2e-2, atol=1e-2)

    print("KERNEL_OK")
</pallas_src>

<mosaic_0001>
module attributes {stable_mosaic.version = 11 : i64} {
  func.func @_gru_decoder_kernel(%arg0: i32, %arg1: memref<16x384xf32, #tpu.memory_space<vmem>>, %arg2: memref<4x2x128xf32, #tpu.memory_space<vmem>>, %arg3: memref<4x64x384xbf16, #tpu.memory_space<vmem>>, %arg4: memref<3x64x384xbf16, #tpu.memory_space<vmem>>, %arg5: memref<3x1x384xf32, #tpu.memory_space<vmem>>, %arg6: memref<4x1x128xf32, #tpu.memory_space<vmem>>, %arg7: memref<16x128xf32, #tpu.memory_space<vmem>>, %arg8: memref<4x2x128xf32, #tpu.memory_space<vmem>>, %arg9: memref<4x2x128xf32, #tpu.memory_space<vmem>>) attributes {dimension_semantics = [#tpu.dimension_semantics<arbitrary>], iteration_bounds = array<i64: 1>, scalar_prefetch = 0 : i64, scratch_operands = 1 : i64, tpu.core_type = #tpu.core_type<tc>, window_params = [{transform_indices = @transform_0, window_bounds = array<i64: 16, 384>}, {pipeline_mode = #tpu.pipeline_mode<synchronous>, transform_indices = @transform_1, window_bounds = array<i64: 4, 2, 128>}, {pipeline_mode = #tpu.pipeline_mode<synchronous>, transform_indices = @transform_2, window_bounds = array<i64: 4, 64, 384>}, {pipeline_mode = #tpu.pipeline_mode<synchronous>, transform_indices = @transform_3, window_bounds = array<i64: 3, 64, 384>}, {pipeline_mode = #tpu.pipeline_mode<synchronous>, transform_indices = @transform_4, window_bounds = array<i64: 3, 1, 384>}, {pipeline_mode = #tpu.pipeline_mode<synchronous>, transform_indices = @transform_5, window_bounds = array<i64: 4, 1, 128>}, {transform_indices = @transform_6, window_bounds = array<i64: 16, 128>}, {pipeline_mode = #tpu.pipeline_mode<synchronous>, transform_indices = @transform_7, window_bounds = array<i64: 4, 2, 128>}]} {
    %c0_i32 = arith.constant 0 : i32
    %0 = arith.cmpi eq, %arg0, %c0_i32 : i32
    %1 = arith.extui %0 : i1 to i32
    %c0_i32_0 = arith.constant 0 : i32
    %2 = arith.cmpi ne, %1, %c0_i32_0 : i32
    scf.if %2 {
      %c0_375 = arith.constant 0 : index
      %c0_376 = arith.constant 0 : index
      %c0_377 = arith.constant 0 : index
      %1232 = vector.load %arg2[%c0_375, %c0_376, %c0_377] : memref<4x2x128xf32, #tpu.memory_space<vmem>>, vector<4x2x128xf32>
      %c0_378 = arith.constant 0 : index
      %c0_379 = arith.constant 0 : index
      %c0_380 = arith.constant 0 : index
      %1233 = vector.load %arg9[%c0_378, %c0_379, %c0_380] : memref<4x2x128xf32, #tpu.memory_space<vmem>>, vector<4x2x128xf32>
      tpu.vector_store %arg9[%c0_378, %c0_379, %c0_380], %1232 {strides = array<i32>} : memref<4x2x128xf32, #tpu.memory_space<vmem>>, vector<4x2x128xf32>,
    } else {
    }
    %c0 = arith.constant 0 : index
    %c0_1 = arith.constant 0 : index
    %c0_2 = arith.constant 0 : index
    %3 = vector.load %arg5[%c0, %c0_1, %c0_2] : memref<3x1x384xf32, #tpu.memory_space<vmem>>, vector<1x1x384xf32>
    %4 = vector.shape_cast %3 : vector<1x1x384xf32> to vector<1x384xf32>
    %5 = vector.shape_cast %4 : vector<1x384xf32> to vector<1x384xf32>
    %6 = vector.broadcast %5 : vector<1x384xf32> to vector<2x384xf32>
    %c1 = arith.constant 1 : index
    %c0_3 = arith.constant 0 : index
    %c0_4 = arith.constant 0 : index
    %7 = vector.load %arg5[%c1, %c0_3, %c0_4] : memref<3x1x384xf32, #tpu.memory_space<vmem>>, vector<1x1x384xf32>
    %8 = vector.shape_cast %7 : vector<1x1x384xf32> to vector<1x384xf32>
    %9 = vector.shape_cast %8 : vector<1x384xf32> to vector<1x384xf32>
    %10 = vector.broadcast %9 : vector<1x384xf32> to vector<2x384xf32>
    %c2 = arith.constant 2 : index
    %c0_5 = arith.constant 0 : index
    %c0_6 = arith.constant 0 : index
    %11 = vector.load %arg5[%c2, %c0_5, %c0_6] : memref<3x1x384xf32, #tpu.memory_space<vmem>>, vector<1x1x384xf32>
    %12 = vector.shape_cast %11 : vector<1x1x384xf32> to vector<1x384xf32>
    %13 = vector.shape_cast %12 : vector<1x384xf32> to vector<1x384xf32>
    %14 = vector.broadcast %13 : vector<1x384xf32> to vector<2x384xf32>
    %c0_7 = arith.constant 0 : index
    %c0_8 = arith.constant 0 : index
    %c0_9 = arith.constant 0 : index
    %15 = vector.load %arg6[%c0_7, %c0_8, %c0_9] : memref<4x1x128xf32, #tpu.memory_space<vmem>>, vector<1x1x128xf32>
    %16 = vector.shape_cast %15 : vector<1x1x128xf32> to vector<1x128xf32>
    %17 = vector.shape_cast %16 : vector<1x128xf32> to vector<1x128xf32>
    %18 = vector.broadcast %17 : vector<1x128xf32> to vector<2x128xf32>
    %c1_10 = arith.constant 1 : index
    %c0_11 = arith.constant 0 : index
    %c0_12 = arith.constant 0 : index
    %19 = vector.load %arg6[%c1_10, %c0_11, %c0_12] : memref<4x1x128xf32, #tpu.memory_space<vmem>>, vector<1x1x128xf32>
    %20 = vector.shape_cast %19 : vector<1x1x128xf32> to vector<1x128xf32>
    %21 = vector.shape_cast %20 : vector<1x128xf32> to vector<1x128xf32>
    %22 = vector.broadcast %21 : vector<1x128xf32> to vector<2x128xf32>
    %c2_13 = arith.constant 2 : index
    %c0_14 = arith.constant 0 : index
    %c0_15 = arith.constant 0 : index
    %23 = vector.load %arg6[%c2_13, %c0_14, %c0_15] : memref<4x1x128xf32, #tpu.memory_space<vmem>>, vector<1x1x128xf32>
    %24 = vector.shape_cast %23 : vector<1x1x128xf32> to vector<1x128xf32>
    %25 = vector.shape_cast %24 : vector<1x128xf32> to vector<1x128xf32>
    %26 = vector.broadcast %25 : vector<1x128xf32> to vector<2x128xf32>
    %c3 = arith.constant 3 : index
    %c0_16 = arith.constant 0 : index
    %c0_17 = arith.constant 0 : index
    %27 = vector.load %arg6[%c3, %c0_16, %c0_17] : memref<4x1x128xf32, #tpu.memory_space<vmem>>, vector<1x1x128xf32>
    %28 = vector.shape_cast %27 : vector<1x1x128xf32> to vector<1x128xf32>
    %29 = vector.shape_cast %28 : vector<1x128xf32> to vector<1x128xf32>
    %30 = vector.broadcast %29 : vector<1x128xf32> to vector<2x128xf32>
    %c0_18 = arith.constant 0 : index
    %c0_19 = arith.constant 0 : index
    %c0_20 = arith.constant 0 : index
    %31 = vector.load %arg9[%c0_18, %c0_19, %c0_20] : memref<4x2x128xf32, #tpu.memory_space<vmem>>, vector<1x2x128xf32>
    %32 = vector.shape_cast %31 : vector<1x2x128xf32> to vector<2x128xf32>
    %c1_21 = arith.constant 1 : index
    %c0_22 = arith.constant 0 : index
    %c0_23 = arith.constant 0 : index
    %33 = vector.load %arg9[%c1_21, %c0_22, %c0_23] : memref<4x2x128xf32, #tpu.memory_space<vmem>>, vector<1x2x128xf32>
    %34 = vector.shape_cast %33 : vector<1x2x128xf32> to vector<2x128xf32>
    %c2_24 = arith.constant 2 : index
    %c0_25 = arith.constant 0 : index
    %c0_26 = arith.constant 0 : index
    %35 = vector.load %arg9[%c2_24, %c0_25, %c0_26] : memref<4x2x128xf32, #tpu.memory_space<vmem>>, vector<1x2x128xf32>
    %36 = vector.shape_cast %35 : vector<1x2x128xf32> to vector<2x128xf32>
    %c3_27 = arith.constant 3 : index
    %c0_28 = arith.constant 0 : index
    %c0_29 = arith.constant 0 : index
    %37 = vector.load %arg9[%c3_27, %c0_28, %c0_29] : memref<4x2x128xf32, #tpu.memory_space<vmem>>, vector<1x2x128xf32>
    %38 = vector.shape_cast %37 : vector<1x2x128xf32> to vector<2x128xf32>
    %39 = vector.extract_strided_slice %32 {offsets = [0, 0], sizes = [2, 64], strides = [1, 1]} : vector<2x128xf32> to vector<2x64xf32>
    %40 = arith.truncf %39 : vector<2x64xf32> to vector<2x64xbf16>
    %c0_30 = arith.constant 0 : index
    %c0_31 = arith.constant 0 : index
    %c0_32 = arith.constant 0 : index
    %41 = vector.load %arg3[%c0_30, %c0_31, %c0_32] : memref<4x64x384xbf16, #tpu.memory_space<vmem>>, vector<1x64x384xbf16>
    %42 = vector.shape_cast %41 : vector<1x64x384xbf16> to vector<64x384xbf16>
    %cst = arith.constant dense<0.000000e+00> : vector<2x384xf32>
    %43 = tpu.matmul %40, %42, %cst {dimension_numbers = #tpu.dot_dimension_numbers<[1], [0], [0], [1], [0, 0, 1, 1], [], []>} : vector<2x64xbf16>, vector<64x384xbf16>, vector<2x384xf32> -> vector<2x384xf32>
    %44 = vector.extract_strided_slice %34 {offsets = [0, 0], sizes = [2, 64], strides = [1, 1]} : vector<2x128xf32> to vector<2x64xf32>
    %45 = arith.truncf %44 : vector<2x64xf32> to vector<2x64xbf16>
    %c1_33 = arith.constant 1 : index
    %c0_34 = arith.constant 0 : index
    %c0_35 = arith.constant 0 : index
    %46 = vector.load %arg3[%c1_33, %c0_34, %c0_35] : memref<4x64x384xbf16, #tpu.memory_space<vmem>>, vector<1x64x384xbf16>
    %47 = vector.shape_cast %46 : vector<1x64x384xbf16> to vector<64x384xbf16>
    %cst_36 = arith.constant dense<0.000000e+00> : vector<2x384xf32>
    %48 = tpu.matmul %45, %47, %cst_36 {dimension_numbers = #tpu.dot_dimension_numbers<[1], [0], [0], [1], [0, 0, 1, 1], [], []>} : vector<2x64xbf16>, vector<64x384xbf16>, vector<2x384xf32> -> vector<2x384xf32>
    %49 = vector.extract_strided_slice %36 {offsets = [0, 0], sizes = [2, 64], strides = [1, 1]} : vector<2x128xf32> to vector<2x64xf32>
    %50 = arith.truncf %49 : vector<2x64xf32> to vector<2x64xbf16>
    %c2_37 = arith.constant 2 : index
    %c0_38 = arith.constant 0 : index
    %c0_39 = arith.constant 0 : index
    %51 = vector.load %arg3[%c2_37, %c0_38, %c0_39] : memref<4x64x384xbf16, #tpu.memory_space<vmem>>, vector<1x64x384xbf16>
    %52 = vector.shape_cast %51 : vector<1x64x384xbf16> to vector<64x384xbf16>
    %cst_40 = arith.constant dense<0.000000e+00> : vector<2x384xf32>
    %53 = tpu.matmul %50, %52, %cst_40 {dimension_numbers = #tpu.dot_dimension_numbers<[1], [0], [0], [1], [0, 0, 1, 1], [], []>} : vector<2x64xbf16>, vector<64x384xbf16>, vector<2x384xf32> -> vector<2x384xf32>
    %54 = vector.extract_strided_slice %38 {offsets = [0, 0], sizes = [2, 64], strides = [1, 1]} : vector<2x128xf32> to vector<2x64xf32>
    %55 = arith.truncf %54 : vector<2x64xf32> to vector<2x64xbf16>
    %c3_41 = arith.constant 3 : index
    %c0_42 = arith.constant 0 : index
    %c0_43 = arith.constant 0 : index
    %56 = vector.load %arg3[%c3_41, %c0_42, %c0_43] : memref<4x64x384xbf16, #tpu.memory_space<vmem>>, vector<1x64x384xbf16>
    %57 = vector.shape_cast %56 : vector<1x64x384xbf16> to vector<64x384xbf16>
    %cst_44 = arith.constant dense<0.000000e+00> : vector<2x384xf32>
    %58 = tpu.matmul %55, %57, %cst_44 {dimension_numbers = #tpu.dot_dimension_numbers<[1], [0], [0], [1], [0, 0, 1, 1], [], []>} : vector<2x64xbf16>, vector<64x384xbf16>, vector<2x384xf32> -> vector<2x384xf32>
    %c0_45 = arith.constant 0 : index
    %c0_46 = arith.constant 0 : index
    %59 = vector.load %arg1[%c0_45, %c0_46] : memref<16x384xf32, #tpu.memory_space<vmem>>, vector<2x384xf32>
    %60 = vector.extract_strided_slice %59 {offsets = [0, 0], sizes = [2, 128], strides = [1, 1]} : vector<2x384xf32> to vector<2x128xf32>
    %61 = vector.extract_strided_slice %43 {offsets = [0, 0], sizes = [2, 128], strides = [1, 1]} : vector<2x384xf32> to vector<2x128xf32>
    %62 = arith.addf %60, %61 : vector<2x128xf32>
    %63 = arith.negf %62 : vector<2x128xf32>
    %64 = math.exp %63 : vector<2x128xf32>
    %cst_47 = arith.constant 1.000000e+00 : f32
    %65 = vector.broadcast %cst_47 : f32 to vector<2x128xf32>
    %66 = arith.addf %65, %64 : vector<2x128xf32>
    %67 = arith.divf %65, %66 : vector<2x128xf32>
    %68 = vector.extract_strided_slice %59 {offsets = [0, 128], sizes = [2, 128], strides = [1, 1]} : vector<2x384xf32> to vector<2x128xf32>
    %69 = vector.extract_strided_slice %43 {offsets = [0, 128], sizes = [2, 128], strides = [1, 1]} : vector<2x384xf32> to vector<2x128xf32>
    %70 = arith.addf %68, %69 : vector<2x128xf32>
    %71 = arith.negf %70 : vector<2x128xf32>
    %72 = math.exp %71 : vector<2x128xf32>
    %cst_48 = arith.constant 1.000000e+00 : f32
    %73 = vector.broadcast %cst_48 : f32 to vector<2x128xf32>
    %74 = arith.addf %73, %72 : vector<2x128xf32>
    %75 = arith.divf %73, %74 : vector<2x128xf32>
    %76 = vector.extract_strided_slice %59 {offsets = [0, 256], sizes = [2, 128], strides = [1, 1]} : vector<2x384xf32> to vector<2x128xf32>
    %77 = vector.extract_strided_slice %43 {offsets = [0, 256], sizes = [2, 128], strides = [1, 1]} : vector<2x384xf32> to vector<2x128xf32>
    %78 = arith.addf %77, %18 : vector<2x128xf32>
    %79 = arith.mulf %67, %78 : vector<2x128xf32>
    %80 = arith.addf %76, %79 : vector<2x128xf32>
    %81 = math.tanh %80 : vector<2x128xf32>
    %cst_49 = arith.constant 1.000000e+00 : f32
    %82 = vector.broadcast %cst_49 : f32 to vector<2x128xf32>
    %83 = arith.subf %82, %75 : vector<2x128xf32>
    %84 = arith.mulf %83, %81 : vector<2x128xf32>
    %85 = arith.mulf %75, %32 : vector<2x128xf32>
    %86 = arith.addf %84, %85 : vector<2x128xf32>
    %87 = vector.extract_strided_slice %86 {offsets = [0, 0], sizes = [2, 64], strides = [1, 1]} : vector<2x128xf32> to vector<2x64xf32>
    %88 = arith.truncf %87 : vector<2x64xf32> to vector<2x64xbf16>
    %c0_50 = arith.constant 0 : index
    %c0_51 = arith.constant 0 : index
    %c0_52 = arith.constant 0 : index
    %89 = vector.load %arg4[%c0_50, %c0_51, %c0_52] : memref<3x64x384xbf16, #tpu.memory_space<vmem>>, vector<1x64x384xbf16>
    %90 = vector.shape_cast %89 : vector<1x64x384xbf16> to vector<64x384xbf16>
    %cst_53 = arith.constant dense<0.000000e+00> : vector<2x384xf32>
    %91 = tpu.matmul %88, %90, %cst_53 {dimension_numbers = #tpu.dot_dimension_numbers<[1], [0], [0], [1], [0, 0, 1, 1], [], []>} : vector<2x64xbf16>, vector<64x384xbf16>, vector<2x384xf32> -> vector<2x384xf32>
    %92 = arith.addf %91, %6 : vector<2x384xf32>
    %93 = vector.extract_strided_slice %92 {offsets = [0, 0], sizes = [2, 128], strides = [1, 1]} : vector<2x384xf32> to vector<2x128xf32>
    %94 = vector.extract_strided_slice %48 {offsets = [0, 0], sizes = [2, 128], strides = [1, 1]} : vector<2x384xf32> to vector<2x128xf32>
    %95 = arith.addf %93, %94 : vector<2x128xf32>
    %96 = arith.negf %95 : vector<2x128xf32>
    %97 = math.exp %96 : vector<2x128xf32>
    %cst_54 = arith.constant 1.000000e+00 : f32
    %98 = vector.broadcast %cst_54 : f32 to vector<2x128xf32>
    %99 = arith.addf %98, %97 : vector<2x128xf32>
    %100 = arith.divf %98, %99 : vector<2x128xf32>
    %101 = vector.extract_strided_slice %92 {offsets = [0, 128], sizes = [2, 128], strides = [1, 1]} : vector<2x384xf32> to vector<2x128xf32>
    %102 = vector.extract_strided_slice %48 {offsets = [0, 128], sizes = [2, 128], strides = [1, 1]} : vector<2x384xf32> to vector<2x128xf32>
    %103 = arith.addf %101, %102 : vector<2x128xf32>
    %104 = arith.negf %103 : vector<2x128xf32>
    %105 = math.exp %104 : vector<2x128xf32>
    %cst_55 = arith.constant 1.000000e+00 : f32
    %106 = vector.broadcast %cst_55 : f32 to vector<2x128xf32>
    %107 = arith.addf %106, %105 : vector<2x128xf32>
    %108 = arith.divf %106, %107 : vector<2x128xf32>
    %109 = vector.extract_strided_slice %92 {offsets = [0, 256], sizes = [2, 128], strides = [1, 1]} : vector<2x384xf32> to vector<2x128xf32>
    %110 = vector.extract_strided_slice %48 {offsets = [0, 256], sizes = [2, 128], strides = [1, 1]} : vector<2x384xf32> to vector<2x128xf32>
    %111 = arith.addf %110, %22 : vector<2x128xf32>
    %112 = arith.mulf %100, %111 : vector<2x128xf32>
    %113 = arith.addf %109, %112 : vector<2x128xf32>
    %114 = math.tanh %113 : vector<2x128xf32>
    %cst_56 = arith.constant 1.000000e+00 : f32
    %115 = vector.broadcast %cst_56 : f32 to vector<2x128xf32>
    %116 = arith.subf %115, %108 : vector<2x128xf32>
    %117 = arith.mulf %116, %114 : vector<2x128xf32>
    %118 = arith.mulf %108, %34 : vector<2x128xf32>
    %119 = arith.addf %117, %118 : vector<2x128xf32>
    %120 = vector.extract_strided_slice %119 {offsets = [0, 0], sizes = [2, 64], strides = [1, 1]} : vector<2x128xf32> to vector<2x64xf32>
    %121 = arith.truncf %120 : vector<2x64xf32> to vector<2x64xbf16>
    %c1_57 = arith.constant 1 : index
    %c0_58 = arith.constant 0 : index
    %c0_59 = arith.constant 0 : index
    %122 = vector.load %arg4[%c1_57, %c0_58, %c0_59] : memref<3x64x384xbf16, #tpu.memory_space<vmem>>, vector<1x64x384xbf16>
    %123 = vector.shape_cast %122 : vector<1x64x384xbf16> to vector<64x384xbf16>
    %cst_60 = arith.constant dense<0.000000e+00> : vector<2x384xf32>
    %124 = tpu.matmul %121, %123, %cst_60 {dimension_numbers = #tpu.dot_dimension_numbers<[1], [0], [0], [1], [0, 0, 1, 1], [], []>} : vector<2x64xbf16>, vector<64x384xbf16>, vector<2x384xf32> -> vector<2x384xf32>
    %125 = arith.addf %124, %10 : vector<2x384xf32>
    %126 = vector.extract_strided_slice %125 {offsets = [0, 0], sizes = [2, 128], strides = [1, 1]} : vector<2x384xf32> to vector<2x128xf32>
    %127 = vector.extract_strided_slice %53 {offsets = [0, 0], sizes = [2, 128], strides = [1, 1]} : vector<2x384xf32> to vector<2x128xf32>
    %128 = arith.addf %126, %127 : vector<2x128xf32>
    %129 = arith.negf %128 : vector<2x128xf32>
    %130 = math.exp %129 : vector<2x128xf32>
    %cst_61 = arith.constant 1.000000e+00 : f32
    %131 = vector.broadcast %cst_61 : f32 to vector<2x128xf32>
    %132 = arith.addf %131, %130 : vector<2x128xf32>
    %133 = arith.divf %131, %132 : vector<2x128xf32>
    %134 = vector.extract_strided_slice %125 {offsets = [0, 128], sizes = [2, 128], strides = [1, 1]} : vector<2x384xf32> to vector<2x128xf32>
    %135 = vector.extract_strided_slice %53 {offsets = [0, 128], sizes = [2, 128], strides = [1, 1]} : vector<2x384xf32> to vector<2x128xf32>
    %136 = arith.addf %134, %135 : vector<2x128xf32>
    %137 = arith.negf %136 : vector<2x128xf32>
    %138 = math.exp %137 : vector<2x128xf32>
    %cst_62 = arith.constant 1.000000e+00 : f32
    %139 = vector.broadcast %cst_62 : f32 to vector<2x128xf32>
    %140 = arith.addf %139, %138 : vector<2x128xf32>
    %141 = arith.divf %139, %140 : vector<2x128xf32>
    %142 = vector.extract_strided_slice %125 {offsets = [0, 256], sizes = [2, 128], strides = [1, 1]} : vector<2x384xf32> to vector<2x128xf32>
    %143 = vector.extract_strided_slice %53 {offsets = [0, 256], sizes = [2, 128], strides = [1, 1]} : vector<2x384xf32> to vector<2x128xf32>
    %144 = arith.addf %143, %26 : vector<2x128xf32>
    %145 = arith.mulf %133, %144 : vector<2x128xf32>
    %146 = arith.addf %142, %145 : vector<2x128xf32>
    %147 = math.tanh %146 : vector<2x128xf32>
    %cst_63 = arith.constant 1.000000e+00 : f32
    %148 = vector.broadcast %cst_63 : f32 to vector<2x128xf32>
    %149 = arith.subf %148, %141 : vector<2x128xf32>
    %150 = arith.mulf %149, %147 : vector<2x128xf32>
    %151 = arith.mulf %141, %36 : vector<2x128xf32>
    %152 = arith.addf %150, %151 : vector<2x128xf32>
    %153 = vector.extract_strided_slice %152 {offsets = [0, 0], sizes = [2, 64], strides = [1, 1]} : vector<2x128xf32> to vector<2x64xf32>
    %154 = arith.truncf %153 : vector<2x64xf32> to vector<2x64xbf16>
    %c2_64 = arith.constant 2 : index
    %c0_65 = arith.constant 0 : index
    %c0_66 = arith.constant 0 : index
    %155 = vector.load %arg4[%c2_64, %c0_65, %c0_66] : memref<3x64x384xbf16, #tpu.memory_space<vmem>>, vector<1x64x384xbf16>
    %156 = vector.shape_cast %155 : vector<1x64x384xbf16> to vector<64x384xbf16>
    %cst_67 = arith.constant dense<0.000000e+00> : vector<2x384xf32>
    %157 = tpu.matmul %154, %156, %cst_67 {dimension_numbers = #tpu.dot_dimension_numbers<[1], [0], [0], [1], [0, 0, 1, 1], [], []>} : vector<2x64xbf16>, vector<64x384xbf16>, vector<2x384xf32> -> vector<2x384xf32>
    %158 = arith.addf %157, %14 : vector<2x384xf32>
    %159 = vector.extract_strided_slice %158 {offsets = [0, 0], sizes = [2, 128], strides = [1, 1]} : vector<2x384xf32> to vector<2x128xf32>
    %160 = vector.extract_strided_slice %58 {offsets = [0, 0], sizes = [2, 128], strides = [1, 1]} : vector<2x384xf32> to vector<2x128xf32>
    %161 = arith.addf %159, %160 : vector<2x128xf32>
    %162 = arith.negf %161 : vector<2x128xf32>
    %163 = math.exp %162 : vector<2x128xf32>
    %cst_68 = arith.constant 1.000000e+00 : f32
    %164 = vector.broadcast %cst_68 : f32 to vector<2x128xf32>
    %165 = arith.addf %164, %163 : vector<2x128xf32>
    %166 = arith.divf %164, %165 : vector<2x128xf32>
    %167 = vector.extract_strided_slice %158 {offsets = [0, 128], sizes = [2, 128], strides = [1, 1]} : vector<2x384xf32> to vector<2x128xf32>
    %168 = vector.extract_strided_slice %58 {offsets = [0, 128], sizes = [2, 128], strides = [1, 1]} : vector<2x384xf32> to vector<2x128xf32>
    %169 = arith.addf %167, %168 : vector<2x128xf32>
    %170 = arith.negf %169 : vector<2x128xf32>
    %171 = math.exp %170 : vector<2x128xf32>
    %cst_69 = arith.constant 1.000000e+00 : f32
    %172 = vector.broadcast %cst_69 : f32 to vector<2x128xf32>
    %173 = arith.addf %172, %171 : vector<2x128xf32>
    %174 = arith.divf %172, %173 : vector<2x128xf32>
    %175 = vector.extract_strided_slice %158 {offsets = [0, 256], sizes = [2, 128], strides = [1, 1]} : vector<2x384xf32> to vector<2x128xf32>
    %176 = vector.extract_strided_slice %58 {offsets = [0, 256], sizes = [2, 128], strides = [1, 1]} : vector<2x384xf32> to vector<2x128xf32>
    %177 = arith.addf %176, %30 : vector<2x128xf32>
    %178 = arith.mulf %166, %177 : vector<2x128xf32>
    %179 = arith.addf %175, %178 : vector<2x128xf32>
    %180 = math.tanh %179 : vector<2x128xf32>
    %cst_70 = arith.constant 1.000000e+00 : f32
    %181 = vector.broadcast %cst_70 : f32 to vector<2x128xf32>
    %182 = arith.subf %181, %174 : vector<2x128xf32>
    %183 = arith.mulf %182, %180 : vector<2x128xf32>
    %184 = arith.mulf %174, %38 : vector<2x128xf32>
    %185 = arith.addf %183, %184 : vector<2x128xf32>
    %186 = vector.extract_strided_slice %86 {offsets = [0, 0], sizes = [2, 64], strides = [1, 1]} : vector<2x128xf32> to vector<2x64xf32>
    %187 = arith.truncf %186 : vector<2x64xf32> to vector<2x64xbf16>
    %c0_71 = arith.constant 0 : index
    %c0_72 = arith.constant 0 : index
    %c0_73 = arith.constant 0 : index
    %188 = vector.load %arg3[%c0_71, %c0_72, %c0_73] : memref<4x64x384xbf16, #tpu.memory_space<vmem>>, vector<1x64x384xbf16>
    %189 = vector.shape_cast %188 : vector<1x64x384xbf16> to vector<64x384xbf16>
    %cst_74 = arith.constant dense<0.000000e+00> : vector<2x384xf32>
    %190 = tpu.matmul %187, %189, %cst_74 {dimension_numbers = #tpu.dot_dimension_numbers<[1], [0], [0], [1], [0, 0, 1, 1], [], []>} : vector<2x64xbf16>, vector<64x384xbf16>, vector<2x384xf32> -> vector<2x384xf32>
    %191 = vector.extract_strided_slice %119 {offsets = [0, 0], sizes = [2, 64], strides = [1, 1]} : vector<2x128xf32> to vector<2x64xf32>
    %192 = arith.truncf %191 : vector<2x64xf32> to vector<2x64xbf16>
    %c1_75 = arith.constant 1 : index
    %c0_76 = arith.constant 0 : index
    %c0_77 = arith.constant 0 : index
    %193 = vector.load %arg3[%c1_75, %c0_76, %c0_77] : memref<4x64x384xbf16, #tpu.memory_space<vmem>>, vector<1x64x384xbf16>
    %194 = vector.shape_cast %193 : vector<1x64x384xbf16> to vector<64x384xbf16>
    %cst_78 = arith.constant dense<0.000000e+00> : vector<2x384xf32>
    %195 = tpu.matmul %192, %194, %cst_78 {dimension_numbers = #tpu.dot_dimension_numbers<[1], [0], [0], [1], [0, 0, 1, 1], [], []>} : vector<2x64xbf16>, vector<64x384xbf16>, vector<2x384xf32> -> vector<2x384xf32>
    %196 = vector.extract_strided_slice %152 {offsets = [0, 0], sizes = [2, 64], strides = [1, 1]} : vector<2x128xf32> to vector<2x64xf32>
    %197 = arith.truncf %196 : vector<2x64xf32> to vector<2x64xbf16>
    %c2_79 = arith.constant 2 : index
    %c0_80 = arith.constant 0 : index
    %c0_81 = arith.constant 0 : index
    %198 = vector.load %arg3[%c2_79, %c0_80, %c0_81] : memref<4x64x384xbf16, #tpu.memory_space<vmem>>, vector<1x64x384xbf16>
    %199 = vector.shape_cast %198 : vector<1x64x384xbf16> to vector<64x384xbf16>
    %cst_82 = arith.constant dense<0.000000e+00> : vector<2x384xf32>
    %200 = tpu.matmul %197, %199, %cst_82 {dimension_numbers = #tpu.dot_dimension_numbers<[1], [0], [0], [1], [0, 0, 1, 1], [], []>} : vector<2x64xbf16>, vector<64x384xbf16>, vector<2x384xf32> -> vector<2x384xf32>
    %201 = vector.extract_strided_slice %185 {offsets = [0, 0], sizes = [2, 64], strides = [1, 1]} : vector<2x128xf32> to vector<2x64xf32>
    %202 = arith.truncf %201 : vector<2x64xf32> to vector<2x64xbf16>
    %c3_83 = arith.constant 3 : index
    %c0_84 = arith.constant 0 : index
    %c0_85 = arith.constant 0 : index
    %203 = vector.load %arg3[%c3_83, %c0_84, %c0_85] : memref<4x64x384xbf16, #tpu.memory_space<vmem>>, vector<1x64x384xbf16>
    %204 = vector.shape_cast %203 : vector<1x64x384xbf16> to vector<64x384xbf16>
    %cst_86 = arith.constant dense<0.000000e+00> : vector<2x384xf32>
    %205 = tpu.matmul %202, %204, %cst_86 {dimension_numbers = #tpu.dot_dimension_numbers<[1], [0], [0], [1], [0, 0, 1, 1], [], []>} : vector<2x64xbf16>, vector<64x384xbf16>, vector<2x384xf32> -> vector<2x384xf32>
    %c2_87 = arith.constant 2 : index
    %c0_88 = arith.constant 0 : index
    %206 = vector.load %arg1[%c2_87, %c0_88] : memref<16x384xf32, #tpu.memory_space<vmem>>, vector<2x384xf32>
    %207 = vector.extract_strided_slice %206 {offsets = [0, 0], sizes = [2, 128], strides = [1, 1]} : vector<2x384xf32> to vector<2x128xf32>
    %208 = vector.extract_strided_slice %190 {offsets = [0, 0], sizes = [2, 128], strides = [1, 1]} : vector<2x384xf32> to vector<2x128xf32>
    %209 = arith.addf %207, %208 : vector<2x128xf32>
    %210 = arith.negf %209 : vector<2x128xf32>
    %211 = math.exp %210 : vector<2x128xf32>
    %cst_89 = arith.constant 1.000000e+00 : f32
    %212 = vector.broadcast %cst_89 : f32 to vector<2x128xf32>
    %213 = arith.addf %212, %211 : vector<2x128xf32>
    %214 = arith.divf %212, %213 : vector<2x128xf32>
    %215 = vector.extract_strided_slice %206 {offsets = [0, 128], sizes = [2, 128], strides = [1, 1]} : vector<2x384xf32> to vector<2x128xf32>
    %216 = vector.extract_strided_slice %190 {offsets = [0, 128], sizes = [2, 128], strides = [1, 1]} : vector<2x384xf32> to vector<2x128xf32>
    %217 = arith.addf %215, %216 : vector<2x128xf32>
    %218 = arith.negf %217 : vector<2x128xf32>
    %219 = math.exp %218 : vector<2x128xf32>
    %cst_90 = arith.constant 1.000000e+00 : f32
    %220 = vector.broadcast %cst_90 : f32 to vector<2x128xf32>
    %221 = arith.addf %220, %219 : vector<2x128xf32>
    %222 = arith.divf %220, %221 : vector<2x128xf32>
    %223 = vector.extract_strided_slice %206 {offsets = [0, 256], sizes = [2, 128], strides = [1, 1]} : vector<2x384xf32> to vector<2x128xf32>
    %224 = vector.extract_strided_slice %190 {offsets = [0, 256], sizes = [2, 128], strides = [1, 1]} : vector<2x384xf32> to vector<2x128xf32>
    %225 = arith.addf %224, %18 : vector<2x128xf32>
    %226 = arith.mulf %214, %225 : vector<2x128xf32>
    %227 = arith.addf %223, %226 : vector<2x128xf32>
    %228 = math.tanh %227 : vector<2x128xf32>
    %cst_91 = arith.constant 1.000000e+00 : f32
    %229 = vector.broadcast %cst_91 : f32 to vector<2x128xf32>
    %230 = arith.subf %229, %222 : vector<2x128xf32>
    %231 = arith.mulf %230, %228 : vector<2x128xf32>
    %232 = arith.mulf %222, %86 : vector<2x128xf32>
    %233 = arith.addf %231, %232 : vector<2x128xf32>
    %234 = vector.extract_strided_slice %233 {offsets = [0, 0], sizes = [2, 64], strides = [1, 1]} : vector<2x128xf32> to vector<2x64xf32>
    %235 = arith.truncf %234 : vector<2x64xf32> to vector<2x64xbf16>
    %c0_92 = arith.constant 0 : index
    %c0_93 = arith.constant 0 : index
    %c0_94 = arith.constant 0 : index
    %236 = vector.load %arg4[%c0_92, %c0_93, %c0_94] : memref<3x64x384xbf16, #tpu.memory_space<vmem>>, vector<1x64x384xbf16>
    %237 = vector.shape_cast %236 : vector<1x64x384xbf16> to vector<64x384xbf16>
    %cst_95 = arith.constant dense<0.000000e+00> : vector<2x384xf32>
    %238 = tpu.matmul %235, %237, %cst_95 {dimension_numbers = #tpu.dot_dimension_numbers<[1], [0], [0], [1], [0, 0, 1, 1], [], []>} : vector<2x64xbf16>, vector<64x384xbf16>, vector<2x384xf32> -> vector<2x384xf32>
    %239 = arith.addf %238, %6 : vector<2x384xf32>
    %240 = vector.extract_strided_slice %239 {offsets = [0, 0], sizes = [2, 128], strides = [1, 1]} : vector<2x384xf32> to vector<2x128xf32>
    %241 = vector.extract_strided_slice %195 {offsets = [0, 0], sizes = [2, 128], strides = [1, 1]} : vector<2x384xf32> to vector<2x128xf32>
    %242 = arith.addf %240, %241 : vector<2x128xf32>
    %243 = arith.negf %242 : vector<2x128xf32>
    %244 = math.exp %243 : vector<2x128xf32>
    %cst_96 = arith.constant 1.000000e+00 : f32
    %245 = vector.broadcast %cst_96 : f32 to vector<2x128xf32>
    %246 = arith.addf %245, %244 : vector<2x128xf32>
    %247 = arith.divf %245, %246 : vector<2x128xf32>
    %248 = vector.extract_strided_slice %239 {offsets = [0, 128], sizes = [2, 128], strides = [1, 1]} : vector<2x384xf32> to vector<2x128xf32>
    %249 = vector.extract_strided_slice %195 {offsets = [0, 128], sizes = [2, 128], strides = [1, 1]} : vector<2x384xf32> to vector<2x128xf32>
    %250 = arith.addf %248, %249 : vector<2x128xf32>
    %251 = arith.negf %250 : vector<2x128xf32>
    %252 = math.exp %251 : vector<2x128xf32>
    %cst_97 = arith.constant 1.000000e+00 : f32
    %253 = vector.broadcast %cst_97 : f32 to vector<2x128xf32>
    %254 = arith.addf %253, %252 : vector<2x128xf32>
    %255 = arith.divf %253, %254 : vector<2x128xf32>
    %256 = vector.extract_strided_slice %239 {offsets = [0, 256], sizes = [2, 128], strides = [1, 1]} : vector<2x384xf32> to vector<2x128xf32>
    %257 = vector.extract_strided_slice %195 {offsets = [0, 256], sizes = [2, 128], strides = [1, 1]} : vector<2x384xf32> to vector<2x128xf32>
    %258 = arith.addf %257, %22 : vector<2x128xf32>
    %259 = arith.mulf %247, %258 : vector<2x128xf32>
    %260 = arith.addf %256, %259 : vector<2x128xf32>
    %261 = math.tanh %260 : vector<2x128xf32>
    %cst_98 = arith.constant 1.000000e+00 : f32
    %262 = vector.broadcast %cst_98 : f32 to vector<2x128xf32>
    %263 = arith.subf %262, %255 : vector<2x128xf32>
    %264 = arith.mulf %263, %261 : vector<2x128xf32>
    %265 = arith.mulf %255, %119 : vector<2x128xf32>
    %266 = arith.addf %264, %265 : vector<2x128xf32>
    %267 = vector.extract_strided_slice %266 {offsets = [0, 0], sizes = [2, 64], strides = [1, 1]} : vector<2x128xf32> to vector<2x64xf32>
    %268 = arith.truncf %267 : vector<2x64xf32> to vector<2x64xbf16>
    %c1_99 = arith.constant 1 : index
    %c0_100 = arith.constant 0 : index
    %c0_101 = arith.constant 0 : index
    %269 = vector.load %arg4[%c1_99, %c0_100, %c0_101] : memref<3x64x384xbf16, #tpu.memory_space<vmem>>, vector<1x64x384xbf16>
    %270 = vector.shape_cast %269 : vector<1x64x384xbf16> to vector<64x384xbf16>
    %cst_102 = arith.constant dense<0.000000e+00> : vector<2x384xf32>
    %271 = tpu.matmul %268, %270, %cst_102 {dimension_numbers = #tpu.dot_dimension_numbers<[1], [0], [0], [1], [0, 0, 1, 1], [], []>} : vector<2x64xbf16>, vector<64x384xbf16>, vector<2x384xf32> -> vector<2x384xf32>
    %272 = arith.addf %271, %10 : vector<2x384xf32>
    %273 = vector.extract_strided_slice %272 {offsets = [0, 0], sizes = [2, 128], strides = [1, 1]} : vector<2x384xf32> to vector<2x128xf32>
    %274 = vector.extract_strided_slice %200 {offsets = [0, 0], sizes = [2, 128], strides = [1, 1]} : vector<2x384xf32> to vector<2x128xf32>
    %275 = arith.addf %273, %274 : vector<2x128xf32>
    %276 = arith.negf %275 : vector<2x128xf32>
    %277 = math.exp %276 : vector<2x128xf32>
    %cst_103 = arith.constant 1.000000e+00 : f32
    %278 = vector.broadcast %cst_103 : f32 to vector<2x128xf32>
    %279 = arith.addf %278, %277 : vector<2x128xf32>
    %280 = arith.divf %278, %279 : vector<2x128xf32>
    %281 = vector.extract_strided_slice %272 {offsets = [0, 128], sizes = [2, 128], strides = [1, 1]} : vector<2x384xf32> to vector<2x128xf32>
    %282 = vector.extract_strided_slice %200 {offsets = [0, 128], sizes = [2, 128], strides = [1, 1]} : vector<2x384xf32> to vector<2x128xf32>
    %283 = arith.addf %281, %282 : vector<2x128xf32>
    %284 = arith.negf %283 : vector<2x128xf32>
    %285 = math.exp %284 : vector<2x128xf32>
    %cst_104 = arith.constant 1.000000e+00 : f32
    %286 = vector.broadcast %cst_104 : f32 to vector<2x128xf32>
    %287 = arith.addf %286, %285 : vector<2x128xf32>
    %288 = arith.divf %286, %287 : vector<2x128xf32>
    %289 = vector.extract_strided_slice %272 {offsets = [0, 256], sizes = [2, 128], strides = [1, 1]} : vector<2x384xf32> to vector<2x128xf32>
    %290 = vector.extract_strided_slice %200 {offsets = [0, 256], sizes = [2, 128], strides = [1, 1]} : vector<2x384xf32> to vector<2x128xf32>
    %291 = arith.addf %290, %26 : vector<2x128xf32>
    %292 = arith.mulf %280, %291 : vector<2x128xf32>
    %293 = arith.addf %289, %292 : vector<2x128xf32>
    %294 = math.tanh %293 : vector<2x128xf32>
    %cst_105 = arith.constant 1.000000e+00 : f32
    %295 = vector.broadcast %cst_105 : f32 to vector<2x128xf32>
    %296 = arith.subf %295, %288 : vector<2x128xf32>
    %297 = arith.mulf %296, %294 : vector<2x128xf32>
    %298 = arith.mulf %288, %152 : vector<2x128xf32>
    %299 = arith.addf %297, %298 : vector<2x128xf32>
    %300 = vector.extract_strided_slice %299 {offsets = [0, 0], sizes = [2, 64], strides = [1, 1]} : vector<2x128xf32> to vector<2x64xf32>
    %301 = arith.truncf %300 : vector<2x64xf32> to vector<2x64xbf16>
    %c2_106 = arith.constant 2 : index
    %c0_107 = arith.constant 0 : index
    %c0_108 = arith.constant 0 : index
    %302 = vector.load %arg4[%c2_106, %c0_107, %c0_108] : memref<3x64x384xbf16, #tpu.memory_space<vmem>>, vector<1x64x384xbf16>
    %303 = vector.shape_cast %302 : vector<1x64x384xbf16> to vector<64x384xbf16>
    %cst_109 = arith.constant dense<0.000000e+00> : vector<2x384xf32>
    %304 = tpu.matmul %301, %303, %cst_109 {dimension_numbers = #tpu.dot_dimension_numbers<[1], [0], [0], [1], [0, 0, 1, 1], [], []>} : vector<2x64xbf16>, vector<64x384xbf16>, vector<2x384xf32> -> vector<2x384xf32>
    %305 = arith.addf %304, %14 : vector<2x384xf32>
    %306 = vector.extract_strided_slice %305 {offsets = [0, 0], sizes = [2, 128], strides = [1, 1]} : vector<2x384xf32> to vector<2x128xf32>
    %307 = vector.extract_strided_slice %205 {offsets = [0, 0], sizes = [2, 128], strides = [1, 1]} : vector<2x384xf32> to vector<2x128xf32>
    %308 = arith.addf %306, %307 : vector<2x128xf32>
    %309 = arith.negf %308 : vector<2x128xf32>
    %310 = math.exp %309 : vector<2x128xf32>
    %cst_110 = arith.constant 1.000000e+00 : f32
    %311 = vector.broadcast %cst_110 : f32 to vector<2x128xf32>
    %312 = arith.addf %311, %310 : vector<2x128xf32>
    %313 = arith.divf %311, %312 : vector<2x128xf32>
    %314 = vector.extract_strided_slice %305 {offsets = [0, 128], sizes = [2, 128], strides = [1, 1]} : vector<2x384xf32> to vector<2x128xf32>
    %315 = vector.extract_strided_slice %205 {offsets = [0, 128], sizes = [2, 128], strides = [1, 1]} : vector<2x384xf32> to vector<2x128xf32>
    %316 = arith.addf %314, %315 : vector<2x128xf32>
    %317 = arith.negf %316 : vector<2x128xf32>
    %318 = math.exp %317 : vector<2x128xf32>
    %cst_111 = arith.constant 1.000000e+00 : f32
    %319 = vector.broadcast %cst_111 : f32 to vector<2x128xf32>
    %320 = arith.addf %319, %318 : vector<2x128xf32>
    %321 = arith.divf %319, %320 : vector<2x128xf32>
    %322 = vector.extract_strided_slice %305 {offsets = [0, 256], sizes = [2, 128], strides = [1, 1]} : vector<2x384xf32> to vector<2x128xf32>
    %323 = vector.extract_strided_slice %205 {offsets = [0, 256], sizes = [2, 128], strides = [1, 1]} : vector<2x384xf32> to vector<2x128xf32>
    %324 = arith.addf %323, %30 : vector<2x128xf32>
    %325 = arith.mulf %313, %324 : vector<2x128xf32>
    %326 = arith.addf %322, %325 : vector<2x128xf32>
    %327 = math.tanh %326 : vector<2x128xf32>
    %cst_112 = arith.constant 1.000000e+00 : f32
    %328 = vector.broadcast %cst_112 : f32 to vector<2x128xf32>
    %329 = arith.subf %328, %321 : vector<2x128xf32>
    %330 = arith.mulf %329, %327 : vector<2x128xf32>
    %331 = arith.mulf %321, %185 : vector<2x128xf32>
    %332 = arith.addf %330, %331 : vector<2x128xf32>
    %333 = vector.extract_strided_slice %233 {offsets = [0, 0], sizes = [2, 64], strides = [1, 1]} : vector<2x128xf32> to vector<2x64xf32>
    %334 = arith.truncf %333 : vector<2x64xf32> to vector<2x64xbf16>
    %c0_113 = arith.constant 0 : index
    %c0_114 = arith.constant 0 : index
    %c0_115 = arith.constant 0 : index
    %335 = vector.load %arg3[%c0_113, %c0_114, %c0_115] : memref<4x64x384xbf16, #tpu.memory_space<vmem>>, vector<1x64x384xbf16>
    %336 = vector.shape_cast %335 : vector<1x64x384xbf16> to vector<64x384xbf16>
    %cst_116 = arith.constant dense<0.000000e+00> : vector<2x384xf32>
    %337 = tpu.matmul %334, %336, %cst_116 {dimension_numbers = #tpu.dot_dimension_numbers<[1], [0], [0], [1], [0, 0, 1, 1], [], []>} : vector<2x64xbf16>, vector<64x384xbf16>, vector<2x384xf32> -> vector<2x384xf32>
    %338 = vector.extract_strided_slice %266 {offsets = [0, 0], sizes = [2, 64], strides = [1, 1]} : vector<2x128xf32> to vector<2x64xf32>
    %339 = arith.truncf %338 : vector<2x64xf32> to vector<2x64xbf16>
    %c1_117 = arith.constant 1 : index
    %c0_118 = arith.constant 0 : index
    %c0_119 = arith.constant 0 : index
    %340 = vector.load %arg3[%c1_117, %c0_118, %c0_119] : memref<4x64x384xbf16, #tpu.memory_space<vmem>>, vector<1x64x384xbf16>
    %341 = vector.shape_cast %340 : vector<1x64x384xbf16> to vector<64x384xbf16>
    %cst_120 = arith.constant dense<0.000000e+00> : vector<2x384xf32>
    %342 = tpu.matmul %339, %341, %cst_120 {dimension_numbers = #tpu.dot_dimension_numbers<[1], [0], [0], [1], [0, 0, 1, 1], [], []>} : vector<2x64xbf16>, vector<64x384xbf16>, vector<2x384xf32> -> vector<2x384xf32>
    %343 = vector.extract_strided_slice %299 {offsets = [0, 0], sizes = [2, 64], strides = [1, 1]} : vector<2x128xf32> to vector<2x64xf32>
    %344 = arith.truncf %343 : vector<2x64xf32> to vector<2x64xbf16>
    %c2_121 = arith.constant 2 : index
    %c0_122 = arith.constant 0 : index
    %c0_123 = arith.constant 0 : index
    %345 = vector.load %arg3[%c2_121, %c0_122, %c0_123] : memref<4x64x384xbf16, #tpu.memory_space<vmem>>, vector<1x64x384xbf16>
    %346 = vector.shape_cast %345 : vector<1x64x384xbf16> to vector<64x384xbf16>
    %cst_124 = arith.constant dense<0.000000e+00> : vector<2x384xf32>
    %347 = tpu.matmul %344, %346, %cst_124 {dimension_numbers = #tpu.dot_dimension_numbers<[1], [0], [0], [1], [0, 0, 1, 1], [], []>} : vector<2x64xbf16>, vector<64x384xbf16>, vector<2x384xf32> -> vector<2x384xf32>
    %348 = vector.extract_strided_slice %332 {offsets = [0, 0], sizes = [2, 64], strides = [1, 1]} : vector<2x128xf32> to vector<2x64xf32>
    %349 = arith.truncf %348 : vector<2x64xf32> to vector<2x64xbf16>
    %c3_125 = arith.constant 3 : index
    %c0_126 = arith.constant 0 : index
    %c0_127 = arith.constant 0 : index
    %350 = vector.load %arg3[%c3_125, %c0_126, %c0_127] : memref<4x64x384xbf16, #tpu.memory_space<vmem>>, vector<1x64x384xbf16>
    %351 = vector.shape_cast %350 : vector<1x64x384xbf16> to vector<64x384xbf16>
    %cst_128 = arith.constant dense<0.000000e+00> : vector<2x384xf32>
    %352 = tpu.matmul %349, %351, %cst_128 {dimension_numbers = #tpu.dot_dimension_numbers<[1], [0], [0], [1], [0, 0, 1, 1], [], []>} : vector<2x64xbf16>, vector<64x384xbf16>, vector<2x384xf32> -> vector<2x384xf32>
    %c4 = arith.constant 4 : index
    %c0_129 = arith.constant 0 : index
    %353 = vector.load %arg1[%c4, %c0_129] : memref<16x384xf32, #tpu.memory_space<vmem>>, vector<2x384xf32>
    %354 = vector.extract_strided_slice %353 {offsets = [0, 0], sizes = [2, 128], strides = [1, 1]} : vector<2x384xf32> to vector<2x128xf32>
    %355 = vector.extract_strided_slice %337 {offsets = [0, 0], sizes = [2, 128], strides = [1, 1]} : vector<2x384xf32> to vector<2x128xf32>
    %356 = arith.addf %354, %355 : vector<2x128xf32>
    %357 = arith.negf %356 : vector<2x128xf32>
    %358 = math.exp %357 : vector<2x128xf32>
    %cst_130 = arith.constant 1.000000e+00 : f32
    %359 = vector.broadcast %cst_130 : f32 to vector<2x128xf32>
    %360 = arith.addf %359, %358 : vector<2x128xf32>
    %361 = arith.divf %359, %360 : vector<2x128xf32>
    %362 = vector.extract_strided_slice %353 {offsets = [0, 128], sizes = [2, 128], strides = [1, 1]} : vector<2x384xf32> to vector<2x128xf32>
    %363 = vector.extract_strided_slice %337 {offsets = [0, 128], sizes = [2, 128], strides = [1, 1]} : vector<2x384xf32> to vector<2x128xf32>
    %364 = arith.addf %362, %363 : vector<2x128xf32>
    %365 = arith.negf %364 : vector<2x128xf32>
    %366 = math.exp %365 : vector<2x128xf32>
    %cst_131 = arith.constant 1.000000e+00 : f32
    %367 = vector.broadcast %cst_131 : f32 to vector<2x128xf32>
    %368 = arith.addf %367, %366 : vector<2x128xf32>
    %369 = arith.divf %367, %368 : vector<2x128xf32>
    %370 = vector.extract_strided_slice %353 {offsets = [0, 256], sizes = [2, 128], strides = [1, 1]} : vector<2x384xf32> to vector<2x128xf32>
    %371 = vector.extract_strided_slice %337 {offsets = [0, 256], sizes = [2, 128], strides = [1, 1]} : vector<2x384xf32> to vector<2x128xf32>
    %372 = arith.addf %371, %18 : vector<2x128xf32>
    %373 = arith.mulf %361, %372 : vector<2x128xf32>
    %374 = arith.addf %370, %373 : vector<2x128xf32>
    %375 = math.tanh %374 : vector<2x128xf32>
    %cst_132 = arith.constant 1.000000e+00 : f32
    %376 = vector.broadcast %cst_132 : f32 to vector<2x128xf32>
    %377 = arith.subf %376, %369 : vector<2x128xf32>
    %378 = arith.mulf %377, %375 : vector<2x128xf32>
    %379 = arith.mulf %369, %233 : vector<2x128xf32>
    %380 = arith.addf %378, %379 : vector<2x128xf32>
    %381 = vector.extract_strided_slice %380 {offsets = [0, 0], sizes = [2, 64], strides = [1, 1]} : vector<2x128xf32> to vector<2x64xf32>
    %382 = arith.truncf %381 : vector<2x64xf32> to vector<2x64xbf16>
    %c0_133 = arith.constant 0 : index
    %c0_134 = arith.constant 0 : index
    %c0_135 = arith.constant 0 : index
    %383 = vector.load %arg4[%c0_133, %c0_134, %c0_135] : memref<3x64x384xbf16, #tpu.memory_space<vmem>>, vector<1x64x384xbf16>
    %384 = vector.shape_cast %383 : vector<1x64x384xbf16> to vector<64x384xbf16>
    %cst_136 = arith.constant dense<0.000000e+00> : vector<2x384xf32>
    %385 = tpu.matmul %382, %384, %cst_136 {dimension_numbers = #tpu.dot_dimension_numbers<[1], [0], [0], [1], [0, 0, 1, 1], [], []>} : vector<2x64xbf16>, vector<64x384xbf16>, vector<2x384xf32> -> vector<2x384xf32>
    %386 = arith.addf %385, %6 : vector<2x384xf32>
    %387 = vector.extract_strided_slice %386 {offsets = [0, 0], sizes = [2, 128], strides = [1, 1]} : vector<2x384xf32> to vector<2x128xf32>
    %388 = vector.extract_strided_slice %342 {offsets = [0, 0], sizes = [2, 128], strides = [1, 1]} : vector<2x384xf32> to vector<2x128xf32>
    %389 = arith.addf %387, %388 : vector<2x128xf32>
    %390 = arith.negf %389 : vector<2x128xf32>
    %391 = math.exp %390 : vector<2x128xf32>
    %cst_137 = arith.constant 1.000000e+00 : f32
    %392 = vector.broadcast %cst_137 : f32 to vector<2x128xf32>
    %393 = arith.addf %392, %391 : vector<2x128xf32>
    %394 = arith.divf %392, %393 : vector<2x128xf32>
    %395 = vector.extract_strided_slice %386 {offsets = [0, 128], sizes = [2, 128], strides = [1, 1]} : vector<2x384xf32> to vector<2x128xf32>
    %396 = vector.extract_strided_slice %342 {offsets = [0, 128], sizes = [2, 128], strides = [1, 1]} : vector<2x384xf32> to vector<2x128xf32>
    %397 = arith.addf %395, %396 : vector<2x128xf32>
    %398 = arith.negf %397 : vector<2x128xf32>
    %399 = math.exp %398 : vector<2x128xf32>
    %cst_138 = arith.constant 1.000000e+00 : f32
    %400 = vector.broadcast %cst_138 : f32 to vector<2x128xf32>
    %401 = arith.addf %400, %399 : vector<2x128xf32>
    %402 = arith.divf %400, %401 : vector<2x128xf32>
    %403 = vector.extract_strided_slice %386 {offsets = [0, 256], sizes = [2, 128], strides = [1, 1]} : vector<2x384xf32> to vector<2x128xf32>
    %404 = vector.extract_strided_slice %342 {offsets = [0, 256], sizes = [2, 128], strides = [1, 1]} : vector<2x384xf32> to vector<2x128xf32>
    %405 = arith.addf %404, %22 : vector<2x128xf32>
    %406 = arith.mulf %394, %405 : vector<2x128xf32>
    %407 = arith.addf %403, %406 : vector<2x128xf32>
    %408 = math.tanh %407 : vector<2x128xf32>
    %cst_139 = arith.constant 1.000000e+00 : f32
    %409 = vector.broadcast %cst_139 : f32 to vector<2x128xf32>
    %410 = arith.subf %409, %402 : vector<2x128xf32>
    %411 = arith.mulf %410, %408 : vector<2x128xf32>
    %412 = arith.mulf %402, %266 : vector<2x128xf32>
    %413 = arith.addf %411, %412 : vector<2x128xf32>
    %414 = vector.extract_strided_slice %413 {offsets = [0, 0], sizes = [2, 64], strides = [1, 1]} : vector<2x128xf32> to vector<2x64xf32>
    %415 = arith.truncf %414 : vector<2x64xf32> to vector<2x64xbf16>
    %c1_140 = arith.constant 1 : index
    %c0_141 = arith.constant 0 : index
    %c0_142 = arith.constant 0 : index
    %416 = vector.load %arg4[%c1_140, %c0_141, %c0_142] : memref<3x64x384xbf16, #tpu.memory_space<vmem>>, vector<1x64x384xbf16>
    %417 = vector.shape_cast %416 : vector<1x64x384xbf16> to vector<64x384xbf16>
    %cst_143 = arith.constant dense<0.000000e+00> : vector<2x384xf32>
    %418 = tpu.matmul %415, %417, %cst_143 {dimension_numbers = #tpu.dot_dimension_numbers<[1], [0], [0], [1], [0, 0, 1, 1], [], []>} : vector<2x64xbf16>, vector<64x384xbf16>, vector<2x384xf32> -> vector<2x384xf32>
    %419 = arith.addf %418, %10 : vector<2x384xf32>
    %420 = vector.extract_strided_slice %419 {offsets = [0, 0], sizes = [2, 128], strides = [1, 1]} : vector<2x384xf32> to vector<2x128xf32>
    %421 = vector.extract_strided_slice %347 {offsets = [0, 0], sizes = [2, 128], strides = [1, 1]} : vector<2x384xf32> to vector<2x128xf32>
    %422 = arith.addf %420, %421 : vector<2x128xf32>
    %423 = arith.negf %422 : vector<2x128xf32>
    %424 = math.exp %423 : vector<2x128xf32>
    %cst_144 = arith.constant 1.000000e+00 : f32
    %425 = vector.broadcast %cst_144 : f32 to vector<2x128xf32>
    %426 = arith.addf %425, %424 : vector<2x128xf32>
    %427 = arith.divf %425, %426 : vector<2x128xf32>
    %428 = vector.extract_strided_slice %419 {offsets = [0, 128], sizes = [2, 128], strides = [1, 1]} : vector<2x384xf32> to vector<2x128xf32>
    %429 = vector.extract_strided_slice %347 {offsets = [0, 128], sizes = [2, 128], strides = [1, 1]} : vector<2x384xf32> to vector<2x128xf32>
    %430 = arith.addf %428, %429 : vector<2x128xf32>
    %431 = arith.negf %430 : vector<2x128xf32>
    %432 = math.exp %431 : vector<2x128xf32>
    %cst_145 = arith.constant 1.000000e+00 : f32
    %433 = vector.broadcast %cst_145 : f32 to vector<2x128xf32>
    %434 = arith.addf %433, %432 : vector<2x128xf32>
    %435 = arith.divf %433, %434 : vector<2x128xf32>
    %436 = vector.extract_strided_slice %419 {offsets = [0, 256], sizes = [2, 128], strides = [1, 1]} : vector<2x384xf32> to vector<2x128xf32>
    %437 = vector.extract_strided_slice %347 {offsets = [0, 256], sizes = [2, 128], strides = [1, 1]} : vector<2x384xf32> to vector<2x128xf32>
    %438 = arith.addf %437, %26 : vector<2x128xf32>
    %439 = arith.mulf %427, %438 : vector<2x128xf32>
    %440 = arith.addf %436, %439 : vector<2x128xf32>
    %441 = math.tanh %440 : vector<2x128xf32>
    %cst_146 = arith.constant 1.000000e+00 : f32
    %442 = vector.broadcast %cst_146 : f32 to vector<2x128xf32>
    %443 = arith.subf %442, %435 : vector<2x128xf32>
    %444 = arith.mulf %443, %441 : vector<2x128xf32>
    %445 = arith.mulf %435, %299 : vector<2x128xf32>
    %446 = arith.addf %444, %445 : vector<2x128xf32>
    %447 = vector.extract_strided_slice %446 {offsets = [0, 0], sizes = [2, 64], strides = [1, 1]} : vector<2x128xf32> to vector<2x64xf32>
    %448 = arith.truncf %447 : vector<2x64xf32> to vector<2x64xbf16>
    %c2_147 = arith.constant 2 : index
    %c0_148 = arith.constant 0 : index
    %c0_149 = arith.constant 0 : index
    %449 = vector.load %arg4[%c2_147, %c0_148, %c0_149] : memref<3x64x384xbf16, #tpu.memory_space<vmem>>, vector<1x64x384xbf16>
    %450 = vector.shape_cast %449 : vector<1x64x384xbf16> to vector<64x384xbf16>
    %cst_150 = arith.constant dense<0.000000e+00> : vector<2x384xf32>
    %451 = tpu.matmul %448, %450, %cst_150 {dimension_numbers = #tpu.dot_dimension_numbers<[1], [0], [0], [1], [0, 0, 1, 1], [], []>} : vector<2x64xbf16>, vector<64x384xbf16>, vector<2x384xf32> -> vector<2x384xf32>
    %452 = arith.addf %451, %14 : vector<2x384xf32>
    %453 = vector.extract_strided_slice %452 {offsets = [0, 0], sizes = [2, 128], strides = [1, 1]} : vector<2x384xf32> to vector<2x128xf32>
    %454 = vector.extract_strided_slice %352 {offsets = [0, 0], sizes = [2, 128], strides = [1, 1]} : vector<2x384xf32> to vector<2x128xf32>
    %455 = arith.addf %453, %454 : vector<2x128xf32>
    %456 = arith.negf %455 : vector<2x128xf32>
    %457 = math.exp %456 : vector<2x128xf32>
    %cst_151 = arith.constant 1.000000e+00 : f32
    %458 = vector.broadcast %cst_151 : f32 to vector<2x128xf32>
    %459 = arith.addf %458, %457 : vector<2x128xf32>
    %460 = arith.divf %458, %459 : vector<2x128xf32>
    %461 = vector.extract_strided_slice %452 {offsets = [0, 128], sizes = [2, 128], strides = [1, 1]} : vector<2x384xf32> to vector<2x128xf32>
    %462 = vector.extract_strided_slice %352 {offsets = [0, 128], sizes = [2, 128], strides = [1, 1]} : vector<2x384xf32> to vector<2x128xf32>
    %463 = arith.addf %461, %462 : vector<2x128xf32>
    %464 = arith.negf %463 : vector<2x128xf32>
    %465 = math.exp %464 : vector<2x128xf32>
    %cst_152 = arith.constant 1.000000e+00 : f32
    %466 = vector.broadcast %cst_152 : f32 to vector<2x128xf32>
    %467 = arith.addf %466, %465 : vector<2x128xf32>
    %468 = arith.divf %466, %467 : vector<2x128xf32>
    %469 = vector.extract_strided_slice %452 {offsets = [0, 256], sizes = [2, 128], strides = [1, 1]} : vector<2x384xf32> to vector<2x128xf32>
    %470 = vector.extract_strided_slice %352 {offsets = [0, 256], sizes = [2, 128], strides = [1, 1]} : vector<2x384xf32> to vector<2x128xf32>
    %471 = arith.addf %470, %30 : vector<2x128xf32>
    %472 = arith.mulf %460, %471 : vector<2x128xf32>
    %473 = arith.addf %469, %472 : vector<2x128xf32>
    %474 = math.tanh %473 : vector<2x128xf32>
    %cst_153 = arith.constant 1.000000e+00 : f32
    %475 = vector.broadcast %cst_153 : f32 to vector<2x128xf32>
    %476 = arith.subf %475, %468 : vector<2x128xf32>
    %477 = arith.mulf %476, %474 : vector<2x128xf32>
    %478 = arith.mulf %468, %332 : vector<2x128xf32>
    %479 = arith.addf %477, %478 : vector<2x128xf32>
    %480 = vector.extract_strided_slice %380 {offsets = [0, 0], sizes = [2, 64], strides = [1, 1]} : vector<2x128xf32> to vector<2x64xf32>
    %481 = arith.truncf %480 : vector<2x64xf32> to vector<2x64xbf16>
    %c0_154 = arith.constant 0 : index
    %c0_155 = arith.constant 0 : index
    %c0_156 = arith.constant 0 : index
    %482 = vector.load %arg3[%c0_154, %c0_155, %c0_156] : memref<4x64x384xbf16, #tpu.memory_space<vmem>>, vector<1x64x384xbf16>
    %483 = vector.shape_cast %482 : vector<1x64x384xbf16> to vector<64x384xbf16>
    %cst_157 = arith.constant dense<0.000000e+00> : vector<2x384xf32>
    %484 = tpu.matmul %481, %483, %cst_157 {dimension_numbers = #tpu.dot_dimension_numbers<[1], [0], [0], [1], [0, 0, 1, 1], [], []>} : vector<2x64xbf16>, vector<64x384xbf16>, vector<2x384xf32> -> vector<2x384xf32>
    %485 = vector.extract_strided_slice %413 {offsets = [0, 0], sizes = [2, 64], strides = [1, 1]} : vector<2x128xf32> to vector<2x64xf32>
    %486 = arith.truncf %485 : vector<2x64xf32> to vector<2x64xbf16>
    %c1_158 = arith.constant 1 : index
    %c0_159 = arith.constant 0 : index
    %c0_160 = arith.constant 0 : index
    %487 = vector.load %arg3[%c1_158, %c0_159, %c0_160] : memref<4x64x384xbf16, #tpu.memory_space<vmem>>, vector<1x64x384xbf16>
    %488 = vector.shape_cast %487 : vector<1x64x384xbf16> to vector<64x384xbf16>
    %cst_161 = arith.constant dense<0.000000e+00> : vector<2x384xf32>
    %489 = tpu.matmul %486, %488, %cst_161 {dimension_numbers = #tpu.dot_dimension_numbers<[1], [0], [0], [1], [0, 0, 1, 1], [], []>} : vector<2x64xbf16>, vector<64x384xbf16>, vector<2x384xf32> -> vector<2x384xf32>
    %490 = vector.extract_strided_slice %446 {offsets = [0, 0], sizes = [2, 64], strides = [1, 1]} : vector<2x128xf32> to vector<2x64xf32>
    %491 = arith.truncf %490 : vector<2x64xf32> to vector<2x64xbf16>
    %c2_162 = arith.constant 2 : index
    %c0_163 = arith.constant 0 : index
    %c0_164 = arith.constant 0 : index
    %492 = vector.load %arg3[%c2_162, %c0_163, %c0_164] : memref<4x64x384xbf16, #tpu.memory_space<vmem>>, vector<1x64x384xbf16>
    %493 = vector.shape_cast %492 : vector<1x64x384xbf16> to vector<64x384xbf16>
    %cst_165 = arith.constant dense<0.000000e+00> : vector<2x384xf32>
    %494 = tpu.matmul %491, %493, %cst_165 {dimension_numbers = #tpu.dot_dimension_numbers<[1], [0], [0], [1], [0, 0, 1, 1], [], []>} : vector<2x64xbf16>, vector<64x384xbf16>, vector<2x384xf32> -> vector<2x384xf32>
    %495 = vector.extract_strided_slice %479 {offsets = [0, 0], sizes = [2, 64], strides = [1, 1]} : vector<2x128xf32> to vector<2x64xf32>
    %496 = arith.truncf %495 : vector<2x64xf32> to vector<2x64xbf16>
    %c3_166 = arith.constant 3 : index
    %c0_167 = arith.constant 0 : index
    %c0_168 = arith.constant 0 : index
    %497 = vector.load %arg3[%c3_166, %c0_167, %c0_168] : memref<4x64x384xbf16, #tpu.memory_space<vmem>>, vector<1x64x384xbf16>
    %498 = vector.shape_cast %497 : vector<1x64x384xbf16> to vector<64x384xbf16>
    %cst_169 = arith.constant dense<0.000000e+00> : vector<2x384xf32>
    %499 = tpu.matmul %496, %498, %cst_169 {dimension_numbers = #tpu.dot_dimension_numbers<[1], [0], [0], [1], [0, 0, 1, 1], [], []>} : vector<2x64xbf16>, vector<64x384xbf16>, vector<2x384xf32> -> vector<2x384xf32>
    %c6 = arith.constant 6 : index
    %c0_170 = arith.constant 0 : index
    %500 = vector.load %arg1[%c6, %c0_170] : memref<16x384xf32, #tpu.memory_space<vmem>>, vector<2x384xf32>
    %501 = vector.extract_strided_slice %500 {offsets = [0, 0], sizes = [2, 128], strides = [1, 1]} : vector<2x384xf32> to vector<2x128xf32>
    %502 = vector.extract_strided_slice %484 {offsets = [0, 0], sizes = [2, 128], strides = [1, 1]} : vector<2x384xf32> to vector<2x128xf32>
    %503 = arith.addf %501, %502 : vector<2x128xf32>
    %504 = arith.negf %503 : vector<2x128xf32>
    %505 = math.exp %504 : vector<2x128xf32>
    %cst_171 = arith.constant 1.000000e+00 : f32
    %506 = vector.broadcast %cst_171 : f32 to vector<2x128xf32>
    %507 = arith.addf %506, %505 : vector<2x128xf32>
    %508 = arith.divf %506, %507 : vector<2x128xf32>
    %509 = vector.extract_strided_slice %500 {offsets = [0, 128], sizes = [2, 128], strides = [1, 1]} : vector<2x384xf32> to vector<2x128xf32>
    %510 = vector.extract_strided_slice %484 {offsets = [0, 128], sizes = [2, 128], strides = [1, 1]} : vector<2x384xf32> to vector<2x128xf32>
    %511 = arith.addf %509, %510 : vector<2x128xf32>
    %512 = arith.negf %511 : vector<2x128xf32>
    %513 = math.exp %512 : vector<2x128xf32>
    %cst_172 = arith.constant 1.000000e+00 : f32
    %514 = vector.broadcast %cst_172 : f32 to vector<2x128xf32>
    %515 = arith.addf %514, %513 : vector<2x128xf32>
    %516 = arith.divf %514, %515 : vector<2x128xf32>
    %517 = vector.extract_strided_slice %500 {offsets = [0, 256], sizes = [2, 128], strides = [1, 1]} : vector<2x384xf32> to vector<2x128xf32>
    %518 = vector.extract_strided_slice %484 {offsets = [0, 256], sizes = [2, 128], strides = [1, 1]} : vector<2x384xf32> to vector<2x128xf32>
    %519 = arith.addf %518, %18 : vector<2x128xf32>
    %520 = arith.mulf %508, %519 : vector<2x128xf32>
    %521 = arith.addf %517, %520 : vector<2x128xf32>
    %522 = math.tanh %521 : vector<2x128xf32>
    %cst_173 = arith.constant 1.000000e+00 : f32
    %523 = vector.broadcast %cst_173 : f32 to vector<2x128xf32>
    %524 = arith.subf %523, %516 : vector<2x128xf32>
    %525 = arith.mulf %524, %522 : vector<2x128xf32>
    %526 = arith.mulf %516, %380 : vector<2x128xf32>
    %527 = arith.addf %525, %526 : vector<2x128xf32>
    %528 = vector.extract_strided_slice %527 {offsets = [0, 0], sizes = [2, 64], strides = [1, 1]} : vector<2x128xf32> to vector<2x64xf32>
    %529 = arith.truncf %528 : vector<2x64xf32> to vector<2x64xbf16>
    %c0_174 = arith.constant 0 : index
    %c0_175 = arith.constant 0 : index
    %c0_176 = arith.constant 0 : index
    %530 = vector.load %arg4[%c0_174, %c0_175, %c0_176] : memref<3x64x384xbf16, #tpu.memory_space<vmem>>, vector<1x64x384xbf16>
    %531 = vector.shape_cast %530 : vector<1x64x384xbf16> to vector<64x384xbf16>
    %cst_177 = arith.constant dense<0.000000e+00> : vector<2x384xf32>
    %532 = tpu.matmul %529, %531, %cst_177 {dimension_numbers = #tpu.dot_dimension_numbers<[1], [0], [0], [1], [0, 0, 1, 1], [], []>} : vector<2x64xbf16>, vector<64x384xbf16>, vector<2x384xf32> -> vector<2x384xf32>
    %533 = arith.addf %532, %6 : vector<2x384xf32>
    %534 = vector.extract_strided_slice %533 {offsets = [0, 0], sizes = [2, 128], strides = [1, 1]} : vector<2x384xf32> to vector<2x128xf32>
    %535 = vector.extract_strided_slice %489 {offsets = [0, 0], sizes = [2, 128], strides = [1, 1]} : vector<2x384xf32> to vector<2x128xf32>
    %536 = arith.addf %534, %535 : vector<2x128xf32>
    %537 = arith.negf %536 : vector<2x128xf32>
    %538 = math.exp %537 : vector<2x128xf32>
    %cst_178 = arith.constant 1.000000e+00 : f32
    %539 = vector.broadcast %cst_178 : f32 to vector<2x128xf32>
    %540 = arith.addf %539, %538 : vector<2x128xf32>
    %541 = arith.divf %539, %540 : vector<2x128xf32>
    %542 = vector.extract_strided_slice %533 {offsets = [0, 128], sizes = [2, 128], strides = [1, 1]} : vector<2x384xf32> to vector<2x128xf32>
    %543 = vector.extract_strided_slice %489 {offsets = [0, 128], sizes = [2, 128], strides = [1, 1]} : vector<2x384xf32> to vector<2x128xf32>
    %544 = arith.addf %542, %543 : vector<2x128xf32>
    %545 = arith.negf %544 : vector<2x128xf32>
    %546 = math.exp %545 : vector<2x128xf32>
    %cst_179 = arith.constant 1.000000e+00 : f32
    %547 = vector.broadcast %cst_179 : f32 to vector<2x128xf32>
    %548 = arith.addf %547, %546 : vector<2x128xf32>
    %549 = arith.divf %547, %548 : vector<2x128xf32>
    %550 = vector.extract_strided_slice %533 {offsets = [0, 256], sizes = [2, 128], strides = [1, 1]} : vector<2x384xf32> to vector<2x128xf32>
    %551 = vector.extract_strided_slice %489 {offsets = [0, 256], sizes = [2, 128], strides = [1, 1]} : vector<2x384xf32> to vector<2x128xf32>
    %552 = arith.addf %551, %22 : vector<2x128xf32>
    %553 = arith.mulf %541, %552 : vector<2x128xf32>
    %554 = arith.addf %550, %553 : vector<2x128xf32>
    %555 = math.tanh %554 : vector<2x128xf32>
    %cst_180 = arith.constant 1.000000e+00 : f32
    %556 = vector.broadcast %cst_180 : f32 to vector<2x128xf32>
    %557 = arith.subf %556, %549 : vector<2x128xf32>
    %558 = arith.mulf %557, %555 : vector<2x128xf32>
    %559 = arith.mulf %549, %413 : vector<2x128xf32>
    %560 = arith.addf %558, %559 : vector<2x128xf32>
    %561 = vector.extract_strided_slice %560 {offsets = [0, 0], sizes = [2, 64], strides = [1, 1]} : vector<2x128xf32> to vector<2x64xf32>
    %562 = arith.truncf %561 : vector<2x64xf32> to vector<2x64xbf16>
    %c1_181 = arith.constant 1 : index
    %c0_182 = arith.constant 0 : index
    %c0_183 = arith.constant 0 : index
    %563 = vector.load %arg4[%c1_181, %c0_182, %c0_183] : memref<3x64x384xbf16, #tpu.memory_space<vmem>>, vector<1x64x384xbf16>
    %564 = vector.shape_cast %563 : vector<1x64x384xbf16> to vector<64x384xbf16>
    %cst_184 = arith.constant dense<0.000000e+00> : vector<2x384xf32>
    %565 = tpu.matmul %562, %564, %cst_184 {dimension_numbers = #tpu.dot_dimension_numbers<[1], [0], [0], [1], [0, 0, 1, 1], [], []>} : vector<2x64xbf16>, vector<64x384xbf16>, vector<2x384xf32> -> vector<2x384xf32>
    %566 = arith.addf %565, %10 : vector<2x384xf32>
    %567 = vector.extract_strided_slice %566 {offsets = [0, 0], sizes = [2, 128], strides = [1, 1]} : vector<2x384xf32> to vector<2x128xf32>
    %568 = vector.extract_strided_slice %494 {offsets = [0, 0], sizes = [2, 128], strides = [1, 1]} : vector<2x384xf32> to vector<2x128xf32>
    %569 = arith.addf %567, %568 : vector<2x128xf32>
    %570 = arith.negf %569 : vector<2x128xf32>
    %571 = math.exp %570 : vector<2x128xf32>
    %cst_185 = arith.constant 1.000000e+00 : f32
    %572 = vector.broadcast %cst_185 : f32 to vector<2x128xf32>
    %573 = arith.addf %572, %571 : vector<2x128xf32>
    %574 = arith.divf %572, %573 : vector<2x128xf32>
    %575 = vector.extract_strided_slice %566 {offsets = [0, 128], sizes = [2, 128], strides = [1, 1]} : vector<2x384xf32> to vector<2x128xf32>
    %576 = vector.extract_strided_slice %494 {offsets = [0, 128], sizes = [2, 128], strides = [1, 1]} : vector<2x384xf32> to vector<2x128xf32>
    %577 = arith.addf %575, %576 : vector<2x128xf32>
    %578 = arith.negf %577 : vector<2x128xf32>
    %579 = math.exp %578 : vector<2x128xf32>
    %cst_186 = arith.constant 1.000000e+00 : f32
    %580 = vector.broadcast %cst_186 : f32 to vector<2x128xf32>
    %581 = arith.addf %580, %579 : vector<2x128xf32>
    %582 = arith.divf %580, %581 : vector<2x128xf32>
    %583 = vector.extract_strided_slice %566 {offsets = [0, 256], sizes = [2, 128], strides = [1, 1]} : vector<2x384xf32> to vector<2x128xf32>
    %584 = vector.extract_strided_slice %494 {offsets = [0, 256], sizes = [2, 128], strides = [1, 1]} : vector<2x384xf32> to vector<2x128xf32>
    %585 = arith.addf %584, %26 : vector<2x128xf32>
    %586 = arith.mulf %574, %585 : vector<2x128xf32>
    %587 = arith.addf %583, %586 : vector<2x128xf32>
    %588 = math.tanh %587 : vector<2x128xf32>
    %cst_187 = arith.constant 1.000000e+00 : f32
    %589 = vector.broadcast %cst_187 : f32 to vector<2x128xf32>
    %590 = arith.subf %589, %582 : vector<2x128xf32>
    %591 = arith.mulf %590, %588 : vector<2x128xf32>
    %592 = arith.mulf %582, %446 : vector<2x128xf32>
    %593 = arith.addf %591, %592 : vector<2x128xf32>
    %594 = vector.extract_strided_slice %593 {offsets = [0, 0], sizes = [2, 64], strides = [1, 1]} : vector<2x128xf32> to vector<2x64xf32>
    %595 = arith.truncf %594 : vector<2x64xf32> to vector<2x64xbf16>
    %c2_188 = arith.constant 2 : index
    %c0_189 = arith.constant 0 : index
    %c0_190 = arith.constant 0 : index
    %596 = vector.load %arg4[%c2_188, %c0_189, %c0_190] : memref<3x64x384xbf16, #tpu.memory_space<vmem>>, vector<1x64x384xbf16>
    %597 = vector.shape_cast %596 : vector<1x64x384xbf16> to vector<64x384xbf16>
    %cst_191 = arith.constant dense<0.000000e+00> : vector<2x384xf32>
    %598 = tpu.matmul %595, %597, %cst_191 {dimension_numbers = #tpu.dot_dimension_numbers<[1], [0], [0], [1], [0, 0, 1, 1], [], []>} : vector<2x64xbf16>, vector<64x384xbf16>, vector<2x384xf32> -> vector<2x384xf32>
    %599 = arith.addf %598, %14 : vector<2x384xf32>
    %600 = vector.extract_strided_slice %599 {offsets = [0, 0], sizes = [2, 128], strides = [1, 1]} : vector<2x384xf32> to vector<2x128xf32>
    %601 = vector.extract_strided_slice %499 {offsets = [0, 0], sizes = [2, 128], strides = [1, 1]} : vector<2x384xf32> to vector<2x128xf32>
    %602 = arith.addf %600, %601 : vector<2x128xf32>
    %603 = arith.negf %602 : vector<2x128xf32>
    %604 = math.exp %603 : vector<2x128xf32>
    %cst_192 = arith.constant 1.000000e+00 : f32
    %605 = vector.broadcast %cst_192 : f32 to vector<2x128xf32>
    %606 = arith.addf %605, %604 : vector<2x128xf32>
    %607 = arith.divf %605, %606 : vector<2x128xf32>
    %608 = vector.extract_strided_slice %599 {offsets = [0, 128], sizes = [2, 128], strides = [1, 1]} : vector<2x384xf32> to vector<2x128xf32>
    %609 = vector.extract_strided_slice %499 {offsets = [0, 128], sizes = [2, 128], strides = [1, 1]} : vector<2x384xf32> to vector<2x128xf32>
    %610 = arith.addf %608, %609 : vector<2x128xf32>
    %611 = arith.negf %610 : vector<2x128xf32>
    %612 = math.exp %611 : vector<2x128xf32>
    %cst_193 = arith.constant 1.000000e+00 : f32
    %613 = vector.broadcast %cst_193 : f32 to vector<2x128xf32>
    %614 = arith.addf %613, %612 : vector<2x128xf32>
    %615 = arith.divf %613, %614 : vector<2x128xf32>
    %616 = vector.extract_strided_slice %599 {offsets = [0, 256], sizes = [2, 128], strides = [1, 1]} : vector<2x384xf32> to vector<2x128xf32>
    %617 = vector.extract_strided_slice %499 {offsets = [0, 256], sizes = [2, 128], strides = [1, 1]} : vector<2x384xf32> to vector<2x128xf32>
    %618 = arith.addf %617, %30 : vector<2x128xf32>
    %619 = arith.mulf %607, %618 : vector<2x128xf32>
    %620 = arith.addf %616, %619 : vector<2x128xf32>
    %621 = math.tanh %620 : vector<2x128xf32>
    %cst_194 = arith.constant 1.000000e+00 : f32
    %622 = vector.broadcast %cst_194 : f32 to vector<2x128xf32>
    %623 = arith.subf %622, %615 : vector<2x128xf32>
    %624 = arith.mulf %623, %621 : vector<2x128xf32>
    %625 = arith.mulf %615, %479 : vector<2x128xf32>
    %626 = arith.addf %624, %625 : vector<2x128xf32>
    %627 = vector.extract_strided_slice %527 {offsets = [0, 0], sizes = [2, 64], strides = [1, 1]} : vector<2x128xf32> to vector<2x64xf32>
    %628 = arith.truncf %627 : vector<2x64xf32> to vector<2x64xbf16>
    %c0_195 = arith.constant 0 : index
    %c0_196 = arith.constant 0 : index
    %c0_197 = arith.constant 0 : index
    %629 = vector.load %arg3[%c0_195, %c0_196, %c0_197] : memref<4x64x384xbf16, #tpu.memory_space<vmem>>, vector<1x64x384xbf16>
    %630 = vector.shape_cast %629 : vector<1x64x384xbf16> to vector<64x384xbf16>
    %cst_198 = arith.constant dense<0.000000e+00> : vector<2x384xf32>
    %631 = tpu.matmul %628, %630, %cst_198 {dimension_numbers = #tpu.dot_dimension_numbers<[1], [0], [0], [1], [0, 0, 1, 1], [], []>} : vector<2x64xbf16>, vector<64x384xbf16>, vector<2x384xf32> -> vector<2x384xf32>
    %632 = vector.extract_strided_slice %560 {offsets = [0, 0], sizes = [2, 64], strides = [1, 1]} : vector<2x128xf32> to vector<2x64xf32>
    %633 = arith.truncf %632 : vector<2x64xf32> to vector<2x64xbf16>
    %c1_199 = arith.constant 1 : index
    %c0_200 = arith.constant 0 : index
    %c0_201 = arith.constant 0 : index
    %634 = vector.load %arg3[%c1_199, %c0_200, %c0_201] : memref<4x64x384xbf16, #tpu.memory_space<vmem>>, vector<1x64x384xbf16>
    %635 = vector.shape_cast %634 : vector<1x64x384xbf16> to vector<64x384xbf16>
    %cst_202 = arith.constant dense<0.000000e+00> : vector<2x384xf32>
    %636 = tpu.matmul %633, %635, %cst_202 {dimension_numbers = #tpu.dot_dimension_numbers<[1], [0], [0], [1], [0, 0, 1, 1], [], []>} : vector<2x64xbf16>, vector<64x384xbf16>, vector<2x384xf32> -> vector<2x384xf32>
    %637 = vector.extract_strided_slice %593 {offsets = [0, 0], sizes = [2, 64], strides = [1, 1]} : vector<2x128xf32> to vector<2x64xf32>
    %638 = arith.truncf %637 : vector<2x64xf32> to vector<2x64xbf16>
    %c2_203 = arith.constant 2 : index
    %c0_204 = arith.constant 0 : index
    %c0_205 = arith.constant 0 : index
    %639 = vector.load %arg3[%c2_203, %c0_204, %c0_205] : memref<4x64x384xbf16, #tpu.memory_space<vmem>>, vector<1x64x384xbf16>
    %640 = vector.shape_cast %639 : vector<1x64x384xbf16> to vector<64x384xbf16>
    %cst_206 = arith.constant dense<0.000000e+00> : vector<2x384xf32>
    %641 = tpu.matmul %638, %640, %cst_206 {dimension_numbers = #tpu.dot_dimension_numbers<[1], [0], [0], [1], [0, 0, 1, 1], [], []>} : vector<2x64xbf16>, vector<64x384xbf16>, vector<2x384xf32> -> vector<2x384xf32>
    %642 = vector.extract_strided_slice %626 {offsets = [0, 0], sizes = [2, 64], strides = [1, 1]} : vector<2x128xf32> to vector<2x64xf32>
    %643 = arith.truncf %642 : vector<2x64xf32> to vector<2x64xbf16>
    %c3_207 = arith.constant 3 : index
    %c0_208 = arith.constant 0 : index
    %c0_209 = arith.constant 0 : index
    %644 = vector.load %arg3[%c3_207, %c0_208, %c0_209] : memref<4x64x384xbf16, #tpu.memory_space<vmem>>, vector<1x64x384xbf16>
    %645 = vector.shape_cast %644 : vector<1x64x384xbf16> to vector<64x384xbf16>
    %cst_210 = arith.constant dense<0.000000e+00> : vector<2x384xf32>
    %646 = tpu.matmul %643, %645, %cst_210 {dimension_numbers = #tpu.dot_dimension_numbers<[1], [0], [0], [1], [0, 0, 1, 1], [], []>} : vector<2x64xbf16>, vector<64x384xbf16>, vector<2x384xf32> -> vector<2x384xf32>
    %c8 = arith.constant 8 : index
    %c0_211 = arith.constant 0 : index
    %647 = vector.load %arg1[%c8, %c0_211] : memref<16x384xf32, #tpu.memory_space<vmem>>, vector<2x384xf32>
    %648 = vector.extract_strided_slice %647 {offsets = [0, 0], sizes = [2, 128], strides = [1, 1]} : vector<2x384xf32> to vector<2x128xf32>
    %649 = vector.extract_strided_slice %631 {offsets = [0, 0], sizes = [2, 128], strides = [1, 1]} : vector<2x384xf32> to vector<2x128xf32>
    %650 = arith.addf %648, %649 : vector<2x128xf32>
    %651 = arith.negf %650 : vector<2x128xf32>
    %652 = math.exp %651 : vector<2x128xf32>
    %cst_212 = arith.constant 1.000000e+00 : f32
    %653 = vector.broadcast %cst_212 : f32 to vector<2x128xf32>
    %654 = arith.addf %653, %652 : vector<2x128xf32>
    %655 = arith.divf %653, %654 : vector<2x128xf32>
    %656 = vector.extract_strided_slice %647 {offsets = [0, 128], sizes = [2, 128], strides = [1, 1]} : vector<2x384xf32> to vector<2x128xf32>
    %657 = vector.extract_strided_slice %631 {offsets = [0, 128], sizes = [2, 128], strides = [1, 1]} : vector<2x384xf32> to vector<2x128xf32>
    %658 = arith.addf %656, %657 : vector<2x128xf32>
    %659 = arith.negf %658 : vector<2x128xf32>
    %660 = math.exp %659 : vector<2x128xf32>
    %cst_213 = arith.constant 1.000000e+00 : f32
    %661 = vector.broadcast %cst_213 : f32 to vector<2x128xf32>
    %662 = arith.addf %661, %660 : vector<2x128xf32>
    %663 = arith.divf %661, %662 : vector<2x128xf32>
    %664 = vector.extract_strided_slice %647 {offsets = [0, 256], sizes = [2, 128], strides = [1, 1]} : vector<2x384xf32> to vector<2x128xf32>
    %665 = vector.extract_strided_slice %631 {offsets = [0, 256], sizes = [2, 128], strides = [1, 1]} : vector<2x384xf32> to vector<2x128xf32>
    %666 = arith.addf %665, %18 : vector<2x128xf32>
    %667 = arith.mulf %655, %666 : vector<2x128xf32>
    %668 = arith.addf %664, %667 : vector<2x128xf32>
    %669 = math.tanh %668 : vector<2x128xf32>
    %cst_214 = arith.constant 1.000000e+00 : f32
    %670 = vector.broadcast %cst_214 : f32 to vector<2x128xf32>
    %671 = arith.subf %670, %663 : vector<2x128xf32>
    %672 = arith.mulf %671, %669 : vector<2x128xf32>
    %673 = arith.mulf %663, %527 : vector<2x128xf32>
    %674 = arith.addf %672, %673 : vector<2x128xf32>
    %675 = vector.extract_strided_slice %674 {offsets = [0, 0], sizes = [2, 64], strides = [1, 1]} : vector<2x128xf32> to vector<2x64xf32>
    %676 = arith.truncf %675 : vector<2x64xf32> to vector<2x64xbf16>
    %c0_215 = arith.constant 0 : index
    %c0_216 = arith.constant 0 : index
    %c0_217 = arith.constant 0 : index
    %677 = vector.load %arg4[%c0_215, %c0_216, %c0_217] : memref<3x64x384xbf16, #tpu.memory_space<vmem>>, vector<1x64x384xbf16>
    %678 = vector.shape_cast %677 : vector<1x64x384xbf16> to vector<64x384xbf16>
    %cst_218 = arith.constant dense<0.000000e+00> : vector<2x384xf32>
    %679 = tpu.matmul %676, %678, %cst_218 {dimension_numbers = #tpu.dot_dimension_numbers<[1], [0], [0], [1], [0, 0, 1, 1], [], []>} : vector<2x64xbf16>, vector<64x384xbf16>, vector<2x384xf32> -> vector<2x384xf32>
    %680 = arith.addf %679, %6 : vector<2x384xf32>
    %681 = vector.extract_strided_slice %680 {offsets = [0, 0], sizes = [2, 128], strides = [1, 1]} : vector<2x384xf32> to vector<2x128xf32>
    %682 = vector.extract_strided_slice %636 {offsets = [0, 0], sizes = [2, 128], strides = [1, 1]} : vector<2x384xf32> to vector<2x128xf32>
    %683 = arith.addf %681, %682 : vector<2x128xf32>
    %684 = arith.negf %683 : vector<2x128xf32>
    %685 = math.exp %684 : vector<2x128xf32>
    %cst_219 = arith.constant 1.000000e+00 : f32
    %686 = vector.broadcast %cst_219 : f32 to vector<2x128xf32>
    %687 = arith.addf %686, %685 : vector<2x128xf32>
    %688 = arith.divf %686, %687 : vector<2x128xf32>
    %689 = vector.extract_strided_slice %680 {offsets = [0, 128], sizes = [2, 128], strides = [1, 1]} : vector<2x384xf32> to vector<2x128xf32>
    %690 = vector.extract_strided_slice %636 {offsets = [0, 128], sizes = [2, 128], strides = [1, 1]} : vector<2x384xf32> to vector<2x128xf32>
    %691 = arith.addf %689, %690 : vector<2x128xf32>
    %692 = arith.negf %691 : vector<2x128xf32>
    %693 = math.exp %692 : vector<2x128xf32>
    %cst_220 = arith.constant 1.000000e+00 : f32
    %694 = vector.broadcast %cst_220 : f32 to vector<2x128xf32>
    %695 = arith.addf %694, %693 : vector<2x128xf32>
    %696 = arith.divf %694, %695 : vector<2x128xf32>
    %697 = vector.extract_strided_slice %680 {offsets = [0, 256], sizes = [2, 128], strides = [1, 1]} : vector<2x384xf32> to vector<2x128xf32>
    %698 = vector.extract_strided_slice %636 {offsets = [0, 256], sizes = [2, 128], strides = [1, 1]} : vector<2x384xf32> to vector<2x128xf32>
    %699 = arith.addf %698, %22 : vector<2x128xf32>
    %700 = arith.mulf %688, %699 : vector<2x128xf32>
    %701 = arith.addf %697, %700 : vector<2x128xf32>
    %702 = math.tanh %701 : vector<2x128xf32>
    %cst_221 = arith.constant 1.000000e+00 : f32
    %703 = vector.broadcast %cst_221 : f32 to vector<2x128xf32>
    %704 = arith.subf %703, %696 : vector<2x128xf32>
    %705 = arith.mulf %704, %702 : vector<2x128xf32>
    %706 = arith.mulf %696, %560 : vector<2x128xf32>
    %707 = arith.addf %705, %706 : vector<2x128xf32>
    %708 = vector.extract_strided_slice %707 {offsets = [0, 0], sizes = [2, 64], strides = [1, 1]} : vector<2x128xf32> to vector<2x64xf32>
    %709 = arith.truncf %708 : vector<2x64xf32> to vector<2x64xbf16>
    %c1_222 = arith.constant 1 : index
    %c0_223 = arith.constant 0 : index
    %c0_224 = arith.constant 0 : index
    %710 = vector.load %arg4[%c1_222, %c0_223, %c0_224] : memref<3x64x384xbf16, #tpu.memory_space<vmem>>, vector<1x64x384xbf16>
    %711 = vector.shape_cast %710 : vector<1x64x384xbf16> to vector<64x384xbf16>
    %cst_225 = arith.constant dense<0.000000e+00> : vector<2x384xf32>
    %712 = tpu.matmul %709, %711, %cst_225 {dimension_numbers = #tpu.dot_dimension_numbers<[1], [0], [0], [1], [0, 0, 1, 1], [], []>} : vector<2x64xbf16>, vector<64x384xbf16>, vector<2x384xf32> -> vector<2x384xf32>
    %713 = arith.addf %712, %10 : vector<2x384xf32>
    %714 = vector.extract_strided_slice %713 {offsets = [0, 0], sizes = [2, 128], strides = [1, 1]} : vector<2x384xf32> to vector<2x128xf32>
    %715 = vector.extract_strided_slice %641 {offsets = [0, 0], sizes = [2, 128], strides = [1, 1]} : vector<2x384xf32> to vector<2x128xf32>
    %716 = arith.addf %714, %715 : vector<2x128xf32>
    %717 = arith.negf %716 : vector<2x128xf32>
    %718 = math.exp %717 : vector<2x128xf32>
    %cst_226 = arith.constant 1.000000e+00 : f32
    %719 = vector.broadcast %cst_226 : f32 to vector<2x128xf32>
    %720 = arith.addf %719, %718 : vector<2x128xf32>
    %721 = arith.divf %719, %720 : vector<2x128xf32>
    %722 = vector.extract_strided_slice %713 {offsets = [0, 128], sizes = [2, 128], strides = [1, 1]} : vector<2x384xf32> to vector<2x128xf32>
    %723 = vector.extract_strided_slice %641 {offsets = [0, 128], sizes = [2, 128], strides = [1, 1]} : vector<2x384xf32> to vector<2x128xf32>
    %724 = arith.addf %722, %723 : vector<2x128xf32>
    %725 = arith.negf %724 : vector<2x128xf32>
    %726 = math.exp %725 : vector<2x128xf32>
    %cst_227 = arith.constant 1.000000e+00 : f32
    %727 = vector.broadcast %cst_227 : f32 to vector<2x128xf32>
    %728 = arith.addf %727, %726 : vector<2x128xf32>
    %729 = arith.divf %727, %728 : vector<2x128xf32>
    %730 = vector.extract_strided_slice %713 {offsets = [0, 256], sizes = [2, 128], strides = [1, 1]} : vector<2x384xf32> to vector<2x128xf32>
    %731 = vector.extract_strided_slice %641 {offsets = [0, 256], sizes = [2, 128], strides = [1, 1]} : vector<2x384xf32> to vector<2x128xf32>
    %732 = arith.addf %731, %26 : vector<2x128xf32>
    %733 = arith.mulf %721, %732 : vector<2x128xf32>
    %734 = arith.addf %730, %733 : vector<2x128xf32>
    %735 = math.tanh %734 : vector<2x128xf32>
    %cst_228 = arith.constant 1.000000e+00 : f32
    %736 = vector.broadcast %cst_228 : f32 to vector<2x128xf32>
    %737 = arith.subf %736, %729 : vector<2x128xf32>
    %738 = arith.mulf %737, %735 : vector<2x128xf32>
    %739 = arith.mulf %729, %593 : vector<2x128xf32>
    %740 = arith.addf %738, %739 : vector<2x128xf32>
    %741 = vector.extract_strided_slice %740 {offsets = [0, 0], sizes = [2, 64], strides = [1, 1]} : vector<2x128xf32> to vector<2x64xf32>
    %742 = arith.truncf %741 : vector<2x64xf32> to vector<2x64xbf16>
    %c2_229 = arith.constant 2 : index
    %c0_230 = arith.constant 0 : index
    %c0_231 = arith.constant 0 : index
    %743 = vector.load %arg4[%c2_229, %c0_230, %c0_231] : memref<3x64x384xbf16, #tpu.memory_space<vmem>>, vector<1x64x384xbf16>
    %744 = vector.shape_cast %743 : vector<1x64x384xbf16> to vector<64x384xbf16>
    %cst_232 = arith.constant dense<0.000000e+00> : vector<2x384xf32>
    %745 = tpu.matmul %742, %744, %cst_232 {dimension_numbers = #tpu.dot_dimension_numbers<[1], [0], [0], [1], [0, 0, 1, 1], [], []>} : vector<2x64xbf16>, vector<64x384xbf16>, vector<2x384xf32> -> vector<2x384xf32>
    %746 = arith.addf %745, %14 : vector<2x384xf32>
    %747 = vector.extract_strided_slice %746 {offsets = [0, 0], sizes = [2, 128], strides = [1, 1]} : vector<2x384xf32> to vector<2x128xf32>
    %748 = vector.extract_strided_slice %646 {offsets = [0, 0], sizes = [2, 128], strides = [1, 1]} : vector<2x384xf32> to vector<2x128xf32>
    %749 = arith.addf %747, %748 : vector<2x128xf32>
    %750 = arith.negf %749 : vector<2x128xf32>
    %751 = math.exp %750 : vector<2x128xf32>
    %cst_233 = arith.constant 1.000000e+00 : f32
    %752 = vector.broadcast %cst_233 : f32 to vector<2x128xf32>
    %753 = arith.addf %752, %751 : vector<2x128xf32>
    %754 = arith.divf %752, %753 : vector<2x128xf32>
    %755 = vector.extract_strided_slice %746 {offsets = [0, 128], sizes = [2, 128], strides = [1, 1]} : vector<2x384xf32> to vector<2x128xf32>
    %756 = vector.extract_strided_slice %646 {offsets = [0, 128], sizes = [2, 128], strides = [1, 1]} : vector<2x384xf32> to vector<2x128xf32>
    %757 = arith.addf %755, %756 : vector<2x128xf32>
    %758 = arith.negf %757 : vector<2x128xf32>
    %759 = math.exp %758 : vector<2x128xf32>
    %cst_234 = arith.constant 1.000000e+00 : f32
    %760 = vector.broadcast %cst_234 : f32 to vector<2x128xf32>
    %761 = arith.addf %760, %759 : vector<2x128xf32>
    %762 = arith.divf %760, %761 : vector<2x128xf32>
    %763 = vector.extract_strided_slice %746 {offsets = [0, 256], sizes = [2, 128], strides = [1, 1]} : vector<2x384xf32> to vector<2x128xf32>
    %764 = vector.extract_strided_slice %646 {offsets = [0, 256], sizes = [2, 128], strides = [1, 1]} : vector<2x384xf32> to vector<2x128xf32>
    %765 = arith.addf %764, %30 : vector<2x128xf32>
    %766 = arith.mulf %754, %765 : vector<2x128xf32>
    %767 = arith.addf %763, %766 : vector<2x128xf32>
    %768 = math.tanh %767 : vector<2x128xf32>
    %cst_235 = arith.constant 1.000000e+00 : f32
    %769 = vector.broadcast %cst_235 : f32 to vector<2x128xf32>
    %770 = arith.subf %769, %762 : vector<2x128xf32>
    %771 = arith.mulf %770, %768 : vector<2x128xf32>
    %772 = arith.mulf %762, %626 : vector<2x128xf32>
    %773 = arith.addf %771, %772 : vector<2x128xf32>
    %774 = vector.extract_strided_slice %674 {offsets = [0, 0], sizes = [2, 64], strides = [1, 1]} : vector<2x128xf32> to vector<2x64xf32>
    %775 = arith.truncf %774 : vector<2x64xf32> to vector<2x64xbf16>
    %c0_236 = arith.constant 0 : index
    %c0_237 = arith.constant 0 : index
    %c0_238 = arith.constant 0 : index
    %776 = vector.load %arg3[%c0_236, %c0_237, %c0_238] : memref<4x64x384xbf16, #tpu.memory_space<vmem>>, vector<1x64x384xbf16>
    %777 = vector.shape_cast %776 : vector<1x64x384xbf16> to vector<64x384xbf16>
    %cst_239 = arith.constant dense<0.000000e+00> : vector<2x384xf32>
    %778 = tpu.matmul %775, %777, %cst_239 {dimension_numbers = #tpu.dot_dimension_numbers<[1], [0], [0], [1], [0, 0, 1, 1], [], []>} : vector<2x64xbf16>, vector<64x384xbf16>, vector<2x384xf32> -> vector<2x384xf32>
    %779 = vector.extract_strided_slice %707 {offsets = [0, 0], sizes = [2, 64], strides = [1, 1]} : vector<2x128xf32> to vector<2x64xf32>
    %780 = arith.truncf %779 : vector<2x64xf32> to vector<2x64xbf16>
    %c1_240 = arith.constant 1 : index
    %c0_241 = arith.constant 0 : index
    %c0_242 = arith.constant 0 : index
    %781 = vector.load %arg3[%c1_240, %c0_241, %c0_242] : memref<4x64x384xbf16, #tpu.memory_space<vmem>>, vector<1x64x384xbf16>
    %782 = vector.shape_cast %781 : vector<1x64x384xbf16> to vector<64x384xbf16>
    %cst_243 = arith.constant dense<0.000000e+00> : vector<2x384xf32>
    %783 = tpu.matmul %780, %782, %cst_243 {dimension_numbers = #tpu.dot_dimension_numbers<[1], [0], [0], [1], [0, 0, 1, 1], [], []>} : vector<2x64xbf16>, vector<64x384xbf16>, vector<2x384xf32> -> vector<2x384xf32>
    %784 = vector.extract_strided_slice %740 {offsets = [0, 0], sizes = [2, 64], strides = [1, 1]} : vector<2x128xf32> to vector<2x64xf32>
    %785 = arith.truncf %784 : vector<2x64xf32> to vector<2x64xbf16>
    %c2_244 = arith.constant 2 : index
    %c0_245 = arith.constant 0 : index
    %c0_246 = arith.constant 0 : index
    %786 = vector.load %arg3[%c2_244, %c0_245, %c0_246] : memref<4x64x384xbf16, #tpu.memory_space<vmem>>, vector<1x64x384xbf16>
    %787 = vector.shape_cast %786 : vector<1x64x384xbf16> to vector<64x384xbf16>
    %cst_247 = arith.constant dense<0.000000e+00> : vector<2x384xf32>
    %788 = tpu.matmul %785, %787, %cst_247 {dimension_numbers = #tpu.dot_dimension_numbers<[1], [0], [0], [1], [0, 0, 1, 1], [], []>} : vector<2x64xbf16>, vector<64x384xbf16>, vector<2x384xf32> -> vector<2x384xf32>
    %789 = vector.extract_strided_slice %773 {offsets = [0, 0], sizes = [2, 64], strides = [1, 1]} : vector<2x128xf32> to vector<2x64xf32>
    %790 = arith.truncf %789 : vector<2x64xf32> to vector<2x64xbf16>
    %c3_248 = arith.constant 3 : index
    %c0_249 = arith.constant 0 : index
    %c0_250 = arith.constant 0 : index
    %791 = vector.load %arg3[%c3_248, %c0_249, %c0_250] : memref<4x64x384xbf16, #tpu.memory_space<vmem>>, vector<1x64x384xbf16>
    %792 = vector.shape_cast %791 : vector<1x64x384xbf16> to vector<64x384xbf16>
    %cst_251 = arith.constant dense<0.000000e+00> : vector<2x384xf32>
    %793 = tpu.matmul %790, %792, %cst_251 {dimension_numbers = #tpu.dot_dimension_numbers<[1], [0], [0], [1], [0, 0, 1, 1], [], []>} : vector<2x64xbf16>, vector<64x384xbf16>, vector<2x384xf32> -> vector<2x384xf32>
    %c10 = arith.constant 10 : index
    %c0_252 = arith.constant 0 : index
    %794 = vector.load %arg1[%c10, %c0_252] : memref<16x384xf32, #tpu.memory_space<vmem>>, vector<2x384xf32>
    %795 = vector.extract_strided_slice %794 {offsets = [0, 0], sizes = [2, 128], strides = [1, 1]} : vector<2x384xf32> to vector<2x128xf32>
    %796 = vector.extract_strided_slice %778 {offsets = [0, 0], sizes = [2, 128], strides = [1, 1]} : vector<2x384xf32> to vector<2x128xf32>
    %797 = arith.addf %795, %796 : vector<2x128xf32>
    %798 = arith.negf %797 : vector<2x128xf32>
    %799 = math.exp %798 : vector<2x128xf32>
    %cst_253 = arith.constant 1.000000e+00 : f32
    %800 = vector.broadcast %cst_253 : f32 to vector<2x128xf32>
    %801 = arith.addf %800, %799 : vector<2x128xf32>
    %802 = arith.divf %800, %801 : vector<2x128xf32>
    %803 = vector.extract_strided_slice %794 {offsets = [0, 128], sizes = [2, 128], strides = [1, 1]} : vector<2x384xf32> to vector<2x128xf32>
    %804 = vector.extract_strided_slice %778 {offsets = [0, 128], sizes = [2, 128], strides = [1, 1]} : vector<2x384xf32> to vector<2x128xf32>
    %805 = arith.addf %803, %804 : vector<2x128xf32>
    %806 = arith.negf %805 : vector<2x128xf32>
    %807 = math.exp %806 : vector<2x128xf32>
    %cst_254 = arith.constant 1.000000e+00 : f32
    %808 = vector.broadcast %cst_254 : f32 to vector<2x128xf32>
    %809 = arith.addf %808, %807 : vector<2x128xf32>
    %810 = arith.divf %808, %809 : vector<2x128xf32>
    %811 = vector.extract_strided_slice %794 {offsets = [0, 256], sizes = [2, 128], strides = [1, 1]} : vector<2x384xf32> to vector<2x128xf32>
    %812 = vector.extract_strided_slice %778 {offsets = [0, 256], sizes = [2, 128], strides = [1, 1]} : vector<2x384xf32> to vector<2x128xf32>
    %813 = arith.addf %812, %18 : vector<2x128xf32>
    %814 = arith.mulf %802, %813 : vector<2x128xf32>
    %815 = arith.addf %811, %814 : vector<2x128xf32>
    %816 = math.tanh %815 : vector<2x128xf32>
    %cst_255 = arith.constant 1.000000e+00 : f32
    %817 = vector.broadcast %cst_255 : f32 to vector<2x128xf32>
    %818 = arith.subf %817, %810 : vector<2x128xf32>
    %819 = arith.mulf %818, %816 : vector<2x128xf32>
    %820 = arith.mulf %810, %674 : vector<2x128xf32>
    %821 = arith.addf %819, %820 : vector<2x128xf32>
    %822 = vector.extract_strided_slice %821 {offsets = [0, 0], sizes = [2, 64], strides = [1, 1]} : vector<2x128xf32> to vector<2x64xf32>
    %823 = arith.truncf %822 : vector<2x64xf32> to vector<2x64xbf16>
    %c0_256 = arith.constant 0 : index
    %c0_257 = arith.constant 0 : index
    %c0_258 = arith.constant 0 : index
    %824 = vector.load %arg4[%c0_256, %c0_257, %c0_258] : memref<3x64x384xbf16, #tpu.memory_space<vmem>>, vector<1x64x384xbf16>
    %825 = vector.shape_cast %824 : vector<1x64x384xbf16> to vector<64x384xbf16>
    %cst_259 = arith.constant dense<0.000000e+00> : vector<2x384xf32>
    %826 = tpu.matmul %823, %825, %cst_259 {dimension_numbers = #tpu.dot_dimension_numbers<[1], [0], [0], [1], [0, 0, 1, 1], [], []>} : vector<2x64xbf16>, vector<64x384xbf16>, vector<2x384xf32> -> vector<2x384xf32>
    %827 = arith.addf %826, %6 : vector<2x384xf32>
    %828 = vector.extract_strided_slice %827 {offsets = [0, 0], sizes = [2, 128], strides = [1, 1]} : vector<2x384xf32> to vector<2x128xf32>
    %829 = vector.extract_strided_slice %783 {offsets = [0, 0], sizes = [2, 128], strides = [1, 1]} : vector<2x384xf32> to vector<2x128xf32>
    %830 = arith.addf %828, %829 : vector<2x128xf32>
    %831 = arith.negf %830 : vector<2x128xf32>
    %832 = math.exp %831 : vector<2x128xf32>
    %cst_260 = arith.constant 1.000000e+00 : f32
    %833 = vector.broadcast %cst_260 : f32 to vector<2x128xf32>
    %834 = arith.addf %833, %832 : vector<2x128xf32>
    %835 = arith.divf %833, %834 : vector<2x128xf32>
    %836 = vector.extract_strided_slice %827 {offsets = [0, 128], sizes = [2, 128], strides = [1, 1]} : vector<2x384xf32> to vector<2x128xf32>
    %837 = vector.extract_strided_slice %783 {offsets = [0, 128], sizes = [2, 128], strides = [1, 1]} : vector<2x384xf32> to vector<2x128xf32>
    %838 = arith.addf %836, %837 : vector<2x128xf32>
    %839 = arith.negf %838 : vector<2x128xf32>
    %840 = math.exp %839 : vector<2x128xf32>
    %cst_261 = arith.constant 1.000000e+00 : f32
    %841 = vector.broadcast %cst_261 : f32 to vector<2x128xf32>
    %842 = arith.addf %841, %840 : vector<2x128xf32>
    %843 = arith.divf %841, %842 : vector<2x128xf32>
    %844 = vector.extract_strided_slice %827 {offsets = [0, 256], sizes = [2, 128], strides = [1, 1]} : vector<2x384xf32> to vector<2x128xf32>
    %845 = vector.extract_strided_slice %783 {offsets = [0, 256], sizes = [2, 128], strides = [1, 1]} : vector<2x384xf32> to vector<2x128xf32>
    %846 = arith.addf %845, %22 : vector<2x128xf32>
    %847 = arith.mulf %835, %846 : vector<2x128xf32>
    %848 = arith.addf %844, %847 : vector<2x128xf32>
    %849 = math.tanh %848 : vector<2x128xf32>
    %cst_262 = arith.constant 1.000000e+00 : f32
    %850 = vector.broadcast %cst_262 : f32 to vector<2x128xf32>
    %851 = arith.subf %850, %843 : vector<2x128xf32>
    %852 = arith.mulf %851, %849 : vector<2x128xf32>
    %853 = arith.mulf %843, %707 : vector<2x128xf32>
    %854 = arith.addf %852, %853 : vector<2x128xf32>
    %855 = vector.extract_strided_slice %854 {offsets = [0, 0], sizes = [2, 64], strides = [1, 1]} : vector<2x128xf32> to vector<2x64xf32>
    %856 = arith.truncf %855 : vector<2x64xf32> to vector<2x64xbf16>
    %c1_263 = arith.constant 1 : index
    %c0_264 = arith.constant 0 : index
    %c0_265 = arith.constant 0 : index
    %857 = vector.load %arg4[%c1_263, %c0_264, %c0_265] : memref<3x64x384xbf16, #tpu.memory_space<vmem>>, vector<1x64x384xbf16>
    %858 = vector.shape_cast %857 : vector<1x64x384xbf16> to vector<64x384xbf16>
    %cst_266 = arith.constant dense<0.000000e+00> : vector<2x384xf32>
    %859 = tpu.matmul %856, %858, %cst_266 {dimension_numbers = #tpu.dot_dimension_numbers<[1], [0], [0], [1], [0, 0, 1, 1], [], []>} : vector<2x64xbf16>, vector<64x384xbf16>, vector<2x384xf32> -> vector<2x384xf32>
    %860 = arith.addf %859, %10 : vector<2x384xf32>
    %861 = vector.extract_strided_slice %860 {offsets = [0, 0], sizes = [2, 128], strides = [1, 1]} : vector<2x384xf32> to vector<2x128xf32>
    %862 = vector.extract_strided_slice %788 {offsets = [0, 0], sizes = [2, 128], strides = [1, 1]} : vector<2x384xf32> to vector<2x128xf32>
    %863 = arith.addf %861, %862 : vector<2x128xf32>
    %864 = arith.negf %863 : vector<2x128xf32>
    %865 = math.exp %864 : vector<2x128xf32>
    %cst_267 = arith.constant 1.000000e+00 : f32
    %866 = vector.broadcast %cst_267 : f32 to vector<2x128xf32>
    %867 = arith.addf %866, %865 : vector<2x128xf32>
    %868 = arith.divf %866, %867 : vector<2x128xf32>
    %869 = vector.extract_strided_slice %860 {offsets = [0, 128], sizes = [2, 128], strides = [1, 1]} : vector<2x384xf32> to vector<2x128xf32>
    %870 = vector.extract_strided_slice %788 {offsets = [0, 128], sizes = [2, 128], strides = [1, 1]} : vector<2x384xf32> to vector<2x128xf32>
    %871 = arith.addf %869, %870 : vector<2x128xf32>
    %872 = arith.negf %871 : vector<2x128xf32>
    %873 = math.exp %872 : vector<2x128xf32>
    %cst_268 = arith.constant 1.000000e+00 : f32
    %874 = vector.broadcast %cst_268 : f32 to vector<2x128xf32>
    %875 = arith.addf %874, %873 : vector<2x128xf32>
    %876 = arith.divf %874, %875 : vector<2x128xf32>
    %877 = vector.extract_strided_slice %860 {offsets = [0, 256], sizes = [2, 128], strides = [1, 1]} : vector<2x384xf32> to vector<2x128xf32>
    %878 = vector.extract_strided_slice %788 {offsets = [0, 256], sizes = [2, 128], strides = [1, 1]} : vector<2x384xf32> to vector<2x128xf32>
    %879 = arith.addf %878, %26 : vector<2x128xf32>
    %880 = arith.mulf %868, %879 : vector<2x128xf32>
    %881 = arith.addf %877, %880 : vector<2x128xf32>
    %882 = math.tanh %881 : vector<2x128xf32>
    %cst_269 = arith.constant 1.000000e+00 : f32
    %883 = vector.broadcast %cst_269 : f32 to vector<2x128xf32>
    %884 = arith.subf %883, %876 : vector<2x128xf32>
    %885 = arith.mulf %884, %882 : vector<2x128xf32>
    %886 = arith.mulf %876, %740 : vector<2x128xf32>
    %887 = arith.addf %885, %886 : vector<2x128xf32>
    %888 = vector.extract_strided_slice %887 {offsets = [0, 0], sizes = [2, 64], strides = [1, 1]} : vector<2x128xf32> to vector<2x64xf32>
    %889 = arith.truncf %888 : vector<2x64xf32> to vector<2x64xbf16>
    %c2_270 = arith.constant 2 : index
    %c0_271 = arith.constant 0 : index
    %c0_272 = arith.constant 0 : index
    %890 = vector.load %arg4[%c2_270, %c0_271, %c0_272] : memref<3x64x384xbf16, #tpu.memory_space<vmem>>, vector<1x64x384xbf16>
    %891 = vector.shape_cast %890 : vector<1x64x384xbf16> to vector<64x384xbf16>
    %cst_273 = arith.constant dense<0.000000e+00> : vector<2x384xf32>
    %892 = tpu.matmul %889, %891, %cst_273 {dimension_numbers = #tpu.dot_dimension_numbers<[1], [0], [0], [1], [0, 0, 1, 1], [], []>} : vector<2x64xbf16>, vector<64x384xbf16>, vector<2x384xf32> -> vector<2x384xf32>
    %893 = arith.addf %892, %14 : vector<2x384xf32>
    %894 = vector.extract_strided_slice %893 {offsets = [0, 0], sizes = [2, 128], strides = [1, 1]} : vector<2x384xf32> to vector<2x128xf32>
    %895 = vector.extract_strided_slice %793 {offsets = [0, 0], sizes = [2, 128], strides = [1, 1]} : vector<2x384xf32> to vector<2x128xf32>
    %896 = arith.addf %894, %895 : vector<2x128xf32>
    %897 = arith.negf %896 : vector<2x128xf32>
    %898 = math.exp %897 : vector<2x128xf32>
    %cst_274 = arith.constant 1.000000e+00 : f32
    %899 = vector.broadcast %cst_274 : f32 to vector<2x128xf32>
    %900 = arith.addf %899, %898 : vector<2x128xf32>
    %901 = arith.divf %899, %900 : vector<2x128xf32>
    %902 = vector.extract_strided_slice %893 {offsets = [0, 128], sizes = [2, 128], strides = [1, 1]} : vector<2x384xf32> to vector<2x128xf32>
    %903 = vector.extract_strided_slice %793 {offsets = [0, 128], sizes = [2, 128], strides = [1, 1]} : vector<2x384xf32> to vector<2x128xf32>
    %904 = arith.addf %902, %903 : vector<2x128xf32>
    %905 = arith.negf %904 : vector<2x128xf32>
    %906 = math.exp %905 : vector<2x128xf32>
    %cst_275 = arith.constant 1.000000e+00 : f32
    %907 = vector.broadcast %cst_275 : f32 to vector<2x128xf32>
    %908 = arith.addf %907, %906 : vector<2x128xf32>
    %909 = arith.divf %907, %908 : vector<2x128xf32>
    %910 = vector.extract_strided_slice %893 {offsets = [0, 256], sizes = [2, 128], strides = [1, 1]} : vector<2x384xf32> to vector<2x128xf32>
    %911 = vector.extract_strided_slice %793 {offsets = [0, 256], sizes = [2, 128], strides = [1, 1]} : vector<2x384xf32> to vector<2x128xf32>
    %912 = arith.addf %911, %30 : vector<2x128xf32>
    %913 = arith.mulf %901, %912 : vector<2x128xf32>
    %914 = arith.addf %910, %913 : vector<2x128xf32>
    %915 = math.tanh %914 : vector<2x128xf32>
    %cst_276 = arith.constant 1.000000e+00 : f32
    %916 = vector.broadcast %cst_276 : f32 to vector<2x128xf32>
    %917 = arith.subf %916, %909 : vector<2x128xf32>
    %918 = arith.mulf %917, %915 : vector<2x128xf32>
    %919 = arith.mulf %909, %773 : vector<2x128xf32>
    %920 = arith.addf %918, %919 : vector<2x128xf32>
    %921 = vector.extract_strided_slice %821 {offsets = [0, 0], sizes = [2, 64], strides = [1, 1]} : vector<2x128xf32> to vector<2x64xf32>
    %922 = arith.truncf %921 : vector<2x64xf32> to vector<2x64xbf16>
    %c0_277 = arith.constant 0 : index
    %c0_278 = arith.constant 0 : index
    %c0_279 = arith.constant 0 : index
    %923 = vector.load %arg3[%c0_277, %c0_278, %c0_279] : memref<4x64x384xbf16, #tpu.memory_space<vmem>>, vector<1x64x384xbf16>
    %924 = vector.shape_cast %923 : vector<1x64x384xbf16> to vector<64x384xbf16>
    %cst_280 = arith.constant dense<0.000000e+00> : vector<2x384xf32>
    %925 = tpu.matmul %922, %924, %cst_280 {dimension_numbers = #tpu.dot_dimension_numbers<[1], [0], [0], [1], [0, 0, 1, 1], [], []>} : vector<2x64xbf16>, vector<64x384xbf16>, vector<2x384xf32> -> vector<2x384xf32>
    %926 = vector.extract_strided_slice %854 {offsets = [0, 0], sizes = [2, 64], strides = [1, 1]} : vector<2x128xf32> to vector<2x64xf32>
    %927 = arith.truncf %926 : vector<2x64xf32> to vector<2x64xbf16>
    %c1_281 = arith.constant 1 : index
    %c0_282 = arith.constant 0 : index
    %c0_283 = arith.constant 0 : index
    %928 = vector.load %arg3[%c1_281, %c0_282, %c0_283] : memref<4x64x384xbf16, #tpu.memory_space<vmem>>, vector<1x64x384xbf16>
    %929 = vector.shape_cast %928 : vector<1x64x384xbf16> to vector<64x384xbf16>
    %cst_284 = arith.constant dense<0.000000e+00> : vector<2x384xf32>
    %930 = tpu.matmul %927, %929, %cst_284 {dimension_numbers = #tpu.dot_dimension_numbers<[1], [0], [0], [1], [0, 0, 1, 1], [], []>} : vector<2x64xbf16>, vector<64x384xbf16>, vector<2x384xf32> -> vector<2x384xf32>
    %931 = vector.extract_strided_slice %887 {offsets = [0, 0], sizes = [2, 64], strides = [1, 1]} : vector<2x128xf32> to vector<2x64xf32>
    %932 = arith.truncf %931 : vector<2x64xf32> to vector<2x64xbf16>
    %c2_285 = arith.constant 2 : index
    %c0_286 = arith.constant 0 : index
    %c0_287 = arith.constant 0 : index
    %933 = vector.load %arg3[%c2_285, %c0_286, %c0_287] : memref<4x64x384xbf16, #tpu.memory_space<vmem>>, vector<1x64x384xbf16>
    %934 = vector.shape_cast %933 : vector<1x64x384xbf16> to vector<64x384xbf16>
    %cst_288 = arith.constant dense<0.000000e+00> : vector<2x384xf32>
    %935 = tpu.matmul %932, %934, %cst_288 {dimension_numbers = #tpu.dot_dimension_numbers<[1], [0], [0], [1], [0, 0, 1, 1], [], []>} : vector<2x64xbf16>, vector<64x384xbf16>, vector<2x384xf32> -> vector<2x384xf32>
    %936 = vector.extract_strided_slice %920 {offsets = [0, 0], sizes = [2, 64], strides = [1, 1]} : vector<2x128xf32> to vector<2x64xf32>
    %937 = arith.truncf %936 : vector<2x64xf32> to vector<2x64xbf16>
    %c3_289 = arith.constant 3 : index
    %c0_290 = arith.constant 0 : index
    %c0_291 = arith.constant 0 : index
    %938 = vector.load %arg3[%c3_289, %c0_290, %c0_291] : memref<4x64x384xbf16, #tpu.memory_space<vmem>>, vector<1x64x384xbf16>
    %939 = vector.shape_cast %938 : vector<1x64x384xbf16> to vector<64x384xbf16>
    %cst_292 = arith.constant dense<0.000000e+00> : vector<2x384xf32>
    %940 = tpu.matmul %937, %939, %cst_292 {dimension_numbers = #tpu.dot_dimension_numbers<[1], [0], [0], [1], [0, 0, 1, 1], [], []>} : vector<2x64xbf16>, vector<64x384xbf16>, vector<2x384xf32> -> vector<2x384xf32>
    %c12 = arith.constant 12 : index
    %c0_293 = arith.constant 0 : index
    %941 = vector.load %arg1[%c12, %c0_293] : memref<16x384xf32, #tpu.memory_space<vmem>>, vector<2x384xf32>
    %942 = vector.extract_strided_slice %941 {offsets = [0, 0], sizes = [2, 128], strides = [1, 1]} : vector<2x384xf32> to vector<2x128xf32>
    %943 = vector.extract_strided_slice %925 {offsets = [0, 0], sizes = [2, 128], strides = [1, 1]} : vector<2x384xf32> to vector<2x128xf32>
    %944 = arith.addf %942, %943 : vector<2x128xf32>
    %945 = arith.negf %944 : vector<2x128xf32>
    %946 = math.exp %945 : vector<2x128xf32>
    %cst_294 = arith.constant 1.000000e+00 : f32
    %947 = vector.broadcast %cst_294 : f32 to vector<2x128xf32>
    %948 = arith.addf %947, %946 : vector<2x128xf32>
    %949 = arith.divf %947, %948 : vector<2x128xf32>
    %950 = vector.extract_strided_slice %941 {offsets = [0, 128], sizes = [2, 128], strides = [1, 1]} : vector<2x384xf32> to vector<2x128xf32>
    %951 = vector.extract_strided_slice %925 {offsets = [0, 128], sizes = [2, 128], strides = [1, 1]} : vector<2x384xf32> to vector<2x128xf32>
    %952 = arith.addf %950, %951 : vector<2x128xf32>
    %953 = arith.negf %952 : vector<2x128xf32>
    %954 = math.exp %953 : vector<2x128xf32>
    %cst_295 = arith.constant 1.000000e+00 : f32
    %955 = vector.broadcast %cst_295 : f32 to vector<2x128xf32>
    %956 = arith.addf %955, %954 : vector<2x128xf32>
    %957 = arith.divf %955, %956 : vector<2x128xf32>
    %958 = vector.extract_strided_slice %941 {offsets = [0, 256], sizes = [2, 128], strides = [1, 1]} : vector<2x384xf32> to vector<2x128xf32>
    %959 = vector.extract_strided_slice %925 {offsets = [0, 256], sizes = [2, 128], strides = [1, 1]} : vector<2x384xf32> to vector<2x128xf32>
    %960 = arith.addf %959, %18 : vector<2x128xf32>
    %961 = arith.mulf %949, %960 : vector<2x128xf32>
    %962 = arith.addf %958, %961 : vector<2x128xf32>
    %963 = math.tanh %962 : vector<2x128xf32>
    %cst_296 = arith.constant 1.000000e+00 : f32
    %964 = vector.broadcast %cst_296 : f32 to vector<2x128xf32>
    %965 = arith.subf %964, %957 : vector<2x128xf32>
    %966 = arith.mulf %965, %963 : vector<2x128xf32>
    %967 = arith.mulf %957, %821 : vector<2x128xf32>
    %968 = arith.addf %966, %967 : vector<2x128xf32>
    %969 = vector.extract_strided_slice %968 {offsets = [0, 0], sizes = [2, 64], strides = [1, 1]} : vector<2x128xf32> to vector<2x64xf32>
    %970 = arith.truncf %969 : vector<2x64xf32> to vector<2x64xbf16>
    %c0_297 = arith.constant 0 : index
    %c0_298 = arith.constant 0 : index
    %c0_299 = arith.constant 0 : index
    %971 = vector.load %arg4[%c0_297, %c0_298, %c0_299] : memref<3x64x384xbf16, #tpu.memory_space<vmem>>, vector<1x64x384xbf16>
    %972 = vector.shape_cast %971 : vector<1x64x384xbf16> to vector<64x384xbf16>
    %cst_300 = arith.constant dense<0.000000e+00> : vector<2x384xf32>
    %973 = tpu.matmul %970, %972, %cst_300 {dimension_numbers = #tpu.dot_dimension_numbers<[1], [0], [0], [1], [0, 0, 1, 1], [], []>} : vector<2x64xbf16>, vector<64x384xbf16>, vector<2x384xf32> -> vector<2x384xf32>
    %974 = arith.addf %973, %6 : vector<2x384xf32>
    %975 = vector.extract_strided_slice %974 {offsets = [0, 0], sizes = [2, 128], strides = [1, 1]} : vector<2x384xf32> to vector<2x128xf32>
    %976 = vector.extract_strided_slice %930 {offsets = [0, 0], sizes = [2, 128], strides = [1, 1]} : vector<2x384xf32> to vector<2x128xf32>
    %977 = arith.addf %975, %976 : vector<2x128xf32>
    %978 = arith.negf %977 : vector<2x128xf32>
    %979 = math.exp %978 : vector<2x128xf32>
    %cst_301 = arith.constant 1.000000e+00 : f32
    %980 = vector.broadcast %cst_301 : f32 to vector<2x128xf32>
    %981 = arith.addf %980, %979 : vector<2x128xf32>
    %982 = arith.divf %980, %981 : vector<2x128xf32>
    %983 = vector.extract_strided_slice %974 {offsets = [0, 128], sizes = [2, 128], strides = [1, 1]} : vector<2x384xf32> to vector<2x128xf32>
    %984 = vector.extract_strided_slice %930 {offsets = [0, 128], sizes = [2, 128], strides = [1, 1]} : vector<2x384xf32> to vector<2x128xf32>
    %985 = arith.addf %983, %984 : vector<2x128xf32>
    %986 = arith.negf %985 : vector<2x128xf32>
    %987 = math.exp %986 : vector<2x128xf32>
    %cst_302 = arith.constant 1.000000e+00 : f32
    %988 = vector.broadcast %cst_302 : f32 to vector<2x128xf32>
    %989 = arith.addf %988, %987 : vector<2x128xf32>
    %990 = arith.divf %988, %989 : vector<2x128xf32>
    %991 = vector.extract_strided_slice %974 {offsets = [0, 256], sizes = [2, 128], strides = [1, 1]} : vector<2x384xf32> to vector<2x128xf32>
    %992 = vector.extract_strided_slice %930 {offsets = [0, 256], sizes = [2, 128], strides = [1, 1]} : vector<2x384xf32> to vector<2x128xf32>
    %993 = arith.addf %992, %22 : vector<2x128xf32>
    %994 = arith.mulf %982, %993 : vector<2x128xf32>
    %995 = arith.addf %991, %994 : vector<2x128xf32>
    %996 = math.tanh %995 : vector<2x128xf32>
    %cst_303 = arith.constant 1.000000e+00 : f32
    %997 = vector.broadcast %cst_303 : f32 to vector<2x128xf32>
    %998 = arith.subf %997, %990 : vector<2x128xf32>
    %999 = arith.mulf %998, %996 : vector<2x128xf32>
    %1000 = arith.mulf %990, %854 : vector<2x128xf32>
    %1001 = arith.addf %999, %1000 : vector<2x128xf32>
    %1002 = vector.extract_strided_slice %1001 {offsets = [0, 0], sizes = [2, 64], strides = [1, 1]} : vector<2x128xf32> to vector<2x64xf32>
    %1003 = arith.truncf %1002 : vector<2x64xf32> to vector<2x64xbf16>
    %c1_304 = arith.constant 1 : index
    %c0_305 = arith.constant 0 : index
    %c0_306 = arith.constant 0 : index
    %1004 = vector.load %arg4[%c1_304, %c0_305, %c0_306] : memref<3x64x384xbf16, #tpu.memory_space<vmem>>, vector<1x64x384xbf16>
    %1005 = vector.shape_cast %1004 : vector<1x64x384xbf16> to vector<64x384xbf16>
    %cst_307 = arith.constant dense<0.000000e+00> : vector<2x384xf32>
    %1006 = tpu.matmul %1003, %1005, %cst_307 {dimension_numbers = #tpu.dot_dimension_numbers<[1], [0], [0], [1], [0, 0, 1, 1], [], []>} : vector<2x64xbf16>, vector<64x384xbf16>, vector<2x384xf32> -> vector<2x384xf32>
    %1007 = arith.addf %1006, %10 : vector<2x384xf32>
    %1008 = vector.extract_strided_slice %1007 {offsets = [0, 0], sizes = [2, 128], strides = [1, 1]} : vector<2x384xf32> to vector<2x128xf32>
    %1009 = vector.extract_strided_slice %935 {offsets = [0, 0], sizes = [2, 128], strides = [1, 1]} : vector<2x384xf32> to vector<2x128xf32>
    %1010 = arith.addf %1008, %1009 : vector<2x128xf32>
    %1011 = arith.negf %1010 : vector<2x128xf32>
    %1012 = math.exp %1011 : vector<2x128xf32>
    %cst_308 = arith.constant 1.000000e+00 : f32
    %1013 = vector.broadcast %cst_308 : f32 to vector<2x128xf32>
    %1014 = arith.addf %1013, %1012 : vector<2x128xf32>
    %1015 = arith.divf %1013, %1014 : vector<2x128xf32>
    %1016 = vector.extract_strided_slice %1007 {offsets = [0, 128], sizes = [2, 128], strides = [1, 1]} : vector<2x384xf32> to vector<2x128xf32>
    %1017 = vector.extract_strided_slice %935 {offsets = [0, 128], sizes = [2, 128], strides = [1, 1]} : vector<2x384xf32> to vector<2x128xf32>
    %1018 = arith.addf %1016, %1017 : vector<2x128xf32>
    %1019 = arith.negf %1018 : vector<2x128xf32>
    %1020 = math.exp %1019 : vector<2x128xf32>
    %cst_309 = arith.constant 1.000000e+00 : f32
    %1021 = vector.broadcast %cst_309 : f32 to vector<2x128xf32>
    %1022 = arith.addf %1021, %1020 : vector<2x128xf32>
    %1023 = arith.divf %1021, %1022 : vector<2x128xf32>
    %1024 = vector.extract_strided_slice %1007 {offsets = [0, 256], sizes = [2, 128], strides = [1, 1]} : vector<2x384xf32> to vector<2x128xf32>
    %1025 = vector.extract_strided_slice %935 {offsets = [0, 256], sizes = [2, 128], strides = [1, 1]} : vector<2x384xf32> to vector<2x128xf32>
    %1026 = arith.addf %1025, %26 : vector<2x128xf32>
    %1027 = arith.mulf %1015, %1026 : vector<2x128xf32>
    %1028 = arith.addf %1024, %1027 : vector<2x128xf32>
    %1029 = math.tanh %1028 : vector<2x128xf32>
    %cst_310 = arith.constant 1.000000e+00 : f32
    %1030 = vector.broadcast %cst_310 : f32 to vector<2x128xf32>
    %1031 = arith.subf %1030, %1023 : vector<2x128xf32>
    %1032 = arith.mulf %1031, %1029 : vector<2x128xf32>
    %1033 = arith.mulf %1023, %887 : vector<2x128xf32>
    %1034 = arith.addf %1032, %1033 : vector<2x128xf32>
    %1035 = vector.extract_strided_slice %1034 {offsets = [0, 0], sizes = [2, 64], strides = [1, 1]} : vector<2x128xf32> to vector<2x64xf32>
    %1036 = arith.truncf %1035 : vector<2x64xf32> to vector<2x64xbf16>
    %c2_311 = arith.constant 2 : index
    %c0_312 = arith.constant 0 : index
    %c0_313 = arith.constant 0 : index
    %1037 = vector.load %arg4[%c2_311, %c0_312, %c0_313] : memref<3x64x384xbf16, #tpu.memory_space<vmem>>, vector<1x64x384xbf16>
    %1038 = vector.shape_cast %1037 : vector<1x64x384xbf16> to vector<64x384xbf16>
    %cst_314 = arith.constant dense<0.000000e+00> : vector<2x384xf32>
    %1039 = tpu.matmul %1036, %1038, %cst_314 {dimension_numbers = #tpu.dot_dimension_numbers<[1], [0], [0], [1], [0, 0, 1, 1], [], []>} : vector<2x64xbf16>, vector<64x384xbf16>, vector<2x384xf32> -> vector<2x384xf32>
    %1040 = arith.addf %1039, %14 : vector<2x384xf32>
    %1041 = vector.extract_strided_slice %1040 {offsets = [0, 0], sizes = [2, 128], strides = [1, 1]} : vector<2x384xf32> to vector<2x128xf32>
    %1042 = vector.extract_strided_slice %940 {offsets = [0, 0], sizes = [2, 128], strides = [1, 1]} : vector<2x384xf32> to vector<2x128xf32>
    %1043 = arith.addf %1041, %1042 : vector<2x128xf32>
    %1044 = arith.negf %1043 : vector<2x128xf32>
    %1045 = math.exp %1044 : vector<2x128xf32>
    %cst_315 = arith.constant 1.000000e+00 : f32
    %1046 = vector.broadcast %cst_315 : f32 to vector<2x128xf32>
    %1047 = arith.addf %1046, %1045 : vector<2x128xf32>
    %1048 = arith.divf %1046, %1047 : vector<2x128xf32>
    %1049 = vector.extract_strided_slice %1040 {offsets = [0, 128], sizes = [2, 128], strides = [1, 1]} : vector<2x384xf32> to vector<2x128xf32>
    %1050 = vector.extract_strided_slice %940 {offsets = [0, 128], sizes = [2, 128], strides = [1, 1]} : vector<2x384xf32> to vector<2x128xf32>
    %1051 = arith.addf %1049, %1050 : vector<2x128xf32>
    %1052 = arith.negf %1051 : vector<2x128xf32>
    %1053 = math.exp %1052 : vector<2x128xf32>
    %cst_316 = arith.constant 1.000000e+00 : f32
    %1054 = vector.broadcast %cst_316 : f32 to vector<2x128xf32>
    %1055 = arith.addf %1054, %1053 : vector<2x128xf32>
    %1056 = arith.divf %1054, %1055 : vector<2x128xf32>
    %1057 = vector.extract_strided_slice %1040 {offsets = [0, 256], sizes = [2, 128], strides = [1, 1]} : vector<2x384xf32> to vector<2x128xf32>
    %1058 = vector.extract_strided_slice %940 {offsets = [0, 256], sizes = [2, 128], strides = [1, 1]} : vector<2x384xf32> to vector<2x128xf32>
    %1059 = arith.addf %1058, %30 : vector<2x128xf32>
    %1060 = arith.mulf %1048, %1059 : vector<2x128xf32>
    %1061 = arith.addf %1057, %1060 : vector<2x128xf32>
    %1062 = math.tanh %1061 : vector<2x128xf32>
    %cst_317 = arith.constant 1.000000e+00 : f32
    %1063 = vector.broadcast %cst_317 : f32 to vector<2x128xf32>
    %1064 = arith.subf %1063, %1056 : vector<2x128xf32>
    %1065 = arith.mulf %1064, %1062 : vector<2x128xf32>
    %1066 = arith.mulf %1056, %920 : vector<2x128xf32>
    %1067 = arith.addf %1065, %1066 : vector<2x128xf32>
    %1068 = vector.extract_strided_slice %968 {offsets = [0, 0], sizes = [2, 64], strides = [1, 1]} : vector<2x128xf32> to vector<2x64xf32>
    %1069 = arith.truncf %1068 : vector<2x64xf32> to vector<2x64xbf16>
    %c0_318 = arith.constant 0 : index
    %c0_319 = arith.constant 0 : index
    %c0_320 = arith.constant 0 : index
    %1070 = vector.load %arg3[%c0_318, %c0_319, %c0_320] : memref<4x64x384xbf16, #tpu.memory_space<vmem>>, vector<1x64x384xbf16>
    %1071 = vector.shape_cast %1070 : vector<1x64x384xbf16> to vector<64x384xbf16>
    %cst_321 = arith.constant dense<0.000000e+00> : vector<2x384xf32>
    %1072 = tpu.matmul %1069, %1071, %cst_321 {dimension_numbers = #tpu.dot_dimension_numbers<[1], [0], [0], [1], [0, 0, 1, 1], [], []>} : vector<2x64xbf16>, vector<64x384xbf16>, vector<2x384xf32> -> vector<2x384xf32>
    %1073 = vector.extract_strided_slice %1001 {offsets = [0, 0], sizes = [2, 64], strides = [1, 1]} : vector<2x128xf32> to vector<2x64xf32>
    %1074 = arith.truncf %1073 : vector<2x64xf32> to vector<2x64xbf16>
    %c1_322 = arith.constant 1 : index
    %c0_323 = arith.constant 0 : index
    %c0_324 = arith.constant 0 : index
    %1075 = vector.load %arg3[%c1_322, %c0_323, %c0_324] : memref<4x64x384xbf16, #tpu.memory_space<vmem>>, vector<1x64x384xbf16>
    %1076 = vector.shape_cast %1075 : vector<1x64x384xbf16> to vector<64x384xbf16>
    %cst_325 = arith.constant dense<0.000000e+00> : vector<2x384xf32>
    %1077 = tpu.matmul %1074, %1076, %cst_325 {dimension_numbers = #tpu.dot_dimension_numbers<[1], [0], [0], [1], [0, 0, 1, 1], [], []>} : vector<2x64xbf16>, vector<64x384xbf16>, vector<2x384xf32> -> vector<2x384xf32>
    %1078 = vector.extract_strided_slice %1034 {offsets = [0, 0], sizes = [2, 64], strides = [1, 1]} : vector<2x128xf32> to vector<2x64xf32>
    %1079 = arith.truncf %1078 : vector<2x64xf32> to vector<2x64xbf16>
    %c2_326 = arith.constant 2 : index
    %c0_327 = arith.constant 0 : index
    %c0_328 = arith.constant 0 : index
    %1080 = vector.load %arg3[%c2_326, %c0_327, %c0_328] : memref<4x64x384xbf16, #tpu.memory_space<vmem>>, vector<1x64x384xbf16>
    %1081 = vector.shape_cast %1080 : vector<1x64x384xbf16> to vector<64x384xbf16>
    %cst_329 = arith.constant dense<0.000000e+00> : vector<2x384xf32>
    %1082 = tpu.matmul %1079, %1081, %cst_329 {dimension_numbers = #tpu.dot_dimension_numbers<[1], [0], [0], [1], [0, 0, 1, 1], [], []>} : vector<2x64xbf16>, vector<64x384xbf16>, vector<2x384xf32> -> vector<2x384xf32>
    %1083 = vector.extract_strided_slice %1067 {offsets = [0, 0], sizes = [2, 64], strides = [1, 1]} : vector<2x128xf32> to vector<2x64xf32>
    %1084 = arith.truncf %1083 : vector<2x64xf32> to vector<2x64xbf16>
    %c3_330 = arith.constant 3 : index
    %c0_331 = arith.constant 0 : index
    %c0_332 = arith.constant 0 : index
    %1085 = vector.load %arg3[%c3_330, %c0_331, %c0_332] : memref<4x64x384xbf16, #tpu.memory_space<vmem>>, vector<1x64x384xbf16>
    %1086 = vector.shape_cast %1085 : vector<1x64x384xbf16> to vector<64x384xbf16>
    %cst_333 = arith.constant dense<0.000000e+00> : vector<2x384xf32>
    %1087 = tpu.matmul %1084, %1086, %cst_333 {dimension_numbers = #tpu.dot_dimension_numbers<[1], [0], [0], [1], [0, 0, 1, 1], [], []>} : vector<2x64xbf16>, vector<64x384xbf16>, vector<2x384xf32> -> vector<2x384xf32>
    %c14 = arith.constant 14 : index
    %c0_334 = arith.constant 0 : index
    %1088 = vector.load %arg1[%c14, %c0_334] : memref<16x384xf32, #tpu.memory_space<vmem>>, vector<2x384xf32>
    %1089 = vector.extract_strided_slice %1088 {offsets = [0, 0], sizes = [2, 128], strides = [1, 1]} : vector<2x384xf32> to vector<2x128xf32>
    %1090 = vector.extract_strided_slice %1072 {offsets = [0, 0], sizes = [2, 128], strides = [1, 1]} : vector<2x384xf32> to vector<2x128xf32>
    %1091 = arith.addf %1089, %1090 : vector<2x128xf32>
    %1092 = arith.negf %1091 : vector<2x128xf32>
    %1093 = math.exp %1092 : vector<2x128xf32>
    %cst_335 = arith.constant 1.000000e+00 : f32
    %1094 = vector.broadcast %cst_335 : f32 to vector<2x128xf32>
    %1095 = arith.addf %1094, %1093 : vector<2x128xf32>
    %1096 = arith.divf %1094, %1095 : vector<2x128xf32>
    %1097 = vector.extract_strided_slice %1088 {offsets = [0, 128], sizes = [2, 128], strides = [1, 1]} : vector<2x384xf32> to vector<2x128xf32>
    %1098 = vector.extract_strided_slice %1072 {offsets = [0, 128], sizes = [2, 128], strides = [1, 1]} : vector<2x384xf32> to vector<2x128xf32>
    %1099 = arith.addf %1097, %1098 : vector<2x128xf32>
    %1100 = arith.negf %1099 : vector<2x128xf32>
    %1101 = math.exp %1100 : vector<2x128xf32>
    %cst_336 = arith.constant 1.000000e+00 : f32
    %1102 = vector.broadcast %cst_336 : f32 to vector<2x128xf32>
    %1103 = arith.addf %1102, %1101 : vector<2x128xf32>
    %1104 = arith.divf %1102, %1103 : vector<2x128xf32>
    %1105 = vector.extract_strided_slice %1088 {offsets = [0, 256], sizes = [2, 128], strides = [1, 1]} : vector<2x384xf32> to vector<2x128xf32>
    %1106 = vector.extract_strided_slice %1072 {offsets = [0, 256], sizes = [2, 128], strides = [1, 1]} : vector<2x384xf32> to vector<2x128xf32>
    %1107 = arith.addf %1106, %18 : vector<2x128xf32>
    %1108 = arith.mulf %1096, %1107 : vector<2x128xf32>
    %1109 = arith.addf %1105, %1108 : vector<2x128xf32>
    %1110 = math.tanh %1109 : vector<2x128xf32>
    %cst_337 = arith.constant 1.000000e+00 : f32
    %1111 = vector.broadcast %cst_337 : f32 to vector<2x128xf32>
    %1112 = arith.subf %1111, %1104 : vector<2x128xf32>
    %1113 = arith.mulf %1112, %1110 : vector<2x128xf32>
    %1114 = arith.mulf %1104, %968 : vector<2x128xf32>
    %1115 = arith.addf %1113, %1114 : vector<2x128xf32>
    %1116 = vector.extract_strided_slice %1115 {offsets = [0, 0], sizes = [2, 64], strides = [1, 1]} : vector<2x128xf32> to vector<2x64xf32>
    %1117 = arith.truncf %1116 : vector<2x64xf32> to vector<2x64xbf16>
    %c0_338 = arith.constant 0 : index
    %c0_339 = arith.constant 0 : index
    %c0_340 = arith.constant 0 : index
    %1118 = vector.load %arg4[%c0_338, %c0_339, %c0_340] : memref<3x64x384xbf16, #tpu.memory_space<vmem>>, vector<1x64x384xbf16>
    %1119 = vector.shape_cast %1118 : vector<1x64x384xbf16> to vector<64x384xbf16>
    %cst_341 = arith.constant dense<0.000000e+00> : vector<2x384xf32>
    %1120 = tpu.matmul %1117, %1119, %cst_341 {dimension_numbers = #tpu.dot_dimension_numbers<[1], [0], [0], [1], [0, 0, 1, 1], [], []>} : vector<2x64xbf16>, vector<64x384xbf16>, vector<2x384xf32> -> vector<2x384xf32>
    %1121 = arith.addf %1120, %6 : vector<2x384xf32>
    %1122 = vector.extract_strided_slice %1121 {offsets = [0, 0], sizes = [2, 128], strides = [1, 1]} : vector<2x384xf32> to vector<2x128xf32>
    %1123 = vector.extract_strided_slice %1077 {offsets = [0, 0], sizes = [2, 128], strides = [1, 1]} : vector<2x384xf32> to vector<2x128xf32>
    %1124 = arith.addf %1122, %1123 : vector<2x128xf32>
    %1125 = arith.negf %1124 : vector<2x128xf32>
    %1126 = math.exp %1125 : vector<2x128xf32>
    %cst_342 = arith.constant 1.000000e+00 : f32
    %1127 = vector.broadcast %cst_342 : f32 to vector<2x128xf32>
    %1128 = arith.addf %1127, %1126 : vector<2x128xf32>
    %1129 = arith.divf %1127, %1128 : vector<2x128xf32>
    %1130 = vector.extract_strided_slice %1121 {offsets = [0, 128], sizes = [2, 128], strides = [1, 1]} : vector<2x384xf32> to vector<2x128xf32>
    %1131 = vector.extract_strided_slice %1077 {offsets = [0, 128], sizes = [2, 128], strides = [1, 1]} : vector<2x384xf32> to vector<2x128xf32>
    %1132 = arith.addf %1130, %1131 : vector<2x128xf32>
    %1133 = arith.negf %1132 : vector<2x128xf32>
    %1134 = math.exp %1133 : vector<2x128xf32>
    %cst_343 = arith.constant 1.000000e+00 : f32
    %1135 = vector.broadcast %cst_343 : f32 to vector<2x128xf32>
    %1136 = arith.addf %1135, %1134 : vector<2x128xf32>
    %1137 = arith.divf %1135, %1136 : vector<2x128xf32>
    %1138 = vector.extract_strided_slice %1121 {offsets = [0, 256], sizes = [2, 128], strides = [1, 1]} : vector<2x384xf32> to vector<2x128xf32>
    %1139 = vector.extract_strided_slice %1077 {offsets = [0, 256], sizes = [2, 128], strides = [1, 1]} : vector<2x384xf32> to vector<2x128xf32>
    %1140 = arith.addf %1139, %22 : vector<2x128xf32>
    %1141 = arith.mulf %1129, %1140 : vector<2x128xf32>
    %1142 = arith.addf %1138, %1141 : vector<2x128xf32>
    %1143 = math.tanh %1142 : vector<2x128xf32>
    %cst_344 = arith.constant 1.000000e+00 : f32
    %1144 = vector.broadcast %cst_344 : f32 to vector<2x128xf32>
    %1145 = arith.subf %1144, %1137 : vector<2x128xf32>
    %1146 = arith.mulf %1145, %1143 : vector<2x128xf32>
    %1147 = arith.mulf %1137, %1001 : vector<2x128xf32>
    %1148 = arith.addf %1146, %1147 : vector<2x128xf32>
    %1149 = vector.extract_strided_slice %1148 {offsets = [0, 0], sizes = [2, 64], strides = [1, 1]} : vector<2x128xf32> to vector<2x64xf32>
    %1150 = arith.truncf %1149 : vector<2x64xf32> to vector<2x64xbf16>
    %c1_345 = arith.constant 1 : index
    %c0_346 = arith.constant 0 : index
    %c0_347 = arith.constant 0 : index
    %1151 = vector.load %arg4[%c1_345, %c0_346, %c0_347] : memref<3x64x384xbf16, #tpu.memory_space<vmem>>, vector<1x64x384xbf16>
    %1152 = vector.shape_cast %1151 : vector<1x64x384xbf16> to vector<64x384xbf16>
    %cst_348 = arith.constant dense<0.000000e+00> : vector<2x384xf32>
    %1153 = tpu.matmul %1150, %1152, %cst_348 {dimension_numbers = #tpu.dot_dimension_numbers<[1], [0], [0], [1], [0, 0, 1, 1], [], []>} : vector<2x64xbf16>, vector<64x384xbf16>, vector<2x384xf32> -> vector<2x384xf32>
    %1154 = arith.addf %1153, %10 : vector<2x384xf32>
    %1155 = vector.extract_strided_slice %1154 {offsets = [0, 0], sizes = [2, 128], strides = [1, 1]} : vector<2x384xf32> to vector<2x128xf32>
    %1156 = vector.extract_strided_slice %1082 {offsets = [0, 0], sizes = [2, 128], strides = [1, 1]} : vector<2x384xf32> to vector<2x128xf32>
    %1157 = arith.addf %1155, %1156 : vector<2x128xf32>
    %1158 = arith.negf %1157 : vector<2x128xf32>
    %1159 = math.exp %1158 : vector<2x128xf32>
    %cst_349 = arith.constant 1.000000e+00 : f32
    %1160 = vector.broadcast %cst_349 : f32 to vector<2x128xf32>
    %1161 = arith.addf %1160, %1159 : vector<2x128xf32>
    %1162 = arith.divf %1160, %1161 : vector<2x128xf32>
    %1163 = vector.extract_strided_slice %1154 {offsets = [0, 128], sizes = [2, 128], strides = [1, 1]} : vector<2x384xf32> to vector<2x128xf32>
    %1164 = vector.extract_strided_slice %1082 {offsets = [0, 128], sizes = [2, 128], strides = [1, 1]} : vector<2x384xf32> to vector<2x128xf32>
    %1165 = arith.addf %1163, %1164 : vector<2x128xf32>
    %1166 = arith.negf %1165 : vector<2x128xf32>
    %1167 = math.exp %1166 : vector<2x128xf32>
    %cst_350 = arith.constant 1.000000e+00 : f32
    %1168 = vector.broadcast %cst_350 : f32 to vector<2x128xf32>
    %1169 = arith.addf %1168, %1167 : vector<2x128xf32>
    %1170 = arith.divf %1168, %1169 : vector<2x128xf32>
    %1171 = vector.extract_strided_slice %1154 {offsets = [0, 256], sizes = [2, 128], strides = [1, 1]} : vector<2x384xf32> to vector<2x128xf32>
    %1172 = vector.extract_strided_slice %1082 {offsets = [0, 256], sizes = [2, 128], strides = [1, 1]} : vector<2x384xf32> to vector<2x128xf32>
    %1173 = arith.addf %1172, %26 : vector<2x128xf32>
    %1174 = arith.mulf %1162, %1173 : vector<2x128xf32>
    %1175 = arith.addf %1171, %1174 : vector<2x128xf32>
    %1176 = math.tanh %1175 : vector<2x128xf32>
    %cst_351 = arith.constant 1.000000e+00 : f32
    %1177 = vector.broadcast %cst_351 : f32 to vector<2x128xf32>
    %1178 = arith.subf %1177, %1170 : vector<2x128xf32>
    %1179 = arith.mulf %1178, %1176 : vector<2x128xf32>
    %1180 = arith.mulf %1170, %1034 : vector<2x128xf32>
    %1181 = arith.addf %1179, %1180 : vector<2x128xf32>
    %1182 = vector.extract_strided_slice %1181 {offsets = [0, 0], sizes = [2, 64], strides = [1, 1]} : vector<2x128xf32> to vector<2x64xf32>
    %1183 = arith.truncf %1182 : vector<2x64xf32> to vector<2x64xbf16>
    %c2_352 = arith.constant 2 : index
    %c0_353 = arith.constant 0 : index
    %c0_354 = arith.constant 0 : index
    %1184 = vector.load %arg4[%c2_352, %c0_353, %c0_354] : memref<3x64x384xbf16, #tpu.memory_space<vmem>>, vector<1x64x384xbf16>
    %1185 = vector.shape_cast %1184 : vector<1x64x384xbf16> to vector<64x384xbf16>
    %cst_355 = arith.constant dense<0.000000e+00> : vector<2x384xf32>
    %1186 = tpu.matmul %1183, %1185, %cst_355 {dimension_numbers = #tpu.dot_dimension_numbers<[1], [0], [0], [1], [0, 0, 1, 1], [], []>} : vector<2x64xbf16>, vector<64x384xbf16>, vector<2x384xf32> -> vector<2x384xf32>
    %1187 = arith.addf %1186, %14 : vector<2x384xf32>
    %1188 = vector.extract_strided_slice %1187 {offsets = [0, 0], sizes = [2, 128], strides = [1, 1]} : vector<2x384xf32> to vector<2x128xf32>
    %1189 = vector.extract_strided_slice %1087 {offsets = [0, 0], sizes = [2, 128], strides = [1, 1]} : vector<2x384xf32> to vector<2x128xf32>
    %1190 = arith.addf %1188, %1189 : vector<2x128xf32>
    %1191 = arith.negf %1190 : vector<2x128xf32>
    %1192 = math.exp %1191 : vector<2x128xf32>
    %cst_356 = arith.constant 1.000000e+00 : f32
    %1193 = vector.broadcast %cst_356 : f32 to vector<2x128xf32>
    %1194 = arith.addf %1193, %1192 : vector<2x128xf32>
    %1195 = arith.divf %1193, %1194 : vector<2x128xf32>
    %1196 = vector.extract_strided_slice %1187 {offsets = [0, 128], sizes = [2, 128], strides = [1, 1]} : vector<2x384xf32> to vector<2x128xf32>
    %1197 = vector.extract_strided_slice %1087 {offsets = [0, 128], sizes = [2, 128], strides = [1, 1]} : vector<2x384xf32> to vector<2x128xf32>
    %1198 = arith.addf %1196, %1197 : vector<2x128xf32>
    %1199 = arith.negf %1198 : vector<2x128xf32>
    %1200 = math.exp %1199 : vector<2x128xf32>
    %cst_357 = arith.constant 1.000000e+00 : f32
    %1201 = vector.broadcast %cst_357 : f32 to vector<2x128xf32>
    %1202 = arith.addf %1201, %1200 : vector<2x128xf32>
    %1203 = arith.divf %1201, %1202 : vector<2x128xf32>
    %1204 = vector.extract_strided_slice %1187 {offsets = [0, 256], sizes = [2, 128], strides = [1, 1]} : vector<2x384xf32> to vector<2x128xf32>
    %1205 = vector.extract_strided_slice %1087 {offsets = [0, 256], sizes = [2, 128], strides = [1, 1]} : vector<2x384xf32> to vector<2x128xf32>
    %1206 = arith.addf %1205, %30 : vector<2x128xf32>
    %1207 = arith.mulf %1195, %1206 : vector<2x128xf32>
    %1208 = arith.addf %1204, %1207 : vector<2x128xf32>
    %1209 = math.tanh %1208 : vector<2x128xf32>
    %cst_358 = arith.constant 1.000000e+00 : f32
    %1210 = vector.broadcast %cst_358 : f32 to vector<2x128xf32>
    %1211 = arith.subf %1210, %1203 : vector<2x128xf32>
    %1212 = arith.mulf %1211, %1209 : vector<2x128xf32>
    %1213 = arith.mulf %1203, %1067 : vector<2x128xf32>
    %1214 = arith.addf %1212, %1213 : vector<2x128xf32>
    %1215 = tpu.concatenate %185, %332, %479, %626, %773, %920, %1067, %1214 in 0 : vector<2x128xf32>, vector<2x128xf32>, vector<2x128xf32>, vector<2x128xf32>, vector<2x128xf32>, vector<2x128xf32>, vector<2x128xf32>, vector<2x128xf32> -> vector<16x128xf32>
    %c0_359 = arith.constant 0 : index
    %c0_360 = arith.constant 0 : index
    %1216 = vector.load %arg7[%c0_359, %c0_360] : memref<16x128xf32, #tpu.memory_space<vmem>>, vector<16x128xf32>
    tpu.vector_store %arg7[%c0_359, %c0_360], %1215 {strides = array<i32>} : memref<16x128xf32, #tpu.memory_space<vmem>>, vector<16x128xf32>,
    %c0_361 = arith.constant 0 : index
    %c0_362 = arith.constant 0 : index
    %c0_363 = arith.constant 0 : index
    %1217 = vector.load %arg9[%c0_361, %c0_362, %c0_363] : memref<4x2x128xf32, #tpu.memory_space<vmem>>, vector<1x2x128xf32>
    %1218 = vector.shape_cast %1217 : vector<1x2x128xf32> to vector<2x128xf32>
    %1219 = vector.shape_cast %1115 : vector<2x128xf32> to vector<1x2x128xf32>
    tpu.vector_store %arg9[%c0_361, %c0_362, %c0_363], %1219 {strides = array<i32>} : memref<4x2x128xf32, #tpu.memory_space<vmem>>, vector<1x2x128xf32>,
    %c1_364 = arith.constant 1 : index
    %c0_365 = arith.constant 0 : index
    %c0_366 = arith.constant 0 : index
    %1220 = vector.load %arg9[%c1_364, %c0_365, %c0_366] : memref<4x2x128xf32, #tpu.memory_space<vmem>>, vector<1x2x128xf32>
    %1221 = vector.shape_cast %1220 : vector<1x2x128xf32> to vector<2x128xf32>
    %1222 = vector.shape_cast %1148 : vector<2x128xf32> to vector<1x2x128xf32>
    tpu.vector_store %arg9[%c1_364, %c0_365, %c0_366], %1222 {strides = array<i32>} : memref<4x2x128xf32, #tpu.memory_space<vmem>>, vector<1x2x128xf32>,
    %c2_367 = arith.constant 2 : index
    %c0_368 = arith.constant 0 : index
    %c0_369 = arith.constant 0 : index
    %1223 = vector.load %arg9[%c2_367, %c0_368, %c0_369] : memref<4x2x128xf32, #tpu.memory_space<vmem>>, vector<1x2x128xf32>
    %1224 = vector.shape_cast %1223 : vector<1x2x128xf32> to vector<2x128xf32>
    %1225 = vector.shape_cast %1181 : vector<2x128xf32> to vector<1x2x128xf32>
    tpu.vector_store %arg9[%c2_367, %c0_368, %c0_369], %1225 {strides = array<i32>} : memref<4x2x128xf32, #tpu.memory_space<vmem>>, vector<1x2x128xf32>,
    %c3_370 = arith.constant 3 : index
    %c0_371 = arith.constant 0 : index
    %c0_372 = arith.constant 0 : index
    %1226 = vector.load %arg9[%c3_370, %c0_371, %c0_372] : memref<4x2x128xf32, #tpu.memory_space<vmem>>, vector<1x2x128xf32>
    %1227 = vector.shape_cast %1226 : vector<1x2x128xf32> to vector<2x128xf32>
    %1228 = vector.shape_cast %1214 : vector<2x128xf32> to vector<1x2x128xf32>
    tpu.vector_store %arg9[%c3_370, %c0_371, %c0_372], %1228 {strides = array<i32>} : memref<4x2x128xf32, #tpu.memory_space<vmem>>, vector<1x2x128xf32>,
    %c0_i32_373 = arith.constant 0 : i32
    %1229 = arith.cmpi eq, %arg0, %c0_i32_373 : i32
    %1230 = arith.extui %1229 : i1 to i32
    %c0_i32_374 = arith.constant 0 : i32
    %1231 = arith.cmpi ne, %1230, %c0_i32_374 : i32
    scf.if %1231 {
      %c0_375 = arith.constant 0 : index
      %c0_376 = arith.constant 0 : index
      %c0_377 = arith.constant 0 : index
      %1232 = vector.load %arg8[%c0_375, %c0_376, %c0_377] : memref<4x2x128xf32, #tpu.memory_space<vmem>>, vector<1x2x128xf32>
      %1233 = vector.shape_cast %1232 : vector<1x2x128xf32> to vector<2x128xf32>
      %1234 = vector.shape_cast %1115 : vector<2x128xf32> to vector<1x2x128xf32>
      tpu.vector_store %arg8[%c0_375, %c0_376, %c0_377], %1234 {strides = array<i32>} : memref<4x2x128xf32, #tpu.memory_space<vmem>>, vector<1x2x128xf32>,
      %c1_378 = arith.constant 1 : index
      %c0_379 = arith.constant 0 : index
      %c0_380 = arith.constant 0 : index
      %1235 = vector.load %arg8[%c1_378, %c0_379, %c0_380] : memref<4x2x128xf32, #tpu.memory_space<vmem>>, vector<1x2x128xf32>
      %1236 = vector.shape_cast %1235 : vector<1x2x128xf32> to vector<2x128xf32>
      %1237 = vector.shape_cast %1148 : vector<2x128xf32> to vector<1x2x128xf32>
      tpu.vector_store %arg8[%c1_378, %c0_379, %c0_380], %1237 {strides = array<i32>} : memref<4x2x128xf32, #tpu.memory_space<vmem>>, vector<1x2x128xf32>,
      %c2_381 = arith.constant 2 : index
      %c0_382 = arith.constant 0 : index
      %c0_383 = arith.constant 0 : index
      %1238 = vector.load %arg8[%c2_381, %c0_382, %c0_383] : memref<4x2x128xf32, #tpu.memory_space<vmem>>, vector<1x2x128xf32>
      %1239 = vector.shape_cast %1238 : vector<1x2x128xf32> to vector<2x128xf32>
      %1240 = vector.shape_cast %1181 : vector<2x128xf32> to vector<1x2x128xf32>
      tpu.vector_store %arg8[%c2_381, %c0_382, %c0_383], %1240 {strides = array<i32>} : memref<4x2x128xf32, #tpu.memory_space<vmem>>, vector<1x2x128xf32>,
      %c3_384 = arith.constant 3 : index
      %c0_385 = arith.constant 0 : index
      %c0_386 = arith.constant 0 : index
      %1241 = vector.load %arg8[%c3_384, %c0_385, %c0_386] : memref<4x2x128xf32, #tpu.memory_space<vmem>>, vector<1x2x128xf32>
      %1242 = vector.shape_cast %1241 : vector<1x2x128xf32> to vector<2x128xf32>
      %1243 = vector.shape_cast %1214 : vector<2x128xf32> to vector<1x2x128xf32>
      tpu.vector_store %arg8[%c3_384, %c0_385, %c0_386], %1243 {strides = array<i32>} : memref<4x2x128xf32, #tpu.memory_space<vmem>>, vector<1x2x128xf32>,
    } else {
    }
    return
  }
  func.func @transform_0(%arg0: i32) -> (i32, i32) {
    %c0_i32 = arith.constant 0 : i32
    %c0_i32_0 = arith.constant 0 : i32
    return %arg0, %c0_i32 : i32, i32
  }
  func.func @transform_1(%arg0: i32) -> (i32, i32, i32) {
    %c0_i32 = arith.constant 0 : i32
    %c0_i32_0 = arith.constant 0 : i32
    %c0_i32_1 = arith.constant 0 : i32
    %c0_i32_2 = arith.constant 0 : i32
    return %c0_i32, %c0_i32_0, %c0_i32_1 : i32, i32, i32
  }
  func.func @transform_2(%arg0: i32) -> (i32, i32, i32) {
    %c0_i32 = arith.constant 0 : i32
    %c0_i32_0 = arith.constant 0 : i32
    %c0_i32_1 = arith.constant 0 : i32
    %c0_i32_2 = arith.constant 0 : i32
    return %c0_i32, %c0_i32_0, %c0_i32_1 : i32, i32, i32
  }
  func.func @transform_3(%arg0: i32) -> (i32, i32, i32) {
    %c0_i32 = arith.constant 0 : i32
    %c0_i32_0 = arith.constant 0 : i32
    %c0_i32_1 = arith.constant 0 : i32
    %c0_i32_2 = arith.constant 0 : i32
    return %c0_i32, %c0_i32_0, %c0_i32_1 : i32, i32, i32
  }
  func.func @transform_4(%arg0: i32) -> (i32, i32, i32) {
    %c0_i32 = arith.constant 0 : i32
    %c0_i32_0 = arith.constant 0 : i32
    %c0_i32_1 = arith.constant 0 : i32
    %c0_i32_2 = arith.constant 0 : i32
    return %c0_i32, %c0_i32_0, %c0_i32_1 : i32, i32, i32
  }
  func.func @transform_5(%arg0: i32) -> (i32, i32, i32) {
    %c0_i32 = arith.constant 0 : i32
    %c0_i32_0 = arith.constant 0 : i32
    %c0_i32_1 = arith.constant 0 : i32
    %c0_i32_2 = arith.constant 0 : i32
    return %c0_i32, %c0_i32_0, %c0_i32_1 : i32, i32, i32
  }
  func.func @transform_6(%arg0: i32) -> (i32, i32) {
    %c0_i32 = arith.constant 0 : i32
    %c0_i32_0 = arith.constant 0 : i32
    return %arg0, %c0_i32 : i32, i32
  }
  func.func @transform_7(%arg0: i32) -> (i32, i32, i32) {
    %c0_i32 = arith.constant 0 : i32
    %c0_i32_0 = arith.constant 0 : i32
    %c0_i32_1 = arith.constant 0 : i32
    %c0_i32_2 = arith.constant 0 : i32
    return %c0_i32, %c0_i32_0, %c0_i32_1 : i32, i32, i32
  }
}

</mosaic_0001>

<llo_original>
// kernel: decoder_forward.1
$region0: #{decoder_forward.1}
  #allocation0 [shape = 'u32[]', space=smem, size = 0x4, offset = 0x4, fixed_abs, tag = 'smem constant byte address 0x4 - core index']
  #allocation1 [shape = 'u32[144,128]{1,0:T(1,128)}', space=vmem, size = 0x12000, scoped, tag = 'internal scratch']
  #allocation2 [shape = 'f32[4,2,128]{2,1,0:T(2,128)}', space=vmem, size = 0x1000, scoped, tag = 'scratch operand']
  %s0 = inlined_call_operand.vmem [shape: f32[16,384], index: 0, kind: input, shape index: {}]
  %s1 = inlined_call_operand.vmem [shape: f32[4,2,128], index: 1, kind: input, shape index: {}]
  %s2 = inlined_call_operand.hbm [shape: bf16[4,64,384], index: 2, kind: input, shape index: {}]
  %s3 = inlined_call_operand.hbm [shape: bf16[3,64,384], index: 3, kind: input, shape index: {}]
  %s4 = inlined_call_operand.vmem [shape: f32[3,1,384], index: 4, kind: input, shape index: {}]
  %s5 = inlined_call_operand.vmem [shape: f32[4,1,128], index: 5, kind: input, shape index: {}]
  %s6 = inlined_call_operand.vmem [shape: f32[16,128], index: 6, kind: output, shape index: {0}]
  %s7 = inlined_call_operand.hbm [shape: f32[4,2,128], index: 7, kind: output, shape index: {1}]
  %8 = xla_tuple %s6, %s7
  %s9 = sld [smem:[#allocation0]]
  $region58: #{decoder_forward.1} parent=0
    _
  %s11 = ssub.s32 1, %s9
  %s12 = scalar_select 0, %s11, %s9
  $region1: #{decoder_forward.1} parent=0
    #allocation3 [shape = 'u8[196608]{0}', space=vmem, size = 0x30000, scoped, tag = 'input window, operand 2, single buffered']
    #allocation4 [shape = 's32[1]{0}', space=sflag, size = 0x4, scoped, tag = 'scoped memory for decoder_forward.1']
    #allocation5 [shape = 's32[1]{0}', space=sflag, size = 0x4, scoped, tag = 'scoped memory for decoder_forward.1']
    #allocation6 [shape = 'u8[147456]{0}', space=vmem, size = 0x24000, scoped, tag = 'input window, operand 3, single buffered']
    #allocation7 [shape = 's32[1]{0}', space=sflag, size = 0x4, scoped, tag = 'scoped memory for decoder_forward.1']
    #allocation8 [shape = 'u8[4096]{0}', space=vmem, size = 0x1000, scoped, tag = 'output window, operand 1, single buffered']
    %13 = vsyncpa [#allocation4], 0
    %14 = vsyncpa [#allocation7], 0
    %15 = vsyncpa [#allocation5], 0
    // Predicated region
    $region2: #{decoder_forward.1} parent=1 // pred_check
      _
    $region3: #{decoder_forward.1} parent=1 // pred_check_branch
      %17 = sbr.rel (0) target = $region5
    $region4: #{decoder_forward.1} parent=1 // pred_region
      _
    $region5: #{decoder_forward.1} parent=1 // pred_fallthru
      _
    // Predicated region
    $region6: #{decoder_forward.1} parent=1 // pred_check
      _
    $region7: #{decoder_forward.1} parent=1 // pred_check_branch
      %19 = sbr.rel (0) target = $region9
    $region8: #{decoder_forward.1} parent=1 // pred_region
      _
    $region9: #{decoder_forward.1} parent=1 // pred_fallthru
      _
    // Predicated region
    $region10: #{decoder_forward.1} parent=1 // pred_check
      _
    $region11: #{decoder_forward.1} parent=1 // pred_check_branch
      %21 = sbr.rel (0) target = $region13
    $region12: #{decoder_forward.1} parent=1 // pred_region
      %s23 = ssub.s32 6144, 6144
      %24 = vsyncadd [#allocation4], %s23
      %s25 = sshll.u32 [#allocation3], 4
      %s26 = int_to_ptr.vmem [resolvable:$true] %s25
      %31 = dma.hbm_to_vmem [thread:$0]  %s2, 6144, %s26, [#allocation4], 192, 192, 12
    $region13: #{decoder_forward.1} parent=1 // pred_fallthru
      _
    // Predicated region
    $region14: #{decoder_forward.1} parent=1 // pred_check
      _
    $region15: #{decoder_forward.1} parent=1 // pred_check_branch
      %33 = sbr.rel (0) target = $region17
    $region16: #{decoder_forward.1} parent=1 // pred_region
      %s35 = ssub.s32 4608, 4608
      %36 = vsyncadd [#allocation7], %s35
      %s37 = sshll.u32 [#allocation6], 4
      %s38 = int_to_ptr.vmem [resolvable:$true] %s37
      %43 = dma.hbm_to_vmem [thread:$0]  %s3, 4608, %s38, [#allocation7], 192, 192, 12
    $region17: #{decoder_forward.1} parent=1 // pred_fallthru
      _
    // Predicated region
    $region18: #{decoder_forward.1} parent=1 // pred_check
      _
    $region19: #{decoder_forward.1} parent=1 // pred_check_branch
      %45 = sbr.rel (0) target = $region21
    $region20: #{decoder_forward.1} parent=1 // pred_region
      _
    $region21: #{decoder_forward.1} parent=1 // pred_fallthru
      _
    // Predicated region
    $region22: #{decoder_forward.1} parent=1 // pred_check
      _
    $region23: #{decoder_forward.1} parent=1 // pred_check_branch
      %47 = sbr.rel (0) target = $region25
    $region24: #{decoder_forward.1} parent=1 // pred_region
      _
    $region25: #{decoder_forward.1} parent=1 // pred_fallthru
      _
    // Predicated region
    $region26: #{decoder_forward.1} parent=1 // pred_check
      _
    $region27: #{decoder_forward.1} parent=1 // pred_check_branch
      %49 = sbr.rel (0) target = $region29
    $region28: #{decoder_forward.1} parent=1 // pred_region
      %50 = dma.done [#allocation4], 6144
    $region29: #{decoder_forward.1} parent=1 // pred_fallthru
      _
    // Predicated region
    $region30: #{decoder_forward.1} parent=1 // pred_check
      _
    $region31: #{decoder_forward.1} parent=1 // pred_check_branch
      %52 = sbr.rel (0) target = $region33
    $region32: #{decoder_forward.1} parent=1 // pred_region
      %53 = dma.done [#allocation7], 4608
    $region33: #{decoder_forward.1} parent=1 // pred_fallthru
      _
    %p55 = scmp.eq.s32.totalorder 0, 0
    // Predicated region
    $region34: #{decoder_forward.1} parent=1 // pred_check
      %p56 = pneg %p55
    $region35: #{decoder_forward.1} parent=1 // pred_check_branch
      %58 = sbr.rel (%p56) target = $region37
    $region36: #{decoder_forward.1} parent=1 // pred_region
      %v59 = vld [vmem:[%s1] sm:$0x3]
      %v60 = vld [vmem:[%s1 + $0x2] sm:$0x3]
      %v61 = vld [vmem:[%s1 + $0x4] sm:$0x3]
      %v62 = vld [vmem:[%s1 + $0x6] sm:$0x3]
      %63 = vst [vmem:[#allocation2] sm:$0x3] %v59
      %64 = vst [vmem:[#allocation2 + $0x2] sm:$0x3] %v60
      %65 = vst [vmem:[#allocation2 + $0x4] sm:$0x3] %v61
      %66 = vst [vmem:[#allocation2 + $0x6] sm:$0x3] %v62
    $region37: #{decoder_forward.1} parent=1 // pred_fallthru
      _
    %v67 = vld [vmem:[%s4] sm:$0x7]
    %v69 = vlaneseq
    %v70 = vshrl.u32 %v69, 7
    %v71 = vsub.s32 0, %v70
    %v72 = vrot.slane %v67, %v71
    %v73 = vlaneseq
    %v74 = vshrl.u32 %v73, 7
    %v75 = vsub.s32 1, %v74
    %v76 = vrot.slane %v67, %v75
    %v77 = vlaneseq
    %v78 = vshrl.u32 %v77, 7
    %v79 = vsub.s32 2, %v78
    %v80 = vrot.slane %v67, %v79
    %s84 = scalar_lea.vmem %s4, 3
    %v85 = vld [vmem:[%s84] sm:$0x7]
    %v87 = vlaneseq
    %v88 = vshrl.u32 %v87, 7
    %v89 = vsub.s32 0, %v88
    %v90 = vrot.slane %v85, %v89
    %v91 = vlaneseq
    %v92 = vshrl.u32 %v91, 7
    %v93 = vsub.s32 1, %v92
    %v94 = vrot.slane %v85, %v93
    %v95 = vlaneseq
    %v96 = vshrl.u32 %v95, 7
    %v97 = vsub.s32 2, %v96
    %v98 = vrot.slane %v85, %v97
    %s102 = scalar_lea.vmem %s4, 6
    %v103 = vld [vmem:[%s102] sm:$0x7]
    %v105 = vlaneseq
    %v106 = vshrl.u32 %v105, 7
    %v107 = vsub.s32 0, %v106
    %v108 = vrot.slane %v103, %v107
    %v109 = vlaneseq
    %v110 = vshrl.u32 %v109, 7
    %v111 = vsub.s32 1, %v110
    %v112 = vrot.slane %v103, %v111
    %v113 = vlaneseq
    %v114 = vshrl.u32 %v113, 7
    %v115 = vsub.s32 2, %v114
    %v116 = vrot.slane %v103, %v115
    %v120 = vld [vmem:[%s5] sm:$0x1]
    %v122 = vlaneseq
    %v123 = vshrl.u32 %v122, 7
    %v124 = vsub.s32 0, %v123
    %v125 = vrot.slane %v120, %v124
    %s127 = scalar_lea.vmem %s5, 1
    %v128 = vld [vmem:[%s127] sm:$0x1]
    %v130 = vlaneseq
    %v131 = vshrl.u32 %v130, 7
    %v132 = vsub.s32 0, %v131
    %v133 = vrot.slane %v128, %v132
    %s135 = scalar_lea.vmem %s5, 2
    %v136 = vld [vmem:[%s135] sm:$0x1]
    %v138 = vlaneseq
    %v139 = vshrl.u32 %v138, 7
    %v140 = vsub.s32 0, %v139
    %v141 = vrot.slane %v136, %v140
    %s143 = scalar_lea.vmem %s5, 3
    %v144 = vld [vmem:[%s143] sm:$0x1]
    %v146 = vlaneseq
    %v147 = vshrl.u32 %v146, 7
    %v148 = vsub.s32 0, %v147
    %v149 = vrot.slane %v144, %v148
    %v151 = vld [vmem:[#allocation2] sm:$0x3]
    %s152 = scalar_lea.vmem [#allocation2], 2
    %v153 = vld [vmem:[%s152] sm:$0x3]
    %s154 = scalar_lea.vmem [#allocation2], 4
    %v155 = vld [vmem:[%s154] sm:$0x3]
    %s156 = scalar_lea.vmem [#allocation2], 6
    %v157 = vld [vmem:[%s156] sm:$0x3]
    %v158 = vpack.c.bf16 %v151, %v151
    %v159 = vld [vmem:[#allocation3] sm:$0xff]
    %v160 = vld [vmem:[#allocation3 + $0x8] sm:$0xf]
    %v161 = vld [vmem:[#allocation3 + $0xc] sm:$0xff]
    %v162 = vld [vmem:[#allocation3 + $0x14] sm:$0xf]
    %v163 = vld [vmem:[#allocation3 + $0x18] sm:$0xff]
    %v164 = vld [vmem:[#allocation3 + $0x20] sm:$0xf]
    %v165 = vld [vmem:[#allocation3 + $0x24] sm:$0xff]
    %v166 = vld [vmem:[#allocation3 + $0x2c] sm:$0xf]
    %v167 = vld [vmem:[#allocation3 + $0x30] sm:$0xff]
    %v168 = vld [vmem:[#allocation3 + $0x38] sm:$0xf]
    %v169 = vld [vmem:[#allocation3 + $0x3c] sm:$0xff]
    %v170 = vld [vmem:[#allocation3 + $0x44] sm:$0xf]
    %v171 = vld [vmem:[#allocation3 + $0x48] sm:$0xff]
    %v172 = vld [vmem:[#allocation3 + $0x50] sm:$0xf]
    %v173 = vld [vmem:[#allocation3 + $0x54] sm:$0xff]
    %v174 = vld [vmem:[#allocation3 + $0x5c] sm:$0xf]
    %v191 = vunpack.c.l.b16 %v159
    %v192 = vunpack.c.h.b16 %v159
    %v193 = vunpack.c.l.b16 %v160
    %v194 = vunpack.c.l.b16 %v161
    %v195 = vunpack.c.h.b16 %v161
    %v196 = vunpack.c.l.b16 %v162
    %v197 = vunpack.c.l.b16 %v163
    %v198 = vunpack.c.h.b16 %v163
    %v199 = vunpack.c.l.b16 %v164
    %v200 = vunpack.c.l.b16 %v165
    %v201 = vunpack.c.h.b16 %v165
    %v202 = vunpack.c.l.b16 %v166
    %v203 = vunpack.c.l.b16 %v167
    %v204 = vunpack.c.h.b16 %v167
    %v205 = vunpack.c.l.b16 %v168
    %v206 = vunpack.c.l.b16 %v169
    %v207 = vunpack.c.h.b16 %v169
    %v208 = vunpack.c.l.b16 %v170
    %v209 = vunpack.c.l.b16 %v171
    %v210 = vunpack.c.h.b16 %v171
    %v211 = vunpack.c.l.b16 %v172
    %v212 = vunpack.c.l.b16 %v173
    %v213 = vunpack.c.h.b16 %v173
    %v214 = vunpack.c.l.b16 %v174
    %v215 = vpack.c.b16 %v194, %v191
    %v216 = vpack.c.b16 %v195, %v192
    %v217 = vpack.c.b16 %v196, %v193
    %v218 = vpack.c.b16 %v200, %v197
    %v219 = vpack.c.b16 %v201, %v198
    %v220 = vpack.c.b16 %v202, %v199
    %v221 = vpack.c.b16 %v206, %v203
    %v222 = vpack.c.b16 %v207, %v204
    %v223 = vpack.c.b16 %v208, %v205
    %v224 = vpack.c.b16 %v212, %v209
    %v225 = vpack.c.b16 %v213, %v210
    %v226 = vpack.c.b16 %v214, %v211
    %vm239 = vcmask 523264
    %v241 = vsel %vm239, %v158, 0
    %243 = vmatprep.subr.bf16.mxu0 %v216
    %244 = vmatpush1.bf16.msra.mxu0 %v215
    %245 = vmatprep.subr.bf16.mxu0 %v219
    %246 = vmatpush1.bf16.msra.mxu0 %v218
    %247 = vmatprep.subr.bf16.mxu0 %v222
    %248 = vmatpush1.bf16.msra.mxu0 %v221
    %249 = vmatprep.subr.bf16.mxu0 %v225
    %250 = vmatpush1.bf16.msra.mxu0 %v224
    %251 = vmatprep.subr.bf16.mxu0 0
    %252 = vmatpush1.bf16.msra.mxu0 0
    %253 = vmatprep.subr.bf16.mxu0 0
    %254 = vmatpush1.bf16.msra.mxu0 0
    %255 = vmatprep.subr.bf16.mxu0 0
    %256 = vmatpush1.bf16.msra.mxu0 0
    %257 = vmatprep.subr.bf16.mxu0 0
    %258 = vmatpush1.bf16.msra.mxu0 0
    %259 = vmatprep.subr.bf16.mxu0 0
    %260 = vmatpush1.bf16.msra.mxu0 0
    %261 = vmatprep.subr.bf16.mxu0 0
    %262 = vmatpush1.bf16.msra.mxu0 0
    %263 = vmatprep.subr.bf16.mxu0 0
    %264 = vmatpush1.bf16.msra.mxu0 0
    %265 = vmatprep.subr.bf16.mxu0 0
    %266 = vmatpush1.bf16.msra.mxu0 0
    %267 = vmatprep.subr.bf16.mxu0 0
    %268 = vmatpush1.bf16.msra.mxu0 0
    %269 = vmatprep.subr.bf16.mxu0 0
    %270 = vmatpush1.bf16.msra.mxu0 0
    %271 = vmatprep.subr.bf16.mxu0 0
    %272 = vmatpush1.bf16.msra.mxu0 0
    %273 = vmatprep.subr.bf16.mxu0 0
    %274 = vmatpush1.bf16.msra.mxu0 0
    %275 = vmatprep.mubr.bf16.mxu0 0
    %276 = vmatmul.mubr.bf16.gmra.mrb[0].mxu0 %v241
    %v277 = vpop.f32.mrb[0].mxu0
    %v278 = vadd.f32 0.0, %v277
    %v279 = vpop.f32.mrb[0].mxu0
    %v280 = vadd.f32 0.0, %v279
    %v281 = vpop.f32.mrb[0].mxu0
    %v282 = vpop.f32.mrb[0].mxu0
    %283 = vdwg.mxu0
    %284 = vmatprep.subr.bf16.mxu0 0
    %285 = vmatpush1.bf16.msra.mxu0 %v217
    %286 = vmatprep.subr.bf16.mxu0 0
    %287 = vmatpush1.bf16.msra.mxu0 %v220
    %288 = vmatprep.subr.bf16.mxu0 0
    %289 = vmatpush1.bf16.msra.mxu0 %v223
    %290 = vmatprep.subr.bf16.mxu0 0
    %291 = vmatpush1.bf16.msra.mxu0 %v226
    %292 = vmatprep.subr.bf16.mxu0 0
    %293 = vmatpush1.bf16.msra.mxu0 0
    %294 = vmatprep.subr.bf16.mxu0 0
    %295 = vmatpush1.bf16.msra.mxu0 0
    %296 = vmatprep.subr.bf16.mxu0 0
    %297 = vmatpush1.bf16.msra.mxu0 0
    %298 = vmatprep.subr.bf16.mxu0 0
    %299 = vmatpush1.bf16.msra.mxu0 0
    %300 = vmatprep.subr.bf16.mxu0 0
    %301 = vmatpush1.bf16.msra.mxu0 0
    %302 = vmatprep.subr.bf16.mxu0 0
    %303 = vmatpush1.bf16.msra.mxu0 0
    %304 = vmatprep.subr.bf16.mxu0 0
    %305 = vmatpush1.bf16.msra.mxu0 0
    %306 = vmatprep.subr.bf16.mxu0 0
    %307 = vmatpush1.bf16.msra.mxu0 0
    %308 = vmatprep.subr.bf16.mxu0 0
    %309 = vmatpush1.bf16.msra.mxu0 0
    %310 = vmatprep.subr.bf16.mxu0 0
    %311 = vmatpush1.bf16.msra.mxu0 0
    %312 = vmatprep.subr.bf16.mxu0 0
    %313 = vmatpush1.bf16.msra.mxu0 0
    %314 = vmatprep.subr.bf16.mxu0 0
    %315 = vmatpush1.bf16.msra.mxu0 0
    %316 = vmatprep.mubr.bf16.mxu0 0
    %317 = vmatmul.mubr.bf16.gmra.mrb[0].mxu0 %v241
    %v318 = vpop.f32.mrb[0].mxu0
    %v319 = vadd.f32 0.0, %v318
    %v320 = vpop.f32.mrb[0].mxu0
    %v321 = vpop.f32.mrb[0].mxu0
    %v322 = vpop.f32.mrb[0].mxu0
    %323 = vdwg.mxu0
    %v324 = vpack.c.bf16 %v153, %v153
    %s325 = scalar_lea.vmem [#allocation3], 96
    %v326 = vld [vmem:[%s325] sm:$0xff]
    %v327 = vld [vmem:[%s325 + $0x8] sm:$0xf]
    %v328 = vld [vmem:[%s325 + $0xc] sm:$0xff]
    %v329 = vld [vmem:[%s325 + $0x14] sm:$0xf]
    %v330 = vld [vmem:[%s325 + $0x18] sm:$0xff]
    %v331 = vld [vmem:[%s325 + $0x20] sm:$0xf]
    %v332 = vld [vmem:[%s325 + $0x24] sm:$0xff]
    %v333 = vld [vmem:[%s325 + $0x2c] sm:$0xf]
    %v334 = vld [vmem:[%s325 + $0x30] sm:$0xff]
    %v335 = vld [vmem:[%s325 + $0x38] sm:$0xf]
    %v336 = vld [vmem:[%s325 + $0x3c] sm:$0xff]
    %v337 = vld [vmem:[%s325 + $0x44] sm:$0xf]
    %v338 = vld [vmem:[%s325 + $0x48] sm:$0xff]
    %v339 = vld [vmem:[%s325 + $0x50] sm:$0xf]
    %v340 = vld [vmem:[%s325 + $0x54] sm:$0xff]
    %v341 = vld [vmem:[%s325 + $0x5c] sm:$0xf]
    %v358 = vunpack.c.l.b16 %v326
    %v359 = vunpack.c.h.b16 %v326
    %v360 = vunpack.c.l.b16 %v327
    %v361 = vunpack.c.l.b16 %v328
    %v362 = vunpack.c.h.b16 %v328
    %v363 = vunpack.c.l.b16 %v329
    %v364 = vunpack.c.l.b16 %v330
    %v365 = vunpack.c.h.b16 %v330
    %v366 = vunpack.c.l.b16 %v331
    %v367 = vunpack.c.l.b16 %v332
    %v368 = vunpack.c.h.b16 %v332
    %v369 = vunpack.c.l.b16 %v333
    %v370 = vunpack.c.l.b16 %v334
    %v371 = vunpack.c.h.b16 %v334
    %v372 = vunpack.c.l.b16 %v335
    %v373 = vunpack.c.l.b16 %v336
    %v374 = vunpack.c.h.b16 %v336
    %v375 = vunpack.c.l.b16 %v337
    %v376 = vunpack.c.l.b16 %v338
    %v377 = vunpack.c.h.b16 %v338
    %v378 = vunpack.c.l.b16 %v339
    %v379 = vunpack.c.l.b16 %v340
    %v380 = vunpack.c.h.b16 %v340
    %v381 = vunpack.c.l.b16 %v341
    %v382 = vpack.c.b16 %v361, %v358
    %v383 = vpack.c.b16 %v362, %v359
    %v384 = vpack.c.b16 %v363, %v360
    %v385 = vpack.c.b16 %v367, %v364
    %v386 = vpack.c.b16 %v368, %v365
    %v387 = vpack.c.b16 %v369, %v366
    %v388 = vpack.c.b16 %v373, %v370
    %v389 = vpack.c.b16 %v374, %v371
    %v390 = vpack.c.b16 %v375, %v372
    %v391 = vpack.c.b16 %v379, %v376
    %v392 = vpack.c.b16 %v380, %v377
    %v393 = vpack.c.b16 %v381, %v378
    %v407 = vsel %vm239, %v324, 0
    %409 = vmatprep.subr.bf16.mxu0 %v383
    %410 = vmatpush1.bf16.msra.mxu0 %v382
    %411 = vmatprep.subr.bf16.mxu0 %v386
    %412 = vmatpush1.bf16.msra.mxu0 %v385
    %413 = vmatprep.subr.bf16.mxu0 %v389
    %414 = vmatpush1.bf16.msra.mxu0 %v388
    %415 = vmatprep.subr.bf16.mxu0 %v392
    %416 = vmatpush1.bf16.msra.mxu0 %v391
    %417 = vmatprep.subr.bf16.mxu0 0
    %418 = vmatpush1.bf16.msra.mxu0 0
    %419 = vmatprep.subr.bf16.mxu0 0
    %420 = vmatpush1.bf16.msra.mxu0 0
    %421 = vmatprep.subr.bf16.mxu0 0
    %422 = vmatpush1.bf16.msra.mxu0 0
    %423 = vmatprep.subr.bf16.mxu0 0
    %424 = vmatpush1.bf16.msra.mxu0 0
    %425 = vmatprep.subr.bf16.mxu0 0
    %426 = vmatpush1.bf16.msra.mxu0 0
    %427 = vmatprep.subr.bf16.mxu0 0
    %428 = vmatpush1.bf16.msra.mxu0 0
    %429 = vmatprep.subr.bf16.mxu0 0
    %430 = vmatpush1.bf16.msra.mxu0 0
    %431 = vmatprep.subr.bf16.mxu0 0
    %432 = vmatpush1.bf16.msra.mxu0 0
    %433 = vmatprep.subr.bf16.mxu0 0
    %434 = vmatpush1.bf16.msra.mxu0 0
    %435 = vmatprep.subr.bf16.mxu0 0
    %436 = vmatpush1.bf16.msra.mxu0 0
    %437 = vmatprep.subr.bf16.mxu0 0
    %438 = vmatpush1.bf16.msra.mxu0 0
    %439 = vmatprep.subr.bf16.mxu0 0
    %440 = vmatpush1.bf16.msra.mxu0 0
    %441 = vmatprep.mubr.bf16.mxu0 0
    %442 = vmatmul.mubr.bf16.gmra.mrb[0].mxu0 %v407
    %v443 = vpop.f32.mrb[0].mxu0
    %v444 = vadd.f32 0.0, %v443
    %v445 = vpop.f32.mrb[0].mxu0
    %v446 = vadd.f32 0.0, %v445
    %v447 = vpop.f32.mrb[0].mxu0
    %v448 = vpop.f32.mrb[0].mxu0
    %449 = vdwg.mxu0
    %450 = vmatprep.subr.bf16.mxu0 0
    %451 = vmatpush1.bf16.msra.mxu0 %v384
    %452 = vmatprep.subr.bf16.mxu0 0
    %453 = vmatpush1.bf16.msra.mxu0 %v387
    %454 = vmatprep.subr.bf16.mxu0 0
    %455 = vmatpush1.bf16.msra.mxu0 %v390
    %456 = vmatprep.subr.bf16.mxu0 0
    %457 = vmatpush1.bf16.msra.mxu0 %v393
    %458 = vmatprep.subr.bf16.mxu0 0
    %459 = vmatpush1.bf16.msra.mxu0 0
    %460 = vmatprep.subr.bf16.mxu0 0
    %461 = vmatpush1.bf16.msra.mxu0 0
    %462 = vmatprep.subr.bf16.mxu0 0
    %463 = vmatpush1.bf16.msra.mxu0 0
    %464 = vmatprep.subr.bf16.mxu0 0
    %465 = vmatpush1.bf16.msra.mxu0 0
    %466 = vmatprep.subr.bf16.mxu0 0
    %467 = vmatpush1.bf16.msra.mxu0 0
    %468 = vmatprep.subr.bf16.mxu0 0
    %469 = vmatpush1.bf16.msra.mxu0 0
    %470 = vmatprep.subr.bf16.mxu0 0
    %471 = vmatpush1.bf16.msra.mxu0 0
    %472 = vmatprep.subr.bf16.mxu0 0
    %473 = vmatpush1.bf16.msra.mxu0 0
    %474 = vmatprep.subr.bf16.mxu0 0
    %475 = vmatpush1.bf16.msra.mxu0 0
    %476 = vmatprep.subr.bf16.mxu0 0
    %477 = vmatpush1.bf16.msra.mxu0 0
    %478 = vmatprep.subr.bf16.mxu0 0
    %479 = vmatpush1.bf16.msra.mxu0 0
    %480 = vmatprep.subr.bf16.mxu0 0
    %481 = vmatpush1.bf16.msra.mxu0 0
    %482 = vmatprep.mubr.bf16.mxu0 0
    %483 = vmatmul.mubr.bf16.gmra.mrb[0].mxu0 %v407
    %v484 = vpop.f32.mrb[0].mxu0
    %v485 = vadd.f32 0.0, %v484
    %v486 = vpop.f32.mrb[0].mxu0
    %v487 = vpop.f32.mrb[0].mxu0
    %v488 = vpop.f32.mrb[0].mxu0
    %489 = vdwg.mxu0
    %v490 = vpack.c.bf16 %v155, %v155
    %s491 = scalar_lea.vmem [#allocation3], 192
    %v492 = vld [vmem:[%s491] sm:$0xff]
    %v493 = vld [vmem:[%s491 + $0x8] sm:$0xf]
    %v494 = vld [vmem:[%s491 + $0xc] sm:$0xff]
    %v495 = vld [vmem:[%s491 + $0x14] sm:$0xf]
    %v496 = vld [vmem:[%s491 + $0x18] sm:$0xff]
    %v497 = vld [vmem:[%s491 + $0x20] sm:$0xf]
    %v498 = vld [vmem:[%s491 + $0x24] sm:$0xff]
    %v499 = vld [vmem:[%s491 + $0x2c] sm:$0xf]
    %v500 = vld [vmem:[%s491 + $0x30] sm:$0xff]
    %v501 = vld [vmem:[%s491 + $0x38] sm:$0xf]
    %v502 = vld [vmem:[%s491 + $0x3c] sm:$0xff]
    %v503 = vld [vmem:[%s491 + $0x44] sm:$0xf]
    %v504 = vld [vmem:[%s491 + $0x48] sm:$0xff]
    %v505 = vld [vmem:[%s491 + $0x50] sm:$0xf]
    %v506 = vld [vmem:[%s491 + $0x54] sm:$0xff]
    %v507 = vld [vmem:[%s491 + $0x5c] sm:$0xf]
    %v524 = vunpack.c.l.b16 %v492
    %v525 = vunpack.c.h.b16 %v492
    %v526 = vunpack.c.l.b16 %v493
    %v527 = vunpack.c.l.b16 %v494
    %v528 = vunpack.c.h.b16 %v494
    %v529 = vunpack.c.l.b16 %v495
    %v530 = vunpack.c.l.b16 %v496
    %v531 = vunpack.c.h.b16 %v496
    %v532 = vunpack.c.l.b16 %v497
    %v533 = vunpack.c.l.b16 %v498
    %v534 = vunpack.c.h.b16 %v498
    %v535 = vunpack.c.l.b16 %v499
    %v536 = vunpack.c.l.b16 %v500
    %v537 = vunpack.c.h.b16 %v500
    %v538 = vunpack.c.l.b16 %v501
    %v539 = vunpack.c.l.b16 %v502
    %v540 = vunpack.c.h.b16 %v502
    %v541 = vunpack.c.l.b16 %v503
    %v542 = vunpack.c.l.b16 %v504
    %v543 = vunpack.c.h.b16 %v504
    %v544 = vunpack.c.l.b16 %v505
    %v545 = vunpack.c.l.b16 %v506
    %v546 = vunpack.c.h.b16 %v506
    %v547 = vunpack.c.l.b16 %v507
    %v548 = vpack.c.b16 %v527, %v524
    %v549 = vpack.c.b16 %v528, %v525
    %v550 = vpack.c.b16 %v529, %v526
    %v551 = vpack.c.b16 %v533, %v530
    %v552 = vpack.c.b16 %v534, %v531
    %v553 = vpack.c.b16 %v535, %v532
    %v554 = vpack.c.b16 %v539, %v536
    %v555 = vpack.c.b16 %v540, %v537
    %v556 = vpack.c.b16 %v541, %v538
    %v557 = vpack.c.b16 %v545, %v542
    %v558 = vpack.c.b16 %v546, %v543
    %v559 = vpack.c.b16 %v547, %v544
    %v573 = vsel %vm239, %v490, 0
    %575 = vmatprep.subr.bf16.mxu0 %v549
    %576 = vmatpush1.bf16.msra.mxu0 %v548
    %577 = vmatprep.subr.bf16.mxu0 %v552
    %578 = vmatpush1.bf16.msra.mxu0 %v551
    %579 = vmatprep.subr.bf16.mxu0 %v555
    %580 = vmatpush1.bf16.msra.mxu0 %v554
    %581 = vmatprep.subr.bf16.mxu0 %v558
    %582 = vmatpush1.bf16.msra.mxu0 %v557
    %583 = vmatprep.subr.bf16.mxu0 0
    %584 = vmatpush1.bf16.msra.mxu0 0
    %585 = vmatprep.subr.bf16.mxu0 0
    %586 = vmatpush1.bf16.msra.mxu0 0
    %587 = vmatprep.subr.bf16.mxu0 0
    %588 = vmatpush1.bf16.msra.mxu0 0
    %589 = vmatprep.subr.bf16.mxu0 0
    %590 = vmatpush1.bf16.msra.mxu0 0
    %591 = vmatprep.subr.bf16.mxu0 0
    %592 = vmatpush1.bf16.msra.mxu0 0
    %593 = vmatprep.subr.bf16.mxu0 0
    %594 = vmatpush1.bf16.msra.mxu0 0
    %595 = vmatprep.subr.bf16.mxu0 0
    %596 = vmatpush1.bf16.msra.mxu0 0
    %597 = vmatprep.subr.bf16.mxu0 0
    %598 = vmatpush1.bf16.msra.mxu0 0
    %599 = vmatprep.subr.bf16.mxu0 0
    %600 = vmatpush1.bf16.msra.mxu0 0
    %601 = vmatprep.subr.bf16.mxu0 0
    %602 = vmatpush1.bf16.msra.mxu0 0
    %603 = vmatprep.subr.bf16.mxu0 0
    %604 = vmatpush1.bf16.msra.mxu0 0
    %605 = vmatprep.subr.bf16.mxu0 0
    %606 = vmatpush1.bf16.msra.mxu0 0
    %607 = vmatprep.mubr.bf16.mxu0 0
    %608 = vmatmul.mubr.bf16.gmra.mrb[0].mxu0 %v573
    %v609 = vpop.f32.mrb[0].mxu0
    %v610 = vadd.f32 0.0, %v609
    %v611 = vpop.f32.mrb[0].mxu0
    %v612 = vadd.f32 0.0, %v611
    %v613 = vpop.f32.mrb[0].mxu0
    %v614 = vpop.f32.mrb[0].mxu0
    %615 = vdwg.mxu0
    %616 = vmatprep.subr.bf16.mxu0 0
    %617 = vmatpush1.bf16.msra.mxu0 %v550
    %618 = vmatprep.subr.bf16.mxu0 0
    %619 = vmatpush1.bf16.msra.mxu0 %v553
    %620 = vmatprep.subr.bf16.mxu0 0
    %621 = vmatpush1.bf16.msra.mxu0 %v556
    %622 = vmatprep.subr.bf16.mxu0 0
    %623 = vmatpush1.bf16.msra.mxu0 %v559
    %624 = vmatprep.subr.bf16.mxu0 0
    %625 = vmatpush1.bf16.msra.mxu0 0
    %626 = vmatprep.subr.bf16.mxu0 0
    %627 = vmatpush1.bf16.msra.mxu0 0
    %628 = vmatprep.subr.bf16.mxu0 0
    %629 = vmatpush1.bf16.msra.mxu0 0
    %630 = vmatprep.subr.bf16.mxu0 0
    %631 = vmatpush1.bf16.msra.mxu0 0
    %632 = vmatprep.subr.bf16.mxu0 0
    %633 = vmatpush1.bf16.msra.mxu0 0
    %634 = vmatprep.subr.bf16.mxu0 0
    %635 = vmatpush1.bf16.msra.mxu0 0
    %636 = vmatprep.subr.bf16.mxu0 0
    %637 = vmatpush1.bf16.msra.mxu0 0
    %638 = vmatprep.subr.bf16.mxu0 0
    %639 = vmatpush1.bf16.msra.mxu0 0
    %640 = vmatprep.subr.bf16.mxu0 0
    %641 = vmatpush1.bf16.msra.mxu0 0
    %642 = vmatprep.subr.bf16.mxu0 0
    %643 = vmatpush1.bf16.msra.mxu0 0
    %644 = vmatprep.subr.bf16.mxu0 0
    %645 = vmatpush1.bf16.msra.mxu0 0
    %646 = vmatprep.subr.bf16.mxu0 0
    %647 = vmatpush1.bf16.msra.mxu0 0
    %648 = vmatprep.mubr.bf16.mxu0 0
    %649 = vmatmul.mubr.bf16.gmra.mrb[0].mxu0 %v573
    %v650 = vpop.f32.mrb[0].mxu0
    %v651 = vadd.f32 0.0, %v650
    %v652 = vpop.f32.mrb[0].mxu0
    %v653 = vpop.f32.mrb[0].mxu0
    %v654 = vpop.f32.mrb[0].mxu0
    %655 = vdwg.mxu0
    %v656 = vpack.c.bf16 %v157, %v157
    %s657 = scalar_lea.vmem [#allocation3], 288
    %v658 = vld [vmem:[%s657] sm:$0xff]
    %v659 = vld [vmem:[%s657 + $0x8] sm:$0xf]
    %v660 = vld [vmem:[%s657 + $0xc] sm:$0xff]
    %v661 = vld [vmem:[%s657 + $0x14] sm:$0xf]
    %v662 = vld [vmem:[%s657 + $0x18] sm:$0xff]
    %v663 = vld [vmem:[%s657 + $0x20] sm:$0xf]
    %v664 = vld [vmem:[%s657 + $0x24] sm:$0xff]
    %v665 = vld [vmem:[%s657 + $0x2c] sm:$0xf]
    %v666 = vld [vmem:[%s657 + $0x30] sm:$0xff]
    %v667 = vld [vmem:[%s657 + $0x38] sm:$0xf]
    %v668 = vld [vmem:[%s657 + $0x3c] sm:$0xff]
    %v669 = vld [vmem:[%s657 + $0x44] sm:$0xf]
    %v670 = vld [vmem:[%s657 + $0x48] sm:$0xff]
    %v671 = vld [vmem:[%s657 + $0x50] sm:$0xf]
    %v672 = vld [vmem:[%s657 + $0x54] sm:$0xff]
    %v673 = vld [vmem:[%s657 + $0x5c] sm:$0xf]
    %v690 = vunpack.c.l.b16 %v658
    %v691 = vunpack.c.h.b16 %v658
    %v692 = vunpack.c.l.b16 %v659
    %v693 = vunpack.c.l.b16 %v660
    %v694 = vunpack.c.h.b16 %v660
    %v695 = vunpack.c.l.b16 %v661
    %v696 = vunpack.c.l.b16 %v662
    %v697 = vunpack.c.h.b16 %v662
    %v698 = vunpack.c.l.b16 %v663
    %v699 = vunpack.c.l.b16 %v664
    %v700 = vunpack.c.h.b16 %v664
    %v701 = vunpack.c.l.b16 %v665
    %v702 = vunpack.c.l.b16 %v666
    %v703 = vunpack.c.h.b16 %v666
    %v704 = vunpack.c.l.b16 %v667
    %v705 = vunpack.c.l.b16 %v668
    %v706 = vunpack.c.h.b16 %v668
    %v707 = vunpack.c.l.b16 %v669
    %v708 = vunpack.c.l.b16 %v670
    %v709 = vunpack.c.h.b16 %v670
    %v710 = vunpack.c.l.b16 %v671
    %v711 = vunpack.c.l.b16 %v672
    %v712 = vunpack.c.h.b16 %v672
    %v713 = vunpack.c.l.b16 %v673
    %v714 = vpack.c.b16 %v693, %v690
    %v715 = vpack.c.b16 %v694, %v691
    %v716 = vpack.c.b16 %v695, %v692
    %v717 = vpack.c.b16 %v699, %v696
    %v718 = vpack.c.b16 %v700, %v697
    %v719 = vpack.c.b16 %v701, %v698
    %v720 = vpack.c.b16 %v705, %v702
    %v721 = vpack.c.b16 %v706, %v703
    %v722 = vpack.c.b16 %v707, %v704
    %v723 = vpack.c.b16 %v711, %v708
    %v724 = vpack.c.b16 %v712, %v709
    %v725 = vpack.c.b16 %v713, %v710
    %v739 = vsel %vm239, %v656, 0
    %741 = vmatprep.subr.bf16.mxu0 %v715
    %742 = vmatpush1.bf16.msra.mxu0 %v714
    %743 = vmatprep.subr.bf16.mxu0 %v718
    %744 = vmatpush1.bf16.msra.mxu0 %v717
    %745 = vmatprep.subr.bf16.mxu0 %v721
    %746 = vmatpush1.bf16.msra.mxu0 %v720
    %747 = vmatprep.subr.bf16.mxu0 %v724
    %748 = vmatpush1.bf16.msra.mxu0 %v723
    %749 = vmatprep.subr.bf16.mxu0 0
    %750 = vmatpush1.bf16.msra.mxu0 0
    %751 = vmatprep.subr.bf16.mxu0 0
    %752 = vmatpush1.bf16.msra.mxu0 0
    %753 = vmatprep.subr.bf16.mxu0 0
    %754 = vmatpush1.bf16.msra.mxu0 0
    %755 = vmatprep.subr.bf16.mxu0 0
    %756 = vmatpush1.bf16.msra.mxu0 0
    %757 = vmatprep.subr.bf16.mxu0 0
    %758 = vmatpush1.bf16.msra.mxu0 0
    %759 = vmatprep.subr.bf16.mxu0 0
    %760 = vmatpush1.bf16.msra.mxu0 0
    %761 = vmatprep.subr.bf16.mxu0 0
    %762 = vmatpush1.bf16.msra.mxu0 0
    %763 = vmatprep.subr.bf16.mxu0 0
    %764 = vmatpush1.bf16.msra.mxu0 0
    %765 = vmatprep.subr.bf16.mxu0 0
    %766 = vmatpush1.bf16.msra.mxu0 0
    %767 = vmatprep.subr.bf16.mxu0 0
    %768 = vmatpush1.bf16.msra.mxu0 0
    %769 = vmatprep.subr.bf16.mxu0 0
    %770 = vmatpush1.bf16.msra.mxu0 0
    %771 = vmatprep.subr.bf16.mxu0 0
    %772 = vmatpush1.bf16.msra.mxu0 0
    %773 = vmatprep.mubr.bf16.mxu0 0
    %774 = vmatmul.mubr.bf16.gmra.mrb[0].mxu0 %v739
    %v775 = vpop.f32.mrb[0].mxu0
    %v776 = vadd.f32 0.0, %v775
    %v777 = vpop.f32.mrb[0].mxu0
    %v778 = vadd.f32 0.0, %v777
    %v779 = vpop.f32.mrb[0].mxu0
    %v780 = vpop.f32.mrb[0].mxu0
    %781 = vdwg.mxu0
    %782 = vmatprep.subr.bf16.mxu0 0
    %783 = vmatpush1.bf16.msra.mxu0 %v716
    %784 = vmatprep.subr.bf16.mxu0 0
    %785 = vmatpush1.bf16.msra.mxu0 %v719
    %786 = vmatprep.subr.bf16.mxu0 0
    %787 = vmatpush1.bf16.msra.mxu0 %v722
    %788 = vmatprep.subr.bf16.mxu0 0
    %789 = vmatpush1.bf16.msra.mxu0 %v725
    %790 = vmatprep.subr.bf16.mxu0 0
    %791 = vmatpush1.bf16.msra.mxu0 0
    %792 = vmatprep.subr.bf16.mxu0 0
    %793 = vmatpush1.bf16.msra.mxu0 0
    %794 = vmatprep.subr.bf16.mxu0 0
    %795 = vmatpush1.bf16.msra.mxu0 0
    %796 = vmatprep.subr.bf16.mxu0 0
    %797 = vmatpush1.bf16.msra.mxu0 0
    %798 = vmatprep.subr.bf16.mxu0 0
    %799 = vmatpush1.bf16.msra.mxu0 0
    %800 = vmatprep.subr.bf16.mxu0 0
    %801 = vmatpush1.bf16.msra.mxu0 0
    %802 = vmatprep.subr.bf16.mxu0 0
    %803 = vmatpush1.bf16.msra.mxu0 0
    %804 = vmatprep.subr.bf16.mxu0 0
    %805 = vmatpush1.bf16.msra.mxu0 0
    %806 = vmatprep.subr.bf16.mxu0 0
    %807 = vmatpush1.bf16.msra.mxu0 0
    %808 = vmatprep.subr.bf16.mxu0 0
    %809 = vmatpush1.bf16.msra.mxu0 0
    %810 = vmatprep.subr.bf16.mxu0 0
    %811 = vmatpush1.bf16.msra.mxu0 0
    %812 = vmatprep.subr.bf16.mxu0 0
    %813 = vmatpush1.bf16.msra.mxu0 0
    %814 = vmatprep.mubr.bf16.mxu0 0
    %815 = vmatmul.mubr.bf16.gmra.mrb[0].mxu0 %v739
    %v816 = vpop.f32.mrb[0].mxu0
    %v817 = vadd.f32 0.0, %v816
    %v818 = vpop.f32.mrb[0].mxu0
    %v819 = vpop.f32.mrb[0].mxu0
    %v820 = vpop.f32.mrb[0].mxu0
    %821 = vdwg.mxu0
    %v822 = vld [vmem:[%s0] sm:$0x3]
    %v823 = vld [vmem:[%s0 + $0x8] sm:$0x3]
    %v824 = vld [vmem:[%s0 + $0x10] sm:$0x3]
    %v825 = vadd.f32 %v822, %v278
    %v826 = vxor.u32 %v825, 2147483648
    %v827 = vmul.f32 %v826, 1.442695
    %v828 = vpow.pop %v827
    %v829 = vadd.f32 %v828, 1.0
    %v830 = vrcp.pop %v829
    %v831 = vmul.f32 1.0, %v830
    %v832 = vadd.f32 %v823, %v280
    %v833 = vxor.u32 %v832, 2147483648
    %v834 = vmul.f32 %v833, 1.442695
    %v835 = vpow.pop %v834
    %v836 = vadd.f32 %v835, 1.0
    %v837 = vrcp.pop %v836
    %v838 = vmul.f32 1.0, %v837
    %v839 = vadd.f32 %v319, %v125
    %v840 = vmul.f32 %v831, %v839
    %v841 = vadd.f32 %v824, %v840
    %v842 = vtanh.pop %v841
    %v843 = vsub.f32 1.0, %v838
    %v844 = vmul.f32 %v843, %v842
    %v845 = vmul.f32 %v838, %v151
    %v846 = vadd.f32 %v844, %v845
    %v847 = vpack.c.bf16 %v846, %v846
    %v848 = vld [vmem:[#allocation6] sm:$0xff]
    %v849 = vld [vmem:[#allocation6 + $0x8] sm:$0xf]
    %v850 = vld [vmem:[#allocation6 + $0xc] sm:$0xff]
    %v851 = vld [vmem:[#allocation6 + $0x14] sm:$0xf]
    %v852 = vld [vmem:[#allocation6 + $0x18] sm:$0xff]
    %v853 = vld [vmem:[#allocation6 + $0x20] sm:$0xf]
    %v854 = vld [vmem:[#allocation6 + $0x24] sm:$0xff]
    %v855 = vld [vmem:[#allocation6 + $0x2c] sm:$0xf]
    %v856 = vld [vmem:[#allocation6 + $0x30] sm:$0xff]
    %v857 = vld [vmem:[#allocation6 + $0x38] sm:$0xf]
    %v858 = vld [vmem:[#allocation6 + $0x3c] sm:$0xff]
    %v859 = vld [vmem:[#allocation6 + $0x44] sm:$0xf]
    %v860 = vld [vmem:[#allocation6 + $0x48] sm:$0xff]
    %v861 = vld [vmem:[#allocation6 + $0x50] sm:$0xf]
    %v862 = vld [vmem:[#allocation6 + $0x54] sm:$0xff]
    %v863 = vld [vmem:[#allocation6 + $0x5c] sm:$0xf]
    %v880 = vunpack.c.l.b16 %v848
    %v881 = vunpack.c.h.b16 %v848
    %v882 = vunpack.c.l.b16 %v849
    %v883 = vunpack.c.l.b16 %v850
    %v884 = vunpack.c.h.b16 %v850
    %v885 = vunpack.c.l.b16 %v851
    %v886 = vunpack.c.l.b16 %v852
    %v887 = vunpack.c.h.b16 %v852
    %v888 = vunpack.c.l.b16 %v853
    %v889 = vunpack.c.l.b16 %v854
    %v890 = vunpack.c.h.b16 %v854
    %v891 = vunpack.c.l.b16 %v855
    %v892 = vunpack.c.l.b16 %v856
    %v893 = vunpack.c.h.b16 %v856
    %v894 = vunpack.c.l.b16 %v857
    %v895 = vunpack.c.l.b16 %v858
    %v896 = vunpack.c.h.b16 %v858
    %v897 = vunpack.c.l.b16 %v859
    %v898 = vunpack.c.l.b16 %v860
    %v899 = vunpack.c.h.b16 %v860
    %v900 = vunpack.c.l.b16 %v861
    %v901 = vunpack.c.l.b16 %v862
    %v902 = vunpack.c.h.b16 %v862
    %v903 = vunpack.c.l.b16 %v863
    %v904 = vpack.c.b16 %v883, %v880
    %v905 = vpack.c.b16 %v884, %v881
    %v906 = vpack.c.b16 %v885, %v882
    %v907 = vpack.c.b16 %v889, %v886
    %v908 = vpack.c.b16 %v890, %v887
    %v909 = vpack.c.b16 %v891, %v888
    %v910 = vpack.c.b16 %v895, %v892
    %v911 = vpack.c.b16 %v896, %v893
    %v912 = vpack.c.b16 %v897, %v894
    %v913 = vpack.c.b16 %v901, %v898
    %v914 = vpack.c.b16 %v902, %v899
    %v915 = vpack.c.b16 %v903, %v900
    %v929 = vsel %vm239, %v847, 0
    %931 = vmatprep.subr.bf16.mxu0 %v905
    %932 = vmatpush1.bf16.msra.mxu0 %v904
    %933 = vmatprep.subr.bf16.mxu0 %v908
    %934 = vmatpush1.bf16.msra.mxu0 %v907
    %935 = vmatprep.subr.bf16.mxu0 %v911
    %936 = vmatpush1.bf16.msra.mxu0 %v910
    %937 = vmatprep.subr.bf16.mxu0 %v914
    %938 = vmatpush1.bf16.msra.mxu0 %v913
    %939 = vmatprep.subr.bf16.mxu0 0
    %940 = vmatpush1.bf16.msra.mxu0 0
    %941 = vmatprep.subr.bf16.mxu0 0
    %942 = vmatpush1.bf16.msra.mxu0 0
    %943 = vmatprep.subr.bf16.mxu0 0
    %944 = vmatpush1.bf16.msra.mxu0 0
    %945 = vmatprep.subr.bf16.mxu0 0
    %946 = vmatpush1.bf16.msra.mxu0 0
    %947 = vmatprep.subr.bf16.mxu0 0
    %948 = vmatpush1.bf16.msra.mxu0 0
    %949 = vmatprep.subr.bf16.mxu0 0
    %950 = vmatpush1.bf16.msra.mxu0 0
    %951 = vmatprep.subr.bf16.mxu0 0
    %952 = vmatpush1.bf16.msra.mxu0 0
    %953 = vmatprep.subr.bf16.mxu0 0
    %954 = vmatpush1.bf16.msra.mxu0 0
    %955 = vmatprep.subr.bf16.mxu0 0
    %956 = vmatpush1.bf16.msra.mxu0 0
    %957 = vmatprep.subr.bf16.mxu0 0
    %958 = vmatpush1.bf16.msra.mxu0 0
    %959 = vmatprep.subr.bf16.mxu0 0
    %960 = vmatpush1.bf16.msra.mxu0 0
    %961 = vmatprep.subr.bf16.mxu0 0
    %962 = vmatpush1.bf16.msra.mxu0 0
    %963 = vmatprep.mubr.bf16.mxu0 0
    %964 = vmatmul.mubr.bf16.gmra.mrb[0].mxu0 %v929
    %v965 = vpop.f32.mrb[0].mxu0
    %v966 = vadd.f32 %v72, %v965
    %v967 = vpop.f32.mrb[0].mxu0
    %v968 = vadd.f32 %v76, %v967
    %v969 = vpop.f32.mrb[0].mxu0
    %v970 = vpop.f32.mrb[0].mxu0
    %971 = vdwg.mxu0
    %972 = vmatprep.subr.bf16.mxu0 0
    %973 = vmatpush1.bf16.msra.mxu0 %v906
    %974 = vmatprep.subr.bf16.mxu0 0
    %975 = vmatpush1.bf16.msra.mxu0 %v909
    %976 = vmatprep.subr.bf16.mxu0 0
    %977 = vmatpush1.bf16.msra.mxu0 %v912
    %978 = vmatprep.subr.bf16.mxu0 0
    %979 = vmatpush1.bf16.msra.mxu0 %v915
    %980 = vmatprep.subr.bf16.mxu0 0
    %981 = vmatpush1.bf16.msra.mxu0 0
    %982 = vmatprep.subr.bf16.mxu0 0
    %983 = vmatpush1.bf16.msra.mxu0 0
    %984 = vmatprep.subr.bf16.mxu0 0
    %985 = vmatpush1.bf16.msra.mxu0 0
    %986 = vmatprep.subr.bf16.mxu0 0
    %987 = vmatpush1.bf16.msra.mxu0 0
    %988 = vmatprep.subr.bf16.mxu0 0
    %989 = vmatpush1.bf16.msra.mxu0 0
    %990 = vmatprep.subr.bf16.mxu0 0
    %991 = vmatpush1.bf16.msra.mxu0 0
    %992 = vmatprep.subr.bf16.mxu0 0
    %993 = vmatpush1.bf16.msra.mxu0 0
    %994 = vmatprep.subr.bf16.mxu0 0
    %995 = vmatpush1.bf16.msra.mxu0 0
    %996 = vmatprep.subr.bf16.mxu0 0
    %997 = vmatpush1.bf16.msra.mxu0 0
    %998 = vmatprep.subr.bf16.mxu0 0
    %999 = vmatpush1.bf16.msra.mxu0 0
    %1000 = vmatprep.subr.bf16.mxu0 0
    %1001 = vmatpush1.bf16.msra.mxu0 0
    %1002 = vmatprep.subr.bf16.mxu0 0
    %1003 = vmatpush1.bf16.msra.mxu0 0
    %1004 = vmatprep.mubr.bf16.mxu0 0
    %1005 = vmatmul.mubr.bf16.gmra.mrb[0].mxu0 %v929
    %v1006 = vpop.f32.mrb[0].mxu0
    %v1007 = vadd.f32 %v80, %v1006
    %v1008 = vpop.f32.mrb[0].mxu0
    %v1009 = vpop.f32.mrb[0].mxu0
    %v1010 = vpop.f32.mrb[0].mxu0
    %1011 = vdwg.mxu0
    %v1012 = vadd.f32 %v966, %v444
    %v1013 = vxor.u32 %v1012, 2147483648
    %v1014 = vmul.f32 %v1013, 1.442695
    %v1015 = vpow.pop %v1014
    %v1016 = vadd.f32 %v1015, 1.0
    %v1017 = vrcp.pop %v1016
    %v1018 = vmul.f32 1.0, %v1017
    %v1019 = vadd.f32 %v968, %v446
    %v1020 = vxor.u32 %v1019, 2147483648
    %v1021 = vmul.f32 %v1020, 1.442695
    %v1022 = vpow.pop %v1021
    %v1023 = vadd.f32 %v1022, 1.0
    %v1024 = vrcp.pop %v1023
    %v1025 = vmul.f32 1.0, %v1024
    %v1026 = vadd.f32 %v485, %v133
    %v1027 = vmul.f32 %v1018, %v1026
    %v1028 = vadd.f32 %v1007, %v1027
    %v1029 = vtanh.pop %v1028
    %v1030 = vsub.f32 1.0, %v1025
    %v1031 = vmul.f32 %v1030, %v1029
    %v1032 = vmul.f32 %v1025, %v153
    %v1033 = vadd.f32 %v1031, %v1032
    %v1034 = vpack.c.bf16 %v1033, %v1033
    %s1035 = scalar_lea.vmem [#allocation6], 96
    %v1036 = vld [vmem:[%s1035] sm:$0xff]
    %v1037 = vld [vmem:[%s1035 + $0x8] sm:$0xf]
    %v1038 = vld [vmem:[%s1035 + $0xc] sm:$0xff]
    %v1039 = vld [vmem:[%s1035 + $0x14] sm:$0xf]
    %v1040 = vld [vmem:[%s1035 + $0x18] sm:$0xff]
    %v1041 = vld [vmem:[%s1035 + $0x20] sm:$0xf]
    %v1042 = vld [vmem:[%s1035 + $0x24] sm:$0xff]
    %v1043 = vld [vmem:[%s1035 + $0x2c] sm:$0xf]
    %v1044 = vld [vmem:[%s1035 + $0x30] sm:$0xff]
    %v1045 = vld [vmem:[%s1035 + $0x38] sm:$0xf]
    %v1046 = vld [vmem:[%s1035 + $0x3c] sm:$0xff]
    %v1047 = vld [vmem:[%s1035 + $0x44] sm:$0xf]
    %v1048 = vld [vmem:[%s1035 + $0x48] sm:$0xff]
    %v1049 = vld [vmem:[%s1035 + $0x50] sm:$0xf]
    %v1050 = vld [vmem:[%s1035 + $0x54] sm:$0xff]
    %v1051 = vld [vmem:[%s1035 + $0x5c] sm:$0xf]
    %v1068 = vunpack.c.l.b16 %v1036
    %v1069 = vunpack.c.h.b16 %v1036
    %v1070 = vunpack.c.l.b16 %v1037
    %v1071 = vunpack.c.l.b16 %v1038
    %v1072 = vunpack.c.h.b16 %v1038
    %v1073 = vunpack.c.l.b16 %v1039
    %v1074 = vunpack.c.l.b16 %v1040
    %v1075 = vunpack.c.h.b16 %v1040
    %v1076 = vunpack.c.l.b16 %v1041
    %v1077 = vunpack.c.l.b16 %v1042
    %v1078 = vunpack.c.h.b16 %v1042
    %v1079 = vunpack.c.l.b16 %v1043
    %v1080 = vunpack.c.l.b16 %v1044
    %v1081 = vunpack.c.h.b16 %v1044
    %v1082 = vunpack.c.l.b16 %v1045
    %v1083 = vunpack.c.l.b16 %v1046
    %v1084 = vunpack.c.h.b16 %v1046
    %v1085 = vunpack.c.l.b16 %v1047
    %v1086 = vunpack.c.l.b16 %v1048
    %v1087 = vunpack.c.h.b16 %v1048
    %v1088 = vunpack.c.l.b16 %v1049
    %v1089 = vunpack.c.l.b16 %v1050
    %v1090 = vunpack.c.h.b16 %v1050
    %v1091 = vunpack.c.l.b16 %v1051
    %v1092 = vpack.c.b16 %v1071, %v1068
    %v1093 = vpack.c.b16 %v1072, %v1069
    %v1094 = vpack.c.b16 %v1073, %v1070
    %v1095 = vpack.c.b16 %v1077, %v1074
    %v1096 = vpack.c.b16 %v1078, %v1075
    %v1097 = vpack.c.b16 %v1079, %v1076
    %v1098 = vpack.c.b16 %v1083, %v1080
    %v1099 = vpack.c.b16 %v1084, %v1081
    %v1100 = vpack.c.b16 %v1085, %v1082
    %v1101 = vpack.c.b16 %v1089, %v1086
    %v1102 = vpack.c.b16 %v1090, %v1087
    %v1103 = vpack.c.b16 %v1091, %v1088
    %v1117 = vsel %vm239, %v1034, 0
    %1119 = vmatprep.subr.bf16.mxu0 %v1093
    %1120 = vmatpush1.bf16.msra.mxu0 %v1092
    %1121 = vmatprep.subr.bf16.mxu0 %v1096
    %1122 = vmatpush1.bf16.msra.mxu0 %v1095
    %1123 = vmatprep.subr.bf16.mxu0 %v1099
    %1124 = vmatpush1.bf16.msra.mxu0 %v1098
    %1125 = vmatprep.subr.bf16.mxu0 %v1102
    %1126 = vmatpush1.bf16.msra.mxu0 %v1101
    %1127 = vmatprep.subr.bf16.mxu0 0
    %1128 = vmatpush1.bf16.msra.mxu0 0
    %1129 = vmatprep.subr.bf16.mxu0 0
    %1130 = vmatpush1.bf16.msra.mxu0 0
    %1131 = vmatprep.subr.bf16.mxu0 0
    %1132 = vmatpush1.bf16.msra.mxu0 0
    %1133 = vmatprep.subr.bf16.mxu0 0
    %1134 = vmatpush1.bf16.msra.mxu0 0
    %1135 = vmatprep.subr.bf16.mxu0 0
    %1136 = vmatpush1.bf16.msra.mxu0 0
    %1137 = vmatprep.subr.bf16.mxu0 0
    %1138 = vmatpush1.bf16.msra.mxu0 0
    %1139 = vmatprep.subr.bf16.mxu0 0
    %1140 = vmatpush1.bf16.msra.mxu0 0
    %1141 = vmatprep.subr.bf16.mxu0 0
    %1142 = vmatpush1.bf16.msra.mxu0 0
    %1143 = vmatprep.subr.bf16.mxu0 0
    %1144 = vmatpush1.bf16.msra.mxu0 0
    %1145 = vmatprep.subr.bf16.mxu0 0
    %1146 = vmatpush1.bf16.msra.mxu0 0
    %1147 = vmatprep.subr.bf16.mxu0 0
    %1148 = vmatpush1.bf16.msra.mxu0 0
    %1149 = vmatprep.subr.bf16.mxu0 0
    %1150 = vmatpush1.bf16.msra.mxu0 0
    %1151 = vmatprep.mubr.bf16.mxu0 0
    %1152 = vmatmul.mubr.bf16.gmra.mrb[0].mxu0 %v1117
    %v1153 = vpop.f32.mrb[0].mxu0
    %v1154 = vadd.f32 %v90, %v1153
    %v1155 = vpop.f32.mrb[0].mxu0
    %v1156 = vadd.f32 %v94, %v1155
    %v1157 = vpop.f32.mrb[0].mxu0
    %v1158 = vpop.f32.mrb[0].mxu0
    %1159 = vdwg.mxu0
    %1160 = vmatprep.subr.bf16.mxu0 0
    %1161 = vmatpush1.bf16.msra.mxu0 %v1094
    %1162 = vmatprep.subr.bf16.mxu0 0
    %1163 = vmatpush1.bf16.msra.mxu0 %v1097
    %1164 = vmatprep.subr.bf16.mxu0 0
    %1165 = vmatpush1.bf16.msra.mxu0 %v1100
    %1166 = vmatprep.subr.bf16.mxu0 0
    %1167 = vmatpush1.bf16.msra.mxu0 %v1103
    %1168 = vmatprep.subr.bf16.mxu0 0
    %1169 = vmatpush1.bf16.msra.mxu0 0
    %1170 = vmatprep.subr.bf16.mxu0 0
    %1171 = vmatpush1.bf16.msra.mxu0 0
    %1172 = vmatprep.subr.bf16.mxu0 0
    %1173 = vmatpush1.bf16.msra.mxu0 0
    %1174 = vmatprep.subr.bf16.mxu0 0
    %1175 = vmatpush1.bf16.msra.mxu0 0
    %1176 = vmatprep.subr.bf16.mxu0 0
    %1177 = vmatpush1.bf16.msra.mxu0 0
    %1178 = vmatprep.subr.bf16.mxu0 0
    %1179 = vmatpush1.bf16.msra.mxu0 0
    %1180 = vmatprep.subr.bf16.mxu0 0
    %1181 = vmatpush1.bf16.msra.mxu0 0
    %1182 = vmatprep.subr.bf16.mxu0 0
    %1183 = vmatpush1.bf16.msra.mxu0 0
    %1184 = vmatprep.subr.bf16.mxu0 0
    %1185 = vmatpush1.bf16.msra.mxu0 0
    %1186 = vmatprep.subr.bf16.mxu0 0
    %1187 = vmatpush1.bf16.msra.mxu0 0
    %1188 = vmatprep.subr.bf16.mxu0 0
    %1189 = vmatpush1.bf16.msra.mxu0 0
    %1190 = vmatprep.subr.bf16.mxu0 0
    %1191 = vmatpush1.bf16.msra.mxu0 0
    %1192 = vmatprep.mubr.bf16.mxu0 0
    %1193 = vmatmul.mubr.bf16.gmra.mrb[0].mxu0 %v1117
    %v1194 = vpop.f32.mrb[0].mxu0
    %v1195 = vadd.f32 %v98, %v1194
    %v1196 = vpop.f32.mrb[0].mxu0
    %v1197 = vpop.f32.mrb[0].mxu0
    %v1198 = vpop.f32.mrb[0].mxu0
    %1199 = vdwg.mxu0
    %v1200 = vadd.f32 %v1154, %v610
    %v1201 = vxor.u32 %v1200, 2147483648
    %v1202 = vmul.f32 %v1201, 1.442695
    %v1203 = vpow.pop %v1202
    %v1204 = vadd.f32 %v1203, 1.0
    %v1205 = vrcp.pop %v1204
    %v1206 = vmul.f32 1.0, %v1205
    %v1207 = vadd.f32 %v1156, %v612
    %v1208 = vxor.u32 %v1207, 2147483648
    %v1209 = vmul.f32 %v1208, 1.442695
    %v1210 = vpow.pop %v1209
    %v1211 = vadd.f32 %v1210, 1.0
    %v1212 = vrcp.pop %v1211
    %v1213 = vmul.f32 1.0, %v1212
    %v1214 = vadd.f32 %v651, %v141
    %v1215 = vmul.f32 %v1206, %v1214
    %v1216 = vadd.f32 %v1195, %v1215
    %v1217 = vtanh.pop %v1216
    %v1218 = vsub.f32 1.0, %v1213
    %v1219 = vmul.f32 %v1218, %v1217
    %v1220 = vmul.f32 %v1213, %v155
    %v1221 = vadd.f32 %v1219, %v1220
    %v1222 = vpack.c.bf16 %v1221, %v1221
    %s1223 = scalar_lea.vmem [#allocation6], 192
    %v1224 = vld [vmem:[%s1223] sm:$0xff]
    %v1225 = vld [vmem:[%s1223 + $0x8] sm:$0xf]
    %v1226 = vld [vmem:[%s1223 + $0xc] sm:$0xff]
    %v1227 = vld [vmem:[%s1223 + $0x14] sm:$0xf]
    %v1228 = vld [vmem:[%s1223 + $0x18] sm:$0xff]
    %v1229 = vld [vmem:[%s1223 + $0x20] sm:$0xf]
    %v1230 = vld [vmem:[%s1223 + $0x24] sm:$0xff]
    %v1231 = vld [vmem:[%s1223 + $0x2c] sm:$0xf]
    %v1232 = vld [vmem:[%s1223 + $0x30] sm:$0xff]
    %v1233 = vld [vmem:[%s1223 + $0x38] sm:$0xf]
    %v1234 = vld [vmem:[%s1223 + $0x3c] sm:$0xff]
    %v1235 = vld [vmem:[%s1223 + $0x44] sm:$0xf]
    %v1236 = vld [vmem:[%s1223 + $0x48] sm:$0xff]
    %v1237 = vld [vmem:[%s1223 + $0x50] sm:$0xf]
    %v1238 = vld [vmem:[%s1223 + $0x54] sm:$0xff]
    %v1239 = vld [vmem:[%s1223 + $0x5c] sm:$0xf]
    %v1256 = vunpack.c.l.b16 %v1224
    %v1257 = vunpack.c.h.b16 %v1224
    %v1258 = vunpack.c.l.b16 %v1225
    %v1259 = vunpack.c.l.b16 %v1226
    %v1260 = vunpack.c.h.b16 %v1226
    %v1261 = vunpack.c.l.b16 %v1227
    %v1262 = vunpack.c.l.b16 %v1228
    %v1263 = vunpack.c.h.b16 %v1228
    %v1264 = vunpack.c.l.b16 %v1229
    %v1265 = vunpack.c.l.b16 %v1230
    %v1266 = vunpack.c.h.b16 %v1230
    %v1267 = vunpack.c.l.b16 %v1231
    %v1268 = vunpack.c.l.b16 %v1232
    %v1269 = vunpack.c.h.b16 %v1232
    %v1270 = vunpack.c.l.b16 %v1233
    %v1271 = vunpack.c.l.b16 %v1234
    %v1272 = vunpack.c.h.b16 %v1234
    %v1273 = vunpack.c.l.b16 %v1235
    %v1274 = vunpack.c.l.b16 %v1236
    %v1275 = vunpack.c.h.b16 %v1236
    %v1276 = vunpack.c.l.b16 %v1237
    %v1277 = vunpack.c.l.b16 %v1238
    %v1278 = vunpack.c.h.b16 %v1238
    %v1279 = vunpack.c.l.b16 %v1239
    %v1280 = vpack.c.b16 %v1259, %v1256
    %v1281 = vpack.c.b16 %v1260, %v1257
    %v1282 = vpack.c.b16 %v1261, %v1258
    %v1283 = vpack.c.b16 %v1265, %v1262
    %v1284 = vpack.c.b16 %v1266, %v1263
    %v1285 = vpack.c.b16 %v1267, %v1264
    %v1286 = vpack.c.b16 %v1271, %v1268
    %v1287 = vpack.c.b16 %v1272, %v1269
    %v1288 = vpack.c.b16 %v1273, %v1270
    %v1289 = vpack.c.b16 %v1277, %v1274
    %v1290 = vpack.c.b16 %v1278, %v1275
    %v1291 = vpack.c.b16 %v1279, %v1276
    %v1305 = vsel %vm239, %v1222, 0
    %1307 = vmatprep.subr.bf16.mxu0 %v1281
    %1308 = vmatpush1.bf16.msra.mxu0 %v1280
    %1309 = vmatprep.subr.bf16.mxu0 %v1284
    %1310 = vmatpush1.bf16.msra.mxu0 %v1283
    %1311 = vmatprep.subr.bf16.mxu0 %v1287
    %1312 = vmatpush1.bf16.msra.mxu0 %v1286
    %1313 = vmatprep.subr.bf16.mxu0 %v1290
    %1314 = vmatpush1.bf16.msra.mxu0 %v1289
    %1315 = vmatprep.subr.bf16.mxu0 0
    %1316 = vmatpush1.bf16.msra.mxu0 0
    %1317 = vmatprep.subr.bf16.mxu0 0
    %1318 = vmatpush1.bf16.msra.mxu0 0
    %1319 = vmatprep.subr.bf16.mxu0 0
    %1320 = vmatpush1.bf16.msra.mxu0 0
    %1321 = vmatprep.subr.bf16.mxu0 0
    %1322 = vmatpush1.bf16.msra.mxu0 0
    %1323 = vmatprep.subr.bf16.mxu0 0
    %1324 = vmatpush1.bf16.msra.mxu0 0
    %1325 = vmatprep.subr.bf16.mxu0 0
    %1326 = vmatpush1.bf16.msra.mxu0 0
    %1327 = vmatprep.subr.bf16.mxu0 0
    %1328 = vmatpush1.bf16.msra.mxu0 0
    %1329 = vmatprep.subr.bf16.mxu0 0
    %1330 = vmatpush1.bf16.msra.mxu0 0
    %1331 = vmatprep.subr.bf16.mxu0 0
    %1332 = vmatpush1.bf16.msra.mxu0 0
    %1333 = vmatprep.subr.bf16.mxu0 0
    %1334 = vmatpush1.bf16.msra.mxu0 0
    %1335 = vmatprep.subr.bf16.mxu0 0
    %1336 = vmatpush1.bf16.msra.mxu0 0
    %1337 = vmatprep.subr.bf16.mxu0 0
    %1338 = vmatpush1.bf16.msra.mxu0 0
    %1339 = vmatprep.mubr.bf16.mxu0 0
    %1340 = vmatmul.mubr.bf16.gmra.mrb[0].mxu0 %v1305
    %v1341 = vpop.f32.mrb[0].mxu0
    %v1342 = vadd.f32 %v108, %v1341
    %v1343 = vpop.f32.mrb[0].mxu0
    %v1344 = vadd.f32 %v112, %v1343
    %v1345 = vpop.f32.mrb[0].mxu0
    %v1346 = vpop.f32.mrb[0].mxu0
    %1347 = vdwg.mxu0
    %1348 = vmatprep.subr.bf16.mxu0 0
    %1349 = vmatpush1.bf16.msra.mxu0 %v1282
    %1350 = vmatprep.subr.bf16.mxu0 0
    %1351 = vmatpush1.bf16.msra.mxu0 %v1285
    %1352 = vmatprep.subr.bf16.mxu0 0
    %1353 = vmatpush1.bf16.msra.mxu0 %v1288
    %1354 = vmatprep.subr.bf16.mxu0 0
    %1355 = vmatpush1.bf16.msra.mxu0 %v1291
    %1356 = vmatprep.subr.bf16.mxu0 0
    %1357 = vmatpush1.bf16.msra.mxu0 0
    %1358 = vmatprep.subr.bf16.mxu0 0
    %1359 = vmatpush1.bf16.msra.mxu0 0
    %1360 = vmatprep.subr.bf16.mxu0 0
    %1361 = vmatpush1.bf16.msra.mxu0 0
    %1362 = vmatprep.subr.bf16.mxu0 0
    %1363 = vmatpush1.bf16.msra.mxu0 0
    %1364 = vmatprep.subr.bf16.mxu0 0
    %1365 = vmatpush1.bf16.msra.mxu0 0
    %1366 = vmatprep.subr.bf16.mxu0 0
    %1367 = vmatpush1.bf16.msra.mxu0 0
    %1368 = vmatprep.subr.bf16.mxu0 0
    %1369 = vmatpush1.bf16.msra.mxu0 0
    %1370 = vmatprep.subr.bf16.mxu0 0
    %1371 = vmatpush1.bf16.msra.mxu0 0
    %1372 = vmatprep.subr.bf16.mxu0 0
    %1373 = vmatpush1.bf16.msra.mxu0 0
    %1374 = vmatprep.subr.bf16.mxu0 0
    %1375 = vmatpush1.bf16.msra.mxu0 0
    %1376 = vmatprep.subr.bf16.mxu0 0
    %1377 = vmatpush1.bf16.msra.mxu0 0
    %1378 = vmatprep.subr.bf16.mxu0 0
    %1379 = vmatpush1.bf16.msra.mxu0 0
    %1380 = vmatprep.mubr.bf16.mxu0 0
    %1381 = vmatmul.mubr.bf16.gmra.mrb[0].mxu0 %v1305
    %v1382 = vpop.f32.mrb[0].mxu0
    %v1383 = vadd.f32 %v116, %v1382
    %v1384 = vpop.f32.mrb[0].mxu0
    %v1385 = vpop.f32.mrb[0].mxu0
    %v1386 = vpop.f32.mrb[0].mxu0
    %1387 = vdwg.mxu0
    %v1388 = vadd.f32 %v1342, %v776
    %v1389 = vxor.u32 %v1388, 2147483648
    %v1390 = vmul.f32 %v1389, 1.442695
    %v1391 = vpow.pop %v1390
    %v1392 = vadd.f32 %v1391, 1.0
    %v1393 = vrcp.pop %v1392
    %v1394 = vmul.f32 1.0, %v1393
    %v1395 = vadd.f32 %v1344, %v778
    %v1396 = vxor.u32 %v1395, 2147483648
    %v1397 = vmul.f32 %v1396, 1.442695
    %v1398 = vpow.pop %v1397
    %v1399 = vadd.f32 %v1398, 1.0
    %v1400 = vrcp.pop %v1399
    %v1401 = vmul.f32 1.0, %v1400
    %v1402 = vadd.f32 %v817, %v149
    %v1403 = vmul.f32 %v1394, %v1402
    %v1404 = vadd.f32 %v1383, %v1403
    %v1405 = vtanh.pop %v1404
    %v1406 = vsub.f32 1.0, %v1401
    %v1407 = vmul.f32 %v1406, %v1405
    %v1408 = vmul.f32 %v1401, %v157
    %v1409 = vadd.f32 %v1407, %v1408
    %1410 = vmatprep.subr.bf16.mxu0 %v216
    %1411 = vmatpush1.bf16.msra.mxu0 %v215
    %1412 = vmatprep.subr.bf16.mxu0 %v219
    %1413 = vmatpush1.bf16.msra.mxu0 %v218
    %1414 = vmatprep.subr.bf16.mxu0 %v222
    %1415 = vmatpush1.bf16.msra.mxu0 %v221
    %1416 = vmatprep.subr.bf16.mxu0 %v225
    %1417 = vmatpush1.bf16.msra.mxu0 %v224
    %1418 = vmatprep.subr.bf16.mxu0 0
    %1419 = vmatpush1.bf16.msra.mxu0 0
    %1420 = vmatprep.subr.bf16.mxu0 0
    %1421 = vmatpush1.bf16.msra.mxu0 0
    %1422 = vmatprep.subr.bf16.mxu0 0
    %1423 = vmatpush1.bf16.msra.mxu0 0
    %1424 = vmatprep.subr.bf16.mxu0 0
    %1425 = vmatpush1.bf16.msra.mxu0 0
    %1426 = vmatprep.subr.bf16.mxu0 0
    %1427 = vmatpush1.bf16.msra.mxu0 0
    %1428 = vmatprep.subr.bf16.mxu0 0
    %1429 = vmatpush1.bf16.msra.mxu0 0
    %1430 = vmatprep.subr.bf16.mxu0 0
    %1431 = vmatpush1.bf16.msra.mxu0 0
    %1432 = vmatprep.subr.bf16.mxu0 0
    %1433 = vmatpush1.bf16.msra.mxu0 0
    %1434 = vmatprep.subr.bf16.mxu0 0
    %1435 = vmatpush1.bf16.msra.mxu0 0
    %1436 = vmatprep.subr.bf16.mxu0 0
    %1437 = vmatpush1.bf16.msra.mxu0 0
    %1438 = vmatprep.subr.bf16.mxu0 0
    %1439 = vmatpush1.bf16.msra.mxu0 0
    %1440 = vmatprep.subr.bf16.mxu0 0
    %1441 = vmatpush1.bf16.msra.mxu0 0
    %1442 = vmatprep.mubr.bf16.mxu0 0
    %1443 = vmatmul.mubr.bf16.gmra.mrb[0].mxu0 %v929
    %v1444 = vpop.f32.mrb[0].mxu0
    %v1445 = vadd.f32 0.0, %v1444
    %v1446 = vpop.f32.mrb[0].mxu0
    %v1447 = vadd.f32 0.0, %v1446
    %v1448 = vpop.f32.mrb[0].mxu0
    %v1449 = vpop.f32.mrb[0].mxu0
    %1450 = vdwg.mxu0
    %1451 = vmatprep.subr.bf16.mxu0 0
    %1452 = vmatpush1.bf16.msra.mxu0 %v217
    %1453 = vmatprep.subr.bf16.mxu0 0
    %1454 = vmatpush1.bf16.msra.mxu0 %v220
    %1455 = vmatprep.subr.bf16.mxu0 0
    %1456 = vmatpush1.bf16.msra.mxu0 %v223
    %1457 = vmatprep.subr.bf16.mxu0 0
    %1458 = vmatpush1.bf16.msra.mxu0 %v226
    %1459 = vmatprep.subr.bf16.mxu0 0
    %1460 = vmatpush1.bf16.msra.mxu0 0
    %1461 = vmatprep.subr.bf16.mxu0 0
    %1462 = vmatpush1.bf16.msra.mxu0 0
    %1463 = vmatprep.subr.bf16.mxu0 0
    %1464 = vmatpush1.bf16.msra.mxu0 0
    %1465 = vmatprep.subr.bf16.mxu0 0
    %1466 = vmatpush1.bf16.msra.mxu0 0
    %1467 = vmatprep.subr.bf16.mxu0 0
    %1468 = vmatpush1.bf16.msra.mxu0 0
    %1469 = vmatprep.subr.bf16.mxu0 0
    %1470 = vmatpush1.bf16.msra.mxu0 0
    %1471 = vmatprep.subr.bf16.mxu0 0
    %1472 = vmatpush1.bf16.msra.mxu0 0
    %1473 = vmatprep.subr.bf16.mxu0 0
    %1474 = vmatpush1.bf16.msra.mxu0 0
    %1475 = vmatprep.subr.bf16.mxu0 0
    %1476 = vmatpush1.bf16.msra.mxu0 0
    %1477 = vmatprep.subr.bf16.mxu0 0
    %1478 = vmatpush1.bf16.msra.mxu0 0
    %1479 = vmatprep.subr.bf16.mxu0 0
    %1480 = vmatpush1.bf16.msra.mxu0 0
    %1481 = vmatprep.subr.bf16.mxu0 0
    %1482 = vmatpush1.bf16.msra.mxu0 0
    %1483 = vmatprep.mubr.bf16.mxu0 0
    %1484 = vmatmul.mubr.bf16.gmra.mrb[0].mxu0 %v929
    %v1485 = vpop.f32.mrb[0].mxu0
    %v1486 = vadd.f32 0.0, %v1485
    %v1487 = vpop.f32.mrb[0].mxu0
    %v1488 = vpop.f32.mrb[0].mxu0
    %v1489 = vpop.f32.mrb[0].mxu0
    %1490 = vdwg.mxu0
    %1491 = vmatprep.subr.bf16.mxu0 %v383
    %1492 = vmatpush1.bf16.msra.mxu0 %v382
    %1493 = vmatprep.subr.bf16.mxu0 %v386
    %1494 = vmatpush1.bf16.msra.mxu0 %v385
    %1495 = vmatprep.subr.bf16.mxu0 %v389
    %1496 = vmatpush1.bf16.msra.mxu0 %v388
    %1497 = vmatprep.subr.bf16.mxu0 %v392
    %1498 = vmatpush1.bf16.msra.mxu0 %v391
    %1499 = vmatprep.subr.bf16.mxu0 0
    %1500 = vmatpush1.bf16.msra.mxu0 0
    %1501 = vmatprep.subr.bf16.mxu0 0
    %1502 = vmatpush1.bf16.msra.mxu0 0
    %1503 = vmatprep.subr.bf16.mxu0 0
    %1504 = vmatpush1.bf16.msra.mxu0 0
    %1505 = vmatprep.subr.bf16.mxu0 0
    %1506 = vmatpush1.bf16.msra.mxu0 0
    %1507 = vmatprep.subr.bf16.mxu0 0
    %1508 = vmatpush1.bf16.msra.mxu0 0
    %1509 = vmatprep.subr.bf16.mxu0 0
    %1510 = vmatpush1.bf16.msra.mxu0 0
    %1511 = vmatprep.subr.bf16.mxu0 0
    %1512 = vmatpush1.bf16.msra.mxu0 0
    %1513 = vmatprep.subr.bf16.mxu0 0
    %1514 = vmatpush1.bf16.msra.mxu0 0
    %1515 = vmatprep.subr.bf16.mxu0 0
    %1516 = vmatpush1.bf16.msra.mxu0 0
    %1517 = vmatprep.subr.bf16.mxu0 0
    %1518 = vmatpush1.bf16.msra.mxu0 0
    %1519 = vmatprep.subr.bf16.mxu0 0
    %1520 = vmatpush1.bf16.msra.mxu0 0
    %1521 = vmatprep.subr.bf16.mxu0 0
    %1522 = vmatpush1.bf16.msra.mxu0 0
    %1523 = vmatprep.mubr.bf16.mxu0 0
    %1524 = vmatmul.mubr.bf16.gmra.mrb[0].mxu0 %v1117
    %v1525 = vpop.f32.mrb[0].mxu0
    %v1526 = vadd.f32 0.0, %v1525
    %v1527 = vpop.f32.mrb[0].mxu0
    %v1528 = vadd.f32 0.0, %v1527
    %v1529 = vpop.f32.mrb[0].mxu0
    %v1530 = vpop.f32.mrb[0].mxu0
    %1531 = vdwg.mxu0
    %1532 = vmatprep.subr.bf16.mxu0 0
    %1533 = vmatpush1.bf16.msra.mxu0 %v384
    %1534 = vmatprep.subr.bf16.mxu0 0
    %1535 = vmatpush1.bf16.msra.mxu0 %v387
    %1536 = vmatprep.subr.bf16.mxu0 0
    %1537 = vmatpush1.bf16.msra.mxu0 %v390
    %1538 = vmatprep.subr.bf16.mxu0 0
    %1539 = vmatpush1.bf16.msra.mxu0 %v393
    %1540 = vmatprep.subr.bf16.mxu0 0
    %1541 = vmatpush1.bf16.msra.mxu0 0
    %1542 = vmatprep.subr.bf16.mxu0 0
    %1543 = vmatpush1.bf16.msra.mxu0 0
    %1544 = vmatprep.subr.bf16.mxu0 0
    %1545 = vmatpush1.bf16.msra.mxu0 0
    %1546 = vmatprep.subr.bf16.mxu0 0
    %1547 = vmatpush1.bf16.msra.mxu0 0
    %1548 = vmatprep.subr.bf16.mxu0 0
    %1549 = vmatpush1.bf16.msra.mxu0 0
    %1550 = vmatprep.subr.bf16.mxu0 0
    %1551 = vmatpush1.bf16.msra.mxu0 0
    %1552 = vmatprep.subr.bf16.mxu0 0
    %1553 = vmatpush1.bf16.msra.mxu0 0
    %1554 = vmatprep.subr.bf16.mxu0 0
    %1555 = vmatpush1.bf16.msra.mxu0 0
    %1556 = vmatprep.subr.bf16.mxu0 0
    %1557 = vmatpush1.bf16.msra.mxu0 0
    %1558 = vmatprep.subr.bf16.mxu0 0
    %1559 = vmatpush1.bf16.msra.mxu0 0
    %1560 = vmatprep.subr.bf16.mxu0 0
    %1561 = vmatpush1.bf16.msra.mxu0 0
    %1562 = vmatprep.subr.bf16.mxu0 0
    %1563 = vmatpush1.bf16.msra.mxu0 0
    %1564 = vmatprep.mubr.bf16.mxu0 0
    %1565 = vmatmul.mubr.bf16.gmra.mrb[0].mxu0 %v1117
    %v1566 = vpop.f32.mrb[0].mxu0
    %v1567 = vadd.f32 0.0, %v1566
    %v1568 = vpop.f32.mrb[0].mxu0
    %v1569 = vpop.f32.mrb[0].mxu0
    %v1570 = vpop.f32.mrb[0].mxu0
    %1571 = vdwg.mxu0
    %1572 = vmatprep.subr.bf16.mxu0 %v549
    %1573 = vmatpush1.bf16.msra.mxu0 %v548
    %1574 = vmatprep.subr.bf16.mxu0 %v552
    %1575 = vmatpush1.bf16.msra.mxu0 %v551
    %1576 = vmatprep.subr.bf16.mxu0 %v555
    %1577 = vmatpush1.bf16.msra.mxu0 %v554
    %1578 = vmatprep.subr.bf16.mxu0 %v558
    %1579 = vmatpush1.bf16.msra.mxu0 %v557
    %1580 = vmatprep.subr.bf16.mxu0 0
    %1581 = vmatpush1.bf16.msra.mxu0 0
    %1582 = vmatprep.subr.bf16.mxu0 0
    %1583 = vmatpush1.bf16.msra.mxu0 0
    %1584 = vmatprep.subr.bf16.mxu0 0
    %1585 = vmatpush1.bf16.msra.mxu0 0
    %1586 = vmatprep.subr.bf16.mxu0 0
    %1587 = vmatpush1.bf16.msra.mxu0 0
    %1588 = vmatprep.subr.bf16.mxu0 0
    %1589 = vmatpush1.bf16.msra.mxu0 0
    %1590 = vmatprep.subr.bf16.mxu0 0
    %1591 = vmatpush1.bf16.msra.mxu0 0
    %1592 = vmatprep.subr.bf16.mxu0 0
    %1593 = vmatpush1.bf16.msra.mxu0 0
    %1594 = vmatprep.subr.bf16.mxu0 0
    %1595 = vmatpush1.bf16.msra.mxu0 0
    %1596 = vmatprep.subr.bf16.mxu0 0
    %1597 = vmatpush1.bf16.msra.mxu0 0
    %1598 = vmatprep.subr.bf16.mxu0 0
    %1599 = vmatpush1.bf16.msra.mxu0 0
    %1600 = vmatprep.subr.bf16.mxu0 0
    %1601 = vmatpush1.bf16.msra.mxu0 0
    %1602 = vmatprep.subr.bf16.mxu0 0
    %1603 = vmatpush1.bf16.msra.mxu0 0
    %1604 = vmatprep.mubr.bf16.mxu0 0
    %1605 = vmatmul.mubr.bf16.gmra.mrb[0].mxu0 %v1305
    %v1606 = vpop.f32.mrb[0].mxu0
    %v1607 = vadd.f32 0.0, %v1606
    %v1608 = vpop.f32.mrb[0].mxu0
    %v1609 = vadd.f32 0.0, %v1608
    %v1610 = vpop.f32.mrb[0].mxu0
    %v1611 = vpop.f32.mrb[0].mxu0
    %1612 = vdwg.mxu0
    %1613 = vmatprep.subr.bf16.mxu0 0
    %1614 = vmatpush1.bf16.msra.mxu0 %v550
    %1615 = vmatprep.subr.bf16.mxu0 0
    %1616 = vmatpush1.bf16.msra.mxu0 %v553
    %1617 = vmatprep.subr.bf16.mxu0 0
    %1618 = vmatpush1.bf16.msra.mxu0 %v556
    %1619 = vmatprep.subr.bf16.mxu0 0
    %1620 = vmatpush1.bf16.msra.mxu0 %v559
    %1621 = vmatprep.subr.bf16.mxu0 0
    %1622 = vmatpush1.bf16.msra.mxu0 0
    %1623 = vmatprep.subr.bf16.mxu0 0
    %1624 = vmatpush1.bf16.msra.mxu0 0
    %1625 = vmatprep.subr.bf16.mxu0 0
    %1626 = vmatpush1.bf16.msra.mxu0 0
    %1627 = vmatprep.subr.bf16.mxu0 0
    %1628 = vmatpush1.bf16.msra.mxu0 0
    %1629 = vmatprep.subr.bf16.mxu0 0
    %1630 = vmatpush1.bf16.msra.mxu0 0
    %1631 = vmatprep.subr.bf16.mxu0 0
    %1632 = vmatpush1.bf16.msra.mxu0 0
    %1633 = vmatprep.subr.bf16.mxu0 0
    %1634 = vmatpush1.bf16.msra.mxu0 0
    %1635 = vmatprep.subr.bf16.mxu0 0
    %1636 = vmatpush1.bf16.msra.mxu0 0
    %1637 = vmatprep.subr.bf16.mxu0 0
    %1638 = vmatpush1.bf16.msra.mxu0 0
    %1639 = vmatprep.subr.bf16.mxu0 0
    %1640 = vmatpush1.bf16.msra.mxu0 0
    %1641 = vmatprep.subr.bf16.mxu0 0
    %1642 = vmatpush1.bf16.msra.mxu0 0
    %1643 = vmatprep.subr.bf16.mxu0 0
    %1644 = vmatpush1.bf16.msra.mxu0 0
    %1645 = vmatprep.mubr.bf16.mxu0 0
    %1646 = vmatmul.mubr.bf16.gmra.mrb[0].mxu0 %v1305
    %v1647 = vpop.f32.mrb[0].mxu0
    %v1648 = vadd.f32 0.0, %v1647
    %v1649 = vpop.f32.mrb[0].mxu0
    %v1650 = vpop.f32.mrb[0].mxu0
    %v1651 = vpop.f32.mrb[0].mxu0
    %1652 = vdwg.mxu0
    %v1653 = vpack.c.bf16 %v1409, %v1409
    %v1655 = vsel %vm239, %v1653, 0
    %1657 = vmatprep.subr.bf16.mxu0 %v715
    %1658 = vmatpush1.bf16.msra.mxu0 %v714
    %1659 = vmatprep.subr.bf16.mxu0 %v718
    %1660 = vmatpush1.bf16.msra.mxu0 %v717
    %1661 = vmatprep.subr.bf16.mxu0 %v721
    %1662 = vmatpush1.bf16.msra.mxu0 %v720
    %1663 = vmatprep.subr.bf16.mxu0 %v724
    %1664 = vmatpush1.bf16.msra.mxu0 %v723
    %1665 = vmatprep.subr.bf16.mxu0 0
    %1666 = vmatpush1.bf16.msra.mxu0 0
    %1667 = vmatprep.subr.bf16.mxu0 0
    %1668 = vmatpush1.bf16.msra.mxu0 0
    %1669 = vmatprep.subr.bf16.mxu0 0
    %1670 = vmatpush1.bf16.msra.mxu0 0
    %1671 = vmatprep.subr.bf16.mxu0 0
    %1672 = vmatpush1.bf16.msra.mxu0 0
    %1673 = vmatprep.subr.bf16.mxu0 0
    %1674 = vmatpush1.bf16.msra.mxu0 0
    %1675 = vmatprep.subr.bf16.mxu0 0
    %1676 = vmatpush1.bf16.msra.mxu0 0
    %1677 = vmatprep.subr.bf16.mxu0 0
    %1678 = vmatpush1.bf16.msra.mxu0 0
    %1679 = vmatprep.subr.bf16.mxu0 0
    %1680 = vmatpush1.bf16.msra.mxu0 0
    %1681 = vmatprep.subr.bf16.mxu0 0
    %1682 = vmatpush1.bf16.msra.mxu0 0
    %1683 = vmatprep.subr.bf16.mxu0 0
    %1684 = vmatpush1.bf16.msra.mxu0 0
    %1685 = vmatprep.subr.bf16.mxu0 0
    %1686 = vmatpush1.bf16.msra.mxu0 0
    %1687 = vmatprep.subr.bf16.mxu0 0
    %1688 = vmatpush1.bf16.msra.mxu0 0
    %1689 = vmatprep.mubr.bf16.mxu0 0
    %1690 = vmatmul.mubr.bf16.gmra.mrb[0].mxu0 %v1655
    %v1691 = vpop.f32.mrb[0].mxu0
    %v1692 = vadd.f32 0.0, %v1691
    %v1693 = vpop.f32.mrb[0].mxu0
    %v1694 = vadd.f32 0.0, %v1693
    %v1695 = vpop.f32.mrb[0].mxu0
    %v1696 = vpop.f32.mrb[0].mxu0
    %1697 = vdwg.mxu0
    %1698 = vmatprep.subr.bf16.mxu0 0
    %1699 = vmatpush1.bf16.msra.mxu0 %v716
    %1700 = vmatprep.subr.bf16.mxu0 0
    %1701 = vmatpush1.bf16.msra.mxu0 %v719
    %1702 = vmatprep.subr.bf16.mxu0 0
    %1703 = vmatpush1.bf16.msra.mxu0 %v722
    %1704 = vmatprep.subr.bf16.mxu0 0
    %1705 = vmatpush1.bf16.msra.mxu0 %v725
    %1706 = vmatprep.subr.bf16.mxu0 0
    %1707 = vmatpush1.bf16.msra.mxu0 0
    %1708 = vmatprep.subr.bf16.mxu0 0
    %1709 = vmatpush1.bf16.msra.mxu0 0
    %1710 = vmatprep.subr.bf16.mxu0 0
    %1711 = vmatpush1.bf16.msra.mxu0 0
    %1712 = vmatprep.subr.bf16.mxu0 0
    %1713 = vmatpush1.bf16.msra.mxu0 0
    %1714 = vmatprep.subr.bf16.mxu0 0
    %1715 = vmatpush1.bf16.msra.mxu0 0
    %1716 = vmatprep.subr.bf16.mxu0 0
    %1717 = vmatpush1.bf16.msra.mxu0 0
    %1718 = vmatprep.subr.bf16.mxu0 0
    %1719 = vmatpush1.bf16.msra.mxu0 0
    %1720 = vmatprep.subr.bf16.mxu0 0
    %1721 = vmatpush1.bf16.msra.mxu0 0
    %1722 = vmatprep.subr.bf16.mxu0 0
    %1723 = vmatpush1.bf16.msra.mxu0 0
    %1724 = vmatprep.subr.bf16.mxu0 0
    %1725 = vmatpush1.bf16.msra.mxu0 0
    %1726 = vmatprep.subr.bf16.mxu0 0
    %1727 = vmatpush1.bf16.msra.mxu0 0
    %1728 = vmatprep.subr.bf16.mxu0 0
    %1729 = vmatpush1.bf16.msra.mxu0 0
    %1730 = vmatprep.mubr.bf16.mxu0 0
    %1731 = vmatmul.mubr.bf16.gmra.mrb[0].mxu0 %v1655
    %v1732 = vpop.f32.mrb[0].mxu0
    %v1733 = vadd.f32 0.0, %v1732
    %v1734 = vpop.f32.mrb[0].mxu0
    %v1735 = vpop.f32.mrb[0].mxu0
    %v1736 = vpop.f32.mrb[0].mxu0
    %1737 = vdwg.mxu0
    %v1738 = vld [vmem:[%s0] sm:$0xc]
    %v1739 = vld [vmem:[%s0 + $0x8] sm:$0xc]
    %v1740 = vld [vmem:[%s0 + $0x10] sm:$0xc]
    %v1742 = vrot.slane %v1445, 6
    %v1744 = vadd.f32 %v1738, %v1742
    %v1745 = vxor.u32 %v1744, 2147483648
    %v1746 = vmul.f32 %v1745, 1.442695
    %v1747 = vpow.pop %v1746
    %v1748 = vadd.f32 %v1747, 1.0
    %v1749 = vrcp.pop %v1748
    %v1750 = vmul.f32 1.0, %v1749
    %v1752 = vrot.slane %v1447, 6
    %v1754 = vadd.f32 %v1739, %v1752
    %v1755 = vxor.u32 %v1754, 2147483648
    %v1756 = vmul.f32 %v1755, 1.442695
    %v1757 = vpow.pop %v1756
    %v1758 = vadd.f32 %v1757, 1.0
    %v1759 = vrcp.pop %v1758
    %v1760 = vmul.f32 1.0, %v1759
    %v1761 = vadd.f32 %v1486, %v125
    %v1763 = vrot.slane %v1761, 6
    %v1765 = vmul.f32 %v1750, %v1763
    %v1766 = vadd.f32 %v1740, %v1765
    %v1767 = vtanh.pop %v1766
    %v1768 = vsub.f32 1.0, %v1760
    %v1769 = vmul.f32 %v1768, %v1767
    %v1771 = vrot.slane %v846, 6
    %v1773 = vmul.f32 %v1760, %v1771
    %v1774 = vadd.f32 %v1769, %v1773
    %v1775 = vpack.c.bf16 %v1774, %v1774
    %v1777 = vrot.slane %v1775, 1
    %v1779 = vsel %vm239, %v1777, 0
    %1781 = vmatprep.subr.bf16.mxu0 %v905
    %1782 = vmatpush1.bf16.msra.mxu0 %v904
    %1783 = vmatprep.subr.bf16.mxu0 %v908
    %1784 = vmatpush1.bf16.msra.mxu0 %v907
    %1785 = vmatprep.subr.bf16.mxu0 %v911
    %1786 = vmatpush1.bf16.msra.mxu0 %v910
    %1787 = vmatprep.subr.bf16.mxu0 %v914
    %1788 = vmatpush1.bf16.msra.mxu0 %v913
    %1789 = vmatprep.subr.bf16.mxu0 0
    %1790 = vmatpush1.bf16.msra.mxu0 0
    %1791 = vmatprep.subr.bf16.mxu0 0
    %1792 = vmatpush1.bf16.msra.mxu0 0
    %1793 = vmatprep.subr.bf16.mxu0 0
    %1794 = vmatpush1.bf16.msra.mxu0 0
    %1795 = vmatprep.subr.bf16.mxu0 0
    %1796 = vmatpush1.bf16.msra.mxu0 0
    %1797 = vmatprep.subr.bf16.mxu0 0
    %1798 = vmatpush1.bf16.msra.mxu0 0
    %1799 = vmatprep.subr.bf16.mxu0 0
    %1800 = vmatpush1.bf16.msra.mxu0 0
    %1801 = vmatprep.subr.bf16.mxu0 0
    %1802 = vmatpush1.bf16.msra.mxu0 0
    %1803 = vmatprep.subr.bf16.mxu0 0
    %1804 = vmatpush1.bf16.msra.mxu0 0
    %1805 = vmatprep.subr.bf16.mxu0 0
    %1806 = vmatpush1.bf16.msra.mxu0 0
    %1807 = vmatprep.subr.bf16.mxu0 0
    %1808 = vmatpush1.bf16.msra.mxu0 0
    %1809 = vmatprep.subr.bf16.mxu0 0
    %1810 = vmatpush1.bf16.msra.mxu0 0
    %1811 = vmatprep.subr.bf16.mxu0 0
    %1812 = vmatpush1.bf16.msra.mxu0 0
    %1813 = vmatprep.mubr.bf16.mxu0 0
    %1814 = vmatmul.mubr.bf16.gmra.mrb[0].mxu0 %v1779
    %v1815 = vpop.f32.mrb[0].mxu0
    %v1816 = vadd.f32 %v72, %v1815
    %v1817 = vpop.f32.mrb[0].mxu0
    %v1818 = vadd.f32 %v76, %v1817
    %v1819 = vpop.f32.mrb[0].mxu0
    %v1820 = vpop.f32.mrb[0].mxu0
    %1821 = vdwg.mxu0
    %1822 = vmatprep.subr.bf16.mxu0 0
    %1823 = vmatpush1.bf16.msra.mxu0 %v906
    %1824 = vmatprep.subr.bf16.mxu0 0
    %1825 = vmatpush1.bf16.msra.mxu0 %v909
    %1826 = vmatprep.subr.bf16.mxu0 0
    %1827 = vmatpush1.bf16.msra.mxu0 %v912
    %1828 = vmatprep.subr.bf16.mxu0 0
    %1829 = vmatpush1.bf16.msra.mxu0 %v915
    %1830 = vmatprep.subr.bf16.mxu0 0
    %1831 = vmatpush1.bf16.msra.mxu0 0
    %1832 = vmatprep.subr.bf16.mxu0 0
    %1833 = vmatpush1.bf16.msra.mxu0 0
    %1834 = vmatprep.subr.bf16.mxu0 0
    %1835 = vmatpush1.bf16.msra.mxu0 0
    %1836 = vmatprep.subr.bf16.mxu0 0
    %1837 = vmatpush1.bf16.msra.mxu0 0
    %1838 = vmatprep.subr.bf16.mxu0 0
    %1839 = vmatpush1.bf16.msra.mxu0 0
    %1840 = vmatprep.subr.bf16.mxu0 0
    %1841 = vmatpush1.bf16.msra.mxu0 0
    %1842 = vmatprep.subr.bf16.mxu0 0
    %1843 = vmatpush1.bf16.msra.mxu0 0
    %1844 = vmatprep.subr.bf16.mxu0 0
    %1845 = vmatpush1.bf16.msra.mxu0 0
    %1846 = vmatprep.subr.bf16.mxu0 0
    %1847 = vmatpush1.bf16.msra.mxu0 0
    %1848 = vmatprep.subr.bf16.mxu0 0
    %1849 = vmatpush1.bf16.msra.mxu0 0
    %1850 = vmatprep.subr.bf16.mxu0 0
    %1851 = vmatpush1.bf16.msra.mxu0 0
    %1852 = vmatprep.subr.bf16.mxu0 0
    %1853 = vmatpush1.bf16.msra.mxu0 0
    %1854 = vmatprep.mubr.bf16.mxu0 0
    %1855 = vmatmul.mubr.bf16.gmra.mrb[0].mxu0 %v1779
    %v1856 = vpop.f32.mrb[0].mxu0
    %v1857 = vadd.f32 %v80, %v1856
    %v1858 = vpop.f32.mrb[0].mxu0
    %v1859 = vpop.f32.mrb[0].mxu0
    %v1860 = vpop.f32.mrb[0].mxu0
    %1861 = vdwg.mxu0
    %v1862 = vadd.f32 %v1816, %v1526
    %v1863 = vxor.u32 %v1862, 2147483648
    %v1864 = vmul.f32 %v1863, 1.442695
    %v1865 = vpow.pop %v1864
    %v1866 = vadd.f32 %v1865, 1.0
    %v1867 = vrcp.pop %v1866
    %v1868 = vmul.f32 1.0, %v1867
    %v1869 = vadd.f32 %v1818, %v1528
    %v1870 = vxor.u32 %v1869, 2147483648
    %v1871 = vmul.f32 %v1870, 1.442695
    %v1872 = vpow.pop %v1871
    %v1873 = vadd.f32 %v1872, 1.0
    %v1874 = vrcp.pop %v1873
    %v1875 = vmul.f32 1.0, %v1874
    %v1876 = vadd.f32 %v1567, %v133
    %v1877 = vmul.f32 %v1868, %v1876
    %v1878 = vadd.f32 %v1857, %v1877
    %v1879 = vtanh.pop %v1878
    %v1880 = vsub.f32 1.0, %v1875
    %v1881 = vmul.f32 %v1880, %v1879
    %v1882 = vmul.f32 %v1875, %v1033
    %v1883 = vadd.f32 %v1881, %v1882
    %v1884 = vpack.c.bf16 %v1883, %v1883
    %v1886 = vsel %vm239, %v1884, 0
    %1888 = vmatprep.subr.bf16.mxu0 %v1093
    %1889 = vmatpush1.bf16.msra.mxu0 %v1092
    %1890 = vmatprep.subr.bf16.mxu0 %v1096
    %1891 = vmatpush1.bf16.msra.mxu0 %v1095
    %1892 = vmatprep.subr.bf16.mxu0 %v1099
    %1893 = vmatpush1.bf16.msra.mxu0 %v1098
    %1894 = vmatprep.subr.bf16.mxu0 %v1102
    %1895 = vmatpush1.bf16.msra.mxu0 %v1101
    %1896 = vmatprep.subr.bf16.mxu0 0
    %1897 = vmatpush1.bf16.msra.mxu0 0
    %1898 = vmatprep.subr.bf16.mxu0 0
    %1899 = vmatpush1.bf16.msra.mxu0 0
    %1900 = vmatprep.subr.bf16.mxu0 0
    %1901 = vmatpush1.bf16.msra.mxu0 0
    %1902 = vmatprep.subr.bf16.mxu0 0
    %1903 = vmatpush1.bf16.msra.mxu0 0
    %1904 = vmatprep.subr.bf16.mxu0 0
    %1905 = vmatpush1.bf16.msra.mxu0 0
    %1906 = vmatprep.subr.bf16.mxu0 0
    %1907 = vmatpush1.bf16.msra.mxu0 0
    %1908 = vmatprep.subr.bf16.mxu0 0
    %1909 = vmatpush1.bf16.msra.mxu0 0
    %1910 = vmatprep.subr.bf16.mxu0 0
    %1911 = vmatpush1.bf16.msra.mxu0 0
    %1912 = vmatprep.subr.bf16.mxu0 0
    %1913 = vmatpush1.bf16.msra.mxu0 0
    %1914 = vmatprep.subr.bf16.mxu0 0
    %1915 = vmatpush1.bf16.msra.mxu0 0
    %1916 = vmatprep.subr.bf16.mxu0 0
    %1917 = vmatpush1.bf16.msra.mxu0 0
    %1918 = vmatprep.subr.bf16.mxu0 0
    %1919 = vmatpush1.bf16.msra.mxu0 0
    %1920 = vmatprep.mubr.bf16.mxu0 0
    %1921 = vmatmul.mubr.bf16.gmra.mrb[0].mxu0 %v1886
    %v1922 = vpop.f32.mrb[0].mxu0
    %v1923 = vadd.f32 %v90, %v1922
    %v1924 = vpop.f32.mrb[0].mxu0
    %v1925 = vadd.f32 %v94, %v1924
    %v1926 = vpop.f32.mrb[0].mxu0
    %v1927 = vpop.f32.mrb[0].mxu0
    %1928 = vdwg.mxu0
    %1929 = vmatprep.subr.bf16.mxu0 0
    %1930 = vmatpush1.bf16.msra.mxu0 %v1094
    %1931 = vmatprep.subr.bf16.mxu0 0
    %1932 = vmatpush1.bf16.msra.mxu0 %v1097
    %1933 = vmatprep.subr.bf16.mxu0 0
    %1934 = vmatpush1.bf16.msra.mxu0 %v1100
    %1935 = vmatprep.subr.bf16.mxu0 0
    %1936 = vmatpush1.bf16.msra.mxu0 %v1103
    %1937 = vmatprep.subr.bf16.mxu0 0
    %1938 = vmatpush1.bf16.msra.mxu0 0
    %1939 = vmatprep.subr.bf16.mxu0 0
    %1940 = vmatpush1.bf16.msra.mxu0 0
    %1941 = vmatprep.subr.bf16.mxu0 0
    %1942 = vmatpush1.bf16.msra.mxu0 0
    %1943 = vmatprep.subr.bf16.mxu0 0
    %1944 = vmatpush1.bf16.msra.mxu0 0
    %1945 = vmatprep.subr.bf16.mxu0 0
    %1946 = vmatpush1.bf16.msra.mxu0 0
    %1947 = vmatprep.subr.bf16.mxu0 0
    %1948 = vmatpush1.bf16.msra.mxu0 0
    %1949 = vmatprep.subr.bf16.mxu0 0
    %1950 = vmatpush1.bf16.msra.mxu0 0
    %1951 = vmatprep.subr.bf16.mxu0 0
    %1952 = vmatpush1.bf16.msra.mxu0 0
    %1953 = vmatprep.subr.bf16.mxu0 0
    %1954 = vmatpush1.bf16.msra.mxu0 0
    %1955 = vmatprep.subr.bf16.mxu0 0
    %1956 = vmatpush1.bf16.msra.mxu0 0
    %1957 = vmatprep.subr.bf16.mxu0 0
    %1958 = vmatpush1.bf16.msra.mxu0 0
    %1959 = vmatprep.subr.bf16.mxu0 0
    %1960 = vmatpush1.bf16.msra.mxu0 0
    %1961 = vmatprep.mubr.bf16.mxu0 0
    %1962 = vmatmul.mubr.bf16.gmra.mrb[0].mxu0 %v1886
    %v1963 = vpop.f32.mrb[0].mxu0
    %v1964 = vadd.f32 %v98, %v1963
    %v1965 = vpop.f32.mrb[0].mxu0
    %v1966 = vpop.f32.mrb[0].mxu0
    %v1967 = vpop.f32.mrb[0].mxu0
    %1968 = vdwg.mxu0
    %v1969 = vadd.f32 %v1923, %v1607
    %v1970 = vxor.u32 %v1969, 2147483648
    %v1971 = vmul.f32 %v1970, 1.442695
    %v1972 = vpow.pop %v1971
    %v1973 = vadd.f32 %v1972, 1.0
    %v1974 = vrcp.pop %v1973
    %v1975 = vmul.f32 1.0, %v1974
    %v1976 = vadd.f32 %v1925, %v1609
    %v1977 = vxor.u32 %v1976, 2147483648
    %v1978 = vmul.f32 %v1977, 1.442695
    %v1979 = vpow.pop %v1978
    %v1980 = vadd.f32 %v1979, 1.0
    %v1981 = vrcp.pop %v1980
    %v1982 = vmul.f32 1.0, %v1981
    %v1983 = vadd.f32 %v1648, %v141
    %v1984 = vmul.f32 %v1975, %v1983
    %v1985 = vadd.f32 %v1964, %v1984
    %v1986 = vtanh.pop %v1985
    %v1987 = vsub.f32 1.0, %v1982
    %v1988 = vmul.f32 %v1987, %v1986
    %v1989 = vmul.f32 %v1982, %v1221
    %v1990 = vadd.f32 %v1988, %v1989
    %v1991 = vpack.c.bf16 %v1990, %v1990
    %v1993 = vsel %vm239, %v1991, 0
    %1995 = vmatprep.subr.bf16.mxu0 %v1281
    %1996 = vmatpush1.bf16.msra.mxu0 %v1280
    %1997 = vmatprep.subr.bf16.mxu0 %v1284
    %1998 = vmatpush1.bf16.msra.mxu0 %v1283
    %1999 = vmatprep.subr.bf16.mxu0 %v1287
    %2000 = vmatpush1.bf16.msra.mxu0 %v1286
    %2001 = vmatprep.subr.bf16.mxu0 %v1290
    %2002 = vmatpush1.bf16.msra.mxu0 %v1289
    %2003 = vmatprep.subr.bf16.mxu0 0
    %2004 = vmatpush1.bf16.msra.mxu0 0
    %2005 = vmatprep.subr.bf16.mxu0 0
    %2006 = vmatpush1.bf16.msra.mxu0 0
    %2007 = vmatprep.subr.bf16.mxu0 0
    %2008 = vmatpush1.bf16.msra.mxu0 0
    %2009 = vmatprep.subr.bf16.mxu0 0
    %2010 = vmatpush1.bf16.msra.mxu0 0
    %2011 = vmatprep.subr.bf16.mxu0 0
    %2012 = vmatpush1.bf16.msra.mxu0 0
    %2013 = vmatprep.subr.bf16.mxu0 0
    %2014 = vmatpush1.bf16.msra.mxu0 0
    %2015 = vmatprep.subr.bf16.mxu0 0
    %2016 = vmatpush1.bf16.msra.mxu0 0
    %2017 = vmatprep.subr.bf16.mxu0 0
    %2018 = vmatpush1.bf16.msra.mxu0 0
    %2019 = vmatprep.subr.bf16.mxu0 0
    %2020 = vmatpush1.bf16.msra.mxu0 0
    %2021 = vmatprep.subr.bf16.mxu0 0
    %2022 = vmatpush1.bf16.msra.mxu0 0
    %2023 = vmatprep.subr.bf16.mxu0 0
    %2024 = vmatpush1.bf16.msra.mxu0 0
    %2025 = vmatprep.subr.bf16.mxu0 0
    %2026 = vmatpush1.bf16.msra.mxu0 0
    %2027 = vmatprep.mubr.bf16.mxu0 0
    %2028 = vmatmul.mubr.bf16.gmra.mrb[0].mxu0 %v1993
    %v2029 = vpop.f32.mrb[0].mxu0
    %v2030 = vadd.f32 %v108, %v2029
    %v2031 = vpop.f32.mrb[0].mxu0
    %v2032 = vadd.f32 %v112, %v2031
    %v2033 = vpop.f32.mrb[0].mxu0
    %v2034 = vpop.f32.mrb[0].mxu0
    %2035 = vdwg.mxu0
    %2036 = vmatprep.subr.bf16.mxu0 0
    %2037 = vmatpush1.bf16.msra.mxu0 %v1282
    %2038 = vmatprep.subr.bf16.mxu0 0
    %2039 = vmatpush1.bf16.msra.mxu0 %v1285
    %2040 = vmatprep.subr.bf16.mxu0 0
    %2041 = vmatpush1.bf16.msra.mxu0 %v1288
    %2042 = vmatprep.subr.bf16.mxu0 0
    %2043 = vmatpush1.bf16.msra.mxu0 %v1291
    %2044 = vmatprep.subr.bf16.mxu0 0
    %2045 = vmatpush1.bf16.msra.mxu0 0
    %2046 = vmatprep.subr.bf16.mxu0 0
    %2047 = vmatpush1.bf16.msra.mxu0 0
    %2048 = vmatprep.subr.bf16.mxu0 0
    %2049 = vmatpush1.bf16.msra.mxu0 0
    %2050 = vmatprep.subr.bf16.mxu0 0
    %2051 = vmatpush1.bf16.msra.mxu0 0
    %2052 = vmatprep.subr.bf16.mxu0 0
    %2053 = vmatpush1.bf16.msra.mxu0 0
    %2054 = vmatprep.subr.bf16.mxu0 0
    %2055 = vmatpush1.bf16.msra.mxu0 0
    %2056 = vmatprep.subr.bf16.mxu0 0
    %2057 = vmatpush1.bf16.msra.mxu0 0
    %2058 = vmatprep.subr.bf16.mxu0 0
    %2059 = vmatpush1.bf16.msra.mxu0 0
    %2060 = vmatprep.subr.bf16.mxu0 0
    %2061 = vmatpush1.bf16.msra.mxu0 0
    %2062 = vmatprep.subr.bf16.mxu0 0
    %2063 = vmatpush1.bf16.msra.mxu0 0
    %2064 = vmatprep.subr.bf16.mxu0 0
    %2065 = vmatpush1.bf16.msra.mxu0 0
    %2066 = vmatprep.subr.bf16.mxu0 0
    %2067 = vmatpush1.bf16.msra.mxu0 0
    %2068 = vmatprep.mubr.bf16.mxu0 0
    %2069 = vmatmul.mubr.bf16.gmra.mrb[0].mxu0 %v1993
    %v2070 = vpop.f32.mrb[0].mxu0
    %v2071 = vadd.f32 %v116, %v2070
    %v2072 = vpop.f32.mrb[0].mxu0
    %v2073 = vpop.f32.mrb[0].mxu0
    %v2074 = vpop.f32.mrb[0].mxu0
    %2075 = vdwg.mxu0
    %v2076 = vadd.f32 %v2030, %v1692
    %v2077 = vxor.u32 %v2076, 2147483648
    %v2078 = vmul.f32 %v2077, 1.442695
    %v2079 = vpow.pop %v2078
    %v2080 = vadd.f32 %v2079, 1.0
    %v2081 = vrcp.pop %v2080
    %v2082 = vmul.f32 1.0, %v2081
    %v2083 = vadd.f32 %v2032, %v1694
    %v2084 = vxor.u32 %v2083, 2147483648
    %v2085 = vmul.f32 %v2084, 1.442695
    %v2086 = vpow.pop %v2085
    %v2087 = vadd.f32 %v2086, 1.0
    %v2088 = vrcp.pop %v2087
    %v2089 = vmul.f32 1.0, %v2088
    %v2090 = vadd.f32 %v1733, %v149
    %v2091 = vmul.f32 %v2082, %v2090
    %v2092 = vadd.f32 %v2071, %v2091
    %v2093 = vtanh.pop %v2092
    %v2094 = vsub.f32 1.0, %v2089
    %v2095 = vmul.f32 %v2094, %v2093
    %v2096 = vmul.f32 %v2089, %v1409
    %v2097 = vadd.f32 %v2095, %v2096
    %2098 = vmatprep.subr.bf16.mxu0 %v216
    %2099 = vmatpush1.bf16.msra.mxu0 %v215
    %2100 = vmatprep.subr.bf16.mxu0 %v219
    %2101 = vmatpush1.bf16.msra.mxu0 %v218
    %2102 = vmatprep.subr.bf16.mxu0 %v222
    %2103 = vmatpush1.bf16.msra.mxu0 %v221
    %2104 = vmatprep.subr.bf16.mxu0 %v225
    %2105 = vmatpush1.bf16.msra.mxu0 %v224
    %2106 = vmatprep.subr.bf16.mxu0 0
    %2107 = vmatpush1.bf16.msra.mxu0 0
    %2108 = vmatprep.subr.bf16.mxu0 0
    %2109 = vmatpush1.bf16.msra.mxu0 0
    %2110 = vmatprep.subr.bf16.mxu0 0
    %2111 = vmatpush1.bf16.msra.mxu0 0
    %2112 = vmatprep.subr.bf16.mxu0 0
    %2113 = vmatpush1.bf16.msra.mxu0 0
    %2114 = vmatprep.subr.bf16.mxu0 0
    %2115 = vmatpush1.bf16.msra.mxu0 0
    %2116 = vmatprep.subr.bf16.mxu0 0
    %2117 = vmatpush1.bf16.msra.mxu0 0
    %2118 = vmatprep.subr.bf16.mxu0 0
    %2119 = vmatpush1.bf16.msra.mxu0 0
    %2120 = vmatprep.subr.bf16.mxu0 0
    %2121 = vmatpush1.bf16.msra.mxu0 0
    %2122 = vmatprep.subr.bf16.mxu0 0
    %2123 = vmatpush1.bf16.msra.mxu0 0
    %2124 = vmatprep.subr.bf16.mxu0 0
    %2125 = vmatpush1.bf16.msra.mxu0 0
    %2126 = vmatprep.subr.bf16.mxu0 0
    %2127 = vmatpush1.bf16.msra.mxu0 0
    %2128 = vmatprep.subr.bf16.mxu0 0
    %2129 = vmatpush1.bf16.msra.mxu0 0
    %2130 = vmatprep.mubr.bf16.mxu0 0
    %2131 = vmatmul.mubr.bf16.gmra.mrb[0].mxu0 %v1779
    %v2132 = vpop.f32.mrb[0].mxu0
    %v2133 = vadd.f32 0.0, %v2132
    %v2134 = vpop.f32.mrb[0].mxu0
    %v2135 = vadd.f32 0.0, %v2134
    %v2136 = vpop.f32.mrb[0].mxu0
    %v2137 = vpop.f32.mrb[0].mxu0
    %2138 = vdwg.mxu0
    %2139 = vmatprep.subr.bf16.mxu0 0
    %2140 = vmatpush1.bf16.msra.mxu0 %v217
    %2141 = vmatprep.subr.bf16.mxu0 0
    %2142 = vmatpush1.bf16.msra.mxu0 %v220
    %2143 = vmatprep.subr.bf16.mxu0 0
    %2144 = vmatpush1.bf16.msra.mxu0 %v223
    %2145 = vmatprep.subr.bf16.mxu0 0
    %2146 = vmatpush1.bf16.msra.mxu0 %v226
    %2147 = vmatprep.subr.bf16.mxu0 0
    %2148 = vmatpush1.bf16.msra.mxu0 0
    %2149 = vmatprep.subr.bf16.mxu0 0
    %2150 = vmatpush1.bf16.msra.mxu0 0
    %2151 = vmatprep.subr.bf16.mxu0 0
    %2152 = vmatpush1.bf16.msra.mxu0 0
    %2153 = vmatprep.subr.bf16.mxu0 0
    %2154 = vmatpush1.bf16.msra.mxu0 0
    %2155 = vmatprep.subr.bf16.mxu0 0
    %2156 = vmatpush1.bf16.msra.mxu0 0
    %2157 = vmatprep.subr.bf16.mxu0 0
    %2158 = vmatpush1.bf16.msra.mxu0 0
    %2159 = vmatprep.subr.bf16.mxu0 0
    %2160 = vmatpush1.bf16.msra.mxu0 0
    %2161 = vmatprep.subr.bf16.mxu0 0
    %2162 = vmatpush1.bf16.msra.mxu0 0
    %2163 = vmatprep.subr.bf16.mxu0 0
    %2164 = vmatpush1.bf16.msra.mxu0 0
    %2165 = vmatprep.subr.bf16.mxu0 0
    %2166 = vmatpush1.bf16.msra.mxu0 0
    %2167 = vmatprep.subr.bf16.mxu0 0
    %2168 = vmatpush1.bf16.msra.mxu0 0
    %2169 = vmatprep.subr.bf16.mxu0 0
    %2170 = vmatpush1.bf16.msra.mxu0 0
    %2171 = vmatprep.mubr.bf16.mxu0 0
    %2172 = vmatmul.mubr.bf16.gmra.mrb[0].mxu0 %v1779
    %v2173 = vpop.f32.mrb[0].mxu0
    %v2174 = vadd.f32 0.0, %v2173
    %v2175 = vpop.f32.mrb[0].mxu0
    %v2176 = vpop.f32.mrb[0].mxu0
    %v2177 = vpop.f32.mrb[0].mxu0
    %2178 = vdwg.mxu0
    %2179 = vmatprep.subr.bf16.mxu0 %v383
    %2180 = vmatpush1.bf16.msra.mxu0 %v382
    %2181 = vmatprep.subr.bf16.mxu0 %v386
    %2182 = vmatpush1.bf16.msra.mxu0 %v385
    %2183 = vmatprep.subr.bf16.mxu0 %v389
    %2184 = vmatpush1.bf16.msra.mxu0 %v388
    %2185 = vmatprep.subr.bf16.mxu0 %v392
    %2186 = vmatpush1.bf16.msra.mxu0 %v391
    %2187 = vmatprep.subr.bf16.mxu0 0
    %2188 = vmatpush1.bf16.msra.mxu0 0
    %2189 = vmatprep.subr.bf16.mxu0 0
    %2190 = vmatpush1.bf16.msra.mxu0 0
    %2191 = vmatprep.subr.bf16.mxu0 0
    %2192 = vmatpush1.bf16.msra.mxu0 0
    %2193 = vmatprep.subr.bf16.mxu0 0
    %2194 = vmatpush1.bf16.msra.mxu0 0
    %2195 = vmatprep.subr.bf16.mxu0 0
    %2196 = vmatpush1.bf16.msra.mxu0 0
    %2197 = vmatprep.subr.bf16.mxu0 0
    %2198 = vmatpush1.bf16.msra.mxu0 0
    %2199 = vmatprep.subr.bf16.mxu0 0
    %2200 = vmatpush1.bf16.msra.mxu0 0
    %2201 = vmatprep.subr.bf16.mxu0 0
    %2202 = vmatpush1.bf16.msra.mxu0 0
    %2203 = vmatprep.subr.bf16.mxu0 0
    %2204 = vmatpush1.bf16.msra.mxu0 0
    %2205 = vmatprep.subr.bf16.mxu0 0
    %2206 = vmatpush1.bf16.msra.mxu0 0
    %2207 = vmatprep.subr.bf16.mxu0 0
    %2208 = vmatpush1.bf16.msra.mxu0 0
    %2209 = vmatprep.subr.bf16.mxu0 0
    %2210 = vmatpush1.bf16.msra.mxu0 0
    %2211 = vmatprep.mubr.bf16.mxu0 0
    %2212 = vmatmul.mubr.bf16.gmra.mrb[0].mxu0 %v1886
    %v2213 = vpop.f32.mrb[0].mxu0
    %v2214 = vadd.f32 0.0, %v2213
    %v2215 = vpop.f32.mrb[0].mxu0
    %v2216 = vadd.f32 0.0, %v2215
    %v2217 = vpop.f32.mrb[0].mxu0
    %v2218 = vpop.f32.mrb[0].mxu0
    %2219 = vdwg.mxu0
    %2220 = vmatprep.subr.bf16.mxu0 0
    %2221 = vmatpush1.bf16.msra.mxu0 %v384
    %2222 = vmatprep.subr.bf16.mxu0 0
    %2223 = vmatpush1.bf16.msra.mxu0 %v387
    %2224 = vmatprep.subr.bf16.mxu0 0
    %2225 = vmatpush1.bf16.msra.mxu0 %v390
    %2226 = vmatprep.subr.bf16.mxu0 0
    %2227 = vmatpush1.bf16.msra.mxu0 %v393
    %2228 = vmatprep.subr.bf16.mxu0 0
    %2229 = vmatpush1.bf16.msra.mxu0 0
    %2230 = vmatprep.subr.bf16.mxu0 0
    %2231 = vmatpush1.bf16.msra.mxu0 0
    %2232 = vmatprep.subr.bf16.mxu0 0
    %2233 = vmatpush1.bf16.msra.mxu0 0
    %2234 = vmatprep.subr.bf16.mxu0 0
    %2235 = vmatpush1.bf16.msra.mxu0 0
    %2236 = vmatprep.subr.bf16.mxu0 0
    %2237 = vmatpush1.bf16.msra.mxu0 0
    %2238 = vmatprep.subr.bf16.mxu0 0
    %2239 = vmatpush1.bf16.msra.mxu0 0
    %2240 = vmatprep.subr.bf16.mxu0 0
    %2241 = vmatpush1.bf16.msra.mxu0 0
    %2242 = vmatprep.subr.bf16.mxu0 0
    %2243 = vmatpush1.bf16.msra.mxu0 0
    %2244 = vmatprep.subr.bf16.mxu0 0
    %2245 = vmatpush1.bf16.msra.mxu0 0
    %2246 = vmatprep.subr.bf16.mxu0 0
    %2247 = vmatpush1.bf16.msra.mxu0 0
    %2248 = vmatprep.subr.bf16.mxu0 0
    %2249 = vmatpush1.bf16.msra.mxu0 0
    %2250 = vmatprep.subr.bf16.mxu0 0
    %2251 = vmatpush1.bf16.msra.mxu0 0
    %2252 = vmatprep.mubr.bf16.mxu0 0
    %2253 = vmatmul.mubr.bf16.gmra.mrb[0].mxu0 %v1886
    %v2254 = vpop.f32.mrb[0].mxu0
    %v2255 = vadd.f32 0.0, %v2254
    %v2256 = vpop.f32.mrb[0].mxu0
    %v2257 = vpop.f32.mrb[0].mxu0
    %v2258 = vpop.f32.mrb[0].mxu0
    %2259 = vdwg.mxu0
    %2260 = vmatprep.subr.bf16.mxu0 %v549
    %2261 = vmatpush1.bf16.msra.mxu0 %v548
    %2262 = vmatprep.subr.bf16.mxu0 %v552
    %2263 = vmatpush1.bf16.msra.mxu0 %v551
    %2264 = vmatprep.subr.bf16.mxu0 %v555
    %2265 = vmatpush1.bf16.msra.mxu0 %v554
    %2266 = vmatprep.subr.bf16.mxu0 %v558
    %2267 = vmatpush1.bf16.msra.mxu0 %v557
    %2268 = vmatprep.subr.bf16.mxu0 0
    %2269 = vmatpush1.bf16.msra.mxu0 0
    %2270 = vmatprep.subr.bf16.mxu0 0
    %2271 = vmatpush1.bf16.msra.mxu0 0
    %2272 = vmatprep.subr.bf16.mxu0 0
    %2273 = vmatpush1.bf16.msra.mxu0 0
    %2274 = vmatprep.subr.bf16.mxu0 0
    %2275 = vmatpush1.bf16.msra.mxu0 0
    %2276 = vmatprep.subr.bf16.mxu0 0
    %2277 = vmatpush1.bf16.msra.mxu0 0
    %2278 = vmatprep.subr.bf16.mxu0 0
    %2279 = vmatpush1.bf16.msra.mxu0 0
    %2280 = vmatprep.subr.bf16.mxu0 0
    %2281 = vmatpush1.bf16.msra.mxu0 0
    %2282 = vmatprep.subr.bf16.mxu0 0
    %2283 = vmatpush1.bf16.msra.mxu0 0
    %2284 = vmatprep.subr.bf16.mxu0 0
    %2285 = vmatpush1.bf16.msra.mxu0 0
    %2286 = vmatprep.subr.bf16.mxu0 0
    %2287 = vmatpush1.bf16.msra.mxu0 0
    %2288 = vmatprep.subr.bf16.mxu0 0
    %2289 = vmatpush1.bf16.msra.mxu0 0
    %2290 = vmatprep.subr.bf16.mxu0 0
    %2291 = vmatpush1.bf16.msra.mxu0 0
    %2292 = vmatprep.mubr.bf16.mxu0 0
    %2293 = vmatmul.mubr.bf16.gmra.mrb[0].mxu0 %v1993
    %v2294 = vpop.f32.mrb[0].mxu0
    %v2295 = vadd.f32 0.0, %v2294
    %v2296 = vpop.f32.mrb[0].mxu0
    %v2297 = vadd.f32 0.0, %v2296
    %v2298 = vpop.f32.mrb[0].mxu0
    %v2299 = vpop.f32.mrb[0].mxu0
    %2300 = vdwg.mxu0
    %2301 = vmatprep.subr.bf16.mxu0 0
    %2302 = vmatpush1.bf16.msra.mxu0 %v550
    %2303 = vmatprep.subr.bf16.mxu0 0
    %2304 = vmatpush1.bf16.msra.mxu0 %v553
    %2305 = vmatprep.subr.bf16.mxu0 0
    %2306 = vmatpush1.bf16.msra.mxu0 %v556
    %2307 = vmatprep.subr.bf16.mxu0 0
    %2308 = vmatpush1.bf16.msra.mxu0 %v559
    %2309 = vmatprep.subr.bf16.mxu0 0
    %2310 = vmatpush1.bf16.msra.mxu0 0
    %2311 = vmatprep.subr.bf16.mxu0 0
    %2312 = vmatpush1.bf16.msra.mxu0 0
    %2313 = vmatprep.subr.bf16.mxu0 0
    %2314 = vmatpush1.bf16.msra.mxu0 0
    %2315 = vmatprep.subr.bf16.mxu0 0
    %2316 = vmatpush1.bf16.msra.mxu0 0
    %2317 = vmatprep.subr.bf16.mxu0 0
    %2318 = vmatpush1.bf16.msra.mxu0 0
    %2319 = vmatprep.subr.bf16.mxu0 0
    %2320 = vmatpush1.bf16.msra.mxu0 0
    %2321 = vmatprep.subr.bf16.mxu0 0
    %2322 = vmatpush1.bf16.msra.mxu0 0
    %2323 = vmatprep.subr.bf16.mxu0 0
    %2324 = vmatpush1.bf16.msra.mxu0 0
    %2325 = vmatprep.subr.bf16.mxu0 0
    %2326 = vmatpush1.bf16.msra.mxu0 0
    %2327 = vmatprep.subr.bf16.mxu0 0
    %2328 = vmatpush1.bf16.msra.mxu0 0
    %2329 = vmatprep.subr.bf16.mxu0 0
    %2330 = vmatpush1.bf16.msra.mxu0 0
    %2331 = vmatprep.subr.bf16.mxu0 0
    %2332 = vmatpush1.bf16.msra.mxu0 0
    %2333 = vmatprep.mubr.bf16.mxu0 0
    %2334 = vmatmul.mubr.bf16.gmra.mrb[0].mxu0 %v1993
    %v2335 = vpop.f32.mrb[0].mxu0
    %v2336 = vadd.f32 0.0, %v2335
    %v2337 = vpop.f32.mrb[0].mxu0
    %v2338 = vpop.f32.mrb[0].mxu0
    %v2339 = vpop.f32.mrb[0].mxu0
    %2340 = vdwg.mxu0
    %v2341 = vpack.c.bf16 %v2097, %v2097
    %v2343 = vsel %vm239, %v2341, 0
    %2345 = vmatprep.subr.bf16.mxu0 %v715
    %2346 = vmatpush1.bf16.msra.mxu0 %v714
    %2347 = vmatprep.subr.bf16.mxu0 %v718
    %2348 = vmatpush1.bf16.msra.mxu0 %v717
    %2349 = vmatprep.subr.bf16.mxu0 %v721
    %2350 = vmatpush1.bf16.msra.mxu0 %v720
    %2351 = vmatprep.subr.bf16.mxu0 %v724
    %2352 = vmatpush1.bf16.msra.mxu0 %v723
    %2353 = vmatprep.subr.bf16.mxu0 0
    %2354 = vmatpush1.bf16.msra.mxu0 0
    %2355 = vmatprep.subr.bf16.mxu0 0
    %2356 = vmatpush1.bf16.msra.mxu0 0
    %2357 = vmatprep.subr.bf16.mxu0 0
    %2358 = vmatpush1.bf16.msra.mxu0 0
    %2359 = vmatprep.subr.bf16.mxu0 0
    %2360 = vmatpush1.bf16.msra.mxu0 0
    %2361 = vmatprep.subr.bf16.mxu0 0
    %2362 = vmatpush1.bf16.msra.mxu0 0
    %2363 = vmatprep.subr.bf16.mxu0 0
    %2364 = vmatpush1.bf16.msra.mxu0 0
    %2365 = vmatprep.subr.bf16.mxu0 0
    %2366 = vmatpush1.bf16.msra.mxu0 0
    %2367 = vmatprep.subr.bf16.mxu0 0
    %2368 = vmatpush1.bf16.msra.mxu0 0
    %2369 = vmatprep.subr.bf16.mxu0 0
    %2370 = vmatpush1.bf16.msra.mxu0 0
    %2371 = vmatprep.subr.bf16.mxu0 0
    %2372 = vmatpush1.bf16.msra.mxu0 0
    %2373 = vmatprep.subr.bf16.mxu0 0
    %2374 = vmatpush1.bf16.msra.mxu0 0
    %2375 = vmatprep.subr.bf16.mxu0 0
    %2376 = vmatpush1.bf16.msra.mxu0 0
    %2377 = vmatprep.mubr.bf16.mxu0 0
    %2378 = vmatmul.mubr.bf16.gmra.mrb[0].mxu0 %v2343
    %v2379 = vpop.f32.mrb[0].mxu0
    %v2380 = vadd.f32 0.0, %v2379
    %v2381 = vpop.f32.mrb[0].mxu0
    %v2382 = vadd.f32 0.0, %v2381
    %v2383 = vpop.f32.mrb[0].mxu0
    %v2384 = vpop.f32.mrb[0].mxu0
    %2385 = vdwg.mxu0
    %2386 = vmatprep.subr.bf16.mxu0 0
    %2387 = vmatpush1.bf16.msra.mxu0 %v716
    %2388 = vmatprep.subr.bf16.mxu0 0
    %2389 = vmatpush1.bf16.msra.mxu0 %v719
    %2390 = vmatprep.subr.bf16.mxu0 0
    %2391 = vmatpush1.bf16.msra.mxu0 %v722
    %2392 = vmatprep.subr.bf16.mxu0 0
    %2393 = vmatpush1.bf16.msra.mxu0 %v725
    %2394 = vmatprep.subr.bf16.mxu0 0
    %2395 = vmatpush1.bf16.msra.mxu0 0
    %2396 = vmatprep.subr.bf16.mxu0 0
    %2397 = vmatpush1.bf16.msra.mxu0 0
    %2398 = vmatprep.subr.bf16.mxu0 0
    %2399 = vmatpush1.bf16.msra.mxu0 0
    %2400 = vmatprep.subr.bf16.mxu0 0
    %2401 = vmatpush1.bf16.msra.mxu0 0
    %2402 = vmatprep.subr.bf16.mxu0 0
    %2403 = vmatpush1.bf16.msra.mxu0 0
    %2404 = vmatprep.subr.bf16.mxu0 0
    %2405 = vmatpush1.bf16.msra.mxu0 0
    %2406 = vmatprep.subr.bf16.mxu0 0
    %2407 = vmatpush1.bf16.msra.mxu0 0
    %2408 = vmatprep.subr.bf16.mxu0 0
    %2409 = vmatpush1.bf16.msra.mxu0 0
    %2410 = vmatprep.subr.bf16.mxu0 0
    %2411 = vmatpush1.bf16.msra.mxu0 0
    %2412 = vmatprep.subr.bf16.mxu0 0
    %2413 = vmatpush1.bf16.msra.mxu0 0
    %2414 = vmatprep.subr.bf16.mxu0 0
    %2415 = vmatpush1.bf16.msra.mxu0 0
    %2416 = vmatprep.subr.bf16.mxu0 0
    %2417 = vmatpush1.bf16.msra.mxu0 0
    %2418 = vmatprep.mubr.bf16.mxu0 0
    %2419 = vmatmul.mubr.bf16.gmra.mrb[0].mxu0 %v2343
    %v2420 = vpop.f32.mrb[0].mxu0
    %v2421 = vadd.f32 0.0, %v2420
    %v2422 = vpop.f32.mrb[0].mxu0
    %v2423 = vpop.f32.mrb[0].mxu0
    %v2424 = vpop.f32.mrb[0].mxu0
    %2425 = vdwg.mxu0
    %v2426 = vld [vmem:[%s0] sm:$0x30]
    %v2427 = vld [vmem:[%s0 + $0x8] sm:$0x30]
    %v2428 = vld [vmem:[%s0 + $0x10] sm:$0x30]
    %v2430 = vrot.slane %v2133, 4
    %v2432 = vadd.f32 %v2426, %v2430
    %v2433 = vxor.u32 %v2432, 2147483648
    %v2434 = vmul.f32 %v2433, 1.442695
    %v2435 = vpow.pop %v2434
    %v2436 = vadd.f32 %v2435, 1.0
    %v2437 = vrcp.pop %v2436
    %v2438 = vmul.f32 1.0, %v2437
    %v2440 = vrot.slane %v2135, 4
    %v2442 = vadd.f32 %v2427, %v2440
    %v2443 = vxor.u32 %v2442, 2147483648
    %v2444 = vmul.f32 %v2443, 1.442695
    %v2445 = vpow.pop %v2444
    %v2446 = vadd.f32 %v2445, 1.0
    %v2447 = vrcp.pop %v2446
    %v2448 = vmul.f32 1.0, %v2447
    %v2449 = vadd.f32 %v2174, %v125
    %v2451 = vrot.slane %v2449, 4
    %v2453 = vmul.f32 %v2438, %v2451
    %v2454 = vadd.f32 %v2428, %v2453
    %v2455 = vtanh.pop %v2454
    %v2456 = vsub.f32 1.0, %v2448
    %v2457 = vmul.f32 %v2456, %v2455
    %v2459 = vrot.slane %v1774, 6
    %v2461 = vmul.f32 %v2448, %v2459
    %v2462 = vadd.f32 %v2457, %v2461
    %v2463 = vpack.c.bf16 %v2462, %v2462
    %v2465 = vrot.slane %v2463, 2
    %v2467 = vsel %vm239, %v2465, 0
    %2469 = vmatprep.subr.bf16.mxu0 %v905
    %2470 = vmatpush1.bf16.msra.mxu0 %v904
    %2471 = vmatprep.subr.bf16.mxu0 %v908
    %2472 = vmatpush1.bf16.msra.mxu0 %v907
    %2473 = vmatprep.subr.bf16.mxu0 %v911
    %2474 = vmatpush1.bf16.msra.mxu0 %v910
    %2475 = vmatprep.subr.bf16.mxu0 %v914
    %2476 = vmatpush1.bf16.msra.mxu0 %v913
    %2477 = vmatprep.subr.bf16.mxu0 0
    %2478 = vmatpush1.bf16.msra.mxu0 0
    %2479 = vmatprep.subr.bf16.mxu0 0
    %2480 = vmatpush1.bf16.msra.mxu0 0
    %2481 = vmatprep.subr.bf16.mxu0 0
    %2482 = vmatpush1.bf16.msra.mxu0 0
    %2483 = vmatprep.subr.bf16.mxu0 0
    %2484 = vmatpush1.bf16.msra.mxu0 0
    %2485 = vmatprep.subr.bf16.mxu0 0
    %2486 = vmatpush1.bf16.msra.mxu0 0
    %2487 = vmatprep.subr.bf16.mxu0 0
    %2488 = vmatpush1.bf16.msra.mxu0 0
    %2489 = vmatprep.subr.bf16.mxu0 0
    %2490 = vmatpush1.bf16.msra.mxu0 0
    %2491 = vmatprep.subr.bf16.mxu0 0
    %2492 = vmatpush1.bf16.msra.mxu0 0
    %2493 = vmatprep.subr.bf16.mxu0 0
    %2494 = vmatpush1.bf16.msra.mxu0 0
    %2495 = vmatprep.subr.bf16.mxu0 0
    %2496 = vmatpush1.bf16.msra.mxu0 0
    %2497 = vmatprep.subr.bf16.mxu0 0
    %2498 = vmatpush1.bf16.msra.mxu0 0
    %2499 = vmatprep.subr.bf16.mxu0 0
    %2500 = vmatpush1.bf16.msra.mxu0 0
    %2501 = vmatprep.mubr.bf16.mxu0 0
    %2502 = vmatmul.mubr.bf16.gmra.mrb[0].mxu0 %v2467
    %v2503 = vpop.f32.mrb[0].mxu0
    %v2504 = vadd.f32 %v72, %v2503
    %v2505 = vpop.f32.mrb[0].mxu0
    %v2506 = vadd.f32 %v76, %v2505
    %v2507 = vpop.f32.mrb[0].mxu0
    %v2508 = vpop.f32.mrb[0].mxu0
    %2509 = vdwg.mxu0
    %2510 = vmatprep.subr.bf16.mxu0 0
    %2511 = vmatpush1.bf16.msra.mxu0 %v906
    %2512 = vmatprep.subr.bf16.mxu0 0
    %2513 = vmatpush1.bf16.msra.mxu0 %v909
    %2514 = vmatprep.subr.bf16.mxu0 0
    %2515 = vmatpush1.bf16.msra.mxu0 %v912
    %2516 = vmatprep.subr.bf16.mxu0 0
    %2517 = vmatpush1.bf16.msra.mxu0 %v915
    %2518 = vmatprep.subr.bf16.mxu0 0
    %2519 = vmatpush1.bf16.msra.mxu0 0
    %2520 = vmatprep.subr.bf16.mxu0 0
    %2521 = vmatpush1.bf16.msra.mxu0 0
    %2522 = vmatprep.subr.bf16.mxu0 0
    %2523 = vmatpush1.bf16.msra.mxu0 0
    %2524 = vmatprep.subr.bf16.mxu0 0
    %2525 = vmatpush1.bf16.msra.mxu0 0
    %2526 = vmatprep.subr.bf16.mxu0 0
    %2527 = vmatpush1.bf16.msra.mxu0 0
    %2528 = vmatprep.subr.bf16.mxu0 0
    %2529 = vmatpush1.bf16.msra.mxu0 0
    %2530 = vmatprep.subr.bf16.mxu0 0
    %2531 = vmatpush1.bf16.msra.mxu0 0
    %2532 = vmatprep.subr.bf16.mxu0 0
    %2533 = vmatpush1.bf16.msra.mxu0 0
    %2534 = vmatprep.subr.bf16.mxu0 0
    %2535 = vmatpush1.bf16.msra.mxu0 0
    %2536 = vmatprep.subr.bf16.mxu0 0
    %2537 = vmatpush1.bf16.msra.mxu0 0
    %2538 = vmatprep.subr.bf16.mxu0 0
    %2539 = vmatpush1.bf16.msra.mxu0 0
    %2540 = vmatprep.subr.bf16.mxu0 0
    %2541 = vmatpush1.bf16.msra.mxu0 0
    %2542 = vmatprep.mubr.bf16.mxu0 0
    %2543 = vmatmul.mubr.bf16.gmra.mrb[0].mxu0 %v2467
    %v2544 = vpop.f32.mrb[0].mxu0
    %v2545 = vadd.f32 %v80, %v2544
    %v2546 = vpop.f32.mrb[0].mxu0
    %v2547 = vpop.f32.mrb[0].mxu0
    %v2548 = vpop.f32.mrb[0].mxu0
    %2549 = vdwg.mxu0
    %v2550 = vadd.f32 %v2504, %v2214
    %v2551 = vxor.u32 %v2550, 2147483648
    %v2552 = vmul.f32 %v2551, 1.442695
    %v2553 = vpow.pop %v2552
    %v2554 = vadd.f32 %v2553, 1.0
    %v2555 = vrcp.pop %v2554
    %v2556 = vmul.f32 1.0, %v2555
    %v2557 = vadd.f32 %v2506, %v2216
    %v2558 = vxor.u32 %v2557, 2147483648
    %v2559 = vmul.f32 %v2558, 1.442695
    %v2560 = vpow.pop %v2559
    %v2561 = vadd.f32 %v2560, 1.0
    %v2562 = vrcp.pop %v2561
    %v2563 = vmul.f32 1.0, %v2562
    %v2564 = vadd.f32 %v2255, %v133
    %v2565 = vmul.f32 %v2556, %v2564
    %v2566 = vadd.f32 %v2545, %v2565
    %v2567 = vtanh.pop %v2566
    %v2568 = vsub.f32 1.0, %v2563
    %v2569 = vmul.f32 %v2568, %v2567
    %v2570 = vmul.f32 %v2563, %v1883
    %v2571 = vadd.f32 %v2569, %v2570
    %v2572 = vpack.c.bf16 %v2571, %v2571
    %v2574 = vsel %vm239, %v2572, 0
    %2576 = vmatprep.subr.bf16.mxu0 %v1093
    %2577 = vmatpush1.bf16.msra.mxu0 %v1092
    %2578 = vmatprep.subr.bf16.mxu0 %v1096
    %2579 = vmatpush1.bf16.msra.mxu0 %v1095
    %2580 = vmatprep.subr.bf16.mxu0 %v1099
    %2581 = vmatpush1.bf16.msra.mxu0 %v1098
    %2582 = vmatprep.subr.bf16.mxu0 %v1102
    %2583 = vmatpush1.bf16.msra.mxu0 %v1101
    %2584 = vmatprep.subr.bf16.mxu0 0
    %2585 = vmatpush1.bf16.msra.mxu0 0
    %2586 = vmatprep.subr.bf16.mxu0 0
    %2587 = vmatpush1.bf16.msra.mxu0 0
    %2588 = vmatprep.subr.bf16.mxu0 0
    %2589 = vmatpush1.bf16.msra.mxu0 0
    %2590 = vmatprep.subr.bf16.mxu0 0
    %2591 = vmatpush1.bf16.msra.mxu0 0
    %2592 = vmatprep.subr.bf16.mxu0 0
    %2593 = vmatpush1.bf16.msra.mxu0 0
    %2594 = vmatprep.subr.bf16.mxu0 0
    %2595 = vmatpush1.bf16.msra.mxu0 0
    %2596 = vmatprep.subr.bf16.mxu0 0
    %2597 = vmatpush1.bf16.msra.mxu0 0
    %2598 = vmatprep.subr.bf16.mxu0 0
    %2599 = vmatpush1.bf16.msra.mxu0 0
    %2600 = vmatprep.subr.bf16.mxu0 0
    %2601 = vmatpush1.bf16.msra.mxu0 0
    %2602 = vmatprep.subr.bf16.mxu0 0
    %2603 = vmatpush1.bf16.msra.mxu0 0
    %2604 = vmatprep.subr.bf16.mxu0 0
    %2605 = vmatpush1.bf16.msra.mxu0 0
    %2606 = vmatprep.subr.bf16.mxu0 0
    %2607 = vmatpush1.bf16.msra.mxu0 0
    %2608 = vmatprep.mubr.bf16.mxu0 0
    %2609 = vmatmul.mubr.bf16.gmra.mrb[0].mxu0 %v2574
    %v2610 = vpop.f32.mrb[0].mxu0
    %v2611 = vadd.f32 %v90, %v2610
    %v2612 = vpop.f32.mrb[0].mxu0
    %v2613 = vadd.f32 %v94, %v2612
    %v2614 = vpop.f32.mrb[0].mxu0
    %v2615 = vpop.f32.mrb[0].mxu0
    %2616 = vdwg.mxu0
    %2617 = vmatprep.subr.bf16.mxu0 0
    %2618 = vmatpush1.bf16.msra.mxu0 %v1094
    %2619 = vmatprep.subr.bf16.mxu0 0
    %2620 = vmatpush1.bf16.msra.mxu0 %v1097
    %2621 = vmatprep.subr.bf16.mxu0 0
    %2622 = vmatpush1.bf16.msra.mxu0 %v1100
    %2623 = vmatprep.subr.bf16.mxu0 0
    %2624 = vmatpush1.bf16.msra.mxu0 %v1103
    %2625 = vmatprep.subr.bf16.mxu0 0
    %2626 = vmatpush1.bf16.msra.mxu0 0
    %2627 = vmatprep.subr.bf16.mxu0 0
    %2628 = vmatpush1.bf16.msra.mxu0 0
    %2629 = vmatprep.subr.bf16.mxu0 0
    %2630 = vmatpush1.bf16.msra.mxu0 0
    %2631 = vmatprep.subr.bf16.mxu0 0
    %2632 = vmatpush1.bf16.msra.mxu0 0
    %2633 = vmatprep.subr.bf16.mxu0 0
    %2634 = vmatpush1.bf16.msra.mxu0 0
    %2635 = vmatprep.subr.bf16.mxu0 0
    %2636 = vmatpush1.bf16.msra.mxu0 0
    %2637 = vmatprep.subr.bf16.mxu0 0
    %2638 = vmatpush1.bf16.msra.mxu0 0
    %2639 = vmatprep.subr.bf16.mxu0 0
    %2640 = vmatpush1.bf16.msra.mxu0 0
    %2641 = vmatprep.subr.bf16.mxu0 0
    %2642 = vmatpush1.bf16.msra.mxu0 0
    %2643 = vmatprep.subr.bf16.mxu0 0
    %2644 = vmatpush1.bf16.msra.mxu0 0
    %2645 = vmatprep.subr.bf16.mxu0 0
    %2646 = vmatpush1.bf16.msra.mxu0 0
    %2647 = vmatprep.subr.bf16.mxu0 0
    %2648 = vmatpush1.bf16.msra.mxu0 0
    %2649 = vmatprep.mubr.bf16.mxu0 0
    %2650 = vmatmul.mubr.bf16.gmra.mrb[0].mxu0 %v2574
    %v2651 = vpop.f32.mrb[0].mxu0
    %v2652 = vadd.f32 %v98, %v2651
    %v2653 = vpop.f32.mrb[0].mxu0
    %v2654 = vpop.f32.mrb[0].mxu0
    %v2655 = vpop.f32.mrb[0].mxu0
    %2656 = vdwg.mxu0
    %v2657 = vadd.f32 %v2611, %v2295
    %v2658 = vxor.u32 %v2657, 2147483648
    %v2659 = vmul.f32 %v2658, 1.442695
    %v2660 = vpow.pop %v2659
    %v2661 = vadd.f32 %v2660, 1.0
    %v2662 = vrcp.pop %v2661
    %v2663 = vmul.f32 1.0, %v2662
    %v2664 = vadd.f32 %v2613, %v2297
    %v2665 = vxor.u32 %v2664, 2147483648
    %v2666 = vmul.f32 %v2665, 1.442695
    %v2667 = vpow.pop %v2666
    %v2668 = vadd.f32 %v2667, 1.0
    %v2669 = vrcp.pop %v2668
    %v2670 = vmul.f32 1.0, %v2669
    %v2671 = vadd.f32 %v2336, %v141
    %v2672 = vmul.f32 %v2663, %v2671
    %v2673 = vadd.f32 %v2652, %v2672
    %v2674 = vtanh.pop %v2673
    %v2675 = vsub.f32 1.0, %v2670
    %v2676 = vmul.f32 %v2675, %v2674
    %v2677 = vmul.f32 %v2670, %v1990
    %v2678 = vadd.f32 %v2676, %v2677
    %v2679 = vpack.c.bf16 %v2678, %v2678
    %v2681 = vsel %vm239, %v2679, 0
    %2683 = vmatprep.subr.bf16.mxu0 %v1281
    %2684 = vmatpush1.bf16.msra.mxu0 %v1280
    %2685 = vmatprep.subr.bf16.mxu0 %v1284
    %2686 = vmatpush1.bf16.msra.mxu0 %v1283
    %2687 = vmatprep.subr.bf16.mxu0 %v1287
    %2688 = vmatpush1.bf16.msra.mxu0 %v1286
    %2689 = vmatprep.subr.bf16.mxu0 %v1290
    %2690 = vmatpush1.bf16.msra.mxu0 %v1289
    %2691 = vmatprep.subr.bf16.mxu0 0
    %2692 = vmatpush1.bf16.msra.mxu0 0
    %2693 = vmatprep.subr.bf16.mxu0 0
    %2694 = vmatpush1.bf16.msra.mxu0 0
    %2695 = vmatprep.subr.bf16.mxu0 0
    %2696 = vmatpush1.bf16.msra.mxu0 0
    %2697 = vmatprep.subr.bf16.mxu0 0
    %2698 = vmatpush1.bf16.msra.mxu0 0
    %2699 = vmatprep.subr.bf16.mxu0 0
    %2700 = vmatpush1.bf16.msra.mxu0 0
    %2701 = vmatprep.subr.bf16.mxu0 0
    %2702 = vmatpush1.bf16.msra.mxu0 0
    %2703 = vmatprep.subr.bf16.mxu0 0
    %2704 = vmatpush1.bf16.msra.mxu0 0
    %2705 = vmatprep.subr.bf16.mxu0 0
    %2706 = vmatpush1.bf16.msra.mxu0 0
    %2707 = vmatprep.subr.bf16.mxu0 0
    %2708 = vmatpush1.bf16.msra.mxu0 0
    %2709 = vmatprep.subr.bf16.mxu0 0
    %2710 = vmatpush1.bf16.msra.mxu0 0
    %2711 = vmatprep.subr.bf16.mxu0 0
    %2712 = vmatpush1.bf16.msra.mxu0 0
    %2713 = vmatprep.subr.bf16.mxu0 0
    %2714 = vmatpush1.bf16.msra.mxu0 0
    %2715 = vmatprep.mubr.bf16.mxu0 0
    %2716 = vmatmul.mubr.bf16.gmra.mrb[0].mxu0 %v2681
    %v2717 = vpop.f32.mrb[0].mxu0
    %v2718 = vadd.f32 %v108, %v2717
    %v2719 = vpop.f32.mrb[0].mxu0
    %v2720 = vadd.f32 %v112, %v2719
    %v2721 = vpop.f32.mrb[0].mxu0
    %v2722 = vpop.f32.mrb[0].mxu0
    %2723 = vdwg.mxu0
    %2724 = vmatprep.subr.bf16.mxu0 0
    %2725 = vmatpush1.bf16.msra.mxu0 %v1282
    %2726 = vmatprep.subr.bf16.mxu0 0
    %2727 = vmatpush1.bf16.msra.mxu0 %v1285
    %2728 = vmatprep.subr.bf16.mxu0 0
    %2729 = vmatpush1.bf16.msra.mxu0 %v1288
    %2730 = vmatprep.subr.bf16.mxu0 0
    %2731 = vmatpush1.bf16.msra.mxu0 %v1291
    %2732 = vmatprep.subr.bf16.mxu0 0
    %2733 = vmatpush1.bf16.msra.mxu0 0
    %2734 = vmatprep.subr.bf16.mxu0 0
    %2735 = vmatpush1.bf16.msra.mxu0 0
    %2736 = vmatprep.subr.bf16.mxu0 0
    %2737 = vmatpush1.bf16.msra.mxu0 0
    %2738 = vmatprep.subr.bf16.mxu0 0
    %2739 = vmatpush1.bf16.msra.mxu0 0
    %2740 = vmatprep.subr.bf16.mxu0 0
    %2741 = vmatpush1.bf16.msra.mxu0 0
    %2742 = vmatprep.subr.bf16.mxu0 0
    %2743 = vmatpush1.bf16.msra.mxu0 0
    %2744 = vmatprep.subr.bf16.mxu0 0
    %2745 = vmatpush1.bf16.msra.mxu0 0
    %2746 = vmatprep.subr.bf16.mxu0 0
    %2747 = vmatpush1.bf16.msra.mxu0 0
    %2748 = vmatprep.subr.bf16.mxu0 0
    %2749 = vmatpush1.bf16.msra.mxu0 0
    %2750 = vmatprep.subr.bf16.mxu0 0
    %2751 = vmatpush1.bf16.msra.mxu0 0
    %2752 = vmatprep.subr.bf16.mxu0 0
    %2753 = vmatpush1.bf16.msra.mxu0 0
    %2754 = vmatprep.subr.bf16.mxu0 0
    %2755 = vmatpush1.bf16.msra.mxu0 0
    %2756 = vmatprep.mubr.bf16.mxu0 0
    %2757 = vmatmul.mubr.bf16.gmra.mrb[0].mxu0 %v2681
    %v2758 = vpop.f32.mrb[0].mxu0
    %v2759 = vadd.f32 %v116, %v2758
    %v2760 = vpop.f32.mrb[0].mxu0
    %v2761 = vpop.f32.mrb[0].mxu0
    %v2762 = vpop.f32.mrb[0].mxu0
    %2763 = vdwg.mxu0
    %v2764 = vadd.f32 %v2718, %v2380
    %v2765 = vxor.u32 %v2764, 2147483648
    %v2766 = vmul.f32 %v2765, 1.442695
    %v2767 = vpow.pop %v2766
    %v2768 = vadd.f32 %v2767, 1.0
    %v2769 = vrcp.pop %v2768
    %v2770 = vmul.f32 1.0, %v2769
    %v2771 = vadd.f32 %v2720, %v2382
    %v2772 = vxor.u32 %v2771, 2147483648
    %v2773 = vmul.f32 %v2772, 1.442695
    %v2774 = vpow.pop %v2773
    %v2775 = vadd.f32 %v2774, 1.0
    %v2776 = vrcp.pop %v2775
    %v2777 = vmul.f32 1.0, %v2776
    %v2778 = vadd.f32 %v2421, %v149
    %v2779 = vmul.f32 %v2770, %v2778
    %v2780 = vadd.f32 %v2759, %v2779
    %v2781 = vtanh.pop %v2780
    %v2782 = vsub.f32 1.0, %v2777
    %v2783 = vmul.f32 %v2782, %v2781
    %v2784 = vmul.f32 %v2777, %v2097
    %v2785 = vadd.f32 %v2783, %v2784
    %2786 = vmatprep.subr.bf16.mxu0 %v216
    %2787 = vmatpush1.bf16.msra.mxu0 %v215
    %2788 = vmatprep.subr.bf16.mxu0 %v219
    %2789 = vmatpush1.bf16.msra.mxu0 %v218
    %2790 = vmatprep.subr.bf16.mxu0 %v222
    %2791 = vmatpush1.bf16.msra.mxu0 %v221
    %2792 = vmatprep.subr.bf16.mxu0 %v225
    %2793 = vmatpush1.bf16.msra.mxu0 %v224
    %2794 = vmatprep.subr.bf16.mxu0 0
    %2795 = vmatpush1.bf16.msra.mxu0 0
    %2796 = vmatprep.subr.bf16.mxu0 0
    %2797 = vmatpush1.bf16.msra.mxu0 0
    %2798 = vmatprep.subr.bf16.mxu0 0
    %2799 = vmatpush1.bf16.msra.mxu0 0
    %2800 = vmatprep.subr.bf16.mxu0 0
    %2801 = vmatpush1.bf16.msra.mxu0 0
    %2802 = vmatprep.subr.bf16.mxu0 0
    %2803 = vmatpush1.bf16.msra.mxu0 0
    %2804 = vmatprep.subr.bf16.mxu0 0
    %2805 = vmatpush1.bf16.msra.mxu0 0
    %2806 = vmatprep.subr.bf16.mxu0 0
    %2807 = vmatpush1.bf16.msra.mxu0 0
    %2808 = vmatprep.subr.bf16.mxu0 0
    %2809 = vmatpush1.bf16.msra.mxu0 0
    %2810 = vmatprep.subr.bf16.mxu0 0
    %2811 = vmatpush1.bf16.msra.mxu0 0
    %2812 = vmatprep.subr.bf16.mxu0 0
    %2813 = vmatpush1.bf16.msra.mxu0 0
    %2814 = vmatprep.subr.bf16.mxu0 0
    %2815 = vmatpush1.bf16.msra.mxu0 0
    %2816 = vmatprep.subr.bf16.mxu0 0
    %2817 = vmatpush1.bf16.msra.mxu0 0
    %2818 = vmatprep.mubr.bf16.mxu0 0
    %2819 = vmatmul.mubr.bf16.gmra.mrb[0].mxu0 %v2467
    %v2820 = vpop.f32.mrb[0].mxu0
    %v2821 = vadd.f32 0.0, %v2820
    %v2822 = vpop.f32.mrb[0].mxu0
    %v2823 = vadd.f32 0.0, %v2822
    %v2824 = vpop.f32.mrb[0].mxu0
    %v2825 = vpop.f32.mrb[0].mxu0
    %2826 = vdwg.mxu0
    %2827 = vmatprep.subr.bf16.mxu0 0
    %2828 = vmatpush1.bf16.msra.mxu0 %v217
    %2829 = vmatprep.subr.bf16.mxu0 0
    %2830 = vmatpush1.bf16.msra.mxu0 %v220
    %2831 = vmatprep.subr.bf16.mxu0 0
    %2832 = vmatpush1.bf16.msra.mxu0 %v223
    %2833 = vmatprep.subr.bf16.mxu0 0
    %2834 = vmatpush1.bf16.msra.mxu0 %v226
    %2835 = vmatprep.subr.bf16.mxu0 0
    %2836 = vmatpush1.bf16.msra.mxu0 0
    %2837 = vmatprep.subr.bf16.mxu0 0
    %2838 = vmatpush1.bf16.msra.mxu0 0
    %2839 = vmatprep.subr.bf16.mxu0 0
    %2840 = vmatpush1.bf16.msra.mxu0 0
    %2841 = vmatprep.subr.bf16.mxu0 0
    %2842 = vmatpush1.bf16.msra.mxu0 0
    %2843 = vmatprep.subr.bf16.mxu0 0
    %2844 = vmatpush1.bf16.msra.mxu0 0
    %2845 = vmatprep.subr.bf16.mxu0 0
    %2846 = vmatpush1.bf16.msra.mxu0 0
    %2847 = vmatprep.subr.bf16.mxu0 0
    %2848 = vmatpush1.bf16.msra.mxu0 0
    %2849 = vmatprep.subr.bf16.mxu0 0
    %2850 = vmatpush1.bf16.msra.mxu0 0
    %2851 = vmatprep.subr.bf16.mxu0 0
    %2852 = vmatpush1.bf16.msra.mxu0 0
    %2853 = vmatprep.subr.bf16.mxu0 0
    %2854 = vmatpush1.bf16.msra.mxu0 0
    %2855 = vmatprep.subr.bf16.mxu0 0
    %2856 = vmatpush1.bf16.msra.mxu0 0
    %2857 = vmatprep.subr.bf16.mxu0 0
    %2858 = vmatpush1.bf16.msra.mxu0 0
    %2859 = vmatprep.mubr.bf16.mxu0 0
    %2860 = vmatmul.mubr.bf16.gmra.mrb[0].mxu0 %v2467
    %v2861 = vpop.f32.mrb[0].mxu0
    %v2862 = vadd.f32 0.0, %v2861
    %v2863 = vpop.f32.mrb[0].mxu0
    %v2864 = vpop.f32.mrb[0].mxu0
    %v2865 = vpop.f32.mrb[0].mxu0
    %2866 = vdwg.mxu0
    %2867 = vmatprep.subr.bf16.mxu0 %v383
    %2868 = vmatpush1.bf16.msra.mxu0 %v382
    %2869 = vmatprep.subr.bf16.mxu0 %v386
    %2870 = vmatpush1.bf16.msra.mxu0 %v385
    %2871 = vmatprep.subr.bf16.mxu0 %v389
    %2872 = vmatpush1.bf16.msra.mxu0 %v388
    %2873 = vmatprep.subr.bf16.mxu0 %v392
    %2874 = vmatpush1.bf16.msra.mxu0 %v391
    %2875 = vmatprep.subr.bf16.mxu0 0
    %2876 = vmatpush1.bf16.msra.mxu0 0
    %2877 = vmatprep.subr.bf16.mxu0 0
    %2878 = vmatpush1.bf16.msra.mxu0 0
    %2879 = vmatprep.subr.bf16.mxu0 0
    %2880 = vmatpush1.bf16.msra.mxu0 0
    %2881 = vmatprep.subr.bf16.mxu0 0
    %2882 = vmatpush1.bf16.msra.mxu0 0
    %2883 = vmatprep.subr.bf16.mxu0 0
    %2884 = vmatpush1.bf16.msra.mxu0 0
    %2885 = vmatprep.subr.bf16.mxu0 0
    %2886 = vmatpush1.bf16.msra.mxu0 0
    %2887 = vmatprep.subr.bf16.mxu0 0
    %2888 = vmatpush1.bf16.msra.mxu0 0
    %2889 = vmatprep.subr.bf16.mxu0 0
    %2890 = vmatpush1.bf16.msra.mxu0 0
    %2891 = vmatprep.subr.bf16.mxu0 0
    %2892 = vmatpush1.bf16.msra.mxu0 0
    %2893 = vmatprep.subr.bf16.mxu0 0
    %2894 = vmatpush1.bf16.msra.mxu0 0
    %2895 = vmatprep.subr.bf16.mxu0 0
    %2896 = vmatpush1.bf16.msra.mxu0 0
    %2897 = vmatprep.subr.bf16.mxu0 0
    %2898 = vmatpush1.bf16.msra.mxu0 0
    %2899 = vmatprep.mubr.bf16.mxu0 0
    %2900 = vmatmul.mubr.bf16.gmra.mrb[0].mxu0 %v2574
    %v2901 = vpop.f32.mrb[0].mxu0
    %v2902 = vadd.f32 0.0, %v2901
    %v2903 = vpop.f32.mrb[0].mxu0
    %v2904 = vadd.f32 0.0, %v2903
    %v2905 = vpop.f32.mrb[0].mxu0
    %v2906 = vpop.f32.mrb[0].mxu0
    %2907 = vdwg.mxu0
    %2908 = vmatprep.subr.bf16.mxu0 0
    %2909 = vmatpush1.bf16.msra.mxu0 %v384
    %2910 = vmatprep.subr.bf16.mxu0 0
    %2911 = vmatpush1.bf16.msra.mxu0 %v387
    %2912 = vmatprep.subr.bf16.mxu0 0
    %2913 = vmatpush1.bf16.msra.mxu0 %v390
    %2914 = vmatprep.subr.bf16.mxu0 0
    %2915 = vmatpush1.bf16.msra.mxu0 %v393
    %2916 = vmatprep.subr.bf16.mxu0 0
    %2917 = vmatpush1.bf16.msra.mxu0 0
    %2918 = vmatprep.subr.bf16.mxu0 0
    %2919 = vmatpush1.bf16.msra.mxu0 0
    %2920 = vmatprep.subr.bf16.mxu0 0
    %2921 = vmatpush1.bf16.msra.mxu0 0
    %2922 = vmatprep.subr.bf16.mxu0 0
    %2923 = vmatpush1.bf16.msra.mxu0 0
    %2924 = vmatprep.subr.bf16.mxu0 0
    %2925 = vmatpush1.bf16.msra.mxu0 0
    %2926 = vmatprep.subr.bf16.mxu0 0
    %2927 = vmatpush1.bf16.msra.mxu0 0
    %2928 = vmatprep.subr.bf16.mxu0 0
    %2929 = vmatpush1.bf16.msra.mxu0 0
    %2930 = vmatprep.subr.bf16.mxu0 0
    %2931 = vmatpush1.bf16.msra.mxu0 0
    %2932 = vmatprep.subr.bf16.mxu0 0
    %2933 = vmatpush1.bf16.msra.mxu0 0
    %2934 = vmatprep.subr.bf16.mxu0 0
    %2935 = vmatpush1.bf16.msra.mxu0 0
    %2936 = vmatprep.subr.bf16.mxu0 0
    %2937 = vmatpush1.bf16.msra.mxu0 0
    %2938 = vmatprep.subr.bf16.mxu0 0
    %2939 = vmatpush1.bf16.msra.mxu0 0
    %2940 = vmatprep.mubr.bf16.mxu0 0
    %2941 = vmatmul.mubr.bf16.gmra.mrb[0].mxu0 %v2574
    %v2942 = vpop.f32.mrb[0].mxu0
    %v2943 = vadd.f32 0.0, %v2942
    %v2944 = vpop.f32.mrb[0].mxu0
    %v2945 = vpop.f32.mrb[0].mxu0
    %v2946 = vpop.f32.mrb[0].mxu0
    %2947 = vdwg.mxu0
    %2948 = vmatprep.subr.bf16.mxu0 %v549
    %2949 = vmatpush1.bf16.msra.mxu0 %v548
    %2950 = vmatprep.subr.bf16.mxu0 %v552
    %2951 = vmatpush1.bf16.msra.mxu0 %v551
    %2952 = vmatprep.subr.bf16.mxu0 %v555
    %2953 = vmatpush1.bf16.msra.mxu0 %v554
    %2954 = vmatprep.subr.bf16.mxu0 %v558
    %2955 = vmatpush1.bf16.msra.mxu0 %v557
    %2956 = vmatprep.subr.bf16.mxu0 0
    %2957 = vmatpush1.bf16.msra.mxu0 0
    %2958 = vmatprep.subr.bf16.mxu0 0
    %2959 = vmatpush1.bf16.msra.mxu0 0
    %2960 = vmatprep.subr.bf16.mxu0 0
    %2961 = vmatpush1.bf16.msra.mxu0 0
    %2962 = vmatprep.subr.bf16.mxu0 0
    %2963 = vmatpush1.bf16.msra.mxu0 0
    %2964 = vmatprep.subr.bf16.mxu0 0
    %2965 = vmatpush1.bf16.msra.mxu0 0
    %2966 = vmatprep.subr.bf16.mxu0 0
    %2967 = vmatpush1.bf16.msra.mxu0 0
    %2968 = vmatprep.subr.bf16.mxu0 0
    %2969 = vmatpush1.bf16.msra.mxu0 0
    %2970 = vmatprep.subr.bf16.mxu0 0
    %2971 = vmatpush1.bf16.msra.mxu0 0
    %2972 = vmatprep.subr.bf16.mxu0 0
    %2973 = vmatpush1.bf16.msra.mxu0 0
    %2974 = vmatprep.subr.bf16.mxu0 0
    %2975 = vmatpush1.bf16.msra.mxu0 0
    %2976 = vmatprep.subr.bf16.mxu0 0
    %2977 = vmatpush1.bf16.msra.mxu0 0
    %2978 = vmatprep.subr.bf16.mxu0 0
    %2979 = vmatpush1.bf16.msra.mxu0 0
    %2980 = vmatprep.mubr.bf16.mxu0 0
    %2981 = vmatmul.mubr.bf16.gmra.mrb[0].mxu0 %v2681
    %v2982 = vpop.f32.mrb[0].mxu0
    %v2983 = vadd.f32 0.0, %v2982
    %v2984 = vpop.f32.mrb[0].mxu0
    %v2985 = vadd.f32 0.0, %v2984
    %v2986 = vpop.f32.mrb[0].mxu0
    %v2987 = vpop.f32.mrb[0].mxu0
    %2988 = vdwg.mxu0
    %2989 = vmatprep.subr.bf16.mxu0 0
    %2990 = vmatpush1.bf16.msra.mxu0 %v550
    %2991 = vmatprep.subr.bf16.mxu0 0
    %2992 = vmatpush1.bf16.msra.mxu0 %v553
    %2993 = vmatprep.subr.bf16.mxu0 0
    %2994 = vmatpush1.bf16.msra.mxu0 %v556
    %2995 = vmatprep.subr.bf16.mxu0 0
    %2996 = vmatpush1.bf16.msra.mxu0 %v559
    %2997 = vmatprep.subr.bf16.mxu0 0
    %2998 = vmatpush1.bf16.msra.mxu0 0
    %2999 = vmatprep.subr.bf16.mxu0 0
    %3000 = vmatpush1.bf16.msra.mxu0 0
    %3001 = vmatprep.subr.bf16.mxu0 0
    %3002 = vmatpush1.bf16.msra.mxu0 0
    %3003 = vmatprep.subr.bf16.mxu0 0
    %3004 = vmatpush1.bf16.msra.mxu0 0
    %3005 = vmatprep.subr.bf16.mxu0 0
    %3006 = vmatpush1.bf16.msra.mxu0 0
    %3007 = vmatprep.subr.bf16.mxu0 0
    %3008 = vmatpush1.bf16.msra.mxu0 0
    %3009 = vmatprep.subr.bf16.mxu0 0
    %3010 = vmatpush1.bf16.msra.mxu0 0
    %3011 = vmatprep.subr.bf16.mxu0 0
    %3012 = vmatpush1.bf16.msra.mxu0 0
    %3013 = vmatprep.subr.bf16.mxu0 0
    %3014 = vmatpush1.bf16.msra.mxu0 0
    %3015 = vmatprep.subr.bf16.mxu0 0
    %3016 = vmatpush1.bf16.msra.mxu0 0
    %3017 = vmatprep.subr.bf16.mxu0 0
    %3018 = vmatpush1.bf16.msra.mxu0 0
    %3019 = vmatprep.subr.bf16.mxu0 0
    %3020 = vmatpush1.bf16.msra.mxu0 0
    %3021 = vmatprep.mubr.bf16.mxu0 0
    %3022 = vmatmul.mubr.bf16.gmra.mrb[0].mxu0 %v2681
    %v3023 = vpop.f32.mrb[0].mxu0
    %v3024 = vadd.f32 0.0, %v3023
    %v3025 = vpop.f32.mrb[0].mxu0
    %v3026 = vpop.f32.mrb[0].mxu0
    %v3027 = vpop.f32.mrb[0].mxu0
    %3028 = vdwg.mxu0
    %v3029 = vpack.c.bf16 %v2785, %v2785
    %v3031 = vsel %vm239, %v3029, 0
    %3033 = vmatprep.subr.bf16.mxu0 %v715
    %3034 = vmatpush1.bf16.msra.mxu0 %v714
    %3035 = vmatprep.subr.bf16.mxu0 %v718
    %3036 = vmatpush1.bf16.msra.mxu0 %v717
    %3037 = vmatprep.subr.bf16.mxu0 %v721
    %3038 = vmatpush1.bf16.msra.mxu0 %v720
    %3039 = vmatprep.subr.bf16.mxu0 %v724
    %3040 = vmatpush1.bf16.msra.mxu0 %v723
    %3041 = vmatprep.subr.bf16.mxu0 0
    %3042 = vmatpush1.bf16.msra.mxu0 0
    %3043 = vmatprep.subr.bf16.mxu0 0
    %3044 = vmatpush1.bf16.msra.mxu0 0
    %3045 = vmatprep.subr.bf16.mxu0 0
    %3046 = vmatpush1.bf16.msra.mxu0 0
    %3047 = vmatprep.subr.bf16.mxu0 0
    %3048 = vmatpush1.bf16.msra.mxu0 0
    %3049 = vmatprep.subr.bf16.mxu0 0
    %3050 = vmatpush1.bf16.msra.mxu0 0
    %3051 = vmatprep.subr.bf16.mxu0 0
    %3052 = vmatpush1.bf16.msra.mxu0 0
    %3053 = vmatprep.subr.bf16.mxu0 0
    %3054 = vmatpush1.bf16.msra.mxu0 0
    %3055 = vmatprep.subr.bf16.mxu0 0
    %3056 = vmatpush1.bf16.msra.mxu0 0
    %3057 = vmatprep.subr.bf16.mxu0 0
    %3058 = vmatpush1.bf16.msra.mxu0 0
    %3059 = vmatprep.subr.bf16.mxu0 0
    %3060 = vmatpush1.bf16.msra.mxu0 0
    %3061 = vmatprep.subr.bf16.mxu0 0
    %3062 = vmatpush1.bf16.msra.mxu0 0
    %3063 = vmatprep.subr.bf16.mxu0 0
    %3064 = vmatpush1.bf16.msra.mxu0 0
    %3065 = vmatprep.mubr.bf16.mxu0 0
    %3066 = vmatmul.mubr.bf16.gmra.mrb[0].mxu0 %v3031
    %v3067 = vpop.f32.mrb[0].mxu0
    %v3068 = vadd.f32 0.0, %v3067
    %v3069 = vpop.f32.mrb[0].mxu0
    %v3070 = vadd.f32 0.0, %v3069
    %v3071 = vpop.f32.mrb[0].mxu0
    %v3072 = vpop.f32.mrb[0].mxu0
    %3073 = vdwg.mxu0
    %3074 = vmatprep.subr.bf16.mxu0 0
    %3075 = vmatpush1.bf16.msra.mxu0 %v716
    %3076 = vmatprep.subr.bf16.mxu0 0
    %3077 = vmatpush1.bf16.msra.mxu0 %v719
    %3078 = vmatprep.subr.bf16.mxu0 0
    %3079 = vmatpush1.bf16.msra.mxu0 %v722
    %3080 = vmatprep.subr.bf16.mxu0 0
    %3081 = vmatpush1.bf16.msra.mxu0 %v725
    %3082 = vmatprep.subr.bf16.mxu0 0
    %3083 = vmatpush1.bf16.msra.mxu0 0
    %3084 = vmatprep.subr.bf16.mxu0 0
    %3085 = vmatpush1.bf16.msra.mxu0 0
    %3086 = vmatprep.subr.bf16.mxu0 0
    %3087 = vmatpush1.bf16.msra.mxu0 0
    %3088 = vmatprep.subr.bf16.mxu0 0
    %3089 = vmatpush1.bf16.msra.mxu0 0
    %3090 = vmatprep.subr.bf16.mxu0 0
    %3091 = vmatpush1.bf16.msra.mxu0 0
    %3092 = vmatprep.subr.bf16.mxu0 0
    %3093 = vmatpush1.bf16.msra.mxu0 0
    %3094 = vmatprep.subr.bf16.mxu0 0
    %3095 = vmatpush1.bf16.msra.mxu0 0
    %3096 = vmatprep.subr.bf16.mxu0 0
    %3097 = vmatpush1.bf16.msra.mxu0 0
    %3098 = vmatprep.subr.bf16.mxu0 0
    %3099 = vmatpush1.bf16.msra.mxu0 0
    %3100 = vmatprep.subr.bf16.mxu0 0
    %3101 = vmatpush1.bf16.msra.mxu0 0
    %3102 = vmatprep.subr.bf16.mxu0 0
    %3103 = vmatpush1.bf16.msra.mxu0 0
    %3104 = vmatprep.subr.bf16.mxu0 0
    %3105 = vmatpush1.bf16.msra.mxu0 0
    %3106 = vmatprep.mubr.bf16.mxu0 0
    %3107 = vmatmul.mubr.bf16.gmra.mrb[0].mxu0 %v3031
    %v3108 = vpop.f32.mrb[0].mxu0
    %v3109 = vadd.f32 0.0, %v3108
    %v3110 = vpop.f32.mrb[0].mxu0
    %v3111 = vpop.f32.mrb[0].mxu0
    %v3112 = vpop.f32.mrb[0].mxu0
    %3113 = vdwg.mxu0
    %v3114 = vld [vmem:[%s0] sm:$0xc0]
    %v3115 = vld [vmem:[%s0 + $0x8] sm:$0xc0]
    %v3116 = vld [vmem:[%s0 + $0x10] sm:$0xc0]
    %v3118 = vrot.slane %v2821, 2
    %v3120 = vadd.f32 %v3114, %v3118
    %v3121 = vxor.u32 %v3120, 2147483648
    %v3122 = vmul.f32 %v3121, 1.442695
    %v3123 = vpow.pop %v3122
    %v3124 = vadd.f32 %v3123, 1.0
    %v3125 = vrcp.pop %v3124
    %v3126 = vmul.f32 1.0, %v3125
    %v3128 = vrot.slane %v2823, 2
    %v3130 = vadd.f32 %v3115, %v3128
    %v3131 = vxor.u32 %v3130, 2147483648
    %v3132 = vmul.f32 %v3131, 1.442695
    %v3133 = vpow.pop %v3132
    %v3134 = vadd.f32 %v3133, 1.0
    %v3135 = vrcp.pop %v3134
    %v3136 = vmul.f32 1.0, %v3135
    %v3137 = vadd.f32 %v2862, %v125
    %v3139 = vrot.slane %v3137, 2
    %v3141 = vmul.f32 %v3126, %v3139
    %v3142 = vadd.f32 %v3116, %v3141
    %v3143 = vtanh.pop %v3142
    %v3144 = vsub.f32 1.0, %v3136
    %v3145 = vmul.f32 %v3144, %v3143
    %v3147 = vrot.slane %v2462, 6
    %v3149 = vmul.f32 %v3136, %v3147
    %v3150 = vadd.f32 %v3145, %v3149
    %v3151 = vpack.c.bf16 %v3150, %v3150
    %v3153 = vrot.slane %v3151, 3
    %v3155 = vsel %vm239, %v3153, 0
    %3157 = vmatprep.subr.bf16.mxu0 %v905
    %3158 = vmatpush1.bf16.msra.mxu0 %v904
    %3159 = vmatprep.subr.bf16.mxu0 %v908
    %3160 = vmatpush1.bf16.msra.mxu0 %v907
    %3161 = vmatprep.subr.bf16.mxu0 %v911
    %3162 = vmatpush1.bf16.msra.mxu0 %v910
    %3163 = vmatprep.subr.bf16.mxu0 %v914
    %3164 = vmatpush1.bf16.msra.mxu0 %v913
    %3165 = vmatprep.subr.bf16.mxu0 0
    %3166 = vmatpush1.bf16.msra.mxu0 0
    %3167 = vmatprep.subr.bf16.mxu0 0
    %3168 = vmatpush1.bf16.msra.mxu0 0
    %3169 = vmatprep.subr.bf16.mxu0 0
    %3170 = vmatpush1.bf16.msra.mxu0 0
    %3171 = vmatprep.subr.bf16.mxu0 0
    %3172 = vmatpush1.bf16.msra.mxu0 0
    %3173 = vmatprep.subr.bf16.mxu0 0
    %3174 = vmatpush1.bf16.msra.mxu0 0
    %3175 = vmatprep.subr.bf16.mxu0 0
    %3176 = vmatpush1.bf16.msra.mxu0 0
    %3177 = vmatprep.subr.bf16.mxu0 0
    %3178 = vmatpush1.bf16.msra.mxu0 0
    %3179 = vmatprep.subr.bf16.mxu0 0
    %3180 = vmatpush1.bf16.msra.mxu0 0
    %3181 = vmatprep.subr.bf16.mxu0 0
    %3182 = vmatpush1.bf16.msra.mxu0 0
    %3183 = vmatprep.subr.bf16.mxu0 0
    %3184 = vmatpush1.bf16.msra.mxu0 0
    %3185 = vmatprep.subr.bf16.mxu0 0
    %3186 = vmatpush1.bf16.msra.mxu0 0
    %3187 = vmatprep.subr.bf16.mxu0 0
    %3188 = vmatpush1.bf16.msra.mxu0 0
    %3189 = vmatprep.mubr.bf16.mxu0 0
    %3190 = vmatmul.mubr.bf16.gmra.mrb[0].mxu0 %v3155
    %v3191 = vpop.f32.mrb[0].mxu0
    %v3192 = vadd.f32 %v72, %v3191
    %v3193 = vpop.f32.mrb[0].mxu0
    %v3194 = vadd.f32 %v76, %v3193
    %v3195 = vpop.f32.mrb[0].mxu0
    %v3196 = vpop.f32.mrb[0].mxu0
    %3197 = vdwg.mxu0
    %3198 = vmatprep.subr.bf16.mxu0 0
    %3199 = vmatpush1.bf16.msra.mxu0 %v906
    %3200 = vmatprep.subr.bf16.mxu0 0
    %3201 = vmatpush1.bf16.msra.mxu0 %v909
    %3202 = vmatprep.subr.bf16.mxu0 0
    %3203 = vmatpush1.bf16.msra.mxu0 %v912
    %3204 = vmatprep.subr.bf16.mxu0 0
    %3205 = vmatpush1.bf16.msra.mxu0 %v915
    %3206 = vmatprep.subr.bf16.mxu0 0
    %3207 = vmatpush1.bf16.msra.mxu0 0
    %3208 = vmatprep.subr.bf16.mxu0 0
    %3209 = vmatpush1.bf16.msra.mxu0 0
    %3210 = vmatprep.subr.bf16.mxu0 0
    %3211 = vmatpush1.bf16.msra.mxu0 0
    %3212 = vmatprep.subr.bf16.mxu0 0
    %3213 = vmatpush1.bf16.msra.mxu0 0
    %3214 = vmatprep.subr.bf16.mxu0 0
    %3215 = vmatpush1.bf16.msra.mxu0 0
    %3216 = vmatprep.subr.bf16.mxu0 0
    %3217 = vmatpush1.bf16.msra.mxu0 0
    %3218 = vmatprep.subr.bf16.mxu0 0
    %3219 = vmatpush1.bf16.msra.mxu0 0
    %3220 = vmatprep.subr.bf16.mxu0 0
    %3221 = vmatpush1.bf16.msra.mxu0 0
    %3222 = vmatprep.subr.bf16.mxu0 0
    %3223 = vmatpush1.bf16.msra.mxu0 0
    %3224 = vmatprep.subr.bf16.mxu0 0
    %3225 = vmatpush1.bf16.msra.mxu0 0
    %3226 = vmatprep.subr.bf16.mxu0 0
    %3227 = vmatpush1.bf16.msra.mxu0 0
    %3228 = vmatprep.subr.bf16.mxu0 0
    %3229 = vmatpush1.bf16.msra.mxu0 0
    %3230 = vmatprep.mubr.bf16.mxu0 0
    %3231 = vmatmul.mubr.bf16.gmra.mrb[0].mxu0 %v3155
    %v3232 = vpop.f32.mrb[0].mxu0
    %v3233 = vadd.f32 %v80, %v3232
    %v3234 = vpop.f32.mrb[0].mxu0
    %v3235 = vpop.f32.mrb[0].mxu0
    %v3236 = vpop.f32.mrb[0].mxu0
    %3237 = vdwg.mxu0
    %v3238 = vadd.f32 %v3192, %v2902
    %v3239 = vxor.u32 %v3238, 2147483648
    %v3240 = vmul.f32 %v3239, 1.442695
    %v3241 = vpow.pop %v3240
    %v3242 = vadd.f32 %v3241, 1.0
    %v3243 = vrcp.pop %v3242
    %v3244 = vmul.f32 1.0, %v3243
    %v3245 = vadd.f32 %v3194, %v2904
    %v3246 = vxor.u32 %v3245, 2147483648
    %v3247 = vmul.f32 %v3246, 1.442695
    %v3248 = vpow.pop %v3247
    %v3249 = vadd.f32 %v3248, 1.0
    %v3250 = vrcp.pop %v3249
    %v3251 = vmul.f32 1.0, %v3250
    %v3252 = vadd.f32 %v2943, %v133
    %v3253 = vmul.f32 %v3244, %v3252
    %v3254 = vadd.f32 %v3233, %v3253
    %v3255 = vtanh.pop %v3254
    %v3256 = vsub.f32 1.0, %v3251
    %v3257 = vmul.f32 %v3256, %v3255
    %v3258 = vmul.f32 %v3251, %v2571
    %v3259 = vadd.f32 %v3257, %v3258
    %v3260 = vpack.c.bf16 %v3259, %v3259
    %v3262 = vsel %vm239, %v3260, 0
    %3264 = vmatprep.subr.bf16.mxu0 %v1093
    %3265 = vmatpush1.bf16.msra.mxu0 %v1092
    %3266 = vmatprep.subr.bf16.mxu0 %v1096
    %3267 = vmatpush1.bf16.msra.mxu0 %v1095
    %3268 = vmatprep.subr.bf16.mxu0 %v1099
    %3269 = vmatpush1.bf16.msra.mxu0 %v1098
    %3270 = vmatprep.subr.bf16.mxu0 %v1102
    %3271 = vmatpush1.bf16.msra.mxu0 %v1101
    %3272 = vmatprep.subr.bf16.mxu0 0
    %3273 = vmatpush1.bf16.msra.mxu0 0
    %3274 = vmatprep.subr.bf16.mxu0 0
    %3275 = vmatpush1.bf16.msra.mxu0 0
    %3276 = vmatprep.subr.bf16.mxu0 0
    %3277 = vmatpush1.bf16.msra.mxu0 0
    %3278 = vmatprep.subr.bf16.mxu0 0
    %3279 = vmatpush1.bf16.msra.mxu0 0
    %3280 = vmatprep.subr.bf16.mxu0 0
    %3281 = vmatpush1.bf16.msra.mxu0 0
    %3282 = vmatprep.subr.bf16.mxu0 0
    %3283 = vmatpush1.bf16.msra.mxu0 0
    %3284 = vmatprep.subr.bf16.mxu0 0
    %3285 = vmatpush1.bf16.msra.mxu0 0
    %3286 = vmatprep.subr.bf16.mxu0 0
    %3287 = vmatpush1.bf16.msra.mxu0 0
    %3288 = vmatprep.subr.bf16.mxu0 0
    %3289 = vmatpush1.bf16.msra.mxu0 0
    %3290 = vmatprep.subr.bf16.mxu0 0
    %3291 = vmatpush1.bf16.msra.mxu0 0
    %3292 = vmatprep.subr.bf16.mxu0 0
    %3293 = vmatpush1.bf16.msra.mxu0 0
    %3294 = vmatprep.subr.bf16.mxu0 0
    %3295 = vmatpush1.bf16.msra.mxu0 0
    %3296 = vmatprep.mubr.bf16.mxu0 0
    %3297 = vmatmul.mubr.bf16.gmra.mrb[0].mxu0 %v3262
    %v3298 = vpop.f32.mrb[0].mxu0
    %v3299 = vadd.f32 %v90, %v3298
    %v3300 = vpop.f32.mrb[0].mxu0
    %v3301 = vadd.f32 %v94, %v3300
    %v3302 = vpop.f32.mrb[0].mxu0
    %v3303 = vpop.f32.mrb[0].mxu0
    %3304 = vdwg.mxu0
    %3305 = vmatprep.subr.bf16.mxu0 0
    %3306 = vmatpush1.bf16.msra.mxu0 %v1094
    %3307 = vmatprep.subr.bf16.mxu0 0
    %3308 = vmatpush1.bf16.msra.mxu0 %v1097
    %3309 = vmatprep.subr.bf16.mxu0 0
    %3310 = vmatpush1.bf16.msra.mxu0 %v1100
    %3311 = vmatprep.subr.bf16.mxu0 0
    %3312 = vmatpush1.bf16.msra.mxu0 %v1103
    %3313 = vmatprep.subr.bf16.mxu0 0
    %3314 = vmatpush1.bf16.msra.mxu0 0
    %3315 = vmatprep.subr.bf16.mxu0 0
    %3316 = vmatpush1.bf16.msra.mxu0 0
    %3317 = vmatprep.subr.bf16.mxu0 0
    %3318 = vmatpush1.bf16.msra.mxu0 0
    %3319 = vmatprep.subr.bf16.mxu0 0
    %3320 = vmatpush1.bf16.msra.mxu0 0
    %3321 = vmatprep.subr.bf16.mxu0 0
    %3322 = vmatpush1.bf16.msra.mxu0 0
    %3323 = vmatprep.subr.bf16.mxu0 0
    %3324 = vmatpush1.bf16.msra.mxu0 0
    %3325 = vmatprep.subr.bf16.mxu0 0
    %3326 = vmatpush1.bf16.msra.mxu0 0
    %3327 = vmatprep.subr.bf16.mxu0 0
    %3328 = vmatpush1.bf16.msra.mxu0 0
    %3329 = vmatprep.subr.bf16.mxu0 0
    %3330 = vmatpush1.bf16.msra.mxu0 0
    %3331 = vmatprep.subr.bf16.mxu0 0
    %3332 = vmatpush1.bf16.msra.mxu0 0
    %3333 = vmatprep.subr.bf16.mxu0 0
    %3334 = vmatpush1.bf16.msra.mxu0 0
    %3335 = vmatprep.subr.bf16.mxu0 0
    %3336 = vmatpush1.bf16.msra.mxu0 0
    %3337 = vmatprep.mubr.bf16.mxu0 0
    %3338 = vmatmul.mubr.bf16.gmra.mrb[0].mxu0 %v3262
    %v3339 = vpop.f32.mrb[0].mxu0
    %v3340 = vadd.f32 %v98, %v3339
    %v3341 = vpop.f32.mrb[0].mxu0
    %v3342 = vpop.f32.mrb[0].mxu0
    %v3343 = vpop.f32.mrb[0].mxu0
    %3344 = vdwg.mxu0
    %v3345 = vadd.f32 %v3299, %v2983
    %v3346 = vxor.u32 %v3345, 2147483648
    %v3347 = vmul.f32 %v3346, 1.442695
    %v3348 = vpow.pop %v3347
    %v3349 = vadd.f32 %v3348, 1.0
    %v3350 = vrcp.pop %v3349
    %v3351 = vmul.f32 1.0, %v3350
    %v3352 = vadd.f32 %v3301, %v2985
    %v3353 = vxor.u32 %v3352, 2147483648
    %v3354 = vmul.f32 %v3353, 1.442695
    %v3355 = vpow.pop %v3354
    %v3356 = vadd.f32 %v3355, 1.0
    %v3357 = vrcp.pop %v3356
    %v3358 = vmul.f32 1.0, %v3357
    %v3359 = vadd.f32 %v3024, %v141
    %v3360 = vmul.f32 %v3351, %v3359
    %v3361 = vadd.f32 %v3340, %v3360
    %v3362 = vtanh.pop %v3361
    %v3363 = vsub.f32 1.0, %v3358
    %v3364 = vmul.f32 %v3363, %v3362
    %v3365 = vmul.f32 %v3358, %v2678
    %v3366 = vadd.f32 %v3364, %v3365
    %v3367 = vpack.c.bf16 %v3366, %v3366
    %v3369 = vsel %vm239, %v3367, 0
    %3371 = vmatprep.subr.bf16.mxu0 %v1281
    %3372 = vmatpush1.bf16.msra.mxu0 %v1280
    %3373 = vmatprep.subr.bf16.mxu0 %v1284
    %3374 = vmatpush1.bf16.msra.mxu0 %v1283
    %3375 = vmatprep.subr.bf16.mxu0 %v1287
    %3376 = vmatpush1.bf16.msra.mxu0 %v1286
    %3377 = vmatprep.subr.bf16.mxu0 %v1290
    %3378 = vmatpush1.bf16.msra.mxu0 %v1289
    %3379 = vmatprep.subr.bf16.mxu0 0
    %3380 = vmatpush1.bf16.msra.mxu0 0
    %3381 = vmatprep.subr.bf16.mxu0 0
    %3382 = vmatpush1.bf16.msra.mxu0 0
    %3383 = vmatprep.subr.bf16.mxu0 0
    %3384 = vmatpush1.bf16.msra.mxu0 0
    %3385 = vmatprep.subr.bf16.mxu0 0
    %3386 = vmatpush1.bf16.msra.mxu0 0
    %3387 = vmatprep.subr.bf16.mxu0 0
    %3388 = vmatpush1.bf16.msra.mxu0 0
    %3389 = vmatprep.subr.bf16.mxu0 0
    %3390 = vmatpush1.bf16.msra.mxu0 0
    %3391 = vmatprep.subr.bf16.mxu0 0
    %3392 = vmatpush1.bf16.msra.mxu0 0
    %3393 = vmatprep.subr.bf16.mxu0 0
    %3394 = vmatpush1.bf16.msra.mxu0 0
    %3395 = vmatprep.subr.bf16.mxu0 0
    %3396 = vmatpush1.bf16.msra.mxu0 0
    %3397 = vmatprep.subr.bf16.mxu0 0
    %3398 = vmatpush1.bf16.msra.mxu0 0
    %3399 = vmatprep.subr.bf16.mxu0 0
    %3400 = vmatpush1.bf16.msra.mxu0 0
    %3401 = vmatprep.subr.bf16.mxu0 0
    %3402 = vmatpush1.bf16.msra.mxu0 0
    %3403 = vmatprep.mubr.bf16.mxu0 0
    %3404 = vmatmul.mubr.bf16.gmra.mrb[0].mxu0 %v3369
    %v3405 = vpop.f32.mrb[0].mxu0
    %v3406 = vadd.f32 %v108, %v3405
    %v3407 = vpop.f32.mrb[0].mxu0
    %v3408 = vadd.f32 %v112, %v3407
    %v3409 = vpop.f32.mrb[0].mxu0
    %v3410 = vpop.f32.mrb[0].mxu0
    %3411 = vdwg.mxu0
    %3412 = vmatprep.subr.bf16.mxu0 0
    %3413 = vmatpush1.bf16.msra.mxu0 %v1282
    %3414 = vmatprep.subr.bf16.mxu0 0
    %3415 = vmatpush1.bf16.msra.mxu0 %v1285
    %3416 = vmatprep.subr.bf16.mxu0 0
    %3417 = vmatpush1.bf16.msra.mxu0 %v1288
    %3418 = vmatprep.subr.bf16.mxu0 0
    %3419 = vmatpush1.bf16.msra.mxu0 %v1291
    %3420 = vmatprep.subr.bf16.mxu0 0
    %3421 = vmatpush1.bf16.msra.mxu0 0
    %3422 = vmatprep.subr.bf16.mxu0 0
    %3423 = vmatpush1.bf16.msra.mxu0 0
    %3424 = vmatprep.subr.bf16.mxu0 0
    %3425 = vmatpush1.bf16.msra.mxu0 0
    %3426 = vmatprep.subr.bf16.mxu0 0
    %3427 = vmatpush1.bf16.msra.mxu0 0
    %3428 = vmatprep.subr.bf16.mxu0 0
    %3429 = vmatpush1.bf16.msra.mxu0 0
    %3430 = vmatprep.subr.bf16.mxu0 0
    %3431 = vmatpush1.bf16.msra.mxu0 0
    %3432 = vmatprep.subr.bf16.mxu0 0
    %3433 = vmatpush1.bf16.msra.mxu0 0
    %3434 = vmatprep.subr.bf16.mxu0 0
    %3435 = vmatpush1.bf16.msra.mxu0 0
    %3436 = vmatprep.subr.bf16.mxu0 0
    %3437 = vmatpush1.bf16.msra.mxu0 0
    %3438 = vmatprep.subr.bf16.mxu0 0
    %3439 = vmatpush1.bf16.msra.mxu0 0
    %3440 = vmatprep.subr.bf16.mxu0 0
    %3441 = vmatpush1.bf16.msra.mxu0 0
    %3442 = vmatprep.subr.bf16.mxu0 0
    %3443 = vmatpush1.bf16.msra.mxu0 0
    %3444 = vmatprep.mubr.bf16.mxu0 0
    %3445 = vmatmul.mubr.bf16.gmra.mrb[0].mxu0 %v3369
    %v3446 = vpop.f32.mrb[0].mxu0
    %v3447 = vadd.f32 %v116, %v3446
    %v3448 = vpop.f32.mrb[0].mxu0
    %v3449 = vpop.f32.mrb[0].mxu0
    %v3450 = vpop.f32.mrb[0].mxu0
    %3451 = vdwg.mxu0
    %v3452 = vadd.f32 %v3406, %v3068
    %v3453 = vxor.u32 %v3452, 2147483648
    %v3454 = vmul.f32 %v3453, 1.442695
    %v3455 = vpow.pop %v3454
    %v3456 = vadd.f32 %v3455, 1.0
    %v3457 = vrcp.pop %v3456
    %v3458 = vmul.f32 1.0, %v3457
    %v3459 = vadd.f32 %v3408, %v3070
    %v3460 = vxor.u32 %v3459, 2147483648
    %v3461 = vmul.f32 %v3460, 1.442695
    %v3462 = vpow.pop %v3461
    %v3463 = vadd.f32 %v3462, 1.0
    %v3464 = vrcp.pop %v3463
    %v3465 = vmul.f32 1.0, %v3464
    %v3466 = vadd.f32 %v3109, %v149
    %v3467 = vmul.f32 %v3458, %v3466
    %v3468 = vadd.f32 %v3447, %v3467
    %v3469 = vtanh.pop %v3468
    %v3470 = vsub.f32 1.0, %v3465
    %v3471 = vmul.f32 %v3470, %v3469
    %v3472 = vmul.f32 %v3465, %v2785
    %v3473 = vadd.f32 %v3471, %v3472
    %3474 = vmatprep.subr.bf16.mxu0 %v216
    %3475 = vmatpush1.bf16.msra.mxu0 %v215
    %3476 = vmatprep.subr.bf16.mxu0 %v219
    %3477 = vmatpush1.bf16.msra.mxu0 %v218
    %3478 = vmatprep.subr.bf16.mxu0 %v222
    %3479 = vmatpush1.bf16.msra.mxu0 %v221
    %3480 = vmatprep.subr.bf16.mxu0 %v225
    %3481 = vmatpush1.bf16.msra.mxu0 %v224
    %3482 = vmatprep.subr.bf16.mxu0 0
    %3483 = vmatpush1.bf16.msra.mxu0 0
    %3484 = vmatprep.subr.bf16.mxu0 0
    %3485 = vmatpush1.bf16.msra.mxu0 0
    %3486 = vmatprep.subr.bf16.mxu0 0
    %3487 = vmatpush1.bf16.msra.mxu0 0
    %3488 = vmatprep.subr.bf16.mxu0 0
    %3489 = vmatpush1.bf16.msra.mxu0 0
    %3490 = vmatprep.subr.bf16.mxu0 0
    %3491 = vmatpush1.bf16.msra.mxu0 0
    %3492 = vmatprep.subr.bf16.mxu0 0
    %3493 = vmatpush1.bf16.msra.mxu0 0
    %3494 = vmatprep.subr.bf16.mxu0 0
    %3495 = vmatpush1.bf16.msra.mxu0 0
    %3496 = vmatprep.subr.bf16.mxu0 0
    %3497 = vmatpush1.bf16.msra.mxu0 0
    %3498 = vmatprep.subr.bf16.mxu0 0
    %3499 = vmatpush1.bf16.msra.mxu0 0
    %3500 = vmatprep.subr.bf16.mxu0 0
    %3501 = vmatpush1.bf16.msra.mxu0 0
    %3502 = vmatprep.subr.bf16.mxu0 0
    %3503 = vmatpush1.bf16.msra.mxu0 0
    %3504 = vmatprep.subr.bf16.mxu0 0
    %3505 = vmatpush1.bf16.msra.mxu0 0
    %3506 = vmatprep.mubr.bf16.mxu0 0
    %3507 = vmatmul.mubr.bf16.gmra.mrb[0].mxu0 %v3155
    %v3508 = vpop.f32.mrb[0].mxu0
    %v3509 = vadd.f32 0.0, %v3508
    %v3510 = vpop.f32.mrb[0].mxu0
    %v3511 = vadd.f32 0.0, %v3510
    %v3512 = vpop.f32.mrb[0].mxu0
    %v3513 = vpop.f32.mrb[0].mxu0
    %3514 = vdwg.mxu0
    %3515 = vmatprep.subr.bf16.mxu0 0
    %3516 = vmatpush1.bf16.msra.mxu0 %v217
    %3517 = vmatprep.subr.bf16.mxu0 0
    %3518 = vmatpush1.bf16.msra.mxu0 %v220
    %3519 = vmatprep.subr.bf16.mxu0 0
    %3520 = vmatpush1.bf16.msra.mxu0 %v223
    %3521 = vmatprep.subr.bf16.mxu0 0
    %3522 = vmatpush1.bf16.msra.mxu0 %v226
    %3523 = vmatprep.subr.bf16.mxu0 0
    %3524 = vmatpush1.bf16.msra.mxu0 0
    %3525 = vmatprep.subr.bf16.mxu0 0
    %3526 = vmatpush1.bf16.msra.mxu0 0
    %3527 = vmatprep.subr.bf16.mxu0 0
    %3528 = vmatpush1.bf16.msra.mxu0 0
    %3529 = vmatprep.subr.bf16.mxu0 0
    %3530 = vmatpush1.bf16.msra.mxu0 0
    %3531 = vmatprep.subr.bf16.mxu0 0
    %3532 = vmatpush1.bf16.msra.mxu0 0
    %3533 = vmatprep.subr.bf16.mxu0 0
    %3534 = vmatpush1.bf16.msra.mxu0 0
    %3535 = vmatprep.subr.bf16.mxu0 0
    %3536 = vmatpush1.bf16.msra.mxu0 0
    %3537 = vmatprep.subr.bf16.mxu0 0
    %3538 = vmatpush1.bf16.msra.mxu0 0
    %3539 = vmatprep.subr.bf16.mxu0 0
    %3540 = vmatpush1.bf16.msra.mxu0 0
    %3541 = vmatprep.subr.bf16.mxu0 0
    %3542 = vmatpush1.bf16.msra.mxu0 0
    %3543 = vmatprep.subr.bf16.mxu0 0
    %3544 = vmatpush1.bf16.msra.mxu0 0
    %3545 = vmatprep.subr.bf16.mxu0 0
    %3546 = vmatpush1.bf16.msra.mxu0 0
    %3547 = vmatprep.mubr.bf16.mxu0 0
    %3548 = vmatmul.mubr.bf16.gmra.mrb[0].mxu0 %v3155
    %v3549 = vpop.f32.mrb[0].mxu0
    %v3550 = vadd.f32 0.0, %v3549
    %v3551 = vpop.f32.mrb[0].mxu0
    %v3552 = vpop.f32.mrb[0].mxu0
    %v3553 = vpop.f32.mrb[0].mxu0
    %3554 = vdwg.mxu0
    %3555 = vmatprep.subr.bf16.mxu0 %v383
    %3556 = vmatpush1.bf16.msra.mxu0 %v382
    %3557 = vmatprep.subr.bf16.mxu0 %v386
    %3558 = vmatpush1.bf16.msra.mxu0 %v385
    %3559 = vmatprep.subr.bf16.mxu0 %v389
    %3560 = vmatpush1.bf16.msra.mxu0 %v388
    %3561 = vmatprep.subr.bf16.mxu0 %v392
    %3562 = vmatpush1.bf16.msra.mxu0 %v391
    %3563 = vmatprep.subr.bf16.mxu0 0
    %3564 = vmatpush1.bf16.msra.mxu0 0
    %3565 = vmatprep.subr.bf16.mxu0 0
    %3566 = vmatpush1.bf16.msra.mxu0 0
    %3567 = vmatprep.subr.bf16.mxu0 0
    %3568 = vmatpush1.bf16.msra.mxu0 0
    %3569 = vmatprep.subr.bf16.mxu0 0
    %3570 = vmatpush1.bf16.msra.mxu0 0
    %3571 = vmatprep.subr.bf16.mxu0 0
    %3572 = vmatpush1.bf16.msra.mxu0 0
    %3573 = vmatprep.subr.bf16.mxu0 0
    %3574 = vmatpush1.bf16.msra.mxu0 0
    %3575 = vmatprep.subr.bf16.mxu0 0
    %3576 = vmatpush1.bf16.msra.mxu0 0
    %3577 = vmatprep.subr.bf16.mxu0 0
    %3578 = vmatpush1.bf16.msra.mxu0 0
    %3579 = vmatprep.subr.bf16.mxu0 0
    %3580 = vmatpush1.bf16.msra.mxu0 0
    %3581 = vmatprep.subr.bf16.mxu0 0
    %3582 = vmatpush1.bf16.msra.mxu0 0
    %3583 = vmatprep.subr.bf16.mxu0 0
    %3584 = vmatpush1.bf16.msra.mxu0 0
    %3585 = vmatprep.subr.bf16.mxu0 0
    %3586 = vmatpush1.bf16.msra.mxu0 0
    %3587 = vmatprep.mubr.bf16.mxu0 0
    %3588 = vmatmul.mubr.bf16.gmra.mrb[0].mxu0 %v3262
    %v3589 = vpop.f32.mrb[0].mxu0
    %v3590 = vadd.f32 0.0, %v3589
    %v3591 = vpop.f32.mrb[0].mxu0
    %v3592 = vadd.f32 0.0, %v3591
    %v3593 = vpop.f32.mrb[0].mxu0
    %v3594 = vpop.f32.mrb[0].mxu0
    %3595 = vdwg.mxu0
    %3596 = vmatprep.subr.bf16.mxu0 0
    %3597 = vmatpush1.bf16.msra.mxu0 %v384
    %3598 = vmatprep.subr.bf16.mxu0 0
    %3599 = vmatpush1.bf16.msra.mxu0 %v387
    %3600 = vmatprep.subr.bf16.mxu0 0
    %3601 = vmatpush1.bf16.msra.mxu0 %v390
    %3602 = vmatprep.subr.bf16.mxu0 0
    %3603 = vmatpush1.bf16.msra.mxu0 %v393
    %3604 = vmatprep.subr.bf16.mxu0 0
    %3605 = vmatpush1.bf16.msra.mxu0 0
    %3606 = vmatprep.subr.bf16.mxu0 0
    %3607 = vmatpush1.bf16.msra.mxu0 0
    %3608 = vmatprep.subr.bf16.mxu0 0
    %3609 = vmatpush1.bf16.msra.mxu0 0
    %3610 = vmatprep.subr.bf16.mxu0 0
    %3611 = vmatpush1.bf16.msra.mxu0 0
    %3612 = vmatprep.subr.bf16.mxu0 0
    %3613 = vmatpush1.bf16.msra.mxu0 0
    %3614 = vmatprep.subr.bf16.mxu0 0
    %3615 = vmatpush1.bf16.msra.mxu0 0
    %3616 = vmatprep.subr.bf16.mxu0 0
    %3617 = vmatpush1.bf16.msra.mxu0 0
    %3618 = vmatprep.subr.bf16.mxu0 0
    %3619 = vmatpush1.bf16.msra.mxu0 0
    %3620 = vmatprep.subr.bf16.mxu0 0
    %3621 = vmatpush1.bf16.msra.mxu0 0
    %3622 = vmatprep.subr.bf16.mxu0 0
    %3623 = vmatpush1.bf16.msra.mxu0 0
    %3624 = vmatprep.subr.bf16.mxu0 0
    %3625 = vmatpush1.bf16.msra.mxu0 0
    %3626 = vmatprep.subr.bf16.mxu0 0
    %3627 = vmatpush1.bf16.msra.mxu0 0
    %3628 = vmatprep.mubr.bf16.mxu0 0
    %3629 = vmatmul.mubr.bf16.gmra.mrb[0].mxu0 %v3262
    %v3630 = vpop.f32.mrb[0].mxu0
    %v3631 = vadd.f32 0.0, %v3630
    %v3632 = vpop.f32.mrb[0].mxu0
    %v3633 = vpop.f32.mrb[0].mxu0
    %v3634 = vpop.f32.mrb[0].mxu0
    %3635 = vdwg.mxu0
    %3636 = vmatprep.subr.bf16.mxu0 %v549
    %3637 = vmatpush1.bf16.msra.mxu0 %v548
    %3638 = vmatprep.subr.bf16.mxu0 %v552
    %3639 = vmatpush1.bf16.msra.mxu0 %v551
    %3640 = vmatprep.subr.bf16.mxu0 %v555
    %3641 = vmatpush1.bf16.msra.mxu0 %v554
    %3642 = vmatprep.subr.bf16.mxu0 %v558
    %3643 = vmatpush1.bf16.msra.mxu0 %v557
    %3644 = vmatprep.subr.bf16.mxu0 0
    %3645 = vmatpush1.bf16.msra.mxu0 0
    %3646 = vmatprep.subr.bf16.mxu0 0
    %3647 = vmatpush1.bf16.msra.mxu0 0
    %3648 = vmatprep.subr.bf16.mxu0 0
    %3649 = vmatpush1.bf16.msra.mxu0 0
    %3650 = vmatprep.subr.bf16.mxu0 0
    %3651 = vmatpush1.bf16.msra.mxu0 0
    %3652 = vmatprep.subr.bf16.mxu0 0
    %3653 = vmatpush1.bf16.msra.mxu0 0
    %3654 = vmatprep.subr.bf16.mxu0 0
    %3655 = vmatpush1.bf16.msra.mxu0 0
    %3656 = vmatprep.subr.bf16.mxu0 0
    %3657 = vmatpush1.bf16.msra.mxu0 0
    %3658 = vmatprep.subr.bf16.mxu0 0
    %3659 = vmatpush1.bf16.msra.mxu0 0
    %3660 = vmatprep.subr.bf16.mxu0 0
    %3661 = vmatpush1.bf16.msra.mxu0 0
    %3662 = vmatprep.subr.bf16.mxu0 0
    %3663 = vmatpush1.bf16.msra.mxu0 0
    %3664 = vmatprep.subr.bf16.mxu0 0
    %3665 = vmatpush1.bf16.msra.mxu0 0
    %3666 = vmatprep.subr.bf16.mxu0 0
    %3667 = vmatpush1.bf16.msra.mxu0 0
    %3668 = vmatprep.mubr.bf16.mxu0 0
    %3669 = vmatmul.mubr.bf16.gmra.mrb[0].mxu0 %v3369
    %v3670 = vpop.f32.mrb[0].mxu0
    %v3671 = vadd.f32 0.0, %v3670
    %v3672 = vpop.f32.mrb[0].mxu0
    %v3673 = vadd.f32 0.0, %v3672
    %v3674 = vpop.f32.mrb[0].mxu0
    %v3675 = vpop.f32.mrb[0].mxu0
    %3676 = vdwg.mxu0
    %3677 = vmatprep.subr.bf16.mxu0 0
    %3678 = vmatpush1.bf16.msra.mxu0 %v550
    %3679 = vmatprep.subr.bf16.mxu0 0
    %3680 = vmatpush1.bf16.msra.mxu0 %v553
    %3681 = vmatprep.subr.bf16.mxu0 0
    %3682 = vmatpush1.bf16.msra.mxu0 %v556
    %3683 = vmatprep.subr.bf16.mxu0 0
    %3684 = vmatpush1.bf16.msra.mxu0 %v559
    %3685 = vmatprep.subr.bf16.mxu0 0
    %3686 = vmatpush1.bf16.msra.mxu0 0
    %3687 = vmatprep.subr.bf16.mxu0 0
    %3688 = vmatpush1.bf16.msra.mxu0 0
    %3689 = vmatprep.subr.bf16.mxu0 0
    %3690 = vmatpush1.bf16.msra.mxu0 0
    %3691 = vmatprep.subr.bf16.mxu0 0
    %3692 = vmatpush1.bf16.msra.mxu0 0
    %3693 = vmatprep.subr.bf16.mxu0 0
    %3694 = vmatpush1.bf16.msra.mxu0 0
    %3695 = vmatprep.subr.bf16.mxu0 0
    %3696 = vmatpush1.bf16.msra.mxu0 0
    %3697 = vmatprep.subr.bf16.mxu0 0
    %3698 = vmatpush1.bf16.msra.mxu0 0
    %3699 = vmatprep.subr.bf16.mxu0 0
    %3700 = vmatpush1.bf16.msra.mxu0 0
    %3701 = vmatprep.subr.bf16.mxu0 0
    %3702 = vmatpush1.bf16.msra.mxu0 0
    %3703 = vmatprep.subr.bf16.mxu0 0
    %3704 = vmatpush1.bf16.msra.mxu0 0
    %3705 = vmatprep.subr.bf16.mxu0 0
    %3706 = vmatpush1.bf16.msra.mxu0 0
    %3707 = vmatprep.subr.bf16.mxu0 0
    %3708 = vmatpush1.bf16.msra.mxu0 0
    %3709 = vmatprep.mubr.bf16.mxu0 0
    %3710 = vmatmul.mubr.bf16.gmra.mrb[0].mxu0 %v3369
    %v3711 = vpop.f32.mrb[0].mxu0
    %v3712 = vadd.f32 0.0, %v3711
    %v3713 = vpop.f32.mrb[0].mxu0
    %v3714 = vpop.f32.mrb[0].mxu0
    %v3715 = vpop.f32.mrb[0].mxu0
    %3716 = vdwg.mxu0
    %v3717 = vpack.c.bf16 %v3473, %v3473
    %v3719 = vsel %vm239, %v3717, 0
    %3721 = vmatprep.subr.bf16.mxu0 %v715
    %3722 = vmatpush1.bf16.msra.mxu0 %v714
    %3723 = vmatprep.subr.bf16.mxu0 %v718
    %3724 = vmatpush1.bf16.msra.mxu0 %v717
    %3725 = vmatprep.subr.bf16.mxu0 %v721
    %3726 = vmatpush1.bf16.msra.mxu0 %v720
    %3727 = vmatprep.subr.bf16.mxu0 %v724
    %3728 = vmatpush1.bf16.msra.mxu0 %v723
    %3729 = vmatprep.subr.bf16.mxu0 0
    %3730 = vmatpush1.bf16.msra.mxu0 0
    %3731 = vmatprep.subr.bf16.mxu0 0
    %3732 = vmatpush1.bf16.msra.mxu0 0
    %3733 = vmatprep.subr.bf16.mxu0 0
    %3734 = vmatpush1.bf16.msra.mxu0 0
    %3735 = vmatprep.subr.bf16.mxu0 0
    %3736 = vmatpush1.bf16.msra.mxu0 0
    %3737 = vmatprep.subr.bf16.mxu0 0
    %3738 = vmatpush1.bf16.msra.mxu0 0
    %3739 = vmatprep.subr.bf16.mxu0 0
    %3740 = vmatpush1.bf16.msra.mxu0 0
    %3741 = vmatprep.subr.bf16.mxu0 0
    %3742 = vmatpush1.bf16.msra.mxu0 0
    %3743 = vmatprep.subr.bf16.mxu0 0
    %3744 = vmatpush1.bf16.msra.mxu0 0
    %3745 = vmatprep.subr.bf16.mxu0 0
    %3746 = vmatpush1.bf16.msra.mxu0 0
    %3747 = vmatprep.subr.bf16.mxu0 0
    %3748 = vmatpush1.bf16.msra.mxu0 0
    %3749 = vmatprep.subr.bf16.mxu0 0
    %3750 = vmatpush1.bf16.msra.mxu0 0
    %3751 = vmatprep.subr.bf16.mxu0 0
    %3752 = vmatpush1.bf16.msra.mxu0 0
    %3753 = vmatprep.mubr.bf16.mxu0 0
    %3754 = vmatmul.mubr.bf16.gmra.mrb[0].mxu0 %v3719
    %v3755 = vpop.f32.mrb[0].mxu0
    %v3756 = vadd.f32 0.0, %v3755
    %v3757 = vpop.f32.mrb[0].mxu0
    %v3758 = vadd.f32 0.0, %v3757
    %v3759 = vpop.f32.mrb[0].mxu0
    %v3760 = vpop.f32.mrb[0].mxu0
    %3761 = vdwg.mxu0
    %3762 = vmatprep.subr.bf16.mxu0 0
    %3763 = vmatpush1.bf16.msra.mxu0 %v716
    %3764 = vmatprep.subr.bf16.mxu0 0
    %3765 = vmatpush1.bf16.msra.mxu0 %v719
    %3766 = vmatprep.subr.bf16.mxu0 0
    %3767 = vmatpush1.bf16.msra.mxu0 %v722
    %3768 = vmatprep.subr.bf16.mxu0 0
    %3769 = vmatpush1.bf16.msra.mxu0 %v725
    %3770 = vmatprep.subr.bf16.mxu0 0
    %3771 = vmatpush1.bf16.msra.mxu0 0
    %3772 = vmatprep.subr.bf16.mxu0 0
    %3773 = vmatpush1.bf16.msra.mxu0 0
    %3774 = vmatprep.subr.bf16.mxu0 0
    %3775 = vmatpush1.bf16.msra.mxu0 0
    %3776 = vmatprep.subr.bf16.mxu0 0
    %3777 = vmatpush1.bf16.msra.mxu0 0
    %3778 = vmatprep.subr.bf16.mxu0 0
    %3779 = vmatpush1.bf16.msra.mxu0 0
    %3780 = vmatprep.subr.bf16.mxu0 0
    %3781 = vmatpush1.bf16.msra.mxu0 0
    %3782 = vmatprep.subr.bf16.mxu0 0
    %3783 = vmatpush1.bf16.msra.mxu0 0
    %3784 = vmatprep.subr.bf16.mxu0 0
    %3785 = vmatpush1.bf16.msra.mxu0 0
    %3786 = vmatprep.subr.bf16.mxu0 0
    %3787 = vmatpush1.bf16.msra.mxu0 0
    %3788 = vmatprep.subr.bf16.mxu0 0
    %3789 = vmatpush1.bf16.msra.mxu0 0
    %3790 = vmatprep.subr.bf16.mxu0 0
    %3791 = vmatpush1.bf16.msra.mxu0 0
    %3792 = vmatprep.subr.bf16.mxu0 0
    %3793 = vmatpush1.bf16.msra.mxu0 0
    %3794 = vmatprep.mubr.bf16.mxu0 0
    %3795 = vmatmul.mubr.bf16.gmra.mrb[0].mxu0 %v3719
    %v3796 = vpop.f32.mrb[0].mxu0
    %v3797 = vadd.f32 0.0, %v3796
    %v3798 = vpop.f32.mrb[0].mxu0
    %v3799 = vpop.f32.mrb[0].mxu0
    %v3800 = vpop.f32.mrb[0].mxu0
    %3801 = vdwg.mxu0
    %v3802 = vld [vmem:[%s0 + $0x18] sm:$0x3]
    %v3803 = vld [vmem:[%s0 + $0x20] sm:$0x3]
    %v3804 = vld [vmem:[%s0 + $0x28] sm:$0x3]
    %v3805 = vadd.f32 %v3802, %v3509
    %v3806 = vxor.u32 %v3805, 2147483648
    %v3807 = vmul.f32 %v3806, 1.442695
    %v3808 = vpow.pop %v3807
    %v3809 = vadd.f32 %v3808, 1.0
    %v3810 = vrcp.pop %v3809
    %v3811 = vmul.f32 1.0, %v3810
    %v3812 = vadd.f32 %v3803, %v3511
    %v3813 = vxor.u32 %v3812, 2147483648
    %v3814 = vmul.f32 %v3813, 1.442695
    %v3815 = vpow.pop %v3814
    %v3816 = vadd.f32 %v3815, 1.0
    %v3817 = vrcp.pop %v3816
    %v3818 = vmul.f32 1.0, %v3817
    %v3819 = vadd.f32 %v3550, %v125
    %v3820 = vmul.f32 %v3811, %v3819
    %v3821 = vadd.f32 %v3804, %v3820
    %v3822 = vtanh.pop %v3821
    %v3823 = vsub.f32 1.0, %v3818
    %v3824 = vmul.f32 %v3823, %v3822
    %v3826 = vrot.slane %v3150, 6
    %v3828 = vmul.f32 %v3818, %v3826
    %v3829 = vadd.f32 %v3824, %v3828
    %v3830 = vpack.c.bf16 %v3829, %v3829
    %v3832 = vsel %vm239, %v3830, 0
    %3834 = vmatprep.subr.bf16.mxu0 %v905
    %3835 = vmatpush1.bf16.msra.mxu0 %v904
    %3836 = vmatprep.subr.bf16.mxu0 %v908
    %3837 = vmatpush1.bf16.msra.mxu0 %v907
    %3838 = vmatprep.subr.bf16.mxu0 %v911
    %3839 = vmatpush1.bf16.msra.mxu0 %v910
    %3840 = vmatprep.subr.bf16.mxu0 %v914
    %3841 = vmatpush1.bf16.msra.mxu0 %v913
    %3842 = vmatprep.subr.bf16.mxu0 0
    %3843 = vmatpush1.bf16.msra.mxu0 0
    %3844 = vmatprep.subr.bf16.mxu0 0
    %3845 = vmatpush1.bf16.msra.mxu0 0
    %3846 = vmatprep.subr.bf16.mxu0 0
    %3847 = vmatpush1.bf16.msra.mxu0 0
    %3848 = vmatprep.subr.bf16.mxu0 0
    %3849 = vmatpush1.bf16.msra.mxu0 0
    %3850 = vmatprep.subr.bf16.mxu0 0
    %3851 = vmatpush1.bf16.msra.mxu0 0
    %3852 = vmatprep.subr.bf16.mxu0 0
    %3853 = vmatpush1.bf16.msra.mxu0 0
    %3854 = vmatprep.subr.bf16.mxu0 0
    %3855 = vmatpush1.bf16.msra.mxu0 0
    %3856 = vmatprep.subr.bf16.mxu0 0
    %3857 = vmatpush1.bf16.msra.mxu0 0
    %3858 = vmatprep.subr.bf16.mxu0 0
    %3859 = vmatpush1.bf16.msra.mxu0 0
    %3860 = vmatprep.subr.bf16.mxu0 0
    %3861 = vmatpush1.bf16.msra.mxu0 0
    %3862 = vmatprep.subr.bf16.mxu0 0
    %3863 = vmatpush1.bf16.msra.mxu0 0
    %3864 = vmatprep.subr.bf16.mxu0 0
    %3865 = vmatpush1.bf16.msra.mxu0 0
    %3866 = vmatprep.mubr.bf16.mxu0 0
    %3867 = vmatmul.mubr.bf16.gmra.mrb[0].mxu0 %v3832
    %v3868 = vpop.f32.mrb[0].mxu0
    %v3869 = vadd.f32 %v72, %v3868
    %v3870 = vpop.f32.mrb[0].mxu0
    %v3871 = vadd.f32 %v76, %v3870
    %v3872 = vpop.f32.mrb[0].mxu0
    %v3873 = vpop.f32.mrb[0].mxu0
    %3874 = vdwg.mxu0
    %3875 = vmatprep.subr.bf16.mxu0 0
    %3876 = vmatpush1.bf16.msra.mxu0 %v906
    %3877 = vmatprep.subr.bf16.mxu0 0
    %3878 = vmatpush1.bf16.msra.mxu0 %v909
    %3879 = vmatprep.subr.bf16.mxu0 0
    %3880 = vmatpush1.bf16.msra.mxu0 %v912
    %3881 = vmatprep.subr.bf16.mxu0 0
    %3882 = vmatpush1.bf16.msra.mxu0 %v915
    %3883 = vmatprep.subr.bf16.mxu0 0
    %3884 = vmatpush1.bf16.msra.mxu0 0
    %3885 = vmatprep.subr.bf16.mxu0 0
    %3886 = vmatpush1.bf16.msra.mxu0 0
    %3887 = vmatprep.subr.bf16.mxu0 0
    %3888 = vmatpush1.bf16.msra.mxu0 0
    %3889 = vmatprep.subr.bf16.mxu0 0
    %3890 = vmatpush1.bf16.msra.mxu0 0
    %3891 = vmatprep.subr.bf16.mxu0 0
    %3892 = vmatpush1.bf16.msra.mxu0 0
    %3893 = vmatprep.subr.bf16.mxu0 0
    %3894 = vmatpush1.bf16.msra.mxu0 0
    %3895 = vmatprep.subr.bf16.mxu0 0
    %3896 = vmatpush1.bf16.msra.mxu0 0
    %3897 = vmatprep.subr.bf16.mxu0 0
    %3898 = vmatpush1.bf16.msra.mxu0 0
    %3899 = vmatprep.subr.bf16.mxu0 0
    %3900 = vmatpush1.bf16.msra.mxu0 0
    %3901 = vmatprep.subr.bf16.mxu0 0
    %3902 = vmatpush1.bf16.msra.mxu0 0
    %3903 = vmatprep.subr.bf16.mxu0 0
    %3904 = vmatpush1.bf16.msra.mxu0 0
    %3905 = vmatprep.subr.bf16.mxu0 0
    %3906 = vmatpush1.bf16.msra.mxu0 0
    %3907 = vmatprep.mubr.bf16.mxu0 0
    %3908 = vmatmul.mubr.bf16.gmra.mrb[0].mxu0 %v3832
    %v3909 = vpop.f32.mrb[0].mxu0
    %v3910 = vadd.f32 %v80, %v3909
    %v3911 = vpop.f32.mrb[0].mxu0
    %v3912 = vpop.f32.mrb[0].mxu0
    %v3913 = vpop.f32.mrb[0].mxu0
    %3914 = vdwg.mxu0
    %v3915 = vadd.f32 %v3869, %v3590
    %v3916 = vxor.u32 %v3915, 2147483648
    %v3917 = vmul.f32 %v3916, 1.442695
    %v3918 = vpow.pop %v3917
    %v3919 = vadd.f32 %v3918, 1.0
    %v3920 = vrcp.pop %v3919
    %v3921 = vmul.f32 1.0, %v3920
    %v3922 = vadd.f32 %v3871, %v3592
    %v3923 = vxor.u32 %v3922, 2147483648
    %v3924 = vmul.f32 %v3923, 1.442695
    %v3925 = vpow.pop %v3924
    %v3926 = vadd.f32 %v3925, 1.0
    %v3927 = vrcp.pop %v3926
    %v3928 = vmul.f32 1.0, %v3927
    %v3929 = vadd.f32 %v3631, %v133
    %v3930 = vmul.f32 %v3921, %v3929
    %v3931 = vadd.f32 %v3910, %v3930
    %v3932 = vtanh.pop %v3931
    %v3933 = vsub.f32 1.0, %v3928
    %v3934 = vmul.f32 %v3933, %v3932
    %v3935 = vmul.f32 %v3928, %v3259
    %v3936 = vadd.f32 %v3934, %v3935
    %v3937 = vpack.c.bf16 %v3936, %v3936
    %v3939 = vsel %vm239, %v3937, 0
    %3941 = vmatprep.subr.bf16.mxu0 %v1093
    %3942 = vmatpush1.bf16.msra.mxu0 %v1092
    %3943 = vmatprep.subr.bf16.mxu0 %v1096
    %3944 = vmatpush1.bf16.msra.mxu0 %v1095
    %3945 = vmatprep.subr.bf16.mxu0 %v1099
    %3946 = vmatpush1.bf16.msra.mxu0 %v1098
    %3947 = vmatprep.subr.bf16.mxu0 %v1102
    %3948 = vmatpush1.bf16.msra.mxu0 %v1101
    %3949 = vmatprep.subr.bf16.mxu0 0
    %3950 = vmatpush1.bf16.msra.mxu0 0
    %3951 = vmatprep.subr.bf16.mxu0 0
    %3952 = vmatpush1.bf16.msra.mxu0 0
    %3953 = vmatprep.subr.bf16.mxu0 0
    %3954 = vmatpush1.bf16.msra.mxu0 0
    %3955 = vmatprep.subr.bf16.mxu0 0
    %3956 = vmatpush1.bf16.msra.mxu0 0
    %3957 = vmatprep.subr.bf16.mxu0 0
    %3958 = vmatpush1.bf16.msra.mxu0 0
    %3959 = vmatprep.subr.bf16.mxu0 0
    %3960 = vmatpush1.bf16.msra.mxu0 0
    %3961 = vmatprep.subr.bf16.mxu0 0
    %3962 = vmatpush1.bf16.msra.mxu0 0
    %3963 = vmatprep.subr.bf16.mxu0 0
    %3964 = vmatpush1.bf16.msra.mxu0 0
    %3965 = vmatprep.subr.bf16.mxu0 0
    %3966 = vmatpush1.bf16.msra.mxu0 0
    %3967 = vmatprep.subr.bf16.mxu0 0
    %3968 = vmatpush1.bf16.msra.mxu0 0
    %3969 = vmatprep.subr.bf16.mxu0 0
    %3970 = vmatpush1.bf16.msra.mxu0 0
    %3971 = vmatprep.subr.bf16.mxu0 0
    %3972 = vmatpush1.bf16.msra.mxu0 0
    %3973 = vmatprep.mubr.bf16.mxu0 0
    %3974 = vmatmul.mubr.bf16.gmra.mrb[0].mxu0 %v3939
    %v3975 = vpop.f32.mrb[0].mxu0
    %v3976 = vadd.f32 %v90, %v3975
    %v3977 = vpop.f32.mrb[0].mxu0
    %v3978 = vadd.f32 %v94, %v3977
    %v3979 = vpop.f32.mrb[0].mxu0
    %v3980 = vpop.f32.mrb[0].mxu0
    %3981 = vdwg.mxu0
    %3982 = vmatprep.subr.bf16.mxu0 0
    %3983 = vmatpush1.bf16.msra.mxu0 %v1094
    %3984 = vmatprep.subr.bf16.mxu0 0
    %3985 = vmatpush1.bf16.msra.mxu0 %v1097
    %3986 = vmatprep.subr.bf16.mxu0 0
    %3987 = vmatpush1.bf16.msra.mxu0 %v1100
    %3988 = vmatprep.subr.bf16.mxu0 0
    %3989 = vmatpush1.bf16.msra.mxu0 %v1103
    %3990 = vmatprep.subr.bf16.mxu0 0
    %3991 = vmatpush1.bf16.msra.mxu0 0
    %3992 = vmatprep.subr.bf16.mxu0 0
    %3993 = vmatpush1.bf16.msra.mxu0 0
    %3994 = vmatprep.subr.bf16.mxu0 0
    %3995 = vmatpush1.bf16.msra.mxu0 0
    %3996 = vmatprep.subr.bf16.mxu0 0
    %3997 = vmatpush1.bf16.msra.mxu0 0
    %3998 = vmatprep.subr.bf16.mxu0 0
    %3999 = vmatpush1.bf16.msra.mxu0 0
    %4000 = vmatprep.subr.bf16.mxu0 0
    %4001 = vmatpush1.bf16.msra.mxu0 0
    %4002 = vmatprep.subr.bf16.mxu0 0
    %4003 = vmatpush1.bf16.msra.mxu0 0
    %4004 = vmatprep.subr.bf16.mxu0 0
    %4005 = vmatpush1.bf16.msra.mxu0 0
    %4006 = vmatprep.subr.bf16.mxu0 0
    %4007 = vmatpush1.bf16.msra.mxu0 0
    %4008 = vmatprep.subr.bf16.mxu0 0
    %4009 = vmatpush1.bf16.msra.mxu0 0
    %4010 = vmatprep.subr.bf16.mxu0 0
    %4011 = vmatpush1.bf16.msra.mxu0 0
    %4012 = vmatprep.subr.bf16.mxu0 0
    %4013 = vmatpush1.bf16.msra.mxu0 0
    %4014 = vmatprep.mubr.bf16.mxu0 0
    %4015 = vmatmul.mubr.bf16.gmra.mrb[0].mxu0 %v3939
    %v4016 = vpop.f32.mrb[0].mxu0
    %v4017 = vadd.f32 %v98, %v4016
    %v4018 = vpop.f32.mrb[0].mxu0
    %v4019 = vpop.f32.mrb[0].mxu0
    %v4020 = vpop.f32.mrb[0].mxu0
    %4021 = vdwg.mxu0
    %v4022 = vadd.f32 %v3976, %v3671
    %v4023 = vxor.u32 %v4022, 2147483648
    %v4024 = vmul.f32 %v4023, 1.442695
    %v4025 = vpow.pop %v4024
    %v4026 = vadd.f32 %v4025, 1.0
    %v4027 = vrcp.pop %v4026
    %v4028 = vmul.f32 1.0, %v4027
    %v4029 = vadd.f32 %v3978, %v3673
    %v4030 = vxor.u32 %v4029, 2147483648
    %v4031 = vmul.f32 %v4030, 1.442695
    %v4032 = vpow.pop %v4031
    %v4033 = vadd.f32 %v4032, 1.0
    %v4034 = vrcp.pop %v4033
    %v4035 = vmul.f32 1.0, %v4034
    %v4036 = vadd.f32 %v3712, %v141
    %v4037 = vmul.f32 %v4028, %v4036
    %v4038 = vadd.f32 %v4017, %v4037
    %v4039 = vtanh.pop %v4038
    %v4040 = vsub.f32 1.0, %v4035
    %v4041 = vmul.f32 %v4040, %v4039
    %v4042 = vmul.f32 %v4035, %v3366
    %v4043 = vadd.f32 %v4041, %v4042
    %v4044 = vpack.c.bf16 %v4043, %v4043
    %v4046 = vsel %vm239, %v4044, 0
    %4048 = vmatprep.subr.bf16.mxu0 %v1281
    %4049 = vmatpush1.bf16.msra.mxu0 %v1280
    %4050 = vmatprep.subr.bf16.mxu0 %v1284
    %4051 = vmatpush1.bf16.msra.mxu0 %v1283
    %4052 = vmatprep.subr.bf16.mxu0 %v1287
    %4053 = vmatpush1.bf16.msra.mxu0 %v1286
    %4054 = vmatprep.subr.bf16.mxu0 %v1290
    %4055 = vmatpush1.bf16.msra.mxu0 %v1289
    %4056 = vmatprep.subr.bf16.mxu0 0
    %4057 = vmatpush1.bf16.msra.mxu0 0
    %4058 = vmatprep.subr.bf16.mxu0 0
    %4059 = vmatpush1.bf16.msra.mxu0 0
    %4060 = vmatprep.subr.bf16.mxu0 0
    %4061 = vmatpush1.bf16.msra.mxu0 0
    %4062 = vmatprep.subr.bf16.mxu0 0
    %4063 = vmatpush1.bf16.msra.mxu0 0
    %4064 = vmatprep.subr.bf16.mxu0 0
    %4065 = vmatpush1.bf16.msra.mxu0 0
    %4066 = vmatprep.subr.bf16.mxu0 0
    %4067 = vmatpush1.bf16.msra.mxu0 0
    %4068 = vmatprep.subr.bf16.mxu0 0
    %4069 = vmatpush1.bf16.msra.mxu0 0
    %4070 = vmatprep.subr.bf16.mxu0 0
    %4071 = vmatpush1.bf16.msra.mxu0 0
    %4072 = vmatprep.subr.bf16.mxu0 0
    %4073 = vmatpush1.bf16.msra.mxu0 0
    %4074 = vmatprep.subr.bf16.mxu0 0
    %4075 = vmatpush1.bf16.msra.mxu0 0
    %4076 = vmatprep.subr.bf16.mxu0 0
    %4077 = vmatpush1.bf16.msra.mxu0 0
    %4078 = vmatprep.subr.bf16.mxu0 0
    %4079 = vmatpush1.bf16.msra.mxu0 0
    %4080 = vmatprep.mubr.bf16.mxu0 0
    %4081 = vmatmul.mubr.bf16.gmra.mrb[0].mxu0 %v4046
    %v4082 = vpop.f32.mrb[0].mxu0
    %v4083 = vadd.f32 %v108, %v4082
    %v4084 = vpop.f32.mrb[0].mxu0
    %v4085 = vadd.f32 %v112, %v4084
    %v4086 = vpop.f32.mrb[0].mxu0
    %v4087 = vpop.f32.mrb[0].mxu0
    %4088 = vdwg.mxu0
    %4089 = vmatprep.subr.bf16.mxu0 0
    %4090 = vmatpush1.bf16.msra.mxu0 %v1282
    %4091 = vmatprep.subr.bf16.mxu0 0
    %4092 = vmatpush1.bf16.msra.mxu0 %v1285
    %4093 = vmatprep.subr.bf16.mxu0 0
    %4094 = vmatpush1.bf16.msra.mxu0 %v1288
    %4095 = vmatprep.subr.bf16.mxu0 0
    %4096 = vmatpush1.bf16.msra.mxu0 %v1291
    %4097 = vmatprep.subr.bf16.mxu0 0
    %4098 = vmatpush1.bf16.msra.mxu0 0
    %4099 = vmatprep.subr.bf16.mxu0 0
    %4100 = vmatpush1.bf16.msra.mxu0 0
    %4101 = vmatprep.subr.bf16.mxu0 0
    %4102 = vmatpush1.bf16.msra.mxu0 0
    %4103 = vmatprep.subr.bf16.mxu0 0
    %4104 = vmatpush1.bf16.msra.mxu0 0
    %4105 = vmatprep.subr.bf16.mxu0 0
    %4106 = vmatpush1.bf16.msra.mxu0 0
    %4107 = vmatprep.subr.bf16.mxu0 0
    %4108 = vmatpush1.bf16.msra.mxu0 0
    %4109 = vmatprep.subr.bf16.mxu0 0
    %4110 = vmatpush1.bf16.msra.mxu0 0
    %4111 = vmatprep.subr.bf16.mxu0 0
    %4112 = vmatpush1.bf16.msra.mxu0 0
    %4113 = vmatprep.subr.bf16.mxu0 0
    %4114 = vmatpush1.bf16.msra.mxu0 0
    %4115 = vmatprep.subr.bf16.mxu0 0
    %4116 = vmatpush1.bf16.msra.mxu0 0
    %4117 = vmatprep.subr.bf16.mxu0 0
    %4118 = vmatpush1.bf16.msra.mxu0 0
    %4119 = vmatprep.subr.bf16.mxu0 0
    %4120 = vmatpush1.bf16.msra.mxu0 0
    %4121 = vmatprep.mubr.bf16.mxu0 0
    %4122 = vmatmul.mubr.bf16.gmra.mrb[0].mxu0 %v4046
    %v4123 = vpop.f32.mrb[0].mxu0
    %v4124 = vadd.f32 %v116, %v4123
    %v4125 = vpop.f32.mrb[0].mxu0
    %v4126 = vpop.f32.mrb[0].mxu0
    %v4127 = vpop.f32.mrb[0].mxu0
    %4128 = vdwg.mxu0
    %v4129 = vadd.f32 %v4083, %v3756
    %v4130 = vxor.u32 %v4129, 2147483648
    %v4131 = vmul.f32 %v4130, 1.442695
    %v4132 = vpow.pop %v4131
    %v4133 = vadd.f32 %v4132, 1.0
    %v4134 = vrcp.pop %v4133
    %v4135 = vmul.f32 1.0, %v4134
    %v4136 = vadd.f32 %v4085, %v3758
    %v4137 = vxor.u32 %v4136, 2147483648
    %v4138 = vmul.f32 %v4137, 1.442695
    %v4139 = vpow.pop %v4138
    %v4140 = vadd.f32 %v4139, 1.0
    %v4141 = vrcp.pop %v4140
    %v4142 = vmul.f32 1.0, %v4141
    %v4143 = vadd.f32 %v3797, %v149
    %v4144 = vmul.f32 %v4135, %v4143
    %v4145 = vadd.f32 %v4124, %v4144
    %v4146 = vtanh.pop %v4145
    %v4147 = vsub.f32 1.0, %v4142
    %v4148 = vmul.f32 %v4147, %v4146
    %v4149 = vmul.f32 %v4142, %v3473
    %v4150 = vadd.f32 %v4148, %v4149
    %4151 = vmatprep.subr.bf16.mxu0 %v216
    %4152 = vmatpush1.bf16.msra.mxu0 %v215
    %4153 = vmatprep.subr.bf16.mxu0 %v219
    %4154 = vmatpush1.bf16.msra.mxu0 %v218
    %4155 = vmatprep.subr.bf16.mxu0 %v222
    %4156 = vmatpush1.bf16.msra.mxu0 %v221
    %4157 = vmatprep.subr.bf16.mxu0 %v225
    %4158 = vmatpush1.bf16.msra.mxu0 %v224
    %4159 = vmatprep.subr.bf16.mxu0 0
    %4160 = vmatpush1.bf16.msra.mxu0 0
    %4161 = vmatprep.subr.bf16.mxu0 0
    %4162 = vmatpush1.bf16.msra.mxu0 0
    %4163 = vmatprep.subr.bf16.mxu0 0
    %4164 = vmatpush1.bf16.msra.mxu0 0
    %4165 = vmatprep.subr.bf16.mxu0 0
    %4166 = vmatpush1.bf16.msra.mxu0 0
    %4167 = vmatprep.subr.bf16.mxu0 0
    %4168 = vmatpush1.bf16.msra.mxu0 0
    %4169 = vmatprep.subr.bf16.mxu0 0
    %4170 = vmatpush1.bf16.msra.mxu0 0
    %4171 = vmatprep.subr.bf16.mxu0 0
    %4172 = vmatpush1.bf16.msra.mxu0 0
    %4173 = vmatprep.subr.bf16.mxu0 0
    %4174 = vmatpush1.bf16.msra.mxu0 0
    %4175 = vmatprep.subr.bf16.mxu0 0
    %4176 = vmatpush1.bf16.msra.mxu0 0
    %4177 = vmatprep.subr.bf16.mxu0 0
    %4178 = vmatpush1.bf16.msra.mxu0 0
    %4179 = vmatprep.subr.bf16.mxu0 0
    %4180 = vmatpush1.bf16.msra.mxu0 0
    %4181 = vmatprep.subr.bf16.mxu0 0
    %4182 = vmatpush1.bf16.msra.mxu0 0
    %4183 = vmatprep.mubr.bf16.mxu0 0
    %4184 = vmatmul.mubr.bf16.gmra.mrb[0].mxu0 %v3832
    %v4185 = vpop.f32.mrb[0].mxu0
    %v4186 = vadd.f32 0.0, %v4185
    %v4187 = vpop.f32.mrb[0].mxu0
    %v4188 = vadd.f32 0.0, %v4187
    %v4189 = vpop.f32.mrb[0].mxu0
    %v4190 = vpop.f32.mrb[0].mxu0
    %4191 = vdwg.mxu0
    %4192 = vmatprep.subr.bf16.mxu0 0
    %4193 = vmatpush1.bf16.msra.mxu0 %v217
    %4194 = vmatprep.subr.bf16.mxu0 0
    %4195 = vmatpush1.bf16.msra.mxu0 %v220
    %4196 = vmatprep.subr.bf16.mxu0 0
    %4197 = vmatpush1.bf16.msra.mxu0 %v223
    %4198 = vmatprep.subr.bf16.mxu0 0
    %4199 = vmatpush1.bf16.msra.mxu0 %v226
    %4200 = vmatprep.subr.bf16.mxu0 0
    %4201 = vmatpush1.bf16.msra.mxu0 0
    %4202 = vmatprep.subr.bf16.mxu0 0
    %4203 = vmatpush1.bf16.msra.mxu0 0
    %4204 = vmatprep.subr.bf16.mxu0 0
    %4205 = vmatpush1.bf16.msra.mxu0 0
    %4206 = vmatprep.subr.bf16.mxu0 0
    %4207 = vmatpush1.bf16.msra.mxu0 0
    %4208 = vmatprep.subr.bf16.mxu0 0
    %4209 = vmatpush1.bf16.msra.mxu0 0
    %4210 = vmatprep.subr.bf16.mxu0 0
    %4211 = vmatpush1.bf16.msra.mxu0 0
    %4212 = vmatprep.subr.bf16.mxu0 0
    %4213 = vmatpush1.bf16.msra.mxu0 0
    %4214 = vmatprep.subr.bf16.mxu0 0
    %4215 = vmatpush1.bf16.msra.mxu0 0
    %4216 = vmatprep.subr.bf16.mxu0 0
    %4217 = vmatpush1.bf16.msra.mxu0 0
    %4218 = vmatprep.subr.bf16.mxu0 0
    %4219 = vmatpush1.bf16.msra.mxu0 0
    %4220 = vmatprep.subr.bf16.mxu0 0
    %4221 = vmatpush1.bf16.msra.mxu0 0
    %4222 = vmatprep.subr.bf16.mxu0 0
    %4223 = vmatpush1.bf16.msra.mxu0 0
    %4224 = vmatprep.mubr.bf16.mxu0 0
    %4225 = vmatmul.mubr.bf16.gmra.mrb[0].mxu0 %v3832
    %v4226 = vpop.f32.mrb[0].mxu0
    %v4227 = vadd.f32 0.0, %v4226
    %v4228 = vpop.f32.mrb[0].mxu0
    %v4229 = vpop.f32.mrb[0].mxu0
    %v4230 = vpop.f32.mrb[0].mxu0
    %4231 = vdwg.mxu0
    %4232 = vmatprep.subr.bf16.mxu0 %v383
    %4233 = vmatpush1.bf16.msra.mxu0 %v382
    %4234 = vmatprep.subr.bf16.mxu0 %v386
    %4235 = vmatpush1.bf16.msra.mxu0 %v385
    %4236 = vmatprep.subr.bf16.mxu0 %v389
    %4237 = vmatpush1.bf16.msra.mxu0 %v388
    %4238 = vmatprep.subr.bf16.mxu0 %v392
    %4239 = vmatpush1.bf16.msra.mxu0 %v391
    %4240 = vmatprep.subr.bf16.mxu0 0
    %4241 = vmatpush1.bf16.msra.mxu0 0
    %4242 = vmatprep.subr.bf16.mxu0 0
    %4243 = vmatpush1.bf16.msra.mxu0 0
    %4244 = vmatprep.subr.bf16.mxu0 0
    %4245 = vmatpush1.bf16.msra.mxu0 0
    %4246 = vmatprep.subr.bf16.mxu0 0
    %4247 = vmatpush1.bf16.msra.mxu0 0
    %4248 = vmatprep.subr.bf16.mxu0 0
    %4249 = vmatpush1.bf16.msra.mxu0 0
    %4250 = vmatprep.subr.bf16.mxu0 0
    %4251 = vmatpush1.bf16.msra.mxu0 0
    %4252 = vmatprep.subr.bf16.mxu0 0
    %4253 = vmatpush1.bf16.msra.mxu0 0
    %4254 = vmatprep.subr.bf16.mxu0 0
    %4255 = vmatpush1.bf16.msra.mxu0 0
    %4256 = vmatprep.subr.bf16.mxu0 0
    %4257 = vmatpush1.bf16.msra.mxu0 0
    %4258 = vmatprep.subr.bf16.mxu0 0
    %4259 = vmatpush1.bf16.msra.mxu0 0
    %4260 = vmatprep.subr.bf16.mxu0 0
    %4261 = vmatpush1.bf16.msra.mxu0 0
    %4262 = vmatprep.subr.bf16.mxu0 0
    %4263 = vmatpush1.bf16.msra.mxu0 0
    %4264 = vmatprep.mubr.bf16.mxu0 0
    %4265 = vmatmul.mubr.bf16.gmra.mrb[0].mxu0 %v3939
    %v4266 = vpop.f32.mrb[0].mxu0
    %v4267 = vadd.f32 0.0, %v4266
    %v4268 = vpop.f32.mrb[0].mxu0
    %v4269 = vadd.f32 0.0, %v4268
    %v4270 = vpop.f32.mrb[0].mxu0
    %v4271 = vpop.f32.mrb[0].mxu0
    %4272 = vdwg.mxu0
    %4273 = vmatprep.subr.bf16.mxu0 0
    %4274 = vmatpush1.bf16.msra.mxu0 %v384
    %4275 = vmatprep.subr.bf16.mxu0 0
    %4276 = vmatpush1.bf16.msra.mxu0 %v387
    %4277 = vmatprep.subr.bf16.mxu0 0
    %4278 = vmatpush1.bf16.msra.mxu0 %v390
    %4279 = vmatprep.subr.bf16.mxu0 0
    %4280 = vmatpush1.bf16.msra.mxu0 %v393
    %4281 = vmatprep.subr.bf16.mxu0 0
    %4282 = vmatpush1.bf16.msra.mxu0 0
    %4283 = vmatprep.subr.bf16.mxu0 0
    %4284 = vmatpush1.bf16.msra.mxu0 0
    %4285 = vmatprep.subr.bf16.mxu0 0
    %4286 = vmatpush1.bf16.msra.mxu0 0
    %4287 = vmatprep.subr.bf16.mxu0 0
    %4288 = vmatpush1.bf16.msra.mxu0 0
    %4289 = vmatprep.subr.bf16.mxu0 0
    %4290 = vmatpush1.bf16.msra.mxu0 0
    %4291 = vmatprep.subr.bf16.mxu0 0
    %4292 = vmatpush1.bf16.msra.mxu0 0
    %4293 = vmatprep.subr.bf16.mxu0 0
    %4294 = vmatpush1.bf16.msra.mxu0 0
    %4295 = vmatprep.subr.bf16.mxu0 0
    %4296 = vmatpush1.bf16.msra.mxu0 0
    %4297 = vmatprep.subr.bf16.mxu0 0
    %4298 = vmatpush1.bf16.msra.mxu0 0
    %4299 = vmatprep.subr.bf16.mxu0 0
    %4300 = vmatpush1.bf16.msra.mxu0 0
    %4301 = vmatprep.subr.bf16.mxu0 0
    %4302 = vmatpush1.bf16.msra.mxu0 0
    %4303 = vmatprep.subr.bf16.mxu0 0
    %4304 = vmatpush1.bf16.msra.mxu0 0
    %4305 = vmatprep.mubr.bf16.mxu0 0
    %4306 = vmatmul.mubr.bf16.gmra.mrb[0].mxu0 %v3939
    %v4307 = vpop.f32.mrb[0].mxu0
    %v4308 = vadd.f32 0.0, %v4307
    %v4309 = vpop.f32.mrb[0].mxu0
    %v4310 = vpop.f32.mrb[0].mxu0
    %v4311 = vpop.f32.mrb[0].mxu0
    %4312 = vdwg.mxu0
    %4313 = vmatprep.subr.bf16.mxu0 %v549
    %4314 = vmatpush1.bf16.msra.mxu0 %v548
    %4315 = vmatprep.subr.bf16.mxu0 %v552
    %4316 = vmatpush1.bf16.msra.mxu0 %v551
    %4317 = vmatprep.subr.bf16.mxu0 %v555
    %4318 = vmatpush1.bf16.msra.mxu0 %v554
    %4319 = vmatprep.subr.bf16.mxu0 %v558
    %4320 = vmatpush1.bf16.msra.mxu0 %v557
    %4321 = vmatprep.subr.bf16.mxu0 0
    %4322 = vmatpush1.bf16.msra.mxu0 0
    %4323 = vmatprep.subr.bf16.mxu0 0
    %4324 = vmatpush1.bf16.msra.mxu0 0
    %4325 = vmatprep.subr.bf16.mxu0 0
    %4326 = vmatpush1.bf16.msra.mxu0 0
    %4327 = vmatprep.subr.bf16.mxu0 0
    %4328 = vmatpush1.bf16.msra.mxu0 0
    %4329 = vmatprep.subr.bf16.mxu0 0
    %4330 = vmatpush1.bf16.msra.mxu0 0
    %4331 = vmatprep.subr.bf16.mxu0 0
    %4332 = vmatpush1.bf16.msra.mxu0 0
    %4333 = vmatprep.subr.bf16.mxu0 0
    %4334 = vmatpush1.bf16.msra.mxu0 0
    %4335 = vmatprep.subr.bf16.mxu0 0
    %4336 = vmatpush1.bf16.msra.mxu0 0
    %4337 = vmatprep.subr.bf16.mxu0 0
    %4338 = vmatpush1.bf16.msra.mxu0 0
    %4339 = vmatprep.subr.bf16.mxu0 0
    %4340 = vmatpush1.bf16.msra.mxu0 0
    %4341 = vmatprep.subr.bf16.mxu0 0
    %4342 = vmatpush1.bf16.msra.mxu0 0
    %4343 = vmatprep.subr.bf16.mxu0 0
    %4344 = vmatpush1.bf16.msra.mxu0 0
    %4345 = vmatprep.mubr.bf16.mxu0 0
    %4346 = vmatmul.mubr.bf16.gmra.mrb[0].mxu0 %v4046
    %v4347 = vpop.f32.mrb[0].mxu0
    %v4348 = vadd.f32 0.0, %v4347
    %v4349 = vpop.f32.mrb[0].mxu0
    %v4350 = vadd.f32 0.0, %v4349
    %v4351 = vpop.f32.mrb[0].mxu0
    %v4352 = vpop.f32.mrb[0].mxu0
    %4353 = vdwg.mxu0
    %4354 = vmatprep.subr.bf16.mxu0 0
    %4355 = vmatpush1.bf16.msra.mxu0 %v550
    %4356 = vmatprep.subr.bf16.mxu0 0
    %4357 = vmatpush1.bf16.msra.mxu0 %v553
    %4358 = vmatprep.subr.bf16.mxu0 0
    %4359 = vmatpush1.bf16.msra.mxu0 %v556
    %4360 = vmatprep.subr.bf16.mxu0 0
    %4361 = vmatpush1.bf16.msra.mxu0 %v559
    %4362 = vmatprep.subr.bf16.mxu0 0
    %4363 = vmatpush1.bf16.msra.mxu0 0
    %4364 = vmatprep.subr.bf16.mxu0 0
    %4365 = vmatpush1.bf16.msra.mxu0 0
    %4366 = vmatprep.subr.bf16.mxu0 0
    %4367 = vmatpush1.bf16.msra.mxu0 0
    %4368 = vmatprep.subr.bf16.mxu0 0
    %4369 = vmatpush1.bf16.msra.mxu0 0
    %4370 = vmatprep.subr.bf16.mxu0 0
    %4371 = vmatpush1.bf16.msra.mxu0 0
    %4372 = vmatprep.subr.bf16.mxu0 0
    %4373 = vmatpush1.bf16.msra.mxu0 0
    %4374 = vmatprep.subr.bf16.mxu0 0
    %4375 = vmatpush1.bf16.msra.mxu0 0
    %4376 = vmatprep.subr.bf16.mxu0 0
    %4377 = vmatpush1.bf16.msra.mxu0 0
    %4378 = vmatprep.subr.bf16.mxu0 0
    %4379 = vmatpush1.bf16.msra.mxu0 0
    %4380 = vmatprep.subr.bf16.mxu0 0
    %4381 = vmatpush1.bf16.msra.mxu0 0
    %4382 = vmatprep.subr.bf16.mxu0 0
    %4383 = vmatpush1.bf16.msra.mxu0 0
    %4384 = vmatprep.subr.bf16.mxu0 0
    %4385 = vmatpush1.bf16.msra.mxu0 0
    %4386 = vmatprep.mubr.bf16.mxu0 0
    %4387 = vmatmul.mubr.bf16.gmra.mrb[0].mxu0 %v4046
    %v4388 = vpop.f32.mrb[0].mxu0
    %v4389 = vadd.f32 0.0, %v4388
    %v4390 = vpop.f32.mrb[0].mxu0
    %v4391 = vpop.f32.mrb[0].mxu0
    %v4392 = vpop.f32.mrb[0].mxu0
    %4393 = vdwg.mxu0
    %v4394 = vpack.c.bf16 %v4150, %v4150
    %v4396 = vsel %vm239, %v4394, 0
    %4398 = vmatprep.subr.bf16.mxu0 %v715
    %4399 = vmatpush1.bf16.msra.mxu0 %v714
    %4400 = vmatprep.subr.bf16.mxu0 %v718
    %4401 = vmatpush1.bf16.msra.mxu0 %v717
    %4402 = vmatprep.subr.bf16.mxu0 %v721
    %4403 = vmatpush1.bf16.msra.mxu0 %v720
    %4404 = vmatprep.subr.bf16.mxu0 %v724
    %4405 = vmatpush1.bf16.msra.mxu0 %v723
    %4406 = vmatprep.subr.bf16.mxu0 0
    %4407 = vmatpush1.bf16.msra.mxu0 0
    %4408 = vmatprep.subr.bf16.mxu0 0
    %4409 = vmatpush1.bf16.msra.mxu0 0
    %4410 = vmatprep.subr.bf16.mxu0 0
    %4411 = vmatpush1.bf16.msra.mxu0 0
    %4412 = vmatprep.subr.bf16.mxu0 0
    %4413 = vmatpush1.bf16.msra.mxu0 0
    %4414 = vmatprep.subr.bf16.mxu0 0
    %4415 = vmatpush1.bf16.msra.mxu0 0
    %4416 = vmatprep.subr.bf16.mxu0 0
    %4417 = vmatpush1.bf16.msra.mxu0 0
    %4418 = vmatprep.subr.bf16.mxu0 0
    %4419 = vmatpush1.bf16.msra.mxu0 0
    %4420 = vmatprep.subr.bf16.mxu0 0
    %4421 = vmatpush1.bf16.msra.mxu0 0
    %4422 = vmatprep.subr.bf16.mxu0 0
    %4423 = vmatpush1.bf16.msra.mxu0 0
    %4424 = vmatprep.subr.bf16.mxu0 0
    %4425 = vmatpush1.bf16.msra.mxu0 0
    %4426 = vmatprep.subr.bf16.mxu0 0
    %4427 = vmatpush1.bf16.msra.mxu0 0
    %4428 = vmatprep.subr.bf16.mxu0 0
    %4429 = vmatpush1.bf16.msra.mxu0 0
    %4430 = vmatprep.mubr.bf16.mxu0 0
    %4431 = vmatmul.mubr.bf16.gmra.mrb[0].mxu0 %v4396
    %v4432 = vpop.f32.mrb[0].mxu0
    %v4433 = vadd.f32 0.0, %v4432
    %v4434 = vpop.f32.mrb[0].mxu0
    %v4435 = vadd.f32 0.0, %v4434
    %v4436 = vpop.f32.mrb[0].mxu0
    %v4437 = vpop.f32.mrb[0].mxu0
    %4438 = vdwg.mxu0
    %4439 = vmatprep.subr.bf16.mxu0 0
    %4440 = vmatpush1.bf16.msra.mxu0 %v716
    %4441 = vmatprep.subr.bf16.mxu0 0
    %4442 = vmatpush1.bf16.msra.mxu0 %v719
    %4443 = vmatprep.subr.bf16.mxu0 0
    %4444 = vmatpush1.bf16.msra.mxu0 %v722
    %4445 = vmatprep.subr.bf16.mxu0 0
    %4446 = vmatpush1.bf16.msra.mxu0 %v725
    %4447 = vmatprep.subr.bf16.mxu0 0
    %4448 = vmatpush1.bf16.msra.mxu0 0
    %4449 = vmatprep.subr.bf16.mxu0 0
    %4450 = vmatpush1.bf16.msra.mxu0 0
    %4451 = vmatprep.subr.bf16.mxu0 0
    %4452 = vmatpush1.bf16.msra.mxu0 0
    %4453 = vmatprep.subr.bf16.mxu0 0
    %4454 = vmatpush1.bf16.msra.mxu0 0
    %4455 = vmatprep.subr.bf16.mxu0 0
    %4456 = vmatpush1.bf16.msra.mxu0 0
    %4457 = vmatprep.subr.bf16.mxu0 0
    %4458 = vmatpush1.bf16.msra.mxu0 0
    %4459 = vmatprep.subr.bf16.mxu0 0
    %4460 = vmatpush1.bf16.msra.mxu0 0
    %4461 = vmatprep.subr.bf16.mxu0 0
    %4462 = vmatpush1.bf16.msra.mxu0 0
    %4463 = vmatprep.subr.bf16.mxu0 0
    %4464 = vmatpush1.bf16.msra.mxu0 0
    %4465 = vmatprep.subr.bf16.mxu0 0
    %4466 = vmatpush1.bf16.msra.mxu0 0
    %4467 = vmatprep.subr.bf16.mxu0 0
    %4468 = vmatpush1.bf16.msra.mxu0 0
    %4469 = vmatprep.subr.bf16.mxu0 0
    %4470 = vmatpush1.bf16.msra.mxu0 0
    %4471 = vmatprep.mubr.bf16.mxu0 0
    %4472 = vmatmul.mubr.bf16.gmra.mrb[0].mxu0 %v4396
    %v4473 = vpop.f32.mrb[0].mxu0
    %v4474 = vadd.f32 0.0, %v4473
    %v4475 = vpop.f32.mrb[0].mxu0
    %v4476 = vpop.f32.mrb[0].mxu0
    %v4477 = vpop.f32.mrb[0].mxu0
    %4478 = vdwg.mxu0
    %v4479 = vld [vmem:[%s0 + $0x18] sm:$0xc]
    %v4480 = vld [vmem:[%s0 + $0x20] sm:$0xc]
    %v4481 = vld [vmem:[%s0 + $0x28] sm:$0xc]
    %v4483 = vrot.slane %v4186, 6
    %v4485 = vadd.f32 %v4479, %v4483
    %v4486 = vxor.u32 %v4485, 2147483648
    %v4487 = vmul.f32 %v4486, 1.442695
    %v4488 = vpow.pop %v4487
    %v4489 = vadd.f32 %v4488, 1.0
    %v4490 = vrcp.pop %v4489
    %v4491 = vmul.f32 1.0, %v4490
    %v4493 = vrot.slane %v4188, 6
    %v4495 = vadd.f32 %v4480, %v4493
    %v4496 = vxor.u32 %v4495, 2147483648
    %v4497 = vmul.f32 %v4496, 1.442695
    %v4498 = vpow.pop %v4497
    %v4499 = vadd.f32 %v4498, 1.0
    %v4500 = vrcp.pop %v4499
    %v4501 = vmul.f32 1.0, %v4500
    %v4502 = vadd.f32 %v4227, %v125
    %v4504 = vrot.slane %v4502, 6
    %v4506 = vmul.f32 %v4491, %v4504
    %v4507 = vadd.f32 %v4481, %v4506
    %v4508 = vtanh.pop %v4507
    %v4509 = vsub.f32 1.0, %v4501
    %v4510 = vmul.f32 %v4509, %v4508
    %v4512 = vrot.slane %v3829, 6
    %v4514 = vmul.f32 %v4501, %v4512
    %v4515 = vadd.f32 %v4510, %v4514
    %v4516 = vpack.c.bf16 %v4515, %v4515
    %v4518 = vrot.slane %v4516, 1
    %v4520 = vsel %vm239, %v4518, 0
    %4522 = vmatprep.subr.bf16.mxu0 %v905
    %4523 = vmatpush1.bf16.msra.mxu0 %v904
    %4524 = vmatprep.subr.bf16.mxu0 %v908
    %4525 = vmatpush1.bf16.msra.mxu0 %v907
    %4526 = vmatprep.subr.bf16.mxu0 %v911
    %4527 = vmatpush1.bf16.msra.mxu0 %v910
    %4528 = vmatprep.subr.bf16.mxu0 %v914
    %4529 = vmatpush1.bf16.msra.mxu0 %v913
    %4530 = vmatprep.subr.bf16.mxu0 0
    %4531 = vmatpush1.bf16.msra.mxu0 0
    %4532 = vmatprep.subr.bf16.mxu0 0
    %4533 = vmatpush1.bf16.msra.mxu0 0
    %4534 = vmatprep.subr.bf16.mxu0 0
    %4535 = vmatpush1.bf16.msra.mxu0 0
    %4536 = vmatprep.subr.bf16.mxu0 0
    %4537 = vmatpush1.bf16.msra.mxu0 0
    %4538 = vmatprep.subr.bf16.mxu0 0
    %4539 = vmatpush1.bf16.msra.mxu0 0
    %4540 = vmatprep.subr.bf16.mxu0 0
    %4541 = vmatpush1.bf16.msra.mxu0 0
    %4542 = vmatprep.subr.bf16.mxu0 0
    %4543 = vmatpush1.bf16.msra.mxu0 0
    %4544 = vmatprep.subr.bf16.mxu0 0
    %4545 = vmatpush1.bf16.msra.mxu0 0
    %4546 = vmatprep.subr.bf16.mxu0 0
    %4547 = vmatpush1.bf16.msra.mxu0 0
    %4548 = vmatprep.subr.bf16.mxu0 0
    %4549 = vmatpush1.bf16.msra.mxu0 0
    %4550 = vmatprep.subr.bf16.mxu0 0
    %4551 = vmatpush1.bf16.msra.mxu0 0
    %4552 = vmatprep.subr.bf16.mxu0 0
    %4553 = vmatpush1.bf16.msra.mxu0 0
    %4554 = vmatprep.mubr.bf16.mxu0 0
    %4555 = vmatmul.mubr.bf16.gmra.mrb[0].mxu0 %v4520
    %v4556 = vpop.f32.mrb[0].mxu0
    %v4557 = vadd.f32 %v72, %v4556
    %v4558 = vpop.f32.mrb[0].mxu0
    %v4559 = vadd.f32 %v76, %v4558
    %v4560 = vpop.f32.mrb[0].mxu0
    %v4561 = vpop.f32.mrb[0].mxu0
    %4562 = vdwg.mxu0
    %4563 = vmatprep.subr.bf16.mxu0 0
    %4564 = vmatpush1.bf16.msra.mxu0 %v906
    %4565 = vmatprep.subr.bf16.mxu0 0
    %4566 = vmatpush1.bf16.msra.mxu0 %v909
    %4567 = vmatprep.subr.bf16.mxu0 0
    %4568 = vmatpush1.bf16.msra.mxu0 %v912
    %4569 = vmatprep.subr.bf16.mxu0 0
    %4570 = vmatpush1.bf16.msra.mxu0 %v915
    %4571 = vmatprep.subr.bf16.mxu0 0
    %4572 = vmatpush1.bf16.msra.mxu0 0
    %4573 = vmatprep.subr.bf16.mxu0 0
    %4574 = vmatpush1.bf16.msra.mxu0 0
    %4575 = vmatprep.subr.bf16.mxu0 0
    %4576 = vmatpush1.bf16.msra.mxu0 0
    %4577 = vmatprep.subr.bf16.mxu0 0
    %4578 = vmatpush1.bf16.msra.mxu0 0
    %4579 = vmatprep.subr.bf16.mxu0 0
    %4580 = vmatpush1.bf16.msra.mxu0 0
    %4581 = vmatprep.subr.bf16.mxu0 0
    %4582 = vmatpush1.bf16.msra.mxu0 0
    %4583 = vmatprep.subr.bf16.mxu0 0
    %4584 = vmatpush1.bf16.msra.mxu0 0
    %4585 = vmatprep.subr.bf16.mxu0 0
    %4586 = vmatpush1.bf16.msra.mxu0 0
    %4587 = vmatprep.subr.bf16.mxu0 0
    %4588 = vmatpush1.bf16.msra.mxu0 0
    %4589 = vmatprep.subr.bf16.mxu0 0
    %4590 = vmatpush1.bf16.msra.mxu0 0
    %4591 = vmatprep.subr.bf16.mxu0 0
    %4592 = vmatpush1.bf16.msra.mxu0 0
    %4593 = vmatprep.subr.bf16.mxu0 0
    %4594 = vmatpush1.bf16.msra.mxu0 0
    %4595 = vmatprep.mubr.bf16.mxu0 0
    %4596 = vmatmul.mubr.bf16.gmra.mrb[0].mxu0 %v4520
    %v4597 = vpop.f32.mrb[0].mxu0
    %v4598 = vadd.f32 %v80, %v4597
    %v4599 = vpop.f32.mrb[0].mxu0
    %v4600 = vpop.f32.mrb[0].mxu0
    %v4601 = vpop.f32.mrb[0].mxu0
    %4602 = vdwg.mxu0
    %v4603 = vadd.f32 %v4557, %v4267
    %v4604 = vxor.u32 %v4603, 2147483648
    %v4605 = vmul.f32 %v4604, 1.442695
    %v4606 = vpow.pop %v4605
    %v4607 = vadd.f32 %v4606, 1.0
    %v4608 = vrcp.pop %v4607
    %v4609 = vmul.f32 1.0, %v4608
    %v4610 = vadd.f32 %v4559, %v4269
    %v4611 = vxor.u32 %v4610, 2147483648
    %v4612 = vmul.f32 %v4611, 1.442695
    %v4613 = vpow.pop %v4612
    %v4614 = vadd.f32 %v4613, 1.0
    %v4615 = vrcp.pop %v4614
    %v4616 = vmul.f32 1.0, %v4615
    %v4617 = vadd.f32 %v4308, %v133
    %v4618 = vmul.f32 %v4609, %v4617
    %v4619 = vadd.f32 %v4598, %v4618
    %v4620 = vtanh.pop %v4619
    %v4621 = vsub.f32 1.0, %v4616
    %v4622 = vmul.f32 %v4621, %v4620
    %v4623 = vmul.f32 %v4616, %v3936
    %v4624 = vadd.f32 %v4622, %v4623
    %v4625 = vpack.c.bf16 %v4624, %v4624
    %v4627 = vsel %vm239, %v4625, 0
    %4629 = vmatprep.subr.bf16.mxu0 %v1093
    %4630 = vmatpush1.bf16.msra.mxu0 %v1092
    %4631 = vmatprep.subr.bf16.mxu0 %v1096
    %4632 = vmatpush1.bf16.msra.mxu0 %v1095
    %4633 = vmatprep.subr.bf16.mxu0 %v1099
    %4634 = vmatpush1.bf16.msra.mxu0 %v1098
    %4635 = vmatprep.subr.bf16.mxu0 %v1102
    %4636 = vmatpush1.bf16.msra.mxu0 %v1101
    %4637 = vmatprep.subr.bf16.mxu0 0
    %4638 = vmatpush1.bf16.msra.mxu0 0
    %4639 = vmatprep.subr.bf16.mxu0 0
    %4640 = vmatpush1.bf16.msra.mxu0 0
    %4641 = vmatprep.subr.bf16.mxu0 0
    %4642 = vmatpush1.bf16.msra.mxu0 0
    %4643 = vmatprep.subr.bf16.mxu0 0
    %4644 = vmatpush1.bf16.msra.mxu0 0
    %4645 = vmatprep.subr.bf16.mxu0 0
    %4646 = vmatpush1.bf16.msra.mxu0 0
    %4647 = vmatprep.subr.bf16.mxu0 0
    %4648 = vmatpush1.bf16.msra.mxu0 0
    %4649 = vmatprep.subr.bf16.mxu0 0
    %4650 = vmatpush1.bf16.msra.mxu0 0
    %4651 = vmatprep.subr.bf16.mxu0 0
    %4652 = vmatpush1.bf16.msra.mxu0 0
    %4653 = vmatprep.subr.bf16.mxu0 0
    %4654 = vmatpush1.bf16.msra.mxu0 0
    %4655 = vmatprep.subr.bf16.mxu0 0
    %4656 = vmatpush1.bf16.msra.mxu0 0
    %4657 = vmatprep.subr.bf16.mxu0 0
    %4658 = vmatpush1.bf16.msra.mxu0 0
    %4659 = vmatprep.subr.bf16.mxu0 0
    %4660 = vmatpush1.bf16.msra.mxu0 0
    %4661 = vmatprep.mubr.bf16.mxu0 0
    %4662 = vmatmul.mubr.bf16.gmra.mrb[0].mxu0 %v4627
    %v4663 = vpop.f32.mrb[0].mxu0
    %v4664 = vadd.f32 %v90, %v4663
    %v4665 = vpop.f32.mrb[0].mxu0
    %v4666 = vadd.f32 %v94, %v4665
    %v4667 = vpop.f32.mrb[0].mxu0
    %v4668 = vpop.f32.mrb[0].mxu0
    %4669 = vdwg.mxu0
    %4670 = vmatprep.subr.bf16.mxu0 0
    %4671 = vmatpush1.bf16.msra.mxu0 %v1094
    %4672 = vmatprep.subr.bf16.mxu0 0
    %4673 = vmatpush1.bf16.msra.mxu0 %v1097
    %4674 = vmatprep.subr.bf16.mxu0 0
    %4675 = vmatpush1.bf16.msra.mxu0 %v1100
    %4676 = vmatprep.subr.bf16.mxu0 0
    %4677 = vmatpush1.bf16.msra.mxu0 %v1103
    %4678 = vmatprep.subr.bf16.mxu0 0
    %4679 = vmatpush1.bf16.msra.mxu0 0
    %4680 = vmatprep.subr.bf16.mxu0 0
    %4681 = vmatpush1.bf16.msra.mxu0 0
    %4682 = vmatprep.subr.bf16.mxu0 0
    %4683 = vmatpush1.bf16.msra.mxu0 0
    %4684 = vmatprep.subr.bf16.mxu0 0
    %4685 = vmatpush1.bf16.msra.mxu0 0
    %4686 = vmatprep.subr.bf16.mxu0 0
    %4687 = vmatpush1.bf16.msra.mxu0 0
    %4688 = vmatprep.subr.bf16.mxu0 0
    %4689 = vmatpush1.bf16.msra.mxu0 0
    %4690 = vmatprep.subr.bf16.mxu0 0
    %4691 = vmatpush1.bf16.msra.mxu0 0
    %4692 = vmatprep.subr.bf16.mxu0 0
    %4693 = vmatpush1.bf16.msra.mxu0 0
    %4694 = vmatprep.subr.bf16.mxu0 0
    %4695 = vmatpush1.bf16.msra.mxu0 0
    %4696 = vmatprep.subr.bf16.mxu0 0
    %4697 = vmatpush1.bf16.msra.mxu0 0
    %4698 = vmatprep.subr.bf16.mxu0 0
    %4699 = vmatpush1.bf16.msra.mxu0 0
    %4700 = vmatprep.subr.bf16.mxu0 0
    %4701 = vmatpush1.bf16.msra.mxu0 0
    %4702 = vmatprep.mubr.bf16.mxu0 0
    %4703 = vmatmul.mubr.bf16.gmra.mrb[0].mxu0 %v4627
    %v4704 = vpop.f32.mrb[0].mxu0
    %v4705 = vadd.f32 %v98, %v4704
    %v4706 = vpop.f32.mrb[0].mxu0
    %v4707 = vpop.f32.mrb[0].mxu0
    %v4708 = vpop.f32.mrb[0].mxu0
    %4709 = vdwg.mxu0
    %v4710 = vadd.f32 %v4664, %v4348
    %v4711 = vxor.u32 %v4710, 2147483648
    %v4712 = vmul.f32 %v4711, 1.442695
    %v4713 = vpow.pop %v4712
    %v4714 = vadd.f32 %v4713, 1.0
    %v4715 = vrcp.pop %v4714
    %v4716 = vmul.f32 1.0, %v4715
    %v4717 = vadd.f32 %v4666, %v4350
    %v4718 = vxor.u32 %v4717, 2147483648
    %v4719 = vmul.f32 %v4718, 1.442695
    %v4720 = vpow.pop %v4719
    %v4721 = vadd.f32 %v4720, 1.0
    %v4722 = vrcp.pop %v4721
    %v4723 = vmul.f32 1.0, %v4722
    %v4724 = vadd.f32 %v4389, %v141
    %v4725 = vmul.f32 %v4716, %v4724
    %v4726 = vadd.f32 %v4705, %v4725
    %v4727 = vtanh.pop %v4726
    %v4728 = vsub.f32 1.0, %v4723
    %v4729 = vmul.f32 %v4728, %v4727
    %v4730 = vmul.f32 %v4723, %v4043
    %v4731 = vadd.f32 %v4729, %v4730
    %v4732 = vpack.c.bf16 %v4731, %v4731
    %v4734 = vsel %vm239, %v4732, 0
    %4736 = vmatprep.subr.bf16.mxu0 %v1281
    %4737 = vmatpush1.bf16.msra.mxu0 %v1280
    %4738 = vmatprep.subr.bf16.mxu0 %v1284
    %4739 = vmatpush1.bf16.msra.mxu0 %v1283
    %4740 = vmatprep.subr.bf16.mxu0 %v1287
    %4741 = vmatpush1.bf16.msra.mxu0 %v1286
    %4742 = vmatprep.subr.bf16.mxu0 %v1290
    %4743 = vmatpush1.bf16.msra.mxu0 %v1289
    %4744 = vmatprep.subr.bf16.mxu0 0
    %4745 = vmatpush1.bf16.msra.mxu0 0
    %4746 = vmatprep.subr.bf16.mxu0 0
    %4747 = vmatpush1.bf16.msra.mxu0 0
    %4748 = vmatprep.subr.bf16.mxu0 0
    %4749 = vmatpush1.bf16.msra.mxu0 0
    %4750 = vmatprep.subr.bf16.mxu0 0
    %4751 = vmatpush1.bf16.msra.mxu0 0
    %4752 = vmatprep.subr.bf16.mxu0 0
    %4753 = vmatpush1.bf16.msra.mxu0 0
    %4754 = vmatprep.subr.bf16.mxu0 0
    %4755 = vmatpush1.bf16.msra.mxu0 0
    %4756 = vmatprep.subr.bf16.mxu0 0
    %4757 = vmatpush1.bf16.msra.mxu0 0
    %4758 = vmatprep.subr.bf16.mxu0 0
    %4759 = vmatpush1.bf16.msra.mxu0 0
    %4760 = vmatprep.subr.bf16.mxu0 0
    %4761 = vmatpush1.bf16.msra.mxu0 0
    %4762 = vmatprep.subr.bf16.mxu0 0
    %4763 = vmatpush1.bf16.msra.mxu0 0
    %4764 = vmatprep.subr.bf16.mxu0 0
    %4765 = vmatpush1.bf16.msra.mxu0 0
    %4766 = vmatprep.subr.bf16.mxu0 0
    %4767 = vmatpush1.bf16.msra.mxu0 0
    %4768 = vmatprep.mubr.bf16.mxu0 0
    %4769 = vmatmul.mubr.bf16.gmra.mrb[0].mxu0 %v4734
    %v4770 = vpop.f32.mrb[0].mxu0
    %v4771 = vadd.f32 %v108, %v4770
    %v4772 = vpop.f32.mrb[0].mxu0
    %v4773 = vadd.f32 %v112, %v4772
    %v4774 = vpop.f32.mrb[0].mxu0
    %v4775 = vpop.f32.mrb[0].mxu0
    %4776 = vdwg.mxu0
    %4777 = vmatprep.subr.bf16.mxu0 0
    %4778 = vmatpush1.bf16.msra.mxu0 %v1282
    %4779 = vmatprep.subr.bf16.mxu0 0
    %4780 = vmatpush1.bf16.msra.mxu0 %v1285
    %4781 = vmatprep.subr.bf16.mxu0 0
    %4782 = vmatpush1.bf16.msra.mxu0 %v1288
    %4783 = vmatprep.subr.bf16.mxu0 0
    %4784 = vmatpush1.bf16.msra.mxu0 %v1291
    %4785 = vmatprep.subr.bf16.mxu0 0
    %4786 = vmatpush1.bf16.msra.mxu0 0
    %4787 = vmatprep.subr.bf16.mxu0 0
    %4788 = vmatpush1.bf16.msra.mxu0 0
    %4789 = vmatprep.subr.bf16.mxu0 0
    %4790 = vmatpush1.bf16.msra.mxu0 0
    %4791 = vmatprep.subr.bf16.mxu0 0
    %4792 = vmatpush1.bf16.msra.mxu0 0
    %4793 = vmatprep.subr.bf16.mxu0 0
    %4794 = vmatpush1.bf16.msra.mxu0 0
    %4795 = vmatprep.subr.bf16.mxu0 0
    %4796 = vmatpush1.bf16.msra.mxu0 0
    %4797 = vmatprep.subr.bf16.mxu0 0
    %4798 = vmatpush1.bf16.msra.mxu0 0
    %4799 = vmatprep.subr.bf16.mxu0 0
    %4800 = vmatpush1.bf16.msra.mxu0 0
    %4801 = vmatprep.subr.bf16.mxu0 0
    %4802 = vmatpush1.bf16.msra.mxu0 0
    %4803 = vmatprep.subr.bf16.mxu0 0
    %4804 = vmatpush1.bf16.msra.mxu0 0
    %4805 = vmatprep.subr.bf16.mxu0 0
    %4806 = vmatpush1.bf16.msra.mxu0 0
    %4807 = vmatprep.subr.bf16.mxu0 0
    %4808 = vmatpush1.bf16.msra.mxu0 0
    %4809 = vmatprep.mubr.bf16.mxu0 0
    %4810 = vmatmul.mubr.bf16.gmra.mrb[0].mxu0 %v4734
    %v4811 = vpop.f32.mrb[0].mxu0
    %v4812 = vadd.f32 %v116, %v4811
    %v4813 = vpop.f32.mrb[0].mxu0
    %v4814 = vpop.f32.mrb[0].mxu0
    %v4815 = vpop.f32.mrb[0].mxu0
    %4816 = vdwg.mxu0
    %v4817 = vadd.f32 %v4771, %v4433
    %v4818 = vxor.u32 %v4817, 2147483648
    %v4819 = vmul.f32 %v4818, 1.442695
    %v4820 = vpow.pop %v4819
    %v4821 = vadd.f32 %v4820, 1.0
    %v4822 = vrcp.pop %v4821
    %v4823 = vmul.f32 1.0, %v4822
    %v4824 = vadd.f32 %v4773, %v4435
    %v4825 = vxor.u32 %v4824, 2147483648
    %v4826 = vmul.f32 %v4825, 1.442695
    %v4827 = vpow.pop %v4826
    %v4828 = vadd.f32 %v4827, 1.0
    %v4829 = vrcp.pop %v4828
    %v4830 = vmul.f32 1.0, %v4829
    %v4831 = vadd.f32 %v4474, %v149
    %v4832 = vmul.f32 %v4823, %v4831
    %v4833 = vadd.f32 %v4812, %v4832
    %v4834 = vtanh.pop %v4833
    %v4835 = vsub.f32 1.0, %v4830
    %v4836 = vmul.f32 %v4835, %v4834
    %v4837 = vmul.f32 %v4830, %v4150
    %v4838 = vadd.f32 %v4836, %v4837
    %4839 = vmatprep.subr.bf16.mxu0 %v216
    %4840 = vmatpush1.bf16.msra.mxu0 %v215
    %4841 = vmatprep.subr.bf16.mxu0 %v219
    %4842 = vmatpush1.bf16.msra.mxu0 %v218
    %4843 = vmatprep.subr.bf16.mxu0 %v222
    %4844 = vmatpush1.bf16.msra.mxu0 %v221
    %4845 = vmatprep.subr.bf16.mxu0 %v225
    %4846 = vmatpush1.bf16.msra.mxu0 %v224
    %4847 = vmatprep.subr.bf16.mxu0 0
    %4848 = vmatpush1.bf16.msra.mxu0 0
    %4849 = vmatprep.subr.bf16.mxu0 0
    %4850 = vmatpush1.bf16.msra.mxu0 0
    %4851 = vmatprep.subr.bf16.mxu0 0
    %4852 = vmatpush1.bf16.msra.mxu0 0
    %4853 = vmatprep.subr.bf16.mxu0 0
    %4854 = vmatpush1.bf16.msra.mxu0 0
    %4855 = vmatprep.subr.bf16.mxu0 0
    %4856 = vmatpush1.bf16.msra.mxu0 0
    %4857 = vmatprep.subr.bf16.mxu0 0
    %4858 = vmatpush1.bf16.msra.mxu0 0
    %4859 = vmatprep.subr.bf16.mxu0 0
    %4860 = vmatpush1.bf16.msra.mxu0 0
    %4861 = vmatprep.subr.bf16.mxu0 0
    %4862 = vmatpush1.bf16.msra.mxu0 0
    %4863 = vmatprep.subr.bf16.mxu0 0
    %4864 = vmatpush1.bf16.msra.mxu0 0
    %4865 = vmatprep.subr.bf16.mxu0 0
    %4866 = vmatpush1.bf16.msra.mxu0 0
    %4867 = vmatprep.subr.bf16.mxu0 0
    %4868 = vmatpush1.bf16.msra.mxu0 0
    %4869 = vmatprep.subr.bf16.mxu0 0
    %4870 = vmatpush1.bf16.msra.mxu0 0
    %4871 = vmatprep.mubr.bf16.mxu0 0
    %4872 = vmatmul.mubr.bf16.gmra.mrb[0].mxu0 %v4520
    %v4873 = vpop.f32.mrb[0].mxu0
    %v4874 = vadd.f32 0.0, %v4873
    %v4875 = vpop.f32.mrb[0].mxu0
    %v4876 = vadd.f32 0.0, %v4875
    %v4877 = vpop.f32.mrb[0].mxu0
    %v4878 = vpop.f32.mrb[0].mxu0
    %4879 = vdwg.mxu0
    %4880 = vmatprep.subr.bf16.mxu0 0
    %4881 = vmatpush1.bf16.msra.mxu0 %v217
    %4882 = vmatprep.subr.bf16.mxu0 0
    %4883 = vmatpush1.bf16.msra.mxu0 %v220
    %4884 = vmatprep.subr.bf16.mxu0 0
    %4885 = vmatpush1.bf16.msra.mxu0 %v223
    %4886 = vmatprep.subr.bf16.mxu0 0
    %4887 = vmatpush1.bf16.msra.mxu0 %v226
    %4888 = vmatprep.subr.bf16.mxu0 0
    %4889 = vmatpush1.bf16.msra.mxu0 0
    %4890 = vmatprep.subr.bf16.mxu0 0
    %4891 = vmatpush1.bf16.msra.mxu0 0
    %4892 = vmatprep.subr.bf16.mxu0 0
    %4893 = vmatpush1.bf16.msra.mxu0 0
    %4894 = vmatprep.subr.bf16.mxu0 0
    %4895 = vmatpush1.bf16.msra.mxu0 0
    %4896 = vmatprep.subr.bf16.mxu0 0
    %4897 = vmatpush1.bf16.msra.mxu0 0
    %4898 = vmatprep.subr.bf16.mxu0 0
    %4899 = vmatpush1.bf16.msra.mxu0 0
    %4900 = vmatprep.subr.bf16.mxu0 0
    %4901 = vmatpush1.bf16.msra.mxu0 0
    %4902 = vmatprep.subr.bf16.mxu0 0
    %4903 = vmatpush1.bf16.msra.mxu0 0
    %4904 = vmatprep.subr.bf16.mxu0 0
    %4905 = vmatpush1.bf16.msra.mxu0 0
    %4906 = vmatprep.subr.bf16.mxu0 0
    %4907 = vmatpush1.bf16.msra.mxu0 0
    %4908 = vmatprep.subr.bf16.mxu0 0
    %4909 = vmatpush1.bf16.msra.mxu0 0
    %4910 = vmatprep.subr.bf16.mxu0 0
    %4911 = vmatpush1.bf16.msra.mxu0 0
    %4912 = vmatprep.mubr.bf16.mxu0 0
    %4913 = vmatmul.mubr.bf16.gmra.mrb[0].mxu0 %v4520
    %v4914 = vpop.f32.mrb[0].mxu0
    %v4915 = vadd.f32 0.0, %v4914
    %v4916 = vpop.f32.mrb[0].mxu0
    %v4917 = vpop.f32.mrb[0].mxu0
    %v4918 = vpop.f32.mrb[0].mxu0
    %4919 = vdwg.mxu0
    %4920 = vmatprep.subr.bf16.mxu0 %v383
    %4921 = vmatpush1.bf16.msra.mxu0 %v382
    %4922 = vmatprep.subr.bf16.mxu0 %v386
    %4923 = vmatpush1.bf16.msra.mxu0 %v385
    %4924 = vmatprep.subr.bf16.mxu0 %v389
    %4925 = vmatpush1.bf16.msra.mxu0 %v388
    %4926 = vmatprep.subr.bf16.mxu0 %v392
    %4927 = vmatpush1.bf16.msra.mxu0 %v391
    %4928 = vmatprep.subr.bf16.mxu0 0
    %4929 = vmatpush1.bf16.msra.mxu0 0
    %4930 = vmatprep.subr.bf16.mxu0 0
    %4931 = vmatpush1.bf16.msra.mxu0 0
    %4932 = vmatprep.subr.bf16.mxu0 0
    %4933 = vmatpush1.bf16.msra.mxu0 0
    %4934 = vmatprep.subr.bf16.mxu0 0
    %4935 = vmatpush1.bf16.msra.mxu0 0
    %4936 = vmatprep.subr.bf16.mxu0 0
    %4937 = vmatpush1.bf16.msra.mxu0 0
    %4938 = vmatprep.subr.bf16.mxu0 0
    %4939 = vmatpush1.bf16.msra.mxu0 0
    %4940 = vmatprep.subr.bf16.mxu0 0
    %4941 = vmatpush1.bf16.msra.mxu0 0
    %4942 = vmatprep.subr.bf16.mxu0 0
    %4943 = vmatpush1.bf16.msra.mxu0 0
    %4944 = vmatprep.subr.bf16.mxu0 0
    %4945 = vmatpush1.bf16.msra.mxu0 0
    %4946 = vmatprep.subr.bf16.mxu0 0
    %4947 = vmatpush1.bf16.msra.mxu0 0
    %4948 = vmatprep.subr.bf16.mxu0 0
    %4949 = vmatpush1.bf16.msra.mxu0 0
    %4950 = vmatprep.subr.bf16.mxu0 0
    %4951 = vmatpush1.bf16.msra.mxu0 0
    %4952 = vmatprep.mubr.bf16.mxu0 0
    %4953 = vmatmul.mubr.bf16.gmra.mrb[0].mxu0 %v4627
    %v4954 = vpop.f32.mrb[0].mxu0
    %v4955 = vadd.f32 0.0, %v4954
    %v4956 = vpop.f32.mrb[0].mxu0
    %v4957 = vadd.f32 0.0, %v4956
    %v4958 = vpop.f32.mrb[0].mxu0
    %v4959 = vpop.f32.mrb[0].mxu0
    %4960 = vdwg.mxu0
    %4961 = vmatprep.subr.bf16.mxu0 0
    %4962 = vmatpush1.bf16.msra.mxu0 %v384
    %4963 = vmatprep.subr.bf16.mxu0 0
    %4964 = vmatpush1.bf16.msra.mxu0 %v387
    %4965 = vmatprep.subr.bf16.mxu0 0
    %4966 = vmatpush1.bf16.msra.mxu0 %v390
    %4967 = vmatprep.subr.bf16.mxu0 0
    %4968 = vmatpush1.bf16.msra.mxu0 %v393
    %4969 = vmatprep.subr.bf16.mxu0 0
    %4970 = vmatpush1.bf16.msra.mxu0 0
    %4971 = vmatprep.subr.bf16.mxu0 0
    %4972 = vmatpush1.bf16.msra.mxu0 0
    %4973 = vmatprep.subr.bf16.mxu0 0
    %4974 = vmatpush1.bf16.msra.mxu0 0
    %4975 = vmatprep.subr.bf16.mxu0 0
    %4976 = vmatpush1.bf16.msra.mxu0 0
    %4977 = vmatprep.subr.bf16.mxu0 0
    %4978 = vmatpush1.bf16.msra.mxu0 0
    %4979 = vmatprep.subr.bf16.mxu0 0
    %4980 = vmatpush1.bf16.msra.mxu0 0
    %4981 = vmatprep.subr.bf16.mxu0 0
    %4982 = vmatpush1.bf16.msra.mxu0 0
    %4983 = vmatprep.subr.bf16.mxu0 0
    %4984 = vmatpush1.bf16.msra.mxu0 0
    %4985 = vmatprep.subr.bf16.mxu0 0
    %4986 = vmatpush1.bf16.msra.mxu0 0
    %4987 = vmatprep.subr.bf16.mxu0 0
    %4988 = vmatpush1.bf16.msra.mxu0 0
    %4989 = vmatprep.subr.bf16.mxu0 0
    %4990 = vmatpush1.bf16.msra.mxu0 0
    %4991 = vmatprep.subr.bf16.mxu0 0
    %4992 = vmatpush1.bf16.msra.mxu0 0
    %4993 = vmatprep.mubr.bf16.mxu0 0
    %4994 = vmatmul.mubr.bf16.gmra.mrb[0].mxu0 %v4627
    %v4995 = vpop.f32.mrb[0].mxu0
    %v4996 = vadd.f32 0.0, %v4995
    %v4997 = vpop.f32.mrb[0].mxu0
    %v4998 = vpop.f32.mrb[0].mxu0
    %v4999 = vpop.f32.mrb[0].mxu0
    %5000 = vdwg.mxu0
    %5001 = vmatprep.subr.bf16.mxu0 %v549
    %5002 = vmatpush1.bf16.msra.mxu0 %v548
    %5003 = vmatprep.subr.bf16.mxu0 %v552
    %5004 = vmatpush1.bf16.msra.mxu0 %v551
    %5005 = vmatprep.subr.bf16.mxu0 %v555
    %5006 = vmatpush1.bf16.msra.mxu0 %v554
    %5007 = vmatprep.subr.bf16.mxu0 %v558
    %5008 = vmatpush1.bf16.msra.mxu0 %v557
    %5009 = vmatprep.subr.bf16.mxu0 0
    %5010 = vmatpush1.bf16.msra.mxu0 0
    %5011 = vmatprep.subr.bf16.mxu0 0
    %5012 = vmatpush1.bf16.msra.mxu0 0
    %5013 = vmatprep.subr.bf16.mxu0 0
    %5014 = vmatpush1.bf16.msra.mxu0 0
    %5015 = vmatprep.subr.bf16.mxu0 0
    %5016 = vmatpush1.bf16.msra.mxu0 0
    %5017 = vmatprep.subr.bf16.mxu0 0
    %5018 = vmatpush1.bf16.msra.mxu0 0
    %5019 = vmatprep.subr.bf16.mxu0 0
    %5020 = vmatpush1.bf16.msra.mxu0 0
    %5021 = vmatprep.subr.bf16.mxu0 0
    %5022 = vmatpush1.bf16.msra.mxu0 0
    %5023 = vmatprep.subr.bf16.mxu0 0
    %5024 = vmatpush1.bf16.msra.mxu0 0
    %5025 = vmatprep.subr.bf16.mxu0 0
    %5026 = vmatpush1.bf16.msra.mxu0 0
    %5027 = vmatprep.subr.bf16.mxu0 0
    %5028 = vmatpush1.bf16.msra.mxu0 0
    %5029 = vmatprep.subr.bf16.mxu0 0
    %5030 = vmatpush1.bf16.msra.mxu0 0
    %5031 = vmatprep.subr.bf16.mxu0 0
    %5032 = vmatpush1.bf16.msra.mxu0 0
    %5033 = vmatprep.mubr.bf16.mxu0 0
    %5034 = vmatmul.mubr.bf16.gmra.mrb[0].mxu0 %v4734
    %v5035 = vpop.f32.mrb[0].mxu0
    %v5036 = vadd.f32 0.0, %v5035
    %v5037 = vpop.f32.mrb[0].mxu0
    %v5038 = vadd.f32 0.0, %v5037
    %v5039 = vpop.f32.mrb[0].mxu0
    %v5040 = vpop.f32.mrb[0].mxu0
    %5041 = vdwg.mxu0
    %5042 = vmatprep.subr.bf16.mxu0 0
    %5043 = vmatpush1.bf16.msra.mxu0 %v550
    %5044 = vmatprep.subr.bf16.mxu0 0
    %5045 = vmatpush1.bf16.msra.mxu0 %v553
    %5046 = vmatprep.subr.bf16.mxu0 0
    %5047 = vmatpush1.bf16.msra.mxu0 %v556
    %5048 = vmatprep.subr.bf16.mxu0 0
    %5049 = vmatpush1.bf16.msra.mxu0 %v559
    %5050 = vmatprep.subr.bf16.mxu0 0
    %5051 = vmatpush1.bf16.msra.mxu0 0
    %5052 = vmatprep.subr.bf16.mxu0 0
    %5053 = vmatpush1.bf16.msra.mxu0 0
    %5054 = vmatprep.subr.bf16.mxu0 0
    %5055 = vmatpush1.bf16.msra.mxu0 0
    %5056 = vmatprep.subr.bf16.mxu0 0
    %5057 = vmatpush1.bf16.msra.mxu0 0
    %5058 = vmatprep.subr.bf16.mxu0 0
    %5059 = vmatpush1.bf16.msra.mxu0 0
    %5060 = vmatprep.subr.bf16.mxu0 0
    %5061 = vmatpush1.bf16.msra.mxu0 0
    %5062 = vmatprep.subr.bf16.mxu0 0
    %5063 = vmatpush1.bf16.msra.mxu0 0
    %5064 = vmatprep.subr.bf16.mxu0 0
    %5065 = vmatpush1.bf16.msra.mxu0 0
    %5066 = vmatprep.subr.bf16.mxu0 0
    %5067 = vmatpush1.bf16.msra.mxu0 0
    %5068 = vmatprep.subr.bf16.mxu0 0
    %5069 = vmatpush1.bf16.msra.mxu0 0
    %5070 = vmatprep.subr.bf16.mxu0 0
    %5071 = vmatpush1.bf16.msra.mxu0 0
    %5072 = vmatprep.subr.bf16.mxu0 0
    %5073 = vmatpush1.bf16.msra.mxu0 0
    %5074 = vmatprep.mubr.bf16.mxu0 0
    %5075 = vmatmul.mubr.bf16.gmra.mrb[0].mxu0 %v4734
    %v5076 = vpop.f32.mrb[0].mxu0
    %v5077 = vadd.f32 0.0, %v5076
    %v5078 = vpop.f32.mrb[0].mxu0
    %v5079 = vpop.f32.mrb[0].mxu0
    %v5080 = vpop.f32.mrb[0].mxu0
    %5081 = vdwg.mxu0
    %v5082 = vpack.c.bf16 %v4838, %v4838
    %v5084 = vsel %vm239, %v5082, 0
    %5086 = vmatprep.subr.bf16.mxu0 %v715
    %5087 = vmatpush1.bf16.msra.mxu0 %v714
    %5088 = vmatprep.subr.bf16.mxu0 %v718
    %5089 = vmatpush1.bf16.msra.mxu0 %v717
    %5090 = vmatprep.subr.bf16.mxu0 %v721
    %5091 = vmatpush1.bf16.msra.mxu0 %v720
    %5092 = vmatprep.subr.bf16.mxu0 %v724
    %5093 = vmatpush1.bf16.msra.mxu0 %v723
    %5094 = vmatprep.subr.bf16.mxu0 0
    %5095 = vmatpush1.bf16.msra.mxu0 0
    %5096 = vmatprep.subr.bf16.mxu0 0
    %5097 = vmatpush1.bf16.msra.mxu0 0
    %5098 = vmatprep.subr.bf16.mxu0 0
    %5099 = vmatpush1.bf16.msra.mxu0 0
    %5100 = vmatprep.subr.bf16.mxu0 0
    %5101 = vmatpush1.bf16.msra.mxu0 0
    %5102 = vmatprep.subr.bf16.mxu0 0
    %5103 = vmatpush1.bf16.msra.mxu0 0
    %5104 = vmatprep.subr.bf16.mxu0 0
    %5105 = vmatpush1.bf16.msra.mxu0 0
    %5106 = vmatprep.subr.bf16.mxu0 0
    %5107 = vmatpush1.bf16.msra.mxu0 0
    %5108 = vmatprep.subr.bf16.mxu0 0
    %5109 = vmatpush1.bf16.msra.mxu0 0
    %5110 = vmatprep.subr.bf16.mxu0 0
    %5111 = vmatpush1.bf16.msra.mxu0 0
    %5112 = vmatprep.subr.bf16.mxu0 0
    %5113 = vmatpush1.bf16.msra.mxu0 0
    %5114 = vmatprep.subr.bf16.mxu0 0
    %5115 = vmatpush1.bf16.msra.mxu0 0
    %5116 = vmatprep.subr.bf16.mxu0 0
    %5117 = vmatpush1.bf16.msra.mxu0 0
    %5118 = vmatprep.mubr.bf16.mxu0 0
    %5119 = vmatmul.mubr.bf16.gmra.mrb[0].mxu0 %v5084
    %v5120 = vpop.f32.mrb[0].mxu0
    %v5121 = vadd.f32 0.0, %v5120
    %v5122 = vpop.f32.mrb[0].mxu0
    %v5123 = vadd.f32 0.0, %v5122
    %v5124 = vpop.f32.mrb[0].mxu0
    %v5125 = vpop.f32.mrb[0].mxu0
    %5126 = vdwg.mxu0
    %5127 = vmatprep.subr.bf16.mxu0 0
    %5128 = vmatpush1.bf16.msra.mxu0 %v716
    %5129 = vmatprep.subr.bf16.mxu0 0
    %5130 = vmatpush1.bf16.msra.mxu0 %v719
    %5131 = vmatprep.subr.bf16.mxu0 0
    %5132 = vmatpush1.bf16.msra.mxu0 %v722
    %5133 = vmatprep.subr.bf16.mxu0 0
    %5134 = vmatpush1.bf16.msra.mxu0 %v725
    %5135 = vmatprep.subr.bf16.mxu0 0
    %5136 = vmatpush1.bf16.msra.mxu0 0
    %5137 = vmatprep.subr.bf16.mxu0 0
    %5138 = vmatpush1.bf16.msra.mxu0 0
    %5139 = vmatprep.subr.bf16.mxu0 0
    %5140 = vmatpush1.bf16.msra.mxu0 0
    %5141 = vmatprep.subr.bf16.mxu0 0
    %5142 = vmatpush1.bf16.msra.mxu0 0
    %5143 = vmatprep.subr.bf16.mxu0 0
    %5144 = vmatpush1.bf16.msra.mxu0 0
    %5145 = vmatprep.subr.bf16.mxu0 0
    %5146 = vmatpush1.bf16.msra.mxu0 0
    %5147 = vmatprep.subr.bf16.mxu0 0
    %5148 = vmatpush1.bf16.msra.mxu0 0
    %5149 = vmatprep.subr.bf16.mxu0 0
    %5150 = vmatpush1.bf16.msra.mxu0 0
    %5151 = vmatprep.subr.bf16.mxu0 0
    %5152 = vmatpush1.bf16.msra.mxu0 0
    %5153 = vmatprep.subr.bf16.mxu0 0
    %5154 = vmatpush1.bf16.msra.mxu0 0
    %5155 = vmatprep.subr.bf16.mxu0 0
    %5156 = vmatpush1.bf16.msra.mxu0 0
    %5157 = vmatprep.subr.bf16.mxu0 0
    %5158 = vmatpush1.bf16.msra.mxu0 0
    %5159 = vmatprep.mubr.bf16.mxu0 0
    %5160 = vmatmul.mubr.bf16.gmra.mrb[0].mxu0 %v5084
    %v5161 = vpop.f32.mrb[0].mxu0
    %v5162 = vadd.f32 0.0, %v5161
    %v5163 = vpop.f32.mrb[0].mxu0
    %v5164 = vpop.f32.mrb[0].mxu0
    %v5165 = vpop.f32.mrb[0].mxu0
    %5166 = vdwg.mxu0
    %v5167 = vld [vmem:[%s0 + $0x18] sm:$0x30]
    %v5168 = vld [vmem:[%s0 + $0x20] sm:$0x30]
    %v5169 = vld [vmem:[%s0 + $0x28] sm:$0x30]
    %v5171 = vrot.slane %v4874, 4
    %v5173 = vadd.f32 %v5167, %v5171
    %v5174 = vxor.u32 %v5173, 2147483648
    %v5175 = vmul.f32 %v5174, 1.442695
    %v5176 = vpow.pop %v5175
    %v5177 = vadd.f32 %v5176, 1.0
    %v5178 = vrcp.pop %v5177
    %v5179 = vmul.f32 1.0, %v5178
    %v5181 = vrot.slane %v4876, 4
    %v5183 = vadd.f32 %v5168, %v5181
    %v5184 = vxor.u32 %v5183, 2147483648
    %v5185 = vmul.f32 %v5184, 1.442695
    %v5186 = vpow.pop %v5185
    %v5187 = vadd.f32 %v5186, 1.0
    %v5188 = vrcp.pop %v5187
    %v5189 = vmul.f32 1.0, %v5188
    %v5190 = vadd.f32 %v4915, %v125
    %v5192 = vrot.slane %v5190, 4
    %v5194 = vmul.f32 %v5179, %v5192
    %v5195 = vadd.f32 %v5169, %v5194
    %v5196 = vtanh.pop %v5195
    %v5197 = vsub.f32 1.0, %v5189
    %v5198 = vmul.f32 %v5197, %v5196
    %v5200 = vrot.slane %v4515, 6
    %v5202 = vmul.f32 %v5189, %v5200
    %v5203 = vadd.f32 %v5198, %v5202
    %v5204 = vpack.c.bf16 %v5203, %v5203
    %v5206 = vrot.slane %v5204, 2
    %v5208 = vsel %vm239, %v5206, 0
    %5210 = vmatprep.subr.bf16.mxu0 %v905
    %5211 = vmatpush1.bf16.msra.mxu0 %v904
    %5212 = vmatprep.subr.bf16.mxu0 %v908
    %5213 = vmatpush1.bf16.msra.mxu0 %v907
    %5214 = vmatprep.subr.bf16.mxu0 %v911
    %5215 = vmatpush1.bf16.msra.mxu0 %v910
    %5216 = vmatprep.subr.bf16.mxu0 %v914
    %5217 = vmatpush1.bf16.msra.mxu0 %v913
    %5218 = vmatprep.subr.bf16.mxu0 0
    %5219 = vmatpush1.bf16.msra.mxu0 0
    %5220 = vmatprep.subr.bf16.mxu0 0
    %5221 = vmatpush1.bf16.msra.mxu0 0
    %5222 = vmatprep.subr.bf16.mxu0 0
    %5223 = vmatpush1.bf16.msra.mxu0 0
    %5224 = vmatprep.subr.bf16.mxu0 0
    %5225 = vmatpush1.bf16.msra.mxu0 0
    %5226 = vmatprep.subr.bf16.mxu0 0
    %5227 = vmatpush1.bf16.msra.mxu0 0
    %5228 = vmatprep.subr.bf16.mxu0 0
    %5229 = vmatpush1.bf16.msra.mxu0 0
    %5230 = vmatprep.subr.bf16.mxu0 0
    %5231 = vmatpush1.bf16.msra.mxu0 0
    %5232 = vmatprep.subr.bf16.mxu0 0
    %5233 = vmatpush1.bf16.msra.mxu0 0
    %5234 = vmatprep.subr.bf16.mxu0 0
    %5235 = vmatpush1.bf16.msra.mxu0 0
    %5236 = vmatprep.subr.bf16.mxu0 0
    %5237 = vmatpush1.bf16.msra.mxu0 0
    %5238 = vmatprep.subr.bf16.mxu0 0
    %5239 = vmatpush1.bf16.msra.mxu0 0
    %5240 = vmatprep.subr.bf16.mxu0 0
    %5241 = vmatpush1.bf16.msra.mxu0 0
    %5242 = vmatprep.mubr.bf16.mxu0 0
    %5243 = vmatmul.mubr.bf16.gmra.mrb[0].mxu0 %v5208
    %v5244 = vpop.f32.mrb[0].mxu0
    %v5245 = vadd.f32 %v72, %v5244
    %v5246 = vpop.f32.mrb[0].mxu0
    %v5247 = vadd.f32 %v76, %v5246
    %v5248 = vpop.f32.mrb[0].mxu0
    %v5249 = vpop.f32.mrb[0].mxu0
    %5250 = vdwg.mxu0
    %5251 = vmatprep.subr.bf16.mxu0 0
    %5252 = vmatpush1.bf16.msra.mxu0 %v906
    %5253 = vmatprep.subr.bf16.mxu0 0
    %5254 = vmatpush1.bf16.msra.mxu0 %v909
    %5255 = vmatprep.subr.bf16.mxu0 0
    %5256 = vmatpush1.bf16.msra.mxu0 %v912
    %5257 = vmatprep.subr.bf16.mxu0 0
    %5258 = vmatpush1.bf16.msra.mxu0 %v915
    %5259 = vmatprep.subr.bf16.mxu0 0
    %5260 = vmatpush1.bf16.msra.mxu0 0
    %5261 = vmatprep.subr.bf16.mxu0 0
    %5262 = vmatpush1.bf16.msra.mxu0 0
    %5263 = vmatprep.subr.bf16.mxu0 0
    %5264 = vmatpush1.bf16.msra.mxu0 0
    %5265 = vmatprep.subr.bf16.mxu0 0
    %5266 = vmatpush1.bf16.msra.mxu0 0
    %5267 = vmatprep.subr.bf16.mxu0 0
    %5268 = vmatpush1.bf16.msra.mxu0 0
    %5269 = vmatprep.subr.bf16.mxu0 0
    %5270 = vmatpush1.bf16.msra.mxu0 0
    %5271 = vmatprep.subr.bf16.mxu0 0
    %5272 = vmatpush1.bf16.msra.mxu0 0
    %5273 = vmatprep.subr.bf16.mxu0 0
    %5274 = vmatpush1.bf16.msra.mxu0 0
    %5275 = vmatprep.subr.bf16.mxu0 0
    %5276 = vmatpush1.bf16.msra.mxu0 0
    %5277 = vmatprep.subr.bf16.mxu0 0
    %5278 = vmatpush1.bf16.msra.mxu0 0
    %5279 = vmatprep.subr.bf16.mxu0 0
    %5280 = vmatpush1.bf16.msra.mxu0 0
    %5281 = vmatprep.subr.bf16.mxu0 0
    %5282 = vmatpush1.bf16.msra.mxu0 0
    %5283 = vmatprep.mubr.bf16.mxu0 0
    %5284 = vmatmul.mubr.bf16.gmra.mrb[0].mxu0 %v5208
    %v5285 = vpop.f32.mrb[0].mxu0
    %v5286 = vadd.f32 %v80, %v5285
    %v5287 = vpop.f32.mrb[0].mxu0
    %v5288 = vpop.f32.mrb[0].mxu0
    %v5289 = vpop.f32.mrb[0].mxu0
    %5290 = vdwg.mxu0
    %v5291 = vadd.f32 %v5245, %v4955
    %v5292 = vxor.u32 %v5291, 2147483648
    %v5293 = vmul.f32 %v5292, 1.442695
    %v5294 = vpow.pop %v5293
    %v5295 = vadd.f32 %v5294, 1.0
    %v5296 = vrcp.pop %v5295
    %v5297 = vmul.f32 1.0, %v5296
    %v5298 = vadd.f32 %v5247, %v4957
    %v5299 = vxor.u32 %v5298, 2147483648
    %v5300 = vmul.f32 %v5299, 1.442695
    %v5301 = vpow.pop %v5300
    %v5302 = vadd.f32 %v5301, 1.0
    %v5303 = vrcp.pop %v5302
    %v5304 = vmul.f32 1.0, %v5303
    %v5305 = vadd.f32 %v4996, %v133
    %v5306 = vmul.f32 %v5297, %v5305
    %v5307 = vadd.f32 %v5286, %v5306
    %v5308 = vtanh.pop %v5307
    %v5309 = vsub.f32 1.0, %v5304
    %v5310 = vmul.f32 %v5309, %v5308
    %v5311 = vmul.f32 %v5304, %v4624
    %v5312 = vadd.f32 %v5310, %v5311
    %v5313 = vpack.c.bf16 %v5312, %v5312
    %v5315 = vsel %vm239, %v5313, 0
    %5317 = vmatprep.subr.bf16.mxu0 %v1093
    %5318 = vmatpush1.bf16.msra.mxu0 %v1092
    %5319 = vmatprep.subr.bf16.mxu0 %v1096
    %5320 = vmatpush1.bf16.msra.mxu0 %v1095
    %5321 = vmatprep.subr.bf16.mxu0 %v1099
    %5322 = vmatpush1.bf16.msra.mxu0 %v1098
    %5323 = vmatprep.subr.bf16.mxu0 %v1102
    %5324 = vmatpush1.bf16.msra.mxu0 %v1101
    %5325 = vmatprep.subr.bf16.mxu0 0
    %5326 = vmatpush1.bf16.msra.mxu0 0
    %5327 = vmatprep.subr.bf16.mxu0 0
    %5328 = vmatpush1.bf16.msra.mxu0 0
    %5329 = vmatprep.subr.bf16.mxu0 0
    %5330 = vmatpush1.bf16.msra.mxu0 0
    %5331 = vmatprep.subr.bf16.mxu0 0
    %5332 = vmatpush1.bf16.msra.mxu0 0
    %5333 = vmatprep.subr.bf16.mxu0 0
    %5334 = vmatpush1.bf16.msra.mxu0 0
    %5335 = vmatprep.subr.bf16.mxu0 0
    %5336 = vmatpush1.bf16.msra.mxu0 0
    %5337 = vmatprep.subr.bf16.mxu0 0
    %5338 = vmatpush1.bf16.msra.mxu0 0
    %5339 = vmatprep.subr.bf16.mxu0 0
    %5340 = vmatpush1.bf16.msra.mxu0 0
    %5341 = vmatprep.subr.bf16.mxu0 0
    %5342 = vmatpush1.bf16.msra.mxu0 0
    %5343 = vmatprep.subr.bf16.mxu0 0
    %5344 = vmatpush1.bf16.msra.mxu0 0
    %5345 = vmatprep.subr.bf16.mxu0 0
    %5346 = vmatpush1.bf16.msra.mxu0 0
    %5347 = vmatprep.subr.bf16.mxu0 0
    %5348 = vmatpush1.bf16.msra.mxu0 0
    %5349 = vmatprep.mubr.bf16.mxu0 0
    %5350 = vmatmul.mubr.bf16.gmra.mrb[0].mxu0 %v5315
    %v5351 = vpop.f32.mrb[0].mxu0
    %v5352 = vadd.f32 %v90, %v5351
    %v5353 = vpop.f32.mrb[0].mxu0
    %v5354 = vadd.f32 %v94, %v5353
    %v5355 = vpop.f32.mrb[0].mxu0
    %v5356 = vpop.f32.mrb[0].mxu0
    %5357 = vdwg.mxu0
    %5358 = vmatprep.subr.bf16.mxu0 0
    %5359 = vmatpush1.bf16.msra.mxu0 %v1094
    %5360 = vmatprep.subr.bf16.mxu0 0
    %5361 = vmatpush1.bf16.msra.mxu0 %v1097
    %5362 = vmatprep.subr.bf16.mxu0 0
    %5363 = vmatpush1.bf16.msra.mxu0 %v1100
    %5364 = vmatprep.subr.bf16.mxu0 0
    %5365 = vmatpush1.bf16.msra.mxu0 %v1103
    %5366 = vmatprep.subr.bf16.mxu0 0
    %5367 = vmatpush1.bf16.msra.mxu0 0
    %5368 = vmatprep.subr.bf16.mxu0 0
    %5369 = vmatpush1.bf16.msra.mxu0 0
    %5370 = vmatprep.subr.bf16.mxu0 0
    %5371 = vmatpush1.bf16.msra.mxu0 0
    %5372 = vmatprep.subr.bf16.mxu0 0
    %5373 = vmatpush1.bf16.msra.mxu0 0
    %5374 = vmatprep.subr.bf16.mxu0 0
    %5375 = vmatpush1.bf16.msra.mxu0 0
    %5376 = vmatprep.subr.bf16.mxu0 0
    %5377 = vmatpush1.bf16.msra.mxu0 0
    %5378 = vmatprep.subr.bf16.mxu0 0
    %5379 = vmatpush1.bf16.msra.mxu0 0
    %5380 = vmatprep.subr.bf16.mxu0 0
    %5381 = vmatpush1.bf16.msra.mxu0 0
    %5382 = vmatprep.subr.bf16.mxu0 0
    %5383 = vmatpush1.bf16.msra.mxu0 0
    %5384 = vmatprep.subr.bf16.mxu0 0
    %5385 = vmatpush1.bf16.msra.mxu0 0
    %5386 = vmatprep.subr.bf16.mxu0 0
    %5387 = vmatpush1.bf16.msra.mxu0 0
    %5388 = vmatprep.subr.bf16.mxu0 0
    %5389 = vmatpush1.bf16.msra.mxu0 0
    %5390 = vmatprep.mubr.bf16.mxu0 0
    %5391 = vmatmul.mubr.bf16.gmra.mrb[0].mxu0 %v5315
    %v5392 = vpop.f32.mrb[0].mxu0
    %v5393 = vadd.f32 %v98, %v5392
    %v5394 = vpop.f32.mrb[0].mxu0
    %v5395 = vpop.f32.mrb[0].mxu0
    %v5396 = vpop.f32.mrb[0].mxu0
    %5397 = vdwg.mxu0
    %v5398 = vadd.f32 %v5352, %v5036
    %v5399 = vxor.u32 %v5398, 2147483648
    %v5400 = vmul.f32 %v5399, 1.442695
    %v5401 = vpow.pop %v5400
    %v5402 = vadd.f32 %v5401, 1.0
    %v5403 = vrcp.pop %v5402
    %v5404 = vmul.f32 1.0, %v5403
    %v5405 = vadd.f32 %v5354, %v5038
    %v5406 = vxor.u32 %v5405, 2147483648
    %v5407 = vmul.f32 %v5406, 1.442695
    %v5408 = vpow.pop %v5407
    %v5409 = vadd.f32 %v5408, 1.0
    %v5410 = vrcp.pop %v5409
    %v5411 = vmul.f32 1.0, %v5410
    %v5412 = vadd.f32 %v5077, %v141
    %v5413 = vmul.f32 %v5404, %v5412
    %v5414 = vadd.f32 %v5393, %v5413
    %v5415 = vtanh.pop %v5414
    %v5416 = vsub.f32 1.0, %v5411
    %v5417 = vmul.f32 %v5416, %v5415
    %v5418 = vmul.f32 %v5411, %v4731
    %v5419 = vadd.f32 %v5417, %v5418
    %v5420 = vpack.c.bf16 %v5419, %v5419
    %v5422 = vsel %vm239, %v5420, 0
    %5424 = vmatprep.subr.bf16.mxu0 %v1281
    %5425 = vmatpush1.bf16.msra.mxu0 %v1280
    %5426 = vmatprep.subr.bf16.mxu0 %v1284
    %5427 = vmatpush1.bf16.msra.mxu0 %v1283
    %5428 = vmatprep.subr.bf16.mxu0 %v1287
    %5429 = vmatpush1.bf16.msra.mxu0 %v1286
    %5430 = vmatprep.subr.bf16.mxu0 %v1290
    %5431 = vmatpush1.bf16.msra.mxu0 %v1289
    %5432 = vmatprep.subr.bf16.mxu0 0
    %5433 = vmatpush1.bf16.msra.mxu0 0
    %5434 = vmatprep.subr.bf16.mxu0 0
    %5435 = vmatpush1.bf16.msra.mxu0 0
    %5436 = vmatprep.subr.bf16.mxu0 0
    %5437 = vmatpush1.bf16.msra.mxu0 0
    %5438 = vmatprep.subr.bf16.mxu0 0
    %5439 = vmatpush1.bf16.msra.mxu0 0
    %5440 = vmatprep.subr.bf16.mxu0 0
    %5441 = vmatpush1.bf16.msra.mxu0 0
    %5442 = vmatprep.subr.bf16.mxu0 0
    %5443 = vmatpush1.bf16.msra.mxu0 0
    %5444 = vmatprep.subr.bf16.mxu0 0
    %5445 = vmatpush1.bf16.msra.mxu0 0
    %5446 = vmatprep.subr.bf16.mxu0 0
    %5447 = vmatpush1.bf16.msra.mxu0 0
    %5448 = vmatprep.subr.bf16.mxu0 0
    %5449 = vmatpush1.bf16.msra.mxu0 0
    %5450 = vmatprep.subr.bf16.mxu0 0
    %5451 = vmatpush1.bf16.msra.mxu0 0
    %5452 = vmatprep.subr.bf16.mxu0 0
    %5453 = vmatpush1.bf16.msra.mxu0 0
    %5454 = vmatprep.subr.bf16.mxu0 0
    %5455 = vmatpush1.bf16.msra.mxu0 0
    %5456 = vmatprep.mubr.bf16.mxu0 0
    %5457 = vmatmul.mubr.bf16.gmra.mrb[0].mxu0 %v5422
    %v5458 = vpop.f32.mrb[0].mxu0
    %v5459 = vadd.f32 %v108, %v5458
    %v5460 = vpop.f32.mrb[0].mxu0
    %v5461 = vadd.f32 %v112, %v5460
    %v5462 = vpop.f32.mrb[0].mxu0
    %v5463 = vpop.f32.mrb[0].mxu0
    %5464 = vdwg.mxu0
    %5465 = vmatprep.subr.bf16.mxu0 0
    %5466 = vmatpush1.bf16.msra.mxu0 %v1282
    %5467 = vmatprep.subr.bf16.mxu0 0
    %5468 = vmatpush1.bf16.msra.mxu0 %v1285
    %5469 = vmatprep.subr.bf16.mxu0 0
    %5470 = vmatpush1.bf16.msra.mxu0 %v1288
    %5471 = vmatprep.subr.bf16.mxu0 0
    %5472 = vmatpush1.bf16.msra.mxu0 %v1291
    %5473 = vmatprep.subr.bf16.mxu0 0
    %5474 = vmatpush1.bf16.msra.mxu0 0
    %5475 = vmatprep.subr.bf16.mxu0 0
    %5476 = vmatpush1.bf16.msra.mxu0 0
    %5477 = vmatprep.subr.bf16.mxu0 0
    %5478 = vmatpush1.bf16.msra.mxu0 0
    %5479 = vmatprep.subr.bf16.mxu0 0
    %5480 = vmatpush1.bf16.msra.mxu0 0
    %5481 = vmatprep.subr.bf16.mxu0 0
    %5482 = vmatpush1.bf16.msra.mxu0 0
    %5483 = vmatprep.subr.bf16.mxu0 0
    %5484 = vmatpush1.bf16.msra.mxu0 0
    %5485 = vmatprep.subr.bf16.mxu0 0
    %5486 = vmatpush1.bf16.msra.mxu0 0
    %5487 = vmatprep.subr.bf16.mxu0 0
    %5488 = vmatpush1.bf16.msra.mxu0 0
    %5489 = vmatprep.subr.bf16.mxu0 0
    %5490 = vmatpush1.bf16.msra.mxu0 0
    %5491 = vmatprep.subr.bf16.mxu0 0
    %5492 = vmatpush1.bf16.msra.mxu0 0
    %5493 = vmatprep.subr.bf16.mxu0 0
    %5494 = vmatpush1.bf16.msra.mxu0 0
    %5495 = vmatprep.subr.bf16.mxu0 0
    %5496 = vmatpush1.bf16.msra.mxu0 0
    %5497 = vmatprep.mubr.bf16.mxu0 0
    %5498 = vmatmul.mubr.bf16.gmra.mrb[0].mxu0 %v5422
    %v5499 = vpop.f32.mrb[0].mxu0
    %v5500 = vadd.f32 %v116, %v5499
    %v5501 = vpop.f32.mrb[0].mxu0
    %v5502 = vpop.f32.mrb[0].mxu0
    %v5503 = vpop.f32.mrb[0].mxu0
    %5504 = vdwg.mxu0
    %v5505 = vadd.f32 %v5459, %v5121
    %v5506 = vxor.u32 %v5505, 2147483648
    %v5507 = vmul.f32 %v5506, 1.442695
    %v5508 = vpow.pop %v5507
    %v5509 = vadd.f32 %v5508, 1.0
    %v5510 = vrcp.pop %v5509
    %v5511 = vmul.f32 1.0, %v5510
    %v5512 = vadd.f32 %v5461, %v5123
    %v5513 = vxor.u32 %v5512, 2147483648
    %v5514 = vmul.f32 %v5513, 1.442695
    %v5515 = vpow.pop %v5514
    %v5516 = vadd.f32 %v5515, 1.0
    %v5517 = vrcp.pop %v5516
    %v5518 = vmul.f32 1.0, %v5517
    %v5519 = vadd.f32 %v5162, %v149
    %v5520 = vmul.f32 %v5511, %v5519
    %v5521 = vadd.f32 %v5500, %v5520
    %v5522 = vtanh.pop %v5521
    %v5523 = vsub.f32 1.0, %v5518
    %v5524 = vmul.f32 %v5523, %v5522
    %v5525 = vmul.f32 %v5518, %v4838
    %v5526 = vadd.f32 %v5524, %v5525
    %5527 = vmatprep.subr.bf16.mxu0 %v216
    %5528 = vmatpush1.bf16.msra.mxu0 %v215
    %5529 = vmatprep.subr.bf16.mxu0 %v219
    %5530 = vmatpush1.bf16.msra.mxu0 %v218
    %5531 = vmatprep.subr.bf16.mxu0 %v222
    %5532 = vmatpush1.bf16.msra.mxu0 %v221
    %5533 = vmatprep.subr.bf16.mxu0 %v225
    %5534 = vmatpush1.bf16.msra.mxu0 %v224
    %5535 = vmatprep.subr.bf16.mxu0 0
    %5536 = vmatpush1.bf16.msra.mxu0 0
    %5537 = vmatprep.subr.bf16.mxu0 0
    %5538 = vmatpush1.bf16.msra.mxu0 0
    %5539 = vmatprep.subr.bf16.mxu0 0
    %5540 = vmatpush1.bf16.msra.mxu0 0
    %5541 = vmatprep.subr.bf16.mxu0 0
    %5542 = vmatpush1.bf16.msra.mxu0 0
    %5543 = vmatprep.subr.bf16.mxu0 0
    %5544 = vmatpush1.bf16.msra.mxu0 0
    %5545 = vmatprep.subr.bf16.mxu0 0
    %5546 = vmatpush1.bf16.msra.mxu0 0
    %5547 = vmatprep.subr.bf16.mxu0 0
    %5548 = vmatpush1.bf16.msra.mxu0 0
    %5549 = vmatprep.subr.bf16.mxu0 0
    %5550 = vmatpush1.bf16.msra.mxu0 0
    %5551 = vmatprep.subr.bf16.mxu0 0
    %5552 = vmatpush1.bf16.msra.mxu0 0
    %5553 = vmatprep.subr.bf16.mxu0 0
    %5554 = vmatpush1.bf16.msra.mxu0 0
    %5555 = vmatprep.subr.bf16.mxu0 0
    %5556 = vmatpush1.bf16.msra.mxu0 0
    %5557 = vmatprep.subr.bf16.mxu0 0
    %5558 = vmatpush1.bf16.msra.mxu0 0
    %5559 = vmatprep.mubr.bf16.mxu0 0
    %5560 = vmatmul.mubr.bf16.gmra.mrb[0].mxu0 %v5208
    %v5561 = vpop.f32.mrb[0].mxu0
    %v5562 = vadd.f32 0.0, %v5561
    %v5563 = vpop.f32.mrb[0].mxu0
    %v5564 = vadd.f32 0.0, %v5563
    %v5565 = vpop.f32.mrb[0].mxu0
    %v5566 = vpop.f32.mrb[0].mxu0
    %5567 = vdwg.mxu0
    %5568 = vmatprep.subr.bf16.mxu0 0
    %5569 = vmatpush1.bf16.msra.mxu0 %v217
    %5570 = vmatprep.subr.bf16.mxu0 0
    %5571 = vmatpush1.bf16.msra.mxu0 %v220
    %5572 = vmatprep.subr.bf16.mxu0 0
    %5573 = vmatpush1.bf16.msra.mxu0 %v223
    %5574 = vmatprep.subr.bf16.mxu0 0
    %5575 = vmatpush1.bf16.msra.mxu0 %v226
    %5576 = vmatprep.subr.bf16.mxu0 0
    %5577 = vmatpush1.bf16.msra.mxu0 0
    %5578 = vmatprep.subr.bf16.mxu0 0
    %5579 = vmatpush1.bf16.msra.mxu0 0
    %5580 = vmatprep.subr.bf16.mxu0 0
    %5581 = vmatpush1.bf16.msra.mxu0 0
    %5582 = vmatprep.subr.bf16.mxu0 0
    %5583 = vmatpush1.bf16.msra.mxu0 0
    %5584 = vmatprep.subr.bf16.mxu0 0
    %5585 = vmatpush1.bf16.msra.mxu0 0
    %5586 = vmatprep.subr.bf16.mxu0 0
    %5587 = vmatpush1.bf16.msra.mxu0 0
    %5588 = vmatprep.subr.bf16.mxu0 0
    %5589 = vmatpush1.bf16.msra.mxu0 0
    %5590 = vmatprep.subr.bf16.mxu0 0
    %5591 = vmatpush1.bf16.msra.mxu0 0
    %5592 = vmatprep.subr.bf16.mxu0 0
    %5593 = vmatpush1.bf16.msra.mxu0 0
    %5594 = vmatprep.subr.bf16.mxu0 0
    %5595 = vmatpush1.bf16.msra.mxu0 0
    %5596 = vmatprep.subr.bf16.mxu0 0
    %5597 = vmatpush1.bf16.msra.mxu0 0
    %5598 = vmatprep.subr.bf16.mxu0 0
    %5599 = vmatpush1.bf16.msra.mxu0 0
    %5600 = vmatprep.mubr.bf16.mxu0 0
    %5601 = vmatmul.mubr.bf16.gmra.mrb[0].mxu0 %v5208
    %v5602 = vpop.f32.mrb[0].mxu0
    %v5603 = vadd.f32 0.0, %v5602
    %v5604 = vpop.f32.mrb[0].mxu0
    %v5605 = vpop.f32.mrb[0].mxu0
    %v5606 = vpop.f32.mrb[0].mxu0
    %5607 = vdwg.mxu0
    %5608 = vmatprep.subr.bf16.mxu0 %v383
    %5609 = vmatpush1.bf16.msra.mxu0 %v382
    %5610 = vmatprep.subr.bf16.mxu0 %v386
    %5611 = vmatpush1.bf16.msra.mxu0 %v385
    %5612 = vmatprep.subr.bf16.mxu0 %v389
    %5613 = vmatpush1.bf16.msra.mxu0 %v388
    %5614 = vmatprep.subr.bf16.mxu0 %v392
    %5615 = vmatpush1.bf16.msra.mxu0 %v391
    %5616 = vmatprep.subr.bf16.mxu0 0
    %5617 = vmatpush1.bf16.msra.mxu0 0
    %5618 = vmatprep.subr.bf16.mxu0 0
    %5619 = vmatpush1.bf16.msra.mxu0 0
    %5620 = vmatprep.subr.bf16.mxu0 0
    %5621 = vmatpush1.bf16.msra.mxu0 0
    %5622 = vmatprep.subr.bf16.mxu0 0
    %5623 = vmatpush1.bf16.msra.mxu0 0
    %5624 = vmatprep.subr.bf16.mxu0 0
    %5625 = vmatpush1.bf16.msra.mxu0 0
    %5626 = vmatprep.subr.bf16.mxu0 0
    %5627 = vmatpush1.bf16.msra.mxu0 0
    %5628 = vmatprep.subr.bf16.mxu0 0
    %5629 = vmatpush1.bf16.msra.mxu0 0
    %5630 = vmatprep.subr.bf16.mxu0 0
    %5631 = vmatpush1.bf16.msra.mxu0 0
    %5632 = vmatprep.subr.bf16.mxu0 0
    %5633 = vmatpush1.bf16.msra.mxu0 0
    %5634 = vmatprep.subr.bf16.mxu0 0
    %5635 = vmatpush1.bf16.msra.mxu0 0
    %5636 = vmatprep.subr.bf16.mxu0 0
    %5637 = vmatpush1.bf16.msra.mxu0 0
    %5638 = vmatprep.subr.bf16.mxu0 0
    %5639 = vmatpush1.bf16.msra.mxu0 0
    %5640 = vmatprep.mubr.bf16.mxu0 0
    %5641 = vmatmul.mubr.bf16.gmra.mrb[0].mxu0 %v5315
    %v5642 = vpop.f32.mrb[0].mxu0
    %v5643 = vadd.f32 0.0, %v5642
    %v5644 = vpop.f32.mrb[0].mxu0
    %v5645 = vadd.f32 0.0, %v5644
    %v5646 = vpop.f32.mrb[0].mxu0
    %v5647 = vpop.f32.mrb[0].mxu0
    %5648 = vdwg.mxu0
    %5649 = vmatprep.subr.bf16.mxu0 0
    %5650 = vmatpush1.bf16.msra.mxu0 %v384
    %5651 = vmatprep.subr.bf16.mxu0 0
    %5652 = vmatpush1.bf16.msra.mxu0 %v387
    %5653 = vmatprep.subr.bf16.mxu0 0
    %5654 = vmatpush1.bf16.msra.mxu0 %v390
    %5655 = vmatprep.subr.bf16.mxu0 0
    %5656 = vmatpush1.bf16.msra.mxu0 %v393
    %5657 = vmatprep.subr.bf16.mxu0 0
    %5658 = vmatpush1.bf16.msra.mxu0 0
    %5659 = vmatprep.subr.bf16.mxu0 0
    %5660 = vmatpush1.bf16.msra.mxu0 0
    %5661 = vmatprep.subr.bf16.mxu0 0
    %5662 = vmatpush1.bf16.msra.mxu0 0
    %5663 = vmatprep.subr.bf16.mxu0 0
    %5664 = vmatpush1.bf16.msra.mxu0 0
    %5665 = vmatprep.subr.bf16.mxu0 0
    %5666 = vmatpush1.bf16.msra.mxu0 0
    %5667 = vmatprep.subr.bf16.mxu0 0
    %5668 = vmatpush1.bf16.msra.mxu0 0
    %5669 = vmatprep.subr.bf16.mxu0 0
    %5670 = vmatpush1.bf16.msra.mxu0 0
    %5671 = vmatprep.subr.bf16.mxu0 0
    %5672 = vmatpush1.bf16.msra.mxu0 0
    %5673 = vmatprep.subr.bf16.mxu0 0
    %5674 = vmatpush1.bf16.msra.mxu0 0
    %5675 = vmatprep.subr.bf16.mxu0 0
    %5676 = vmatpush1.bf16.msra.mxu0 0
    %5677 = vmatprep.subr.bf16.mxu0 0
    %5678 = vmatpush1.bf16.msra.mxu0 0
    %5679 = vmatprep.subr.bf16.mxu0 0
    %5680 = vmatpush1.bf16.msra.mxu0 0
    %5681 = vmatprep.mubr.bf16.mxu0 0
    %5682 = vmatmul.mubr.bf16.gmra.mrb[0].mxu0 %v5315
    %v5683 = vpop.f32.mrb[0].mxu0
    %v5684 = vadd.f32 0.0, %v5683
    %v5685 = vpop.f32.mrb[0].mxu0
    %v5686 = vpop.f32.mrb[0].mxu0
    %v5687 = vpop.f32.mrb[0].mxu0
    %5688 = vdwg.mxu0
    %5689 = vmatprep.subr.bf16.mxu0 %v549
    %5690 = vmatpush1.bf16.msra.mxu0 %v548
    %5691 = vmatprep.subr.bf16.mxu0 %v552
    %5692 = vmatpush1.bf16.msra.mxu0 %v551
    %5693 = vmatprep.subr.bf16.mxu0 %v555
    %5694 = vmatpush1.bf16.msra.mxu0 %v554
    %5695 = vmatprep.subr.bf16.mxu0 %v558
    %5696 = vmatpush1.bf16.msra.mxu0 %v557
    %5697 = vmatprep.subr.bf16.mxu0 0
    %5698 = vmatpush1.bf16.msra.mxu0 0
    %5699 = vmatprep.subr.bf16.mxu0 0
    %5700 = vmatpush1.bf16.msra.mxu0 0
    %5701 = vmatprep.subr.bf16.mxu0 0
    %5702 = vmatpush1.bf16.msra.mxu0 0
    %5703 = vmatprep.subr.bf16.mxu0 0
    %5704 = vmatpush1.bf16.msra.mxu0 0
    %5705 = vmatprep.subr.bf16.mxu0 0
    %5706 = vmatpush1.bf16.msra.mxu0 0
    %5707 = vmatprep.subr.bf16.mxu0 0
    %5708 = vmatpush1.bf16.msra.mxu0 0
    %5709 = vmatprep.subr.bf16.mxu0 0
    %5710 = vmatpush1.bf16.msra.mxu0 0
    %5711 = vmatprep.subr.bf16.mxu0 0
    %5712 = vmatpush1.bf16.msra.mxu0 0
    %5713 = vmatprep.subr.bf16.mxu0 0
    %5714 = vmatpush1.bf16.msra.mxu0 0
    %5715 = vmatprep.subr.bf16.mxu0 0
    %5716 = vmatpush1.bf16.msra.mxu0 0
    %5717 = vmatprep.subr.bf16.mxu0 0
    %5718 = vmatpush1.bf16.msra.mxu0 0
    %5719 = vmatprep.subr.bf16.mxu0 0
    %5720 = vmatpush1.bf16.msra.mxu0 0
    %5721 = vmatprep.mubr.bf16.mxu0 0
    %5722 = vmatmul.mubr.bf16.gmra.mrb[0].mxu0 %v5422
    %v5723 = vpop.f32.mrb[0].mxu0
    %v5724 = vadd.f32 0.0, %v5723
    %v5725 = vpop.f32.mrb[0].mxu0
    %v5726 = vadd.f32 0.0, %v5725
    %v5727 = vpop.f32.mrb[0].mxu0
    %v5728 = vpop.f32.mrb[0].mxu0
    %5729 = vdwg.mxu0
    %5730 = vmatprep.subr.bf16.mxu0 0
    %5731 = vmatpush1.bf16.msra.mxu0 %v550
    %5732 = vmatprep.subr.bf16.mxu0 0
    %5733 = vmatpush1.bf16.msra.mxu0 %v553
    %5734 = vmatprep.subr.bf16.mxu0 0
    %5735 = vmatpush1.bf16.msra.mxu0 %v556
    %5736 = vmatprep.subr.bf16.mxu0 0
    %5737 = vmatpush1.bf16.msra.mxu0 %v559
    %5738 = vmatprep.subr.bf16.mxu0 0
    %5739 = vmatpush1.bf16.msra.mxu0 0
    %5740 = vmatprep.subr.bf16.mxu0 0
    %5741 = vmatpush1.bf16.msra.mxu0 0
    %5742 = vmatprep.subr.bf16.mxu0 0
    %5743 = vmatpush1.bf16.msra.mxu0 0
    %5744 = vmatprep.subr.bf16.mxu0 0
    %5745 = vmatpush1.bf16.msra.mxu0 0
    %5746 = vmatprep.subr.bf16.mxu0 0
    %5747 = vmatpush1.bf16.msra.mxu0 0
    %5748 = vmatprep.subr.bf16.mxu0 0
    %5749 = vmatpush1.bf16.msra.mxu0 0
    %5750 = vmatprep.subr.bf16.mxu0 0
    %5751 = vmatpush1.bf16.msra.mxu0 0
    %5752 = vmatprep.subr.bf16.mxu0 0
    %5753 = vmatpush1.bf16.msra.mxu0 0
    %5754 = vmatprep.subr.bf16.mxu0 0
    %5755 = vmatpush1.bf16.msra.mxu0 0
    %5756 = vmatprep.subr.bf16.mxu0 0
    %5757 = vmatpush1.bf16.msra.mxu0 0
    %5758 = vmatprep.subr.bf16.mxu0 0
    %5759 = vmatpush1.bf16.msra.mxu0 0
    %5760 = vmatprep.subr.bf16.mxu0 0
    %5761 = vmatpush1.bf16.msra.mxu0 0
    %5762 = vmatprep.mubr.bf16.mxu0 0
    %5763 = vmatmul.mubr.bf16.gmra.mrb[0].mxu0 %v5422
    %v5764 = vpop.f32.mrb[0].mxu0
    %v5765 = vadd.f32 0.0, %v5764
    %v5766 = vpop.f32.mrb[0].mxu0
    %v5767 = vpop.f32.mrb[0].mxu0
    %v5768 = vpop.f32.mrb[0].mxu0
    %5769 = vdwg.mxu0
    %v5770 = vpack.c.bf16 %v5526, %v5526
    %v5772 = vsel %vm239, %v5770, 0
    %5774 = vmatprep.subr.bf16.mxu0 %v715
    %5775 = vmatpush1.bf16.msra.mxu0 %v714
    %5776 = vmatprep.subr.bf16.mxu0 %v718
    %5777 = vmatpush1.bf16.msra.mxu0 %v717
    %5778 = vmatprep.subr.bf16.mxu0 %v721
    %5779 = vmatpush1.bf16.msra.mxu0 %v720
    %5780 = vmatprep.subr.bf16.mxu0 %v724
    %5781 = vmatpush1.bf16.msra.mxu0 %v723
    %5782 = vmatprep.subr.bf16.mxu0 0
    %5783 = vmatpush1.bf16.msra.mxu0 0
    %5784 = vmatprep.subr.bf16.mxu0 0
    %5785 = vmatpush1.bf16.msra.mxu0 0
    %5786 = vmatprep.subr.bf16.mxu0 0
    %5787 = vmatpush1.bf16.msra.mxu0 0
    %5788 = vmatprep.subr.bf16.mxu0 0
    %5789 = vmatpush1.bf16.msra.mxu0 0
    %5790 = vmatprep.subr.bf16.mxu0 0
    %5791 = vmatpush1.bf16.msra.mxu0 0
    %5792 = vmatprep.subr.bf16.mxu0 0
    %5793 = vmatpush1.bf16.msra.mxu0 0
    %5794 = vmatprep.subr.bf16.mxu0 0
    %5795 = vmatpush1.bf16.msra.mxu0 0
    %5796 = vmatprep.subr.bf16.mxu0 0
    %5797 = vmatpush1.bf16.msra.mxu0 0
    %5798 = vmatprep.subr.bf16.mxu0 0
    %5799 = vmatpush1.bf16.msra.mxu0 0
    %5800 = vmatprep.subr.bf16.mxu0 0
    %5801 = vmatpush1.bf16.msra.mxu0 0
    %5802 = vmatprep.subr.bf16.mxu0 0
    %5803 = vmatpush1.bf16.msra.mxu0 0
    %5804 = vmatprep.subr.bf16.mxu0 0
    %5805 = vmatpush1.bf16.msra.mxu0 0
    %5806 = vmatprep.mubr.bf16.mxu0 0
    %5807 = vmatmul.mubr.bf16.gmra.mrb[0].mxu0 %v5772
    %v5808 = vpop.f32.mrb[0].mxu0
    %v5809 = vadd.f32 0.0, %v5808
    %v5810 = vpop.f32.mrb[0].mxu0
    %v5811 = vadd.f32 0.0, %v5810
    %v5812 = vpop.f32.mrb[0].mxu0
    %v5813 = vpop.f32.mrb[0].mxu0
    %5814 = vdwg.mxu0
    %5815 = vmatprep.subr.bf16.mxu0 0
    %5816 = vmatpush1.bf16.msra.mxu0 %v716
    %5817 = vmatprep.subr.bf16.mxu0 0
    %5818 = vmatpush1.bf16.msra.mxu0 %v719
    %5819 = vmatprep.subr.bf16.mxu0 0
    %5820 = vmatpush1.bf16.msra.mxu0 %v722
    %5821 = vmatprep.subr.bf16.mxu0 0
    %5822 = vmatpush1.bf16.msra.mxu0 %v725
    %5823 = vmatprep.subr.bf16.mxu0 0
    %5824 = vmatpush1.bf16.msra.mxu0 0
    %5825 = vmatprep.subr.bf16.mxu0 0
    %5826 = vmatpush1.bf16.msra.mxu0 0
    %5827 = vmatprep.subr.bf16.mxu0 0
    %5828 = vmatpush1.bf16.msra.mxu0 0
    %5829 = vmatprep.subr.bf16.mxu0 0
    %5830 = vmatpush1.bf16.msra.mxu0 0
    %5831 = vmatprep.subr.bf16.mxu0 0
    %5832 = vmatpush1.bf16.msra.mxu0 0
    %5833 = vmatprep.subr.bf16.mxu0 0
    %5834 = vmatpush1.bf16.msra.mxu0 0
    %5835 = vmatprep.subr.bf16.mxu0 0
    %5836 = vmatpush1.bf16.msra.mxu0 0
    %5837 = vmatprep.subr.bf16.mxu0 0
    %5838 = vmatpush1.bf16.msra.mxu0 0
    %5839 = vmatprep.subr.bf16.mxu0 0
    %5840 = vmatpush1.bf16.msra.mxu0 0
    %5841 = vmatprep.subr.bf16.mxu0 0
    %5842 = vmatpush1.bf16.msra.mxu0 0
    %5843 = vmatprep.subr.bf16.mxu0 0
    %5844 = vmatpush1.bf16.msra.mxu0 0
    %5845 = vmatprep.subr.bf16.mxu0 0
    %5846 = vmatpush1.bf16.msra.mxu0 0
    %5847 = vmatprep.mubr.bf16.mxu0 0
    %5848 = vmatmul.mubr.bf16.gmra.mrb[0].mxu0 %v5772
    %v5849 = vpop.f32.mrb[0].mxu0
    %v5850 = vadd.f32 0.0, %v5849
    %v5851 = vpop.f32.mrb[0].mxu0
    %v5852 = vpop.f32.mrb[0].mxu0
    %v5853 = vpop.f32.mrb[0].mxu0
    %5854 = vdwg.mxu0
    %v5855 = vld [vmem:[%s0 + $0x18] sm:$0xc0]
    %v5856 = vld [vmem:[%s0 + $0x20] sm:$0xc0]
    %v5857 = vld [vmem:[%s0 + $0x28] sm:$0xc0]
    %v5859 = vrot.slane %v5562, 2
    %v5861 = vadd.f32 %v5855, %v5859
    %v5862 = vxor.u32 %v5861, 2147483648
    %v5863 = vmul.f32 %v5862, 1.442695
    %v5864 = vpow.pop %v5863
    %v5865 = vadd.f32 %v5864, 1.0
    %v5866 = vrcp.pop %v5865
    %v5867 = vmul.f32 1.0, %v5866
    %v5869 = vrot.slane %v5564, 2
    %v5871 = vadd.f32 %v5856, %v5869
    %v5872 = vxor.u32 %v5871, 2147483648
    %v5873 = vmul.f32 %v5872, 1.442695
    %v5874 = vpow.pop %v5873
    %v5875 = vadd.f32 %v5874, 1.0
    %v5876 = vrcp.pop %v5875
    %v5877 = vmul.f32 1.0, %v5876
    %v5878 = vadd.f32 %v5603, %v125
    %v5880 = vrot.slane %v5878, 2
    %v5882 = vmul.f32 %v5867, %v5880
    %v5883 = vadd.f32 %v5857, %v5882
    %v5884 = vtanh.pop %v5883
    %v5885 = vsub.f32 1.0, %v5877
    %v5886 = vmul.f32 %v5885, %v5884
    %v5888 = vrot.slane %v5203, 6
    %v5890 = vmul.f32 %v5877, %v5888
    %v5891 = vadd.f32 %v5886, %v5890
    %v5892 = vpack.c.bf16 %v5891, %v5891
    %v5894 = vrot.slane %v5892, 3
    %v5896 = vsel %vm239, %v5894, 0
    %5898 = vmatprep.subr.bf16.mxu0 %v905
    %5899 = vmatpush1.bf16.msra.mxu0 %v904
    %5900 = vmatprep.subr.bf16.mxu0 %v908
    %5901 = vmatpush1.bf16.msra.mxu0 %v907
    %5902 = vmatprep.subr.bf16.mxu0 %v911
    %5903 = vmatpush1.bf16.msra.mxu0 %v910
    %5904 = vmatprep.subr.bf16.mxu0 %v914
    %5905 = vmatpush1.bf16.msra.mxu0 %v913
    %5906 = vmatprep.subr.bf16.mxu0 0
    %5907 = vmatpush1.bf16.msra.mxu0 0
    %5908 = vmatprep.subr.bf16.mxu0 0
    %5909 = vmatpush1.bf16.msra.mxu0 0
    %5910 = vmatprep.subr.bf16.mxu0 0
    %5911 = vmatpush1.bf16.msra.mxu0 0
    %5912 = vmatprep.subr.bf16.mxu0 0
    %5913 = vmatpush1.bf16.msra.mxu0 0
    %5914 = vmatprep.subr.bf16.mxu0 0
    %5915 = vmatpush1.bf16.msra.mxu0 0
    %5916 = vmatprep.subr.bf16.mxu0 0
    %5917 = vmatpush1.bf16.msra.mxu0 0
    %5918 = vmatprep.subr.bf16.mxu0 0
    %5919 = vmatpush1.bf16.msra.mxu0 0
    %5920 = vmatprep.subr.bf16.mxu0 0
    %5921 = vmatpush1.bf16.msra.mxu0 0
    %5922 = vmatprep.subr.bf16.mxu0 0
    %5923 = vmatpush1.bf16.msra.mxu0 0
    %5924 = vmatprep.subr.bf16.mxu0 0
    %5925 = vmatpush1.bf16.msra.mxu0 0
    %5926 = vmatprep.subr.bf16.mxu0 0
    %5927 = vmatpush1.bf16.msra.mxu0 0
    %5928 = vmatprep.subr.bf16.mxu0 0
    %5929 = vmatpush1.bf16.msra.mxu0 0
    %5930 = vmatprep.mubr.bf16.mxu0 0
    %5931 = vmatmul.mubr.bf16.gmra.mrb[0].mxu0 %v5896
    %v5932 = vpop.f32.mrb[0].mxu0
    %v5933 = vadd.f32 %v72, %v5932
    %v5934 = vpop.f32.mrb[0].mxu0
    %v5935 = vadd.f32 %v76, %v5934
    %v5936 = vpop.f32.mrb[0].mxu0
    %v5937 = vpop.f32.mrb[0].mxu0
    %5938 = vdwg.mxu0
    %5939 = vmatprep.subr.bf16.mxu0 0
    %5940 = vmatpush1.bf16.msra.mxu0 %v906
    %5941 = vmatprep.subr.bf16.mxu0 0
    %5942 = vmatpush1.bf16.msra.mxu0 %v909
    %5943 = vmatprep.subr.bf16.mxu0 0
    %5944 = vmatpush1.bf16.msra.mxu0 %v912
    %5945 = vmatprep.subr.bf16.mxu0 0
    %5946 = vmatpush1.bf16.msra.mxu0 %v915
    %5947 = vmatprep.subr.bf16.mxu0 0
    %5948 = vmatpush1.bf16.msra.mxu0 0
    %5949 = vmatprep.subr.bf16.mxu0 0
    %5950 = vmatpush1.bf16.msra.mxu0 0
    %5951 = vmatprep.subr.bf16.mxu0 0
    %5952 = vmatpush1.bf16.msra.mxu0 0
    %5953 = vmatprep.subr.bf16.mxu0 0
    %5954 = vmatpush1.bf16.msra.mxu0 0
    %5955 = vmatprep.subr.bf16.mxu0 0
    %5956 = vmatpush1.bf16.msra.mxu0 0
    %5957 = vmatprep.subr.bf16.mxu0 0
    %5958 = vmatpush1.bf16.msra.mxu0 0
    %5959 = vmatprep.subr.bf16.mxu0 0
    %5960 = vmatpush1.bf16.msra.mxu0 0
    %5961 = vmatprep.subr.bf16.mxu0 0
    %5962 = vmatpush1.bf16.msra.mxu0 0
    %5963 = vmatprep.subr.bf16.mxu0 0
    %5964 = vmatpush1.bf16.msra.mxu0 0
    %5965 = vmatprep.subr.bf16.mxu0 0
    %5966 = vmatpush1.bf16.msra.mxu0 0
    %5967 = vmatprep.subr.bf16.mxu0 0
    %5968 = vmatpush1.bf16.msra.mxu0 0
    %5969 = vmatprep.subr.bf16.mxu0 0
    %5970 = vmatpush1.bf16.msra.mxu0 0
    %5971 = vmatprep.mubr.bf16.mxu0 0
    %5972 = vmatmul.mubr.bf16.gmra.mrb[0].mxu0 %v5896
    %v5973 = vpop.f32.mrb[0].mxu0
    %v5974 = vadd.f32 %v80, %v5973
    %v5975 = vpop.f32.mrb[0].mxu0
    %v5976 = vpop.f32.mrb[0].mxu0
    %v5977 = vpop.f32.mrb[0].mxu0
    %5978 = vdwg.mxu0
    %v5979 = vadd.f32 %v5933, %v5643
    %v5980 = vxor.u32 %v5979, 2147483648
    %v5981 = vmul.f32 %v5980, 1.442695
    %v5982 = vpow.pop %v5981
    %v5983 = vadd.f32 %v5982, 1.0
    %v5984 = vrcp.pop %v5983
    %v5985 = vmul.f32 1.0, %v5984
    %v5986 = vadd.f32 %v5935, %v5645
    %v5987 = vxor.u32 %v5986, 2147483648
    %v5988 = vmul.f32 %v5987, 1.442695
    %v5989 = vpow.pop %v5988
    %v5990 = vadd.f32 %v5989, 1.0
    %v5991 = vrcp.pop %v5990
    %v5992 = vmul.f32 1.0, %v5991
    %v5993 = vadd.f32 %v5684, %v133
    %v5994 = vmul.f32 %v5985, %v5993
    %v5995 = vadd.f32 %v5974, %v5994
    %v5996 = vtanh.pop %v5995
    %v5997 = vsub.f32 1.0, %v5992
    %v5998 = vmul.f32 %v5997, %v5996
    %v5999 = vmul.f32 %v5992, %v5312
    %v6000 = vadd.f32 %v5998, %v5999
    %v6001 = vpack.c.bf16 %v6000, %v6000
    %v6003 = vsel %vm239, %v6001, 0
    %6005 = vmatprep.subr.bf16.mxu0 %v1093
    %6006 = vmatpush1.bf16.msra.mxu0 %v1092
    %6007 = vmatprep.subr.bf16.mxu0 %v1096
    %6008 = vmatpush1.bf16.msra.mxu0 %v1095
    %6009 = vmatprep.subr.bf16.mxu0 %v1099
    %6010 = vmatpush1.bf16.msra.mxu0 %v1098
    %6011 = vmatprep.subr.bf16.mxu0 %v1102
    %6012 = vmatpush1.bf16.msra.mxu0 %v1101
    %6013 = vmatprep.subr.bf16.mxu0 0
    %6014 = vmatpush1.bf16.msra.mxu0 0
    %6015 = vmatprep.subr.bf16.mxu0 0
    %6016 = vmatpush1.bf16.msra.mxu0 0
    %6017 = vmatprep.subr.bf16.mxu0 0
    %6018 = vmatpush1.bf16.msra.mxu0 0
    %6019 = vmatprep.subr.bf16.mxu0 0
    %6020 = vmatpush1.bf16.msra.mxu0 0
    %6021 = vmatprep.subr.bf16.mxu0 0
    %6022 = vmatpush1.bf16.msra.mxu0 0
    %6023 = vmatprep.subr.bf16.mxu0 0
    %6024 = vmatpush1.bf16.msra.mxu0 0
    %6025 = vmatprep.subr.bf16.mxu0 0
    %6026 = vmatpush1.bf16.msra.mxu0 0
    %6027 = vmatprep.subr.bf16.mxu0 0
    %6028 = vmatpush1.bf16.msra.mxu0 0
    %6029 = vmatprep.subr.bf16.mxu0 0
    %6030 = vmatpush1.bf16.msra.mxu0 0
    %6031 = vmatprep.subr.bf16.mxu0 0
    %6032 = vmatpush1.bf16.msra.mxu0 0
    %6033 = vmatprep.subr.bf16.mxu0 0
    %6034 = vmatpush1.bf16.msra.mxu0 0
    %6035 = vmatprep.subr.bf16.mxu0 0
    %6036 = vmatpush1.bf16.msra.mxu0 0
    %6037 = vmatprep.mubr.bf16.mxu0 0
    %6038 = vmatmul.mubr.bf16.gmra.mrb[0].mxu0 %v6003
    %v6039 = vpop.f32.mrb[0].mxu0
    %v6040 = vadd.f32 %v90, %v6039
    %v6041 = vpop.f32.mrb[0].mxu0
    %v6042 = vadd.f32 %v94, %v6041
    %v6043 = vpop.f32.mrb[0].mxu0
    %v6044 = vpop.f32.mrb[0].mxu0
    %6045 = vdwg.mxu0
    %6046 = vmatprep.subr.bf16.mxu0 0
    %6047 = vmatpush1.bf16.msra.mxu0 %v1094
    %6048 = vmatprep.subr.bf16.mxu0 0
    %6049 = vmatpush1.bf16.msra.mxu0 %v1097
    %6050 = vmatprep.subr.bf16.mxu0 0
    %6051 = vmatpush1.bf16.msra.mxu0 %v1100
    %6052 = vmatprep.subr.bf16.mxu0 0
    %6053 = vmatpush1.bf16.msra.mxu0 %v1103
    %6054 = vmatprep.subr.bf16.mxu0 0
    %6055 = vmatpush1.bf16.msra.mxu0 0
    %6056 = vmatprep.subr.bf16.mxu0 0
    %6057 = vmatpush1.bf16.msra.mxu0 0
    %6058 = vmatprep.subr.bf16.mxu0 0
    %6059 = vmatpush1.bf16.msra.mxu0 0
    %6060 = vmatprep.subr.bf16.mxu0 0
    %6061 = vmatpush1.bf16.msra.mxu0 0
    %6062 = vmatprep.subr.bf16.mxu0 0
    %6063 = vmatpush1.bf16.msra.mxu0 0
    %6064 = vmatprep.subr.bf16.mxu0 0
    %6065 = vmatpush1.bf16.msra.mxu0 0
    %6066 = vmatprep.subr.bf16.mxu0 0
    %6067 = vmatpush1.bf16.msra.mxu0 0
    %6068 = vmatprep.subr.bf16.mxu0 0
    %6069 = vmatpush1.bf16.msra.mxu0 0
    %6070 = vmatprep.subr.bf16.mxu0 0
    %6071 = vmatpush1.bf16.msra.mxu0 0
    %6072 = vmatprep.subr.bf16.mxu0 0
    %6073 = vmatpush1.bf16.msra.mxu0 0
    %6074 = vmatprep.subr.bf16.mxu0 0
    %6075 = vmatpush1.bf16.msra.mxu0 0
    %6076 = vmatprep.subr.bf16.mxu0 0
    %6077 = vmatpush1.bf16.msra.mxu0 0
    %6078 = vmatprep.mubr.bf16.mxu0 0
    %6079 = vmatmul.mubr.bf16.gmra.mrb[0].mxu0 %v6003
    %v6080 = vpop.f32.mrb[0].mxu0
    %v6081 = vadd.f32 %v98, %v6080
    %v6082 = vpop.f32.mrb[0].mxu0
    %v6083 = vpop.f32.mrb[0].mxu0
    %v6084 = vpop.f32.mrb[0].mxu0
    %6085 = vdwg.mxu0
    %v6086 = vadd.f32 %v6040, %v5724
    %v6087 = vxor.u32 %v6086, 2147483648
    %v6088 = vmul.f32 %v6087, 1.442695
    %v6089 = vpow.pop %v6088
    %v6090 = vadd.f32 %v6089, 1.0
    %v6091 = vrcp.pop %v6090
    %v6092 = vmul.f32 1.0, %v6091
    %v6093 = vadd.f32 %v6042, %v5726
    %v6094 = vxor.u32 %v6093, 2147483648
    %v6095 = vmul.f32 %v6094, 1.442695
    %v6096 = vpow.pop %v6095
    %v6097 = vadd.f32 %v6096, 1.0
    %v6098 = vrcp.pop %v6097
    %v6099 = vmul.f32 1.0, %v6098
    %v6100 = vadd.f32 %v5765, %v141
    %v6101 = vmul.f32 %v6092, %v6100
    %v6102 = vadd.f32 %v6081, %v6101
    %v6103 = vtanh.pop %v6102
    %v6104 = vsub.f32 1.0, %v6099
    %v6105 = vmul.f32 %v6104, %v6103
    %v6106 = vmul.f32 %v6099, %v5419
    %v6107 = vadd.f32 %v6105, %v6106
    %v6108 = vpack.c.bf16 %v6107, %v6107
    %v6110 = vsel %vm239, %v6108, 0
    %6112 = vmatprep.subr.bf16.mxu0 %v1281
    %6113 = vmatpush1.bf16.msra.mxu0 %v1280
    %6114 = vmatprep.subr.bf16.mxu0 %v1284
    %6115 = vmatpush1.bf16.msra.mxu0 %v1283
    %6116 = vmatprep.subr.bf16.mxu0 %v1287
    %6117 = vmatpush1.bf16.msra.mxu0 %v1286
    %6118 = vmatprep.subr.bf16.mxu0 %v1290
    %6119 = vmatpush1.bf16.msra.mxu0 %v1289
    %6120 = vmatprep.subr.bf16.mxu0 0
    %6121 = vmatpush1.bf16.msra.mxu0 0
    %6122 = vmatprep.subr.bf16.mxu0 0
    %6123 = vmatpush1.bf16.msra.mxu0 0
    %6124 = vmatprep.subr.bf16.mxu0 0
    %6125 = vmatpush1.bf16.msra.mxu0 0
    %6126 = vmatprep.subr.bf16.mxu0 0
    %6127 = vmatpush1.bf16.msra.mxu0 0
    %6128 = vmatprep.subr.bf16.mxu0 0
    %6129 = vmatpush1.bf16.msra.mxu0 0
    %6130 = vmatprep.subr.bf16.mxu0 0
    %6131 = vmatpush1.bf16.msra.mxu0 0
    %6132 = vmatprep.subr.bf16.mxu0 0
    %6133 = vmatpush1.bf16.msra.mxu0 0
    %6134 = vmatprep.subr.bf16.mxu0 0
    %6135 = vmatpush1.bf16.msra.mxu0 0
    %6136 = vmatprep.subr.bf16.mxu0 0
    %6137 = vmatpush1.bf16.msra.mxu0 0
    %6138 = vmatprep.subr.bf16.mxu0 0
    %6139 = vmatpush1.bf16.msra.mxu0 0
    %6140 = vmatprep.subr.bf16.mxu0 0
    %6141 = vmatpush1.bf16.msra.mxu0 0
    %6142 = vmatprep.subr.bf16.mxu0 0
    %6143 = vmatpush1.bf16.msra.mxu0 0
    %6144 = vmatprep.mubr.bf16.mxu0 0
    %6145 = vmatmul.mubr.bf16.gmra.mrb[0].mxu0 %v6110
    %v6146 = vpop.f32.mrb[0].mxu0
    %v6147 = vadd.f32 %v108, %v6146
    %v6148 = vpop.f32.mrb[0].mxu0
    %v6149 = vadd.f32 %v112, %v6148
    %v6150 = vpop.f32.mrb[0].mxu0
    %v6151 = vpop.f32.mrb[0].mxu0
    %6152 = vdwg.mxu0
    %6153 = vmatprep.subr.bf16.mxu0 0
    %6154 = vmatpush1.bf16.msra.mxu0 %v1282
    %6155 = vmatprep.subr.bf16.mxu0 0
    %6156 = vmatpush1.bf16.msra.mxu0 %v1285
    %6157 = vmatprep.subr.bf16.mxu0 0
    %6158 = vmatpush1.bf16.msra.mxu0 %v1288
    %6159 = vmatprep.subr.bf16.mxu0 0
    %6160 = vmatpush1.bf16.msra.mxu0 %v1291
    %6161 = vmatprep.subr.bf16.mxu0 0
    %6162 = vmatpush1.bf16.msra.mxu0 0
    %6163 = vmatprep.subr.bf16.mxu0 0
    %6164 = vmatpush1.bf16.msra.mxu0 0
    %6165 = vmatprep.subr.bf16.mxu0 0
    %6166 = vmatpush1.bf16.msra.mxu0 0
    %6167 = vmatprep.subr.bf16.mxu0 0
    %6168 = vmatpush1.bf16.msra.mxu0 0
    %6169 = vmatprep.subr.bf16.mxu0 0
    %6170 = vmatpush1.bf16.msra.mxu0 0
    %6171 = vmatprep.subr.bf16.mxu0 0
    %6172 = vmatpush1.bf16.msra.mxu0 0
    %6173 = vmatprep.subr.bf16.mxu0 0
    %6174 = vmatpush1.bf16.msra.mxu0 0
    %6175 = vmatprep.subr.bf16.mxu0 0
    %6176 = vmatpush1.bf16.msra.mxu0 0
    %6177 = vmatprep.subr.bf16.mxu0 0
    %6178 = vmatpush1.bf16.msra.mxu0 0
    %6179 = vmatprep.subr.bf16.mxu0 0
    %6180 = vmatpush1.bf16.msra.mxu0 0
    %6181 = vmatprep.subr.bf16.mxu0 0
    %6182 = vmatpush1.bf16.msra.mxu0 0
    %6183 = vmatprep.subr.bf16.mxu0 0
    %6184 = vmatpush1.bf16.msra.mxu0 0
    %6185 = vmatprep.mubr.bf16.mxu0 0
    %6186 = vmatmul.mubr.bf16.gmra.mrb[0].mxu0 %v6110
    %v6187 = vpop.f32.mrb[0].mxu0
    %v6188 = vadd.f32 %v116, %v6187
    %v6189 = vpop.f32.mrb[0].mxu0
    %v6190 = vpop.f32.mrb[0].mxu0
    %v6191 = vpop.f32.mrb[0].mxu0
    %6192 = vdwg.mxu0
    %v6193 = vadd.f32 %v6147, %v5809
    %v6194 = vxor.u32 %v6193, 2147483648
    %v6195 = vmul.f32 %v6194, 1.442695
    %v6196 = vpow.pop %v6195
    %v6197 = vadd.f32 %v6196, 1.0
    %v6198 = vrcp.pop %v6197
    %v6199 = vmul.f32 1.0, %v6198
    %v6200 = vadd.f32 %v6149, %v5811
    %v6201 = vxor.u32 %v6200, 2147483648
    %v6202 = vmul.f32 %v6201, 1.442695
    %v6203 = vpow.pop %v6202
    %v6204 = vadd.f32 %v6203, 1.0
    %v6205 = vrcp.pop %v6204
    %v6206 = vmul.f32 1.0, %v6205
    %v6207 = vadd.f32 %v5850, %v149
    %v6208 = vmul.f32 %v6199, %v6207
    %v6209 = vadd.f32 %v6188, %v6208
    %v6210 = vtanh.pop %v6209
    %v6211 = vsub.f32 1.0, %v6206
    %v6212 = vmul.f32 %v6211, %v6210
    %v6213 = vmul.f32 %v6206, %v5526
    %v6214 = vadd.f32 %v6212, %v6213
    %v6216 = vrot.slane %v2097, 6
    %v6219 = vrot.slane %v2785, 4
    %v6222 = vrot.slane %v3473, 2
    %v6225 = vrot.slane %v4838, 6
    %v6228 = vrot.slane %v5526, 4
    %v6231 = vrot.slane %v6214, 2
    %vm6233 = vcmask 1041408
    %v6234 = vsel %vm6233, %v1409, %v6216
    %vm6235 = vcmask 1043456
    %v6236 = vsel %vm6235, %v6234, %v6219
    %vm6237 = vcmask 1045504
    %v6238 = vsel %vm6237, %v6236, %v6222
    %v6239 = vsel %vm6233, %v4150, %v6225
    %v6240 = vsel %vm6235, %v6239, %v6228
    %v6241 = vsel %vm6237, %v6240, %v6231
    %6242 = vst [vmem:[%s6] sm:$0xff] %v6238
    %6243 = vst [vmem:[%s6 + $0x8] sm:$0xff] %v6241
    %6244 = vst [vmem:[#allocation2 - $0x6] sm:$0xc0] %v5891
    %6245 = vst [vmem:[%s152] sm:$0x3] %v6000
    %6246 = vst [vmem:[%s154] sm:$0x3] %v6107
    %6247 = vst [vmem:[%s156] sm:$0x3] %v6214
    // Predicated region
    $region38: #{decoder_forward.1} parent=1 // pred_check
      %p6248 = pneg %p55
    $region39: #{decoder_forward.1} parent=1 // pred_check_branch
      %6250 = sbr.rel (%p6248) target = $region41
    $region40: #{decoder_forward.1} parent=1 // pred_region
      %6251 = vst [vmem:[#allocation8 - $0x6] sm:$0xc0] %v5891
      %s6252 = scalar_lea.vmem [#allocation8], 2
      %6253 = vst [vmem:[%s6252] sm:$0x3] %v6000
      %s6254 = scalar_lea.vmem [#allocation8], 4
      %6255 = vst [vmem:[%s6254] sm:$0x3] %v6107
      %s6256 = scalar_lea.vmem [#allocation8], 6
      %6257 = vst [vmem:[%s6256] sm:$0x3] %v6214
    $region41: #{decoder_forward.1} parent=1 // pred_fallthru
      _
    // Predicated region
    $region42: #{decoder_forward.1} parent=1 // pred_check
      _
    $region43: #{decoder_forward.1} parent=1 // pred_check_branch
      %6259 = sbr.rel (0) target = $region45
    $region44: #{decoder_forward.1} parent=1 // pred_region
      _
    $region45: #{decoder_forward.1} parent=1 // pred_fallthru
      _
    // Predicated region
    $region46: #{decoder_forward.1} parent=1 // pred_check
      _
    $region47: #{decoder_forward.1} parent=1 // pred_check_branch
      %6261 = sbr.rel (0) target = $region49
    $region48: #{decoder_forward.1} parent=1 // pred_region
      %s6263 = ssub.s32 128, 128
      %6264 = vsyncadd [#allocation5], %s6263
      %s6265 = sshll.u32 [#allocation8], 4
      %s6266 = int_to_ptr.vmem [resolvable:$true] %s6265
      %6271 = dma.vmem_to_hbm [thread:$0]  %s6266, 128, %s7, [#allocation5], 32, 32, 2
    $region49: #{decoder_forward.1} parent=1 // pred_fallthru
      _
    // Predicated region
    $region50: #{decoder_forward.1} parent=1 // pred_check
      _
    $region51: #{decoder_forward.1} parent=1 // pred_check_branch
      %6273 = sbr.rel (0) target = $region53
    $region52: #{decoder_forward.1} parent=1 // pred_region
      _
    $region53: #{decoder_forward.1} parent=1 // pred_fallthru
      _
    // Predicated region
    $region54: #{decoder_forward.1} parent=1 // pred_check
      _
    $region55: #{decoder_forward.1} parent=1 // pred_check_branch
      %6275 = sbr.rel (0) target = $region57
    $region56: #{decoder_forward.1} parent=1 // pred_region
      %6276 = dma.done [#allocation5], 128
    $region57: #{decoder_forward.1} parent=1 // pred_fallthru
      _
    %6277 = vsyncpa [#allocation4], 1
    %6278 = vsyncpa [#allocation7], 1
    %6279 = vsyncpa [#allocation5], 1

</llo_original>
